<compile_context>
chip_gen: v7x
topology: tpu7x:2x2x1
jax: 0.10.0
libtpu: 0.0.40
codegen_flags: <defaults>
</compile_context>

<pallas_src>
import jax
import jax.numpy as jnp
from jax.experimental import pallas as pl
from jax.experimental.pallas import tpu as pltpu


# ----------------------------------------------------------------------------
# Kernel factory.
#   Inputs : inputs (B,T) i32 SMEM, relation (B,) i32 SMEM, emb (vocab,E) VMEM,
#            w_slab (2*L*Hp + L, 4*Hp) VMEM, wout (Hp,Vp), bout (1,Vp),
#            h0 (L,B,H), c0 (L,B,H)
#   Outputs: logits_bm (B*T, Vp) [batch-major, lane-padded], hn (L,B,H), cn (L,B,H)
#   Scratch: gx0 (T*B, 4*Hp), seq (T*B, Hp)
# w_slab row layout (each block is Hp=128 rows, zero padded):
#   block 2l   : W_ih_l  (layer 0: tok rows [0:E), rel rows [E:2E))
#   block 2l+1 : W_hh_l
#   rows 2*L*Hp + l : fused bias (b_ih + b_hh) of layer l
# Gate columns are per-gate padded: gate k lives in cols [k*Hp, k*Hp + H).
# ----------------------------------------------------------------------------
def _make_generator_kernel(L, B, T, H, E, vocab, Hp):
    f32 = jnp.float32

    def kernel(inputs_ref, relation_ref, emb_ref, w_ref, wout_ref, bout_ref,
               h0_ref, c0_ref, logits_ref, hn_ref, cn_ref, gx0_ref, seq_ref):
        # ---------------- Prologue: embedding gather via one-hot matmul -----
        lane_iota = jax.lax.broadcasted_iota(jnp.int32, (1, vocab), 1)

        def onehot_row(idx):                              # idx: traced scalar
            return (lane_iota == idx).astype(f32)          # (1, vocab)

        tok_rows = []
        for t in range(T):                                 # time-major rows
            for b_i in range(B):
                tok_rows.append(onehot_row(inputs_ref[b_i, t]))
        onehot_tok = jnp.concatenate(tok_rows, axis=0)     # (T*B, vocab)

        rel_rows = [onehot_row(relation_ref[b_i]) for b_i in range(B)]
        onehot_rel = jnp.concatenate(rel_rows, axis=0)     # (B, vocab)

        emb = emb_ref[...]                                 # (vocab, E)
        w_tok = w_ref[pl.ds(0, E), :]                      # (E, 4*Hp)
        w_rel = w_ref[pl.ds(E, E), :]                      # (E, 4*Hp)
        b0 = w_ref[pl.ds(2 * L * Hp, 1), :]                # (1, 4*Hp)

        emb_tm = jnp.dot(onehot_tok, emb, preferred_element_type=f32)   # (T*B,E)
        rel_emb = jnp.dot(onehot_rel, emb, preferred_element_type=f32)  # (B,E)

        # Hoisted layer-0 input-to-hidden matmul over the whole sequence;
        # relation contribution + bias folded in once, off the critical path.
        gx_tok = jnp.dot(emb_tm, w_tok, preferred_element_type=f32)     # (T*B,4Hp)
        rel_c = jnp.dot(rel_emb, w_rel, preferred_element_type=f32) + b0
        gx0_ref[...] = gx_tok + jnp.tile(rel_c, (T, 1))

        # ---------------- Per-layer weights & (lane-padded) initial state ---
        zpad = jnp.zeros((B, Hp - H), f32)
        whh, wih, bias, h_st, c_st = [], [None], [None], [], []
        for l in range(L):
            whh.append(w_ref[pl.ds((2 * l + 1) * Hp, Hp), :])     # (Hp, 4*Hp)
            if l >= 1:
                wih.append(w_ref[pl.ds((2 * l) * Hp, Hp), :])     # (Hp, 4*Hp)
                bias.append(w_ref[pl.ds(2 * L * Hp + l, 1), :])   # (1, 4*Hp)
            h_st.append(jnp.concatenate([h0_ref[l], zpad], axis=-1))  # (B, Hp)
            c_st.append(jnp.concatenate([c0_ref[l], zpad], axis=-1))

        def lstm_step(gates, c_prev):
            # Lane-aligned gate slices (each a full 128-lane stripe).
            i_g = jax.nn.sigmoid(gates[:, 0 * Hp:1 * Hp])
            f_g = jax.nn.sigmoid(gates[:, 1 * Hp:2 * Hp])
            g_g = jnp.tanh(gates[:, 2 * Hp:3 * Hp])
            o_g = jax.nn.sigmoid(gates[:, 3 * Hp:4 * Hp])
            c = f_g * c_prev + i_g * g_g
            h = o_g * jnp.tanh(c)
            return h, c

        # ---------------- Wavefronted recurrence (fully unrolled) -----------
        for t in range(T):
            # Layer 0: only h @ W_hh is on the serial critical path.
            gates = gx0_ref[pl.ds(t * B, B), :] + jnp.dot(
                h_st[0], whh[0], preferred_element_type=f32)
            h_st[0], c_st[0] = lstm_step(gates, c_st[0])
            # Upper layers consume h of the layer below produced this step;
            # the unrolled schedule lets layer l's step t overlap layer l-1's
            # step t+1 (independent chains).
            for l in range(1, L):
                gates = (jnp.dot(h_st[l - 1], wih[l], preferred_element_type=f32)
                         + bias[l]
                         + jnp.dot(h_st[l], whh[l], preferred_element_type=f32))
                h_st[l], c_st[l] = lstm_step(gates, c_st[l])
            # Collect top-layer h (batch-major rows) -- off the h->h chain.
            for b_i in range(B):
                seq_ref[pl.ds(b_i * T + t, 1), :] = h_st[L - 1][b_i:b_i + 1, :]

        # ---------------- Epilogue -------------------------------------------
        for l in range(L):
            hn_ref[l] = h_st[l][:, :H]
            cn_ref[l] = c_st[l][:, :H]

        # Lane-dense output projection: one (B*T, Hp) x (Hp, Vp) matmul.
        logits_ref[...] = (jnp.dot(seq_ref[...], wout_ref[...],
                                   preferred_element_type=f32)
                           + bout_ref[...])

    return kernel


# ----------------------------------------------------------------------------
# One-time parameter packing (padding / slab building is NOT on the call path).
# ----------------------------------------------------------------------------
def _pad_gate_cols(w, H, Hp):
    if Hp == H:
        return w
    parts = []
    for k in range(4):
        g = w[..., k * H:(k + 1) * H]
        parts.append(g)
        parts.append(jnp.zeros(g.shape[:-1] + (Hp - H,), g.dtype))
    return jnp.concatenate(parts, axis=-1)


def _pad_rows(w, rows):
    if w.shape[0] == rows:
        return w
    return jnp.concatenate(
        [w, jnp.zeros((rows - w.shape[0],) + w.shape[1:], w.dtype)], axis=0)


def prepare_pallas_params(params):
    emb = params["embedding"].astype(jnp.float32)
    E = emb.shape[1]
    H = params["whh"][0].shape[0]
    L = len(params["wih"])
    V = params["wout"].shape[1]
    Hp = 128
    Vp = ((V + 127) // 128) * 128
    assert 2 * E <= Hp and H <= Hp, "this packing assumes 2E, H <= 128"

    blocks = []
    for l in range(L):
        wih_l = _pad_gate_cols(params["wih"][l].astype(jnp.float32), H, Hp)
        whh_l = _pad_gate_cols(params["whh"][l].astype(jnp.float32), H, Hp)
        blocks.append(_pad_rows(wih_l, Hp))
        blocks.append(_pad_rows(whh_l, Hp))
    bias_rows = jnp.concatenate(
        [_pad_gate_cols(params["b"][l].astype(jnp.float32), H, Hp)
         for l in range(L)], axis=0)                          # (L, 4*Hp)
    w_slab = jnp.concatenate(blocks + [bias_rows], axis=0)    # (2*L*Hp + L, 4*Hp)

    wout = _pad_rows(params["wout"].astype(jnp.float32), Hp)  # (Hp, V)
    wout = jnp.concatenate([wout, jnp.zeros((Hp, Vp - V), jnp.float32)], axis=-1)
    bout = jnp.concatenate([params["bout"].astype(jnp.float32),
                            jnp.zeros((1, Vp - V), jnp.float32)], axis=-1)

    return {"emb": emb, "w_slab": w_slab, "wout": wout, "bout": bout,
            "E": E, "H": H, "L": L, "V": V, "Hp": Hp, "Vp": Vp}


def generator_forward_pallas(inputs, relation, h0, c0, prep):
    """Pallas implementation of Generator.forward (single fused pallas_call)."""
    B, T = inputs.shape
    L, H, E = prep["L"], prep["H"], prep["E"]
    Hp, Vp, V = prep["Hp"], prep["Vp"], prep["V"]
    vocab = prep["emb"].shape[0]

    smem = pl.BlockSpec(memory_space=pltpu.MemorySpace.SMEM)
    vmem = pl.BlockSpec(memory_space=pltpu.MemorySpace.VMEM)
    out_shapes = (
        jax.ShapeDtypeStruct((B * T, Vp), jnp.float32),   # batch-major logits
        jax.ShapeDtypeStruct((L, B, H), jnp.float32),
        jax.ShapeDtypeStruct((L, B, H), jnp.float32),
    )
    logits_bm, hn, cn = pl.pallas_call(
        _make_generator_kernel(L, B, T, H, E, vocab, Hp),
        out_shape=out_shapes,
        in_specs=[smem, smem, vmem, vmem, vmem, vmem, vmem, vmem],
        out_specs=(vmem, vmem, vmem),
        scratch_shapes=[pltpu.VMEM((T * B, 4 * Hp), jnp.float32),
                        pltpu.VMEM((T * B, Hp), jnp.float32)],
    )(inputs.astype(jnp.int32), relation.astype(jnp.int32),
      prep["emb"], prep["w_slab"], prep["wout"], prep["bout"],
      h0.astype(jnp.float32), c0.astype(jnp.float32))

    logits = logits_bm.reshape(B, T, Vp)[:, :, :V]
    return logits, (hn, cn)


# ----------------------------------------------------------------------------
# Pure-JAX reference (mirrors torch.nn.LSTM gate order i, f, g, o).
# ----------------------------------------------------------------------------
def generator_forward_ref(inputs, relation, h0, c0, params):
    emb_table = params["embedding"]
    B, T = inputs.shape
    E = emb_table.shape[1]
    H = params["whh"][0].shape[0]
    L = len(params["wih"])

    emb = jnp.take(emb_table, inputs, axis=0)
    emb_r = jnp.broadcast_to(jnp.take(emb_table, relation, axis=0)[:, None, :],
                             (B, T, E))
    x = jnp.concatenate([emb, emb_r], axis=-1).astype(jnp.float32)

    hn, cn = [], []
    layer_in = x
    for l in range(L):
        wih, whh, b = params["wih"][l], params["whh"][l], params["b"][l]
        h, c = h0[l], c0[l]
        outs = []
        for t in range(T):
            gates = layer_in[:, t, :] @ wih + h @ whh + b
            i_g = jax.nn.sigmoid(gates[:, 0 * H:1 * H])
            f_g = jax.nn.sigmoid(gates[:, 1 * H:2 * H])
            g_g = jnp.tanh(gates[:, 2 * H:3 * H])
            o_g = jax.nn.sigmoid(gates[:, 3 * H:4 * H])
            c = f_g * c + i_g * g_g
            h = o_g * jnp.tanh(c)
            outs.append(h)
        layer_in = jnp.stack(outs, axis=1)
        hn.append(h)
        cn.append(c)
    logits = jnp.einsum("bth,hv->btv", layer_in, params["wout"]) + params["bout"]
    return logits, (jnp.stack(hn), jnp.stack(cn))


# ----------------------------------------------------------------------------
# Deterministic parameter init (PyTorch-like scales).
# ----------------------------------------------------------------------------
def init_params(key, num_relations, num_layers, embedding_dim, hidden_dim):
    vocab_size = num_relations + 2
    label_size = num_relations + 1
    padding_idx = num_relations + 1
    E, H = embedding_dim, hidden_dim

    keys = jax.random.split(key, 4 + 4 * num_layers)
    k_emb, k_wout, k_bout = keys[0], keys[1], keys[2]
    lkeys = keys[3:]

    emb = jax.random.normal(k_emb, (vocab_size, E), jnp.float32)
    emb = emb.at[padding_idx].set(0.0)               # padding_idx row is zero

    s = 1.0 / jnp.sqrt(jnp.float32(H))
    wih, whh, b = [], [], []
    for l in range(num_layers):
        in_dim = 2 * E if l == 0 else H
        k0, k1, k2, k3 = lkeys[4 * l:4 * l + 4]
        wih.append(jax.random.uniform(k0, (in_dim, 4 * H), jnp.float32, -s, s))
        whh.append(jax.random.uniform(k1, (H, 4 * H), jnp.float32, -s, s))
        b_ih = jax.random.uniform(k2, (4 * H,), jnp.float32, -s, s)
        b_hh = jax.random.uniform(k3, (4 * H,), jnp.float32, -s, s)
        b.append((b_ih + b_hh).reshape(1, 4 * H))

    wout = jax.random.uniform(k_wout, (H, label_size), jnp.float32, -s, s)
    bout = jax.random.uniform(k_bout, (1, label_size), jnp.float32, -s, s)

    return {"embedding": emb, "wih": wih, "whh": whh, "b": b,
            "wout": wout, "bout": bout}


if __name__ == "__main__":
    # Small synthetic config consistent with the module.
    num_relations = 6          # -> vocab_size = 8, label_size = 7
    num_layers = 2
    embedding_dim = 16
    hidden_dim = 32
    B, T = 2, 8

    key = jax.random.PRNGKey(0)
    k_param, k_in, k_rel, k_h, k_c = jax.random.split(key, 5)

    params = init_params(k_param, num_relations, num_layers,
                         embedding_dim, hidden_dim)
    prep = prepare_pallas_params(params)            # one-time packing/padding
    jax.block_until_ready(prep["w_slab"])

    inputs = jax.random.randint(k_in, (B, T), 0, num_relations + 2, jnp.int32)
    relation = jax.random.randint(k_rel, (B,), 0, num_relations, jnp.int32)
    h0 = jax.random.normal(k_h, (num_layers, B, hidden_dim), jnp.float32)
    c0 = jax.random.normal(k_c, (num_layers, B, hidden_dim), jnp.float32)

    logits, (hn, cn) = generator_forward_pallas(inputs, relation, h0, c0, prep)
    jax.block_until_ready((logits, hn, cn))

    ref_logits, (ref_hn, ref_cn) = generator_forward_ref(
        inputs, relation, h0, c0, params)

    assert logits.shape == (B, T, num_relations + 1)
    assert hn.shape == (num_layers, B, hidden_dim)
    assert cn.shape == (num_layers, B, hidden_dim)
    assert jnp.allclose(logits, ref_logits, atol=1e-4, rtol=1e-4)
    assert jnp.allclose(hn, ref_hn, atol=1e-4, rtol=1e-4)
    assert jnp.allclose(cn, ref_cn, atol=1e-4, rtol=1e-4)

    print("KERNEL_OK")
</pallas_src>

<mosaic_0001>
module attributes {stable_mosaic.version = 11 : i64} {
  func.func @kernel(%arg0: memref<2x8xi32, #tpu.memory_space<smem>>, %arg1: memref<2xi32, #tpu.memory_space<smem>>, %arg2: memref<8x16xf32, #tpu.memory_space<vmem>>, %arg3: memref<514x512xf32, #tpu.memory_space<vmem>>, %arg4: memref<128x128xf32, #tpu.memory_space<vmem>>, %arg5: memref<1x128xf32, #tpu.memory_space<vmem>>, %arg6: memref<2x2x32xf32, #tpu.memory_space<vmem>>, %arg7: memref<2x2x32xf32, #tpu.memory_space<vmem>>, %arg8: memref<16x128xf32, #tpu.memory_space<vmem>>, %arg9: memref<2x2x32xf32, #tpu.memory_space<vmem>>, %arg10: memref<2x2x32xf32, #tpu.memory_space<vmem>>, %arg11: memref<16x512xf32, #tpu.memory_space<vmem>>, %arg12: memref<16x128xf32, #tpu.memory_space<vmem>>) attributes {dimension_semantics = [], scalar_prefetch = 0 : i64, scratch_operands = 2 : i64, tpu.core_type = #tpu.core_type<tc>} {
    %0 = tpu.iota {dimensions = array<i32: 1>} : vector<1x8xi32>
    %c0 = arith.constant 0 : index
    %c0_0 = arith.constant 0 : index
    %1 = memref.load %arg0[%c0, %c0_0] : memref<2x8xi32, #tpu.memory_space<smem>>
    %2 = vector.broadcast %1 : i32 to vector<1x8xi32>
    %3 = arith.cmpi eq, %0, %2 : vector<1x8xi32>
    %4 = arith.extui %3 : vector<1x8xi1> to vector<1x8xi32>
    %5 = arith.sitofp %4 : vector<1x8xi32> to vector<1x8xf32>
    %c1 = arith.constant 1 : index
    %c0_1 = arith.constant 0 : index
    %6 = memref.load %arg0[%c1, %c0_1] : memref<2x8xi32, #tpu.memory_space<smem>>
    %7 = vector.broadcast %6 : i32 to vector<1x8xi32>
    %8 = arith.cmpi eq, %0, %7 : vector<1x8xi32>
    %9 = arith.extui %8 : vector<1x8xi1> to vector<1x8xi32>
    %10 = arith.sitofp %9 : vector<1x8xi32> to vector<1x8xf32>
    %c0_2 = arith.constant 0 : index
    %c1_3 = arith.constant 1 : index
    %11 = memref.load %arg0[%c0_2, %c1_3] : memref<2x8xi32, #tpu.memory_space<smem>>
    %12 = vector.broadcast %11 : i32 to vector<1x8xi32>
    %13 = arith.cmpi eq, %0, %12 : vector<1x8xi32>
    %14 = arith.extui %13 : vector<1x8xi1> to vector<1x8xi32>
    %15 = arith.sitofp %14 : vector<1x8xi32> to vector<1x8xf32>
    %c1_4 = arith.constant 1 : index
    %c1_5 = arith.constant 1 : index
    %16 = memref.load %arg0[%c1_4, %c1_5] : memref<2x8xi32, #tpu.memory_space<smem>>
    %17 = vector.broadcast %16 : i32 to vector<1x8xi32>
    %18 = arith.cmpi eq, %0, %17 : vector<1x8xi32>
    %19 = arith.extui %18 : vector<1x8xi1> to vector<1x8xi32>
    %20 = arith.sitofp %19 : vector<1x8xi32> to vector<1x8xf32>
    %c0_6 = arith.constant 0 : index
    %c2 = arith.constant 2 : index
    %21 = memref.load %arg0[%c0_6, %c2] : memref<2x8xi32, #tpu.memory_space<smem>>
    %22 = vector.broadcast %21 : i32 to vector<1x8xi32>
    %23 = arith.cmpi eq, %0, %22 : vector<1x8xi32>
    %24 = arith.extui %23 : vector<1x8xi1> to vector<1x8xi32>
    %25 = arith.sitofp %24 : vector<1x8xi32> to vector<1x8xf32>
    %c1_7 = arith.constant 1 : index
    %c2_8 = arith.constant 2 : index
    %26 = memref.load %arg0[%c1_7, %c2_8] : memref<2x8xi32, #tpu.memory_space<smem>>
    %27 = vector.broadcast %26 : i32 to vector<1x8xi32>
    %28 = arith.cmpi eq, %0, %27 : vector<1x8xi32>
    %29 = arith.extui %28 : vector<1x8xi1> to vector<1x8xi32>
    %30 = arith.sitofp %29 : vector<1x8xi32> to vector<1x8xf32>
    %c0_9 = arith.constant 0 : index
    %c3 = arith.constant 3 : index
    %31 = memref.load %arg0[%c0_9, %c3] : memref<2x8xi32, #tpu.memory_space<smem>>
    %32 = vector.broadcast %31 : i32 to vector<1x8xi32>
    %33 = arith.cmpi eq, %0, %32 : vector<1x8xi32>
    %34 = arith.extui %33 : vector<1x8xi1> to vector<1x8xi32>
    %35 = arith.sitofp %34 : vector<1x8xi32> to vector<1x8xf32>
    %c1_10 = arith.constant 1 : index
    %c3_11 = arith.constant 3 : index
    %36 = memref.load %arg0[%c1_10, %c3_11] : memref<2x8xi32, #tpu.memory_space<smem>>
    %37 = vector.broadcast %36 : i32 to vector<1x8xi32>
    %38 = arith.cmpi eq, %0, %37 : vector<1x8xi32>
    %39 = arith.extui %38 : vector<1x8xi1> to vector<1x8xi32>
    %40 = arith.sitofp %39 : vector<1x8xi32> to vector<1x8xf32>
    %c0_12 = arith.constant 0 : index
    %c4 = arith.constant 4 : index
    %41 = memref.load %arg0[%c0_12, %c4] : memref<2x8xi32, #tpu.memory_space<smem>>
    %42 = vector.broadcast %41 : i32 to vector<1x8xi32>
    %43 = arith.cmpi eq, %0, %42 : vector<1x8xi32>
    %44 = arith.extui %43 : vector<1x8xi1> to vector<1x8xi32>
    %45 = arith.sitofp %44 : vector<1x8xi32> to vector<1x8xf32>
    %c1_13 = arith.constant 1 : index
    %c4_14 = arith.constant 4 : index
    %46 = memref.load %arg0[%c1_13, %c4_14] : memref<2x8xi32, #tpu.memory_space<smem>>
    %47 = vector.broadcast %46 : i32 to vector<1x8xi32>
    %48 = arith.cmpi eq, %0, %47 : vector<1x8xi32>
    %49 = arith.extui %48 : vector<1x8xi1> to vector<1x8xi32>
    %50 = arith.sitofp %49 : vector<1x8xi32> to vector<1x8xf32>
    %c0_15 = arith.constant 0 : index
    %c5 = arith.constant 5 : index
    %51 = memref.load %arg0[%c0_15, %c5] : memref<2x8xi32, #tpu.memory_space<smem>>
    %52 = vector.broadcast %51 : i32 to vector<1x8xi32>
    %53 = arith.cmpi eq, %0, %52 : vector<1x8xi32>
    %54 = arith.extui %53 : vector<1x8xi1> to vector<1x8xi32>
    %55 = arith.sitofp %54 : vector<1x8xi32> to vector<1x8xf32>
    %c1_16 = arith.constant 1 : index
    %c5_17 = arith.constant 5 : index
    %56 = memref.load %arg0[%c1_16, %c5_17] : memref<2x8xi32, #tpu.memory_space<smem>>
    %57 = vector.broadcast %56 : i32 to vector<1x8xi32>
    %58 = arith.cmpi eq, %0, %57 : vector<1x8xi32>
    %59 = arith.extui %58 : vector<1x8xi1> to vector<1x8xi32>
    %60 = arith.sitofp %59 : vector<1x8xi32> to vector<1x8xf32>
    %c0_18 = arith.constant 0 : index
    %c6 = arith.constant 6 : index
    %61 = memref.load %arg0[%c0_18, %c6] : memref<2x8xi32, #tpu.memory_space<smem>>
    %62 = vector.broadcast %61 : i32 to vector<1x8xi32>
    %63 = arith.cmpi eq, %0, %62 : vector<1x8xi32>
    %64 = arith.extui %63 : vector<1x8xi1> to vector<1x8xi32>
    %65 = arith.sitofp %64 : vector<1x8xi32> to vector<1x8xf32>
    %c1_19 = arith.constant 1 : index
    %c6_20 = arith.constant 6 : index
    %66 = memref.load %arg0[%c1_19, %c6_20] : memref<2x8xi32, #tpu.memory_space<smem>>
    %67 = vector.broadcast %66 : i32 to vector<1x8xi32>
    %68 = arith.cmpi eq, %0, %67 : vector<1x8xi32>
    %69 = arith.extui %68 : vector<1x8xi1> to vector<1x8xi32>
    %70 = arith.sitofp %69 : vector<1x8xi32> to vector<1x8xf32>
    %c0_21 = arith.constant 0 : index
    %c7 = arith.constant 7 : index
    %71 = memref.load %arg0[%c0_21, %c7] : memref<2x8xi32, #tpu.memory_space<smem>>
    %72 = vector.broadcast %71 : i32 to vector<1x8xi32>
    %73 = arith.cmpi eq, %0, %72 : vector<1x8xi32>
    %74 = arith.extui %73 : vector<1x8xi1> to vector<1x8xi32>
    %75 = arith.sitofp %74 : vector<1x8xi32> to vector<1x8xf32>
    %c1_22 = arith.constant 1 : index
    %c7_23 = arith.constant 7 : index
    %76 = memref.load %arg0[%c1_22, %c7_23] : memref<2x8xi32, #tpu.memory_space<smem>>
    %77 = vector.broadcast %76 : i32 to vector<1x8xi32>
    %78 = arith.cmpi eq, %0, %77 : vector<1x8xi32>
    %79 = arith.extui %78 : vector<1x8xi1> to vector<1x8xi32>
    %80 = arith.sitofp %79 : vector<1x8xi32> to vector<1x8xf32>
    %81 = tpu.concatenate %5, %10, %15, %20, %25, %30, %35, %40, %45, %50, %55, %60, %65, %70, %75, %80 in 0 : vector<1x8xf32>, vector<1x8xf32>, vector<1x8xf32>, vector<1x8xf32>, vector<1x8xf32>, vector<1x8xf32>, vector<1x8xf32>, vector<1x8xf32>, vector<1x8xf32>, vector<1x8xf32>, vector<1x8xf32>, vector<1x8xf32>, vector<1x8xf32>, vector<1x8xf32>, vector<1x8xf32>, vector<1x8xf32> -> vector<16x8xf32>
    %c0_24 = arith.constant 0 : index
    %82 = memref.load %arg1[%c0_24] : memref<2xi32, #tpu.memory_space<smem>>
    %83 = vector.broadcast %82 : i32 to vector<1x8xi32>
    %84 = arith.cmpi eq, %0, %83 : vector<1x8xi32>
    %85 = arith.extui %84 : vector<1x8xi1> to vector<1x8xi32>
    %86 = arith.sitofp %85 : vector<1x8xi32> to vector<1x8xf32>
    %c1_25 = arith.constant 1 : index
    %87 = memref.load %arg1[%c1_25] : memref<2xi32, #tpu.memory_space<smem>>
    %88 = vector.broadcast %87 : i32 to vector<1x8xi32>
    %89 = arith.cmpi eq, %0, %88 : vector<1x8xi32>
    %90 = arith.extui %89 : vector<1x8xi1> to vector<1x8xi32>
    %91 = arith.sitofp %90 : vector<1x8xi32> to vector<1x8xf32>
    %92 = tpu.concatenate %86, %91 in 0 : vector<1x8xf32>, vector<1x8xf32> -> vector<2x8xf32>
    %c0_26 = arith.constant 0 : index
    %c0_27 = arith.constant 0 : index
    %93 = vector.load %arg2[%c0_26, %c0_27] : memref<8x16xf32, #tpu.memory_space<vmem>>, vector<8x16xf32>
    %c0_28 = arith.constant 0 : index
    %c0_29 = arith.constant 0 : index
    %94 = vector.load %arg3[%c0_28, %c0_29] : memref<514x512xf32, #tpu.memory_space<vmem>>, vector<16x512xf32>
    %c16 = arith.constant 16 : index
    %c0_30 = arith.constant 0 : index
    %95 = vector.load %arg3[%c16, %c0_30] : memref<514x512xf32, #tpu.memory_space<vmem>>, vector<16x512xf32>
    %c512 = arith.constant 512 : index
    %c0_31 = arith.constant 0 : index
    %96 = vector.load %arg3[%c512, %c0_31] : memref<514x512xf32, #tpu.memory_space<vmem>>, vector<1x512xf32>
    %cst = arith.constant dense<0.000000e+00> : vector<16x16xf32>
    %97 = tpu.matmul %81, %93, %cst {dimension_numbers = #tpu.dot_dimension_numbers<[1], [0], [0], [1], [0, 0, 1, 1], [], []>} : vector<16x8xf32>, vector<8x16xf32>, vector<16x16xf32> -> vector<16x16xf32>
    %cst_32 = arith.constant dense<0.000000e+00> : vector<2x16xf32>
    %98 = tpu.matmul %92, %93, %cst_32 {dimension_numbers = #tpu.dot_dimension_numbers<[1], [0], [0], [1], [0, 0, 1, 1], [], []>} : vector<2x8xf32>, vector<8x16xf32>, vector<2x16xf32> -> vector<2x16xf32>
    %cst_33 = arith.constant dense<0.000000e+00> : vector<16x512xf32>
    %99 = tpu.matmul %97, %94, %cst_33 {dimension_numbers = #tpu.dot_dimension_numbers<[1], [0], [0], [1], [0, 0, 1, 1], [], []>} : vector<16x16xf32>, vector<16x512xf32>, vector<16x512xf32> -> vector<16x512xf32>
    %cst_34 = arith.constant dense<0.000000e+00> : vector<2x512xf32>
    %100 = tpu.matmul %98, %95, %cst_34 {dimension_numbers = #tpu.dot_dimension_numbers<[1], [0], [0], [1], [0, 0, 1, 1], [], []>} : vector<2x16xf32>, vector<16x512xf32>, vector<2x512xf32> -> vector<2x512xf32>
    %101 = vector.broadcast %96 : vector<1x512xf32> to vector<2x512xf32>
    %102 = arith.addf %100, %101 : vector<2x512xf32>
    %103 = tpu.concatenate %102, %102, %102, %102, %102, %102, %102, %102 in 0 : vector<2x512xf32>, vector<2x512xf32>, vector<2x512xf32>, vector<2x512xf32>, vector<2x512xf32>, vector<2x512xf32>, vector<2x512xf32>, vector<2x512xf32> -> vector<16x512xf32>
    %104 = arith.addf %99, %103 : vector<16x512xf32>
    %c0_35 = arith.constant 0 : index
    %c0_36 = arith.constant 0 : index
    %105 = vector.load %arg11[%c0_35, %c0_36] : memref<16x512xf32, #tpu.memory_space<vmem>>, vector<16x512xf32>
    tpu.vector_store %arg11[%c0_35, %c0_36], %104 {strides = array<i32>} : memref<16x512xf32, #tpu.memory_space<vmem>>, vector<16x512xf32>,
    %cst_37 = arith.constant 0.000000e+00 : f32
    %106 = vector.broadcast %cst_37 : f32 to vector<2x96xf32>
    %c128 = arith.constant 128 : index
    %c0_38 = arith.constant 0 : index
    %107 = vector.load %arg3[%c128, %c0_38] : memref<514x512xf32, #tpu.memory_space<vmem>>, vector<128x512xf32>
    %c0_39 = arith.constant 0 : index
    %c0_40 = arith.constant 0 : index
    %c0_41 = arith.constant 0 : index
    %108 = vector.load %arg6[%c0_39, %c0_40, %c0_41] : memref<2x2x32xf32, #tpu.memory_space<vmem>>, vector<1x2x32xf32>
    %109 = vector.shape_cast %108 : vector<1x2x32xf32> to vector<2x32xf32>
    %110 = tpu.concatenate %109, %106 in 1 : vector<2x32xf32>, vector<2x96xf32> -> vector<2x128xf32>
    %c0_42 = arith.constant 0 : index
    %c0_43 = arith.constant 0 : index
    %c0_44 = arith.constant 0 : index
    %111 = vector.load %arg7[%c0_42, %c0_43, %c0_44] : memref<2x2x32xf32, #tpu.memory_space<vmem>>, vector<1x2x32xf32>
    %112 = vector.shape_cast %111 : vector<1x2x32xf32> to vector<2x32xf32>
    %113 = tpu.concatenate %112, %106 in 1 : vector<2x32xf32>, vector<2x96xf32> -> vector<2x128xf32>
    %c384 = arith.constant 384 : index
    %c0_45 = arith.constant 0 : index
    %114 = vector.load %arg3[%c384, %c0_45] : memref<514x512xf32, #tpu.memory_space<vmem>>, vector<128x512xf32>
    %c256 = arith.constant 256 : index
    %c0_46 = arith.constant 0 : index
    %115 = vector.load %arg3[%c256, %c0_46] : memref<514x512xf32, #tpu.memory_space<vmem>>, vector<128x512xf32>
    %c513 = arith.constant 513 : index
    %c0_47 = arith.constant 0 : index
    %116 = vector.load %arg3[%c513, %c0_47] : memref<514x512xf32, #tpu.memory_space<vmem>>, vector<1x512xf32>
    %c1_48 = arith.constant 1 : index
    %c0_49 = arith.constant 0 : index
    %c0_50 = arith.constant 0 : index
    %117 = vector.load %arg6[%c1_48, %c0_49, %c0_50] : memref<2x2x32xf32, #tpu.memory_space<vmem>>, vector<1x2x32xf32>
    %118 = vector.shape_cast %117 : vector<1x2x32xf32> to vector<2x32xf32>
    %119 = tpu.concatenate %118, %106 in 1 : vector<2x32xf32>, vector<2x96xf32> -> vector<2x128xf32>
    %c1_51 = arith.constant 1 : index
    %c0_52 = arith.constant 0 : index
    %c0_53 = arith.constant 0 : index
    %120 = vector.load %arg7[%c1_51, %c0_52, %c0_53] : memref<2x2x32xf32, #tpu.memory_space<vmem>>, vector<1x2x32xf32>
    %121 = vector.shape_cast %120 : vector<1x2x32xf32> to vector<2x32xf32>
    %122 = tpu.concatenate %121, %106 in 1 : vector<2x32xf32>, vector<2x96xf32> -> vector<2x128xf32>
    %c0_54 = arith.constant 0 : index
    %c0_55 = arith.constant 0 : index
    %123 = vector.load %arg11[%c0_54, %c0_55] : memref<16x512xf32, #tpu.memory_space<vmem>>, vector<2x512xf32>
    %cst_56 = arith.constant dense<0.000000e+00> : vector<2x512xf32>
    %124 = tpu.matmul %110, %107, %cst_56 {dimension_numbers = #tpu.dot_dimension_numbers<[1], [0], [0], [1], [0, 0, 1, 1], [], []>} : vector<2x128xf32>, vector<128x512xf32>, vector<2x512xf32> -> vector<2x512xf32>
    %125 = arith.addf %123, %124 : vector<2x512xf32>
    %126 = vector.extract_strided_slice %125 {offsets = [0, 0], sizes = [2, 128], strides = [1, 1]} : vector<2x512xf32> to vector<2x128xf32>
    %127 = arith.negf %126 : vector<2x128xf32>
    %128 = math.exp %127 : vector<2x128xf32>
    %cst_57 = arith.constant 1.000000e+00 : f32
    %129 = vector.broadcast %cst_57 : f32 to vector<2x128xf32>
    %130 = arith.addf %129, %128 : vector<2x128xf32>
    %131 = arith.divf %129, %130 : vector<2x128xf32>
    %132 = vector.extract_strided_slice %125 {offsets = [0, 128], sizes = [2, 128], strides = [1, 1]} : vector<2x512xf32> to vector<2x128xf32>
    %133 = arith.negf %132 : vector<2x128xf32>
    %134 = math.exp %133 : vector<2x128xf32>
    %cst_58 = arith.constant 1.000000e+00 : f32
    %135 = vector.broadcast %cst_58 : f32 to vector<2x128xf32>
    %136 = arith.addf %135, %134 : vector<2x128xf32>
    %137 = arith.divf %135, %136 : vector<2x128xf32>
    %138 = vector.extract_strided_slice %125 {offsets = [0, 256], sizes = [2, 128], strides = [1, 1]} : vector<2x512xf32> to vector<2x128xf32>
    %139 = math.tanh %138 : vector<2x128xf32>
    %140 = vector.extract_strided_slice %125 {offsets = [0, 384], sizes = [2, 128], strides = [1, 1]} : vector<2x512xf32> to vector<2x128xf32>
    %141 = arith.negf %140 : vector<2x128xf32>
    %142 = math.exp %141 : vector<2x128xf32>
    %cst_59 = arith.constant 1.000000e+00 : f32
    %143 = vector.broadcast %cst_59 : f32 to vector<2x128xf32>
    %144 = arith.addf %143, %142 : vector<2x128xf32>
    %145 = arith.divf %143, %144 : vector<2x128xf32>
    %146 = arith.mulf %137, %113 : vector<2x128xf32>
    %147 = arith.mulf %131, %139 : vector<2x128xf32>
    %148 = arith.addf %146, %147 : vector<2x128xf32>
    %149 = math.tanh %148 : vector<2x128xf32>
    %150 = arith.mulf %145, %149 : vector<2x128xf32>
    %cst_60 = arith.constant dense<0.000000e+00> : vector<2x512xf32>
    %151 = tpu.matmul %150, %115, %cst_60 {dimension_numbers = #tpu.dot_dimension_numbers<[1], [0], [0], [1], [0, 0, 1, 1], [], []>} : vector<2x128xf32>, vector<128x512xf32>, vector<2x512xf32> -> vector<2x512xf32>
    %152 = vector.broadcast %116 : vector<1x512xf32> to vector<2x512xf32>
    %153 = arith.addf %151, %152 : vector<2x512xf32>
    %cst_61 = arith.constant dense<0.000000e+00> : vector<2x512xf32>
    %154 = tpu.matmul %119, %114, %cst_61 {dimension_numbers = #tpu.dot_dimension_numbers<[1], [0], [0], [1], [0, 0, 1, 1], [], []>} : vector<2x128xf32>, vector<128x512xf32>, vector<2x512xf32> -> vector<2x512xf32>
    %155 = arith.addf %153, %154 : vector<2x512xf32>
    %156 = vector.extract_strided_slice %155 {offsets = [0, 0], sizes = [2, 128], strides = [1, 1]} : vector<2x512xf32> to vector<2x128xf32>
    %157 = arith.negf %156 : vector<2x128xf32>
    %158 = math.exp %157 : vector<2x128xf32>
    %cst_62 = arith.constant 1.000000e+00 : f32
    %159 = vector.broadcast %cst_62 : f32 to vector<2x128xf32>
    %160 = arith.addf %159, %158 : vector<2x128xf32>
    %161 = arith.divf %159, %160 : vector<2x128xf32>
    %162 = vector.extract_strided_slice %155 {offsets = [0, 128], sizes = [2, 128], strides = [1, 1]} : vector<2x512xf32> to vector<2x128xf32>
    %163 = arith.negf %162 : vector<2x128xf32>
    %164 = math.exp %163 : vector<2x128xf32>
    %cst_63 = arith.constant 1.000000e+00 : f32
    %165 = vector.broadcast %cst_63 : f32 to vector<2x128xf32>
    %166 = arith.addf %165, %164 : vector<2x128xf32>
    %167 = arith.divf %165, %166 : vector<2x128xf32>
    %168 = vector.extract_strided_slice %155 {offsets = [0, 256], sizes = [2, 128], strides = [1, 1]} : vector<2x512xf32> to vector<2x128xf32>
    %169 = math.tanh %168 : vector<2x128xf32>
    %170 = vector.extract_strided_slice %155 {offsets = [0, 384], sizes = [2, 128], strides = [1, 1]} : vector<2x512xf32> to vector<2x128xf32>
    %171 = arith.negf %170 : vector<2x128xf32>
    %172 = math.exp %171 : vector<2x128xf32>
    %cst_64 = arith.constant 1.000000e+00 : f32
    %173 = vector.broadcast %cst_64 : f32 to vector<2x128xf32>
    %174 = arith.addf %173, %172 : vector<2x128xf32>
    %175 = arith.divf %173, %174 : vector<2x128xf32>
    %176 = arith.mulf %167, %122 : vector<2x128xf32>
    %177 = arith.mulf %161, %169 : vector<2x128xf32>
    %178 = arith.addf %176, %177 : vector<2x128xf32>
    %179 = math.tanh %178 : vector<2x128xf32>
    %180 = arith.mulf %175, %179 : vector<2x128xf32>
    %181 = vector.extract_strided_slice %180 {offsets = [0, 0], sizes = [1, 128], strides = [1, 1]} : vector<2x128xf32> to vector<1x128xf32>
    %c0_65 = arith.constant 0 : index
    %c0_66 = arith.constant 0 : index
    %182 = vector.load %arg12[%c0_65, %c0_66] : memref<16x128xf32, #tpu.memory_space<vmem>>, vector<1x128xf32>
    tpu.vector_store %arg12[%c0_65, %c0_66], %181 {strides = array<i32>} : memref<16x128xf32, #tpu.memory_space<vmem>>, vector<1x128xf32>,
    %183 = vector.extract_strided_slice %180 {offsets = [1, 0], sizes = [1, 128], strides = [1, 1]} : vector<2x128xf32> to vector<1x128xf32>
    %c8 = arith.constant 8 : index
    %c0_67 = arith.constant 0 : index
    %184 = vector.load %arg12[%c8, %c0_67] : memref<16x128xf32, #tpu.memory_space<vmem>>, vector<1x128xf32>
    tpu.vector_store %arg12[%c8, %c0_67], %183 {strides = array<i32>} : memref<16x128xf32, #tpu.memory_space<vmem>>, vector<1x128xf32>,
    %c2_68 = arith.constant 2 : index
    %c0_69 = arith.constant 0 : index
    %185 = vector.load %arg11[%c2_68, %c0_69] : memref<16x512xf32, #tpu.memory_space<vmem>>, vector<2x512xf32>
    %cst_70 = arith.constant dense<0.000000e+00> : vector<2x512xf32>
    %186 = tpu.matmul %150, %107, %cst_70 {dimension_numbers = #tpu.dot_dimension_numbers<[1], [0], [0], [1], [0, 0, 1, 1], [], []>} : vector<2x128xf32>, vector<128x512xf32>, vector<2x512xf32> -> vector<2x512xf32>
    %187 = arith.addf %185, %186 : vector<2x512xf32>
    %188 = vector.extract_strided_slice %187 {offsets = [0, 0], sizes = [2, 128], strides = [1, 1]} : vector<2x512xf32> to vector<2x128xf32>
    %189 = arith.negf %188 : vector<2x128xf32>
    %190 = math.exp %189 : vector<2x128xf32>
    %cst_71 = arith.constant 1.000000e+00 : f32
    %191 = vector.broadcast %cst_71 : f32 to vector<2x128xf32>
    %192 = arith.addf %191, %190 : vector<2x128xf32>
    %193 = arith.divf %191, %192 : vector<2x128xf32>
    %194 = vector.extract_strided_slice %187 {offsets = [0, 128], sizes = [2, 128], strides = [1, 1]} : vector<2x512xf32> to vector<2x128xf32>
    %195 = arith.negf %194 : vector<2x128xf32>
    %196 = math.exp %195 : vector<2x128xf32>
    %cst_72 = arith.constant 1.000000e+00 : f32
    %197 = vector.broadcast %cst_72 : f32 to vector<2x128xf32>
    %198 = arith.addf %197, %196 : vector<2x128xf32>
    %199 = arith.divf %197, %198 : vector<2x128xf32>
    %200 = vector.extract_strided_slice %187 {offsets = [0, 256], sizes = [2, 128], strides = [1, 1]} : vector<2x512xf32> to vector<2x128xf32>
    %201 = math.tanh %200 : vector<2x128xf32>
    %202 = vector.extract_strided_slice %187 {offsets = [0, 384], sizes = [2, 128], strides = [1, 1]} : vector<2x512xf32> to vector<2x128xf32>
    %203 = arith.negf %202 : vector<2x128xf32>
    %204 = math.exp %203 : vector<2x128xf32>
    %cst_73 = arith.constant 1.000000e+00 : f32
    %205 = vector.broadcast %cst_73 : f32 to vector<2x128xf32>
    %206 = arith.addf %205, %204 : vector<2x128xf32>
    %207 = arith.divf %205, %206 : vector<2x128xf32>
    %208 = arith.mulf %199, %148 : vector<2x128xf32>
    %209 = arith.mulf %193, %201 : vector<2x128xf32>
    %210 = arith.addf %208, %209 : vector<2x128xf32>
    %211 = math.tanh %210 : vector<2x128xf32>
    %212 = arith.mulf %207, %211 : vector<2x128xf32>
    %cst_74 = arith.constant dense<0.000000e+00> : vector<2x512xf32>
    %213 = tpu.matmul %212, %115, %cst_74 {dimension_numbers = #tpu.dot_dimension_numbers<[1], [0], [0], [1], [0, 0, 1, 1], [], []>} : vector<2x128xf32>, vector<128x512xf32>, vector<2x512xf32> -> vector<2x512xf32>
    %214 = vector.broadcast %116 : vector<1x512xf32> to vector<2x512xf32>
    %215 = arith.addf %213, %214 : vector<2x512xf32>
    %cst_75 = arith.constant dense<0.000000e+00> : vector<2x512xf32>
    %216 = tpu.matmul %180, %114, %cst_75 {dimension_numbers = #tpu.dot_dimension_numbers<[1], [0], [0], [1], [0, 0, 1, 1], [], []>} : vector<2x128xf32>, vector<128x512xf32>, vector<2x512xf32> -> vector<2x512xf32>
    %217 = arith.addf %215, %216 : vector<2x512xf32>
    %218 = vector.extract_strided_slice %217 {offsets = [0, 0], sizes = [2, 128], strides = [1, 1]} : vector<2x512xf32> to vector<2x128xf32>
    %219 = arith.negf %218 : vector<2x128xf32>
    %220 = math.exp %219 : vector<2x128xf32>
    %cst_76 = arith.constant 1.000000e+00 : f32
    %221 = vector.broadcast %cst_76 : f32 to vector<2x128xf32>
    %222 = arith.addf %221, %220 : vector<2x128xf32>
    %223 = arith.divf %221, %222 : vector<2x128xf32>
    %224 = vector.extract_strided_slice %217 {offsets = [0, 128], sizes = [2, 128], strides = [1, 1]} : vector<2x512xf32> to vector<2x128xf32>
    %225 = arith.negf %224 : vector<2x128xf32>
    %226 = math.exp %225 : vector<2x128xf32>
    %cst_77 = arith.constant 1.000000e+00 : f32
    %227 = vector.broadcast %cst_77 : f32 to vector<2x128xf32>
    %228 = arith.addf %227, %226 : vector<2x128xf32>
    %229 = arith.divf %227, %228 : vector<2x128xf32>
    %230 = vector.extract_strided_slice %217 {offsets = [0, 256], sizes = [2, 128], strides = [1, 1]} : vector<2x512xf32> to vector<2x128xf32>
    %231 = math.tanh %230 : vector<2x128xf32>
    %232 = vector.extract_strided_slice %217 {offsets = [0, 384], sizes = [2, 128], strides = [1, 1]} : vector<2x512xf32> to vector<2x128xf32>
    %233 = arith.negf %232 : vector<2x128xf32>
    %234 = math.exp %233 : vector<2x128xf32>
    %cst_78 = arith.constant 1.000000e+00 : f32
    %235 = vector.broadcast %cst_78 : f32 to vector<2x128xf32>
    %236 = arith.addf %235, %234 : vector<2x128xf32>
    %237 = arith.divf %235, %236 : vector<2x128xf32>
    %238 = arith.mulf %229, %178 : vector<2x128xf32>
    %239 = arith.mulf %223, %231 : vector<2x128xf32>
    %240 = arith.addf %238, %239 : vector<2x128xf32>
    %241 = math.tanh %240 : vector<2x128xf32>
    %242 = arith.mulf %237, %241 : vector<2x128xf32>
    %243 = vector.extract_strided_slice %242 {offsets = [0, 0], sizes = [1, 128], strides = [1, 1]} : vector<2x128xf32> to vector<1x128xf32>
    %c1_79 = arith.constant 1 : index
    %c0_80 = arith.constant 0 : index
    %244 = vector.load %arg12[%c1_79, %c0_80] : memref<16x128xf32, #tpu.memory_space<vmem>>, vector<1x128xf32>
    tpu.vector_store %arg12[%c1_79, %c0_80], %243 {strides = array<i32>} : memref<16x128xf32, #tpu.memory_space<vmem>>, vector<1x128xf32>,
    %245 = vector.extract_strided_slice %242 {offsets = [1, 0], sizes = [1, 128], strides = [1, 1]} : vector<2x128xf32> to vector<1x128xf32>
    %c9 = arith.constant 9 : index
    %c0_81 = arith.constant 0 : index
    %246 = vector.load %arg12[%c9, %c0_81] : memref<16x128xf32, #tpu.memory_space<vmem>>, vector<1x128xf32>
    tpu.vector_store %arg12[%c9, %c0_81], %245 {strides = array<i32>} : memref<16x128xf32, #tpu.memory_space<vmem>>, vector<1x128xf32>,
    %c4_82 = arith.constant 4 : index
    %c0_83 = arith.constant 0 : index
    %247 = vector.load %arg11[%c4_82, %c0_83] : memref<16x512xf32, #tpu.memory_space<vmem>>, vector<2x512xf32>
    %cst_84 = arith.constant dense<0.000000e+00> : vector<2x512xf32>
    %248 = tpu.matmul %212, %107, %cst_84 {dimension_numbers = #tpu.dot_dimension_numbers<[1], [0], [0], [1], [0, 0, 1, 1], [], []>} : vector<2x128xf32>, vector<128x512xf32>, vector<2x512xf32> -> vector<2x512xf32>
    %249 = arith.addf %247, %248 : vector<2x512xf32>
    %250 = vector.extract_strided_slice %249 {offsets = [0, 0], sizes = [2, 128], strides = [1, 1]} : vector<2x512xf32> to vector<2x128xf32>
    %251 = arith.negf %250 : vector<2x128xf32>
    %252 = math.exp %251 : vector<2x128xf32>
    %cst_85 = arith.constant 1.000000e+00 : f32
    %253 = vector.broadcast %cst_85 : f32 to vector<2x128xf32>
    %254 = arith.addf %253, %252 : vector<2x128xf32>
    %255 = arith.divf %253, %254 : vector<2x128xf32>
    %256 = vector.extract_strided_slice %249 {offsets = [0, 128], sizes = [2, 128], strides = [1, 1]} : vector<2x512xf32> to vector<2x128xf32>
    %257 = arith.negf %256 : vector<2x128xf32>
    %258 = math.exp %257 : vector<2x128xf32>
    %cst_86 = arith.constant 1.000000e+00 : f32
    %259 = vector.broadcast %cst_86 : f32 to vector<2x128xf32>
    %260 = arith.addf %259, %258 : vector<2x128xf32>
    %261 = arith.divf %259, %260 : vector<2x128xf32>
    %262 = vector.extract_strided_slice %249 {offsets = [0, 256], sizes = [2, 128], strides = [1, 1]} : vector<2x512xf32> to vector<2x128xf32>
    %263 = math.tanh %262 : vector<2x128xf32>
    %264 = vector.extract_strided_slice %249 {offsets = [0, 384], sizes = [2, 128], strides = [1, 1]} : vector<2x512xf32> to vector<2x128xf32>
    %265 = arith.negf %264 : vector<2x128xf32>
    %266 = math.exp %265 : vector<2x128xf32>
    %cst_87 = arith.constant 1.000000e+00 : f32
    %267 = vector.broadcast %cst_87 : f32 to vector<2x128xf32>
    %268 = arith.addf %267, %266 : vector<2x128xf32>
    %269 = arith.divf %267, %268 : vector<2x128xf32>
    %270 = arith.mulf %261, %210 : vector<2x128xf32>
    %271 = arith.mulf %255, %263 : vector<2x128xf32>
    %272 = arith.addf %270, %271 : vector<2x128xf32>
    %273 = math.tanh %272 : vector<2x128xf32>
    %274 = arith.mulf %269, %273 : vector<2x128xf32>
    %cst_88 = arith.constant dense<0.000000e+00> : vector<2x512xf32>
    %275 = tpu.matmul %274, %115, %cst_88 {dimension_numbers = #tpu.dot_dimension_numbers<[1], [0], [0], [1], [0, 0, 1, 1], [], []>} : vector<2x128xf32>, vector<128x512xf32>, vector<2x512xf32> -> vector<2x512xf32>
    %276 = vector.broadcast %116 : vector<1x512xf32> to vector<2x512xf32>
    %277 = arith.addf %275, %276 : vector<2x512xf32>
    %cst_89 = arith.constant dense<0.000000e+00> : vector<2x512xf32>
    %278 = tpu.matmul %242, %114, %cst_89 {dimension_numbers = #tpu.dot_dimension_numbers<[1], [0], [0], [1], [0, 0, 1, 1], [], []>} : vector<2x128xf32>, vector<128x512xf32>, vector<2x512xf32> -> vector<2x512xf32>
    %279 = arith.addf %277, %278 : vector<2x512xf32>
    %280 = vector.extract_strided_slice %279 {offsets = [0, 0], sizes = [2, 128], strides = [1, 1]} : vector<2x512xf32> to vector<2x128xf32>
    %281 = arith.negf %280 : vector<2x128xf32>
    %282 = math.exp %281 : vector<2x128xf32>
    %cst_90 = arith.constant 1.000000e+00 : f32
    %283 = vector.broadcast %cst_90 : f32 to vector<2x128xf32>
    %284 = arith.addf %283, %282 : vector<2x128xf32>
    %285 = arith.divf %283, %284 : vector<2x128xf32>
    %286 = vector.extract_strided_slice %279 {offsets = [0, 128], sizes = [2, 128], strides = [1, 1]} : vector<2x512xf32> to vector<2x128xf32>
    %287 = arith.negf %286 : vector<2x128xf32>
    %288 = math.exp %287 : vector<2x128xf32>
    %cst_91 = arith.constant 1.000000e+00 : f32
    %289 = vector.broadcast %cst_91 : f32 to vector<2x128xf32>
    %290 = arith.addf %289, %288 : vector<2x128xf32>
    %291 = arith.divf %289, %290 : vector<2x128xf32>
    %292 = vector.extract_strided_slice %279 {offsets = [0, 256], sizes = [2, 128], strides = [1, 1]} : vector<2x512xf32> to vector<2x128xf32>
    %293 = math.tanh %292 : vector<2x128xf32>
    %294 = vector.extract_strided_slice %279 {offsets = [0, 384], sizes = [2, 128], strides = [1, 1]} : vector<2x512xf32> to vector<2x128xf32>
    %295 = arith.negf %294 : vector<2x128xf32>
    %296 = math.exp %295 : vector<2x128xf32>
    %cst_92 = arith.constant 1.000000e+00 : f32
    %297 = vector.broadcast %cst_92 : f32 to vector<2x128xf32>
    %298 = arith.addf %297, %296 : vector<2x128xf32>
    %299 = arith.divf %297, %298 : vector<2x128xf32>
    %300 = arith.mulf %291, %240 : vector<2x128xf32>
    %301 = arith.mulf %285, %293 : vector<2x128xf32>
    %302 = arith.addf %300, %301 : vector<2x128xf32>
    %303 = math.tanh %302 : vector<2x128xf32>
    %304 = arith.mulf %299, %303 : vector<2x128xf32>
    %305 = vector.extract_strided_slice %304 {offsets = [0, 0], sizes = [1, 128], strides = [1, 1]} : vector<2x128xf32> to vector<1x128xf32>
    %c2_93 = arith.constant 2 : index
    %c0_94 = arith.constant 0 : index
    %306 = vector.load %arg12[%c2_93, %c0_94] : memref<16x128xf32, #tpu.memory_space<vmem>>, vector<1x128xf32>
    tpu.vector_store %arg12[%c2_93, %c0_94], %305 {strides = array<i32>} : memref<16x128xf32, #tpu.memory_space<vmem>>, vector<1x128xf32>,
    %307 = vector.extract_strided_slice %304 {offsets = [1, 0], sizes = [1, 128], strides = [1, 1]} : vector<2x128xf32> to vector<1x128xf32>
    %c10 = arith.constant 10 : index
    %c0_95 = arith.constant 0 : index
    %308 = vector.load %arg12[%c10, %c0_95] : memref<16x128xf32, #tpu.memory_space<vmem>>, vector<1x128xf32>
    tpu.vector_store %arg12[%c10, %c0_95], %307 {strides = array<i32>} : memref<16x128xf32, #tpu.memory_space<vmem>>, vector<1x128xf32>,
    %c6_96 = arith.constant 6 : index
    %c0_97 = arith.constant 0 : index
    %309 = vector.load %arg11[%c6_96, %c0_97] : memref<16x512xf32, #tpu.memory_space<vmem>>, vector<2x512xf32>
    %cst_98 = arith.constant dense<0.000000e+00> : vector<2x512xf32>
    %310 = tpu.matmul %274, %107, %cst_98 {dimension_numbers = #tpu.dot_dimension_numbers<[1], [0], [0], [1], [0, 0, 1, 1], [], []>} : vector<2x128xf32>, vector<128x512xf32>, vector<2x512xf32> -> vector<2x512xf32>
    %311 = arith.addf %309, %310 : vector<2x512xf32>
    %312 = vector.extract_strided_slice %311 {offsets = [0, 0], sizes = [2, 128], strides = [1, 1]} : vector<2x512xf32> to vector<2x128xf32>
    %313 = arith.negf %312 : vector<2x128xf32>
    %314 = math.exp %313 : vector<2x128xf32>
    %cst_99 = arith.constant 1.000000e+00 : f32
    %315 = vector.broadcast %cst_99 : f32 to vector<2x128xf32>
    %316 = arith.addf %315, %314 : vector<2x128xf32>
    %317 = arith.divf %315, %316 : vector<2x128xf32>
    %318 = vector.extract_strided_slice %311 {offsets = [0, 128], sizes = [2, 128], strides = [1, 1]} : vector<2x512xf32> to vector<2x128xf32>
    %319 = arith.negf %318 : vector<2x128xf32>
    %320 = math.exp %319 : vector<2x128xf32>
    %cst_100 = arith.constant 1.000000e+00 : f32
    %321 = vector.broadcast %cst_100 : f32 to vector<2x128xf32>
    %322 = arith.addf %321, %320 : vector<2x128xf32>
    %323 = arith.divf %321, %322 : vector<2x128xf32>
    %324 = vector.extract_strided_slice %311 {offsets = [0, 256], sizes = [2, 128], strides = [1, 1]} : vector<2x512xf32> to vector<2x128xf32>
    %325 = math.tanh %324 : vector<2x128xf32>
    %326 = vector.extract_strided_slice %311 {offsets = [0, 384], sizes = [2, 128], strides = [1, 1]} : vector<2x512xf32> to vector<2x128xf32>
    %327 = arith.negf %326 : vector<2x128xf32>
    %328 = math.exp %327 : vector<2x128xf32>
    %cst_101 = arith.constant 1.000000e+00 : f32
    %329 = vector.broadcast %cst_101 : f32 to vector<2x128xf32>
    %330 = arith.addf %329, %328 : vector<2x128xf32>
    %331 = arith.divf %329, %330 : vector<2x128xf32>
    %332 = arith.mulf %323, %272 : vector<2x128xf32>
    %333 = arith.mulf %317, %325 : vector<2x128xf32>
    %334 = arith.addf %332, %333 : vector<2x128xf32>
    %335 = math.tanh %334 : vector<2x128xf32>
    %336 = arith.mulf %331, %335 : vector<2x128xf32>
    %cst_102 = arith.constant dense<0.000000e+00> : vector<2x512xf32>
    %337 = tpu.matmul %336, %115, %cst_102 {dimension_numbers = #tpu.dot_dimension_numbers<[1], [0], [0], [1], [0, 0, 1, 1], [], []>} : vector<2x128xf32>, vector<128x512xf32>, vector<2x512xf32> -> vector<2x512xf32>
    %338 = vector.broadcast %116 : vector<1x512xf32> to vector<2x512xf32>
    %339 = arith.addf %337, %338 : vector<2x512xf32>
    %cst_103 = arith.constant dense<0.000000e+00> : vector<2x512xf32>
    %340 = tpu.matmul %304, %114, %cst_103 {dimension_numbers = #tpu.dot_dimension_numbers<[1], [0], [0], [1], [0, 0, 1, 1], [], []>} : vector<2x128xf32>, vector<128x512xf32>, vector<2x512xf32> -> vector<2x512xf32>
    %341 = arith.addf %339, %340 : vector<2x512xf32>
    %342 = vector.extract_strided_slice %341 {offsets = [0, 0], sizes = [2, 128], strides = [1, 1]} : vector<2x512xf32> to vector<2x128xf32>
    %343 = arith.negf %342 : vector<2x128xf32>
    %344 = math.exp %343 : vector<2x128xf32>
    %cst_104 = arith.constant 1.000000e+00 : f32
    %345 = vector.broadcast %cst_104 : f32 to vector<2x128xf32>
    %346 = arith.addf %345, %344 : vector<2x128xf32>
    %347 = arith.divf %345, %346 : vector<2x128xf32>
    %348 = vector.extract_strided_slice %341 {offsets = [0, 128], sizes = [2, 128], strides = [1, 1]} : vector<2x512xf32> to vector<2x128xf32>
    %349 = arith.negf %348 : vector<2x128xf32>
    %350 = math.exp %349 : vector<2x128xf32>
    %cst_105 = arith.constant 1.000000e+00 : f32
    %351 = vector.broadcast %cst_105 : f32 to vector<2x128xf32>
    %352 = arith.addf %351, %350 : vector<2x128xf32>
    %353 = arith.divf %351, %352 : vector<2x128xf32>
    %354 = vector.extract_strided_slice %341 {offsets = [0, 256], sizes = [2, 128], strides = [1, 1]} : vector<2x512xf32> to vector<2x128xf32>
    %355 = math.tanh %354 : vector<2x128xf32>
    %356 = vector.extract_strided_slice %341 {offsets = [0, 384], sizes = [2, 128], strides = [1, 1]} : vector<2x512xf32> to vector<2x128xf32>
    %357 = arith.negf %356 : vector<2x128xf32>
    %358 = math.exp %357 : vector<2x128xf32>
    %cst_106 = arith.constant 1.000000e+00 : f32
    %359 = vector.broadcast %cst_106 : f32 to vector<2x128xf32>
    %360 = arith.addf %359, %358 : vector<2x128xf32>
    %361 = arith.divf %359, %360 : vector<2x128xf32>
    %362 = arith.mulf %353, %302 : vector<2x128xf32>
    %363 = arith.mulf %347, %355 : vector<2x128xf32>
    %364 = arith.addf %362, %363 : vector<2x128xf32>
    %365 = math.tanh %364 : vector<2x128xf32>
    %366 = arith.mulf %361, %365 : vector<2x128xf32>
    %367 = vector.extract_strided_slice %366 {offsets = [0, 0], sizes = [1, 128], strides = [1, 1]} : vector<2x128xf32> to vector<1x128xf32>
    %c3_107 = arith.constant 3 : index
    %c0_108 = arith.constant 0 : index
    %368 = vector.load %arg12[%c3_107, %c0_108] : memref<16x128xf32, #tpu.memory_space<vmem>>, vector<1x128xf32>
    tpu.vector_store %arg12[%c3_107, %c0_108], %367 {strides = array<i32>} : memref<16x128xf32, #tpu.memory_space<vmem>>, vector<1x128xf32>,
    %369 = vector.extract_strided_slice %366 {offsets = [1, 0], sizes = [1, 128], strides = [1, 1]} : vector<2x128xf32> to vector<1x128xf32>
    %c11 = arith.constant 11 : index
    %c0_109 = arith.constant 0 : index
    %370 = vector.load %arg12[%c11, %c0_109] : memref<16x128xf32, #tpu.memory_space<vmem>>, vector<1x128xf32>
    tpu.vector_store %arg12[%c11, %c0_109], %369 {strides = array<i32>} : memref<16x128xf32, #tpu.memory_space<vmem>>, vector<1x128xf32>,
    %c8_110 = arith.constant 8 : index
    %c0_111 = arith.constant 0 : index
    %371 = vector.load %arg11[%c8_110, %c0_111] : memref<16x512xf32, #tpu.memory_space<vmem>>, vector<2x512xf32>
    %cst_112 = arith.constant dense<0.000000e+00> : vector<2x512xf32>
    %372 = tpu.matmul %336, %107, %cst_112 {dimension_numbers = #tpu.dot_dimension_numbers<[1], [0], [0], [1], [0, 0, 1, 1], [], []>} : vector<2x128xf32>, vector<128x512xf32>, vector<2x512xf32> -> vector<2x512xf32>
    %373 = arith.addf %371, %372 : vector<2x512xf32>
    %374 = vector.extract_strided_slice %373 {offsets = [0, 0], sizes = [2, 128], strides = [1, 1]} : vector<2x512xf32> to vector<2x128xf32>
    %375 = arith.negf %374 : vector<2x128xf32>
    %376 = math.exp %375 : vector<2x128xf32>
    %cst_113 = arith.constant 1.000000e+00 : f32
    %377 = vector.broadcast %cst_113 : f32 to vector<2x128xf32>
    %378 = arith.addf %377, %376 : vector<2x128xf32>
    %379 = arith.divf %377, %378 : vector<2x128xf32>
    %380 = vector.extract_strided_slice %373 {offsets = [0, 128], sizes = [2, 128], strides = [1, 1]} : vector<2x512xf32> to vector<2x128xf32>
    %381 = arith.negf %380 : vector<2x128xf32>
    %382 = math.exp %381 : vector<2x128xf32>
    %cst_114 = arith.constant 1.000000e+00 : f32
    %383 = vector.broadcast %cst_114 : f32 to vector<2x128xf32>
    %384 = arith.addf %383, %382 : vector<2x128xf32>
    %385 = arith.divf %383, %384 : vector<2x128xf32>
    %386 = vector.extract_strided_slice %373 {offsets = [0, 256], sizes = [2, 128], strides = [1, 1]} : vector<2x512xf32> to vector<2x128xf32>
    %387 = math.tanh %386 : vector<2x128xf32>
    %388 = vector.extract_strided_slice %373 {offsets = [0, 384], sizes = [2, 128], strides = [1, 1]} : vector<2x512xf32> to vector<2x128xf32>
    %389 = arith.negf %388 : vector<2x128xf32>
    %390 = math.exp %389 : vector<2x128xf32>
    %cst_115 = arith.constant 1.000000e+00 : f32
    %391 = vector.broadcast %cst_115 : f32 to vector<2x128xf32>
    %392 = arith.addf %391, %390 : vector<2x128xf32>
    %393 = arith.divf %391, %392 : vector<2x128xf32>
    %394 = arith.mulf %385, %334 : vector<2x128xf32>
    %395 = arith.mulf %379, %387 : vector<2x128xf32>
    %396 = arith.addf %394, %395 : vector<2x128xf32>
    %397 = math.tanh %396 : vector<2x128xf32>
    %398 = arith.mulf %393, %397 : vector<2x128xf32>
    %cst_116 = arith.constant dense<0.000000e+00> : vector<2x512xf32>
    %399 = tpu.matmul %398, %115, %cst_116 {dimension_numbers = #tpu.dot_dimension_numbers<[1], [0], [0], [1], [0, 0, 1, 1], [], []>} : vector<2x128xf32>, vector<128x512xf32>, vector<2x512xf32> -> vector<2x512xf32>
    %400 = vector.broadcast %116 : vector<1x512xf32> to vector<2x512xf32>
    %401 = arith.addf %399, %400 : vector<2x512xf32>
    %cst_117 = arith.constant dense<0.000000e+00> : vector<2x512xf32>
    %402 = tpu.matmul %366, %114, %cst_117 {dimension_numbers = #tpu.dot_dimension_numbers<[1], [0], [0], [1], [0, 0, 1, 1], [], []>} : vector<2x128xf32>, vector<128x512xf32>, vector<2x512xf32> -> vector<2x512xf32>
    %403 = arith.addf %401, %402 : vector<2x512xf32>
    %404 = vector.extract_strided_slice %403 {offsets = [0, 0], sizes = [2, 128], strides = [1, 1]} : vector<2x512xf32> to vector<2x128xf32>
    %405 = arith.negf %404 : vector<2x128xf32>
    %406 = math.exp %405 : vector<2x128xf32>
    %cst_118 = arith.constant 1.000000e+00 : f32
    %407 = vector.broadcast %cst_118 : f32 to vector<2x128xf32>
    %408 = arith.addf %407, %406 : vector<2x128xf32>
    %409 = arith.divf %407, %408 : vector<2x128xf32>
    %410 = vector.extract_strided_slice %403 {offsets = [0, 128], sizes = [2, 128], strides = [1, 1]} : vector<2x512xf32> to vector<2x128xf32>
    %411 = arith.negf %410 : vector<2x128xf32>
    %412 = math.exp %411 : vector<2x128xf32>
    %cst_119 = arith.constant 1.000000e+00 : f32
    %413 = vector.broadcast %cst_119 : f32 to vector<2x128xf32>
    %414 = arith.addf %413, %412 : vector<2x128xf32>
    %415 = arith.divf %413, %414 : vector<2x128xf32>
    %416 = vector.extract_strided_slice %403 {offsets = [0, 256], sizes = [2, 128], strides = [1, 1]} : vector<2x512xf32> to vector<2x128xf32>
    %417 = math.tanh %416 : vector<2x128xf32>
    %418 = vector.extract_strided_slice %403 {offsets = [0, 384], sizes = [2, 128], strides = [1, 1]} : vector<2x512xf32> to vector<2x128xf32>
    %419 = arith.negf %418 : vector<2x128xf32>
    %420 = math.exp %419 : vector<2x128xf32>
    %cst_120 = arith.constant 1.000000e+00 : f32
    %421 = vector.broadcast %cst_120 : f32 to vector<2x128xf32>
    %422 = arith.addf %421, %420 : vector<2x128xf32>
    %423 = arith.divf %421, %422 : vector<2x128xf32>
    %424 = arith.mulf %415, %364 : vector<2x128xf32>
    %425 = arith.mulf %409, %417 : vector<2x128xf32>
    %426 = arith.addf %424, %425 : vector<2x128xf32>
    %427 = math.tanh %426 : vector<2x128xf32>
    %428 = arith.mulf %423, %427 : vector<2x128xf32>
    %429 = vector.extract_strided_slice %428 {offsets = [0, 0], sizes = [1, 128], strides = [1, 1]} : vector<2x128xf32> to vector<1x128xf32>
    %c4_121 = arith.constant 4 : index
    %c0_122 = arith.constant 0 : index
    %430 = vector.load %arg12[%c4_121, %c0_122] : memref<16x128xf32, #tpu.memory_space<vmem>>, vector<1x128xf32>
    tpu.vector_store %arg12[%c4_121, %c0_122], %429 {strides = array<i32>} : memref<16x128xf32, #tpu.memory_space<vmem>>, vector<1x128xf32>,
    %431 = vector.extract_strided_slice %428 {offsets = [1, 0], sizes = [1, 128], strides = [1, 1]} : vector<2x128xf32> to vector<1x128xf32>
    %c12 = arith.constant 12 : index
    %c0_123 = arith.constant 0 : index
    %432 = vector.load %arg12[%c12, %c0_123] : memref<16x128xf32, #tpu.memory_space<vmem>>, vector<1x128xf32>
    tpu.vector_store %arg12[%c12, %c0_123], %431 {strides = array<i32>} : memref<16x128xf32, #tpu.memory_space<vmem>>, vector<1x128xf32>,
    %c10_124 = arith.constant 10 : index
    %c0_125 = arith.constant 0 : index
    %433 = vector.load %arg11[%c10_124, %c0_125] : memref<16x512xf32, #tpu.memory_space<vmem>>, vector<2x512xf32>
    %cst_126 = arith.constant dense<0.000000e+00> : vector<2x512xf32>
    %434 = tpu.matmul %398, %107, %cst_126 {dimension_numbers = #tpu.dot_dimension_numbers<[1], [0], [0], [1], [0, 0, 1, 1], [], []>} : vector<2x128xf32>, vector<128x512xf32>, vector<2x512xf32> -> vector<2x512xf32>
    %435 = arith.addf %433, %434 : vector<2x512xf32>
    %436 = vector.extract_strided_slice %435 {offsets = [0, 0], sizes = [2, 128], strides = [1, 1]} : vector<2x512xf32> to vector<2x128xf32>
    %437 = arith.negf %436 : vector<2x128xf32>
    %438 = math.exp %437 : vector<2x128xf32>
    %cst_127 = arith.constant 1.000000e+00 : f32
    %439 = vector.broadcast %cst_127 : f32 to vector<2x128xf32>
    %440 = arith.addf %439, %438 : vector<2x128xf32>
    %441 = arith.divf %439, %440 : vector<2x128xf32>
    %442 = vector.extract_strided_slice %435 {offsets = [0, 128], sizes = [2, 128], strides = [1, 1]} : vector<2x512xf32> to vector<2x128xf32>
    %443 = arith.negf %442 : vector<2x128xf32>
    %444 = math.exp %443 : vector<2x128xf32>
    %cst_128 = arith.constant 1.000000e+00 : f32
    %445 = vector.broadcast %cst_128 : f32 to vector<2x128xf32>
    %446 = arith.addf %445, %444 : vector<2x128xf32>
    %447 = arith.divf %445, %446 : vector<2x128xf32>
    %448 = vector.extract_strided_slice %435 {offsets = [0, 256], sizes = [2, 128], strides = [1, 1]} : vector<2x512xf32> to vector<2x128xf32>
    %449 = math.tanh %448 : vector<2x128xf32>
    %450 = vector.extract_strided_slice %435 {offsets = [0, 384], sizes = [2, 128], strides = [1, 1]} : vector<2x512xf32> to vector<2x128xf32>
    %451 = arith.negf %450 : vector<2x128xf32>
    %452 = math.exp %451 : vector<2x128xf32>
    %cst_129 = arith.constant 1.000000e+00 : f32
    %453 = vector.broadcast %cst_129 : f32 to vector<2x128xf32>
    %454 = arith.addf %453, %452 : vector<2x128xf32>
    %455 = arith.divf %453, %454 : vector<2x128xf32>
    %456 = arith.mulf %447, %396 : vector<2x128xf32>
    %457 = arith.mulf %441, %449 : vector<2x128xf32>
    %458 = arith.addf %456, %457 : vector<2x128xf32>
    %459 = math.tanh %458 : vector<2x128xf32>
    %460 = arith.mulf %455, %459 : vector<2x128xf32>
    %cst_130 = arith.constant dense<0.000000e+00> : vector<2x512xf32>
    %461 = tpu.matmul %460, %115, %cst_130 {dimension_numbers = #tpu.dot_dimension_numbers<[1], [0], [0], [1], [0, 0, 1, 1], [], []>} : vector<2x128xf32>, vector<128x512xf32>, vector<2x512xf32> -> vector<2x512xf32>
    %462 = vector.broadcast %116 : vector<1x512xf32> to vector<2x512xf32>
    %463 = arith.addf %461, %462 : vector<2x512xf32>
    %cst_131 = arith.constant dense<0.000000e+00> : vector<2x512xf32>
    %464 = tpu.matmul %428, %114, %cst_131 {dimension_numbers = #tpu.dot_dimension_numbers<[1], [0], [0], [1], [0, 0, 1, 1], [], []>} : vector<2x128xf32>, vector<128x512xf32>, vector<2x512xf32> -> vector<2x512xf32>
    %465 = arith.addf %463, %464 : vector<2x512xf32>
    %466 = vector.extract_strided_slice %465 {offsets = [0, 0], sizes = [2, 128], strides = [1, 1]} : vector<2x512xf32> to vector<2x128xf32>
    %467 = arith.negf %466 : vector<2x128xf32>
    %468 = math.exp %467 : vector<2x128xf32>
    %cst_132 = arith.constant 1.000000e+00 : f32
    %469 = vector.broadcast %cst_132 : f32 to vector<2x128xf32>
    %470 = arith.addf %469, %468 : vector<2x128xf32>
    %471 = arith.divf %469, %470 : vector<2x128xf32>
    %472 = vector.extract_strided_slice %465 {offsets = [0, 128], sizes = [2, 128], strides = [1, 1]} : vector<2x512xf32> to vector<2x128xf32>
    %473 = arith.negf %472 : vector<2x128xf32>
    %474 = math.exp %473 : vector<2x128xf32>
    %cst_133 = arith.constant 1.000000e+00 : f32
    %475 = vector.broadcast %cst_133 : f32 to vector<2x128xf32>
    %476 = arith.addf %475, %474 : vector<2x128xf32>
    %477 = arith.divf %475, %476 : vector<2x128xf32>
    %478 = vector.extract_strided_slice %465 {offsets = [0, 256], sizes = [2, 128], strides = [1, 1]} : vector<2x512xf32> to vector<2x128xf32>
    %479 = math.tanh %478 : vector<2x128xf32>
    %480 = vector.extract_strided_slice %465 {offsets = [0, 384], sizes = [2, 128], strides = [1, 1]} : vector<2x512xf32> to vector<2x128xf32>
    %481 = arith.negf %480 : vector<2x128xf32>
    %482 = math.exp %481 : vector<2x128xf32>
    %cst_134 = arith.constant 1.000000e+00 : f32
    %483 = vector.broadcast %cst_134 : f32 to vector<2x128xf32>
    %484 = arith.addf %483, %482 : vector<2x128xf32>
    %485 = arith.divf %483, %484 : vector<2x128xf32>
    %486 = arith.mulf %477, %426 : vector<2x128xf32>
    %487 = arith.mulf %471, %479 : vector<2x128xf32>
    %488 = arith.addf %486, %487 : vector<2x128xf32>
    %489 = math.tanh %488 : vector<2x128xf32>
    %490 = arith.mulf %485, %489 : vector<2x128xf32>
    %491 = vector.extract_strided_slice %490 {offsets = [0, 0], sizes = [1, 128], strides = [1, 1]} : vector<2x128xf32> to vector<1x128xf32>
    %c5_135 = arith.constant 5 : index
    %c0_136 = arith.constant 0 : index
    %492 = vector.load %arg12[%c5_135, %c0_136] : memref<16x128xf32, #tpu.memory_space<vmem>>, vector<1x128xf32>
    tpu.vector_store %arg12[%c5_135, %c0_136], %491 {strides = array<i32>} : memref<16x128xf32, #tpu.memory_space<vmem>>, vector<1x128xf32>,
    %493 = vector.extract_strided_slice %490 {offsets = [1, 0], sizes = [1, 128], strides = [1, 1]} : vector<2x128xf32> to vector<1x128xf32>
    %c13 = arith.constant 13 : index
    %c0_137 = arith.constant 0 : index
    %494 = vector.load %arg12[%c13, %c0_137] : memref<16x128xf32, #tpu.memory_space<vmem>>, vector<1x128xf32>
    tpu.vector_store %arg12[%c13, %c0_137], %493 {strides = array<i32>} : memref<16x128xf32, #tpu.memory_space<vmem>>, vector<1x128xf32>,
    %c12_138 = arith.constant 12 : index
    %c0_139 = arith.constant 0 : index
    %495 = vector.load %arg11[%c12_138, %c0_139] : memref<16x512xf32, #tpu.memory_space<vmem>>, vector<2x512xf32>
    %cst_140 = arith.constant dense<0.000000e+00> : vector<2x512xf32>
    %496 = tpu.matmul %460, %107, %cst_140 {dimension_numbers = #tpu.dot_dimension_numbers<[1], [0], [0], [1], [0, 0, 1, 1], [], []>} : vector<2x128xf32>, vector<128x512xf32>, vector<2x512xf32> -> vector<2x512xf32>
    %497 = arith.addf %495, %496 : vector<2x512xf32>
    %498 = vector.extract_strided_slice %497 {offsets = [0, 0], sizes = [2, 128], strides = [1, 1]} : vector<2x512xf32> to vector<2x128xf32>
    %499 = arith.negf %498 : vector<2x128xf32>
    %500 = math.exp %499 : vector<2x128xf32>
    %cst_141 = arith.constant 1.000000e+00 : f32
    %501 = vector.broadcast %cst_141 : f32 to vector<2x128xf32>
    %502 = arith.addf %501, %500 : vector<2x128xf32>
    %503 = arith.divf %501, %502 : vector<2x128xf32>
    %504 = vector.extract_strided_slice %497 {offsets = [0, 128], sizes = [2, 128], strides = [1, 1]} : vector<2x512xf32> to vector<2x128xf32>
    %505 = arith.negf %504 : vector<2x128xf32>
    %506 = math.exp %505 : vector<2x128xf32>
    %cst_142 = arith.constant 1.000000e+00 : f32
    %507 = vector.broadcast %cst_142 : f32 to vector<2x128xf32>
    %508 = arith.addf %507, %506 : vector<2x128xf32>
    %509 = arith.divf %507, %508 : vector<2x128xf32>
    %510 = vector.extract_strided_slice %497 {offsets = [0, 256], sizes = [2, 128], strides = [1, 1]} : vector<2x512xf32> to vector<2x128xf32>
    %511 = math.tanh %510 : vector<2x128xf32>
    %512 = vector.extract_strided_slice %497 {offsets = [0, 384], sizes = [2, 128], strides = [1, 1]} : vector<2x512xf32> to vector<2x128xf32>
    %513 = arith.negf %512 : vector<2x128xf32>
    %514 = math.exp %513 : vector<2x128xf32>
    %cst_143 = arith.constant 1.000000e+00 : f32
    %515 = vector.broadcast %cst_143 : f32 to vector<2x128xf32>
    %516 = arith.addf %515, %514 : vector<2x128xf32>
    %517 = arith.divf %515, %516 : vector<2x128xf32>
    %518 = arith.mulf %509, %458 : vector<2x128xf32>
    %519 = arith.mulf %503, %511 : vector<2x128xf32>
    %520 = arith.addf %518, %519 : vector<2x128xf32>
    %521 = math.tanh %520 : vector<2x128xf32>
    %522 = arith.mulf %517, %521 : vector<2x128xf32>
    %cst_144 = arith.constant dense<0.000000e+00> : vector<2x512xf32>
    %523 = tpu.matmul %522, %115, %cst_144 {dimension_numbers = #tpu.dot_dimension_numbers<[1], [0], [0], [1], [0, 0, 1, 1], [], []>} : vector<2x128xf32>, vector<128x512xf32>, vector<2x512xf32> -> vector<2x512xf32>
    %524 = vector.broadcast %116 : vector<1x512xf32> to vector<2x512xf32>
    %525 = arith.addf %523, %524 : vector<2x512xf32>
    %cst_145 = arith.constant dense<0.000000e+00> : vector<2x512xf32>
    %526 = tpu.matmul %490, %114, %cst_145 {dimension_numbers = #tpu.dot_dimension_numbers<[1], [0], [0], [1], [0, 0, 1, 1], [], []>} : vector<2x128xf32>, vector<128x512xf32>, vector<2x512xf32> -> vector<2x512xf32>
    %527 = arith.addf %525, %526 : vector<2x512xf32>
    %528 = vector.extract_strided_slice %527 {offsets = [0, 0], sizes = [2, 128], strides = [1, 1]} : vector<2x512xf32> to vector<2x128xf32>
    %529 = arith.negf %528 : vector<2x128xf32>
    %530 = math.exp %529 : vector<2x128xf32>
    %cst_146 = arith.constant 1.000000e+00 : f32
    %531 = vector.broadcast %cst_146 : f32 to vector<2x128xf32>
    %532 = arith.addf %531, %530 : vector<2x128xf32>
    %533 = arith.divf %531, %532 : vector<2x128xf32>
    %534 = vector.extract_strided_slice %527 {offsets = [0, 128], sizes = [2, 128], strides = [1, 1]} : vector<2x512xf32> to vector<2x128xf32>
    %535 = arith.negf %534 : vector<2x128xf32>
    %536 = math.exp %535 : vector<2x128xf32>
    %cst_147 = arith.constant 1.000000e+00 : f32
    %537 = vector.broadcast %cst_147 : f32 to vector<2x128xf32>
    %538 = arith.addf %537, %536 : vector<2x128xf32>
    %539 = arith.divf %537, %538 : vector<2x128xf32>
    %540 = vector.extract_strided_slice %527 {offsets = [0, 256], sizes = [2, 128], strides = [1, 1]} : vector<2x512xf32> to vector<2x128xf32>
    %541 = math.tanh %540 : vector<2x128xf32>
    %542 = vector.extract_strided_slice %527 {offsets = [0, 384], sizes = [2, 128], strides = [1, 1]} : vector<2x512xf32> to vector<2x128xf32>
    %543 = arith.negf %542 : vector<2x128xf32>
    %544 = math.exp %543 : vector<2x128xf32>
    %cst_148 = arith.constant 1.000000e+00 : f32
    %545 = vector.broadcast %cst_148 : f32 to vector<2x128xf32>
    %546 = arith.addf %545, %544 : vector<2x128xf32>
    %547 = arith.divf %545, %546 : vector<2x128xf32>
    %548 = arith.mulf %539, %488 : vector<2x128xf32>
    %549 = arith.mulf %533, %541 : vector<2x128xf32>
    %550 = arith.addf %548, %549 : vector<2x128xf32>
    %551 = math.tanh %550 : vector<2x128xf32>
    %552 = arith.mulf %547, %551 : vector<2x128xf32>
    %553 = vector.extract_strided_slice %552 {offsets = [0, 0], sizes = [1, 128], strides = [1, 1]} : vector<2x128xf32> to vector<1x128xf32>
    %c6_149 = arith.constant 6 : index
    %c0_150 = arith.constant 0 : index
    %554 = vector.load %arg12[%c6_149, %c0_150] : memref<16x128xf32, #tpu.memory_space<vmem>>, vector<1x128xf32>
    tpu.vector_store %arg12[%c6_149, %c0_150], %553 {strides = array<i32>} : memref<16x128xf32, #tpu.memory_space<vmem>>, vector<1x128xf32>,
    %555 = vector.extract_strided_slice %552 {offsets = [1, 0], sizes = [1, 128], strides = [1, 1]} : vector<2x128xf32> to vector<1x128xf32>
    %c14 = arith.constant 14 : index
    %c0_151 = arith.constant 0 : index
    %556 = vector.load %arg12[%c14, %c0_151] : memref<16x128xf32, #tpu.memory_space<vmem>>, vector<1x128xf32>
    tpu.vector_store %arg12[%c14, %c0_151], %555 {strides = array<i32>} : memref<16x128xf32, #tpu.memory_space<vmem>>, vector<1x128xf32>,
    %c14_152 = arith.constant 14 : index
    %c0_153 = arith.constant 0 : index
    %557 = vector.load %arg11[%c14_152, %c0_153] : memref<16x512xf32, #tpu.memory_space<vmem>>, vector<2x512xf32>
    %cst_154 = arith.constant dense<0.000000e+00> : vector<2x512xf32>
    %558 = tpu.matmul %522, %107, %cst_154 {dimension_numbers = #tpu.dot_dimension_numbers<[1], [0], [0], [1], [0, 0, 1, 1], [], []>} : vector<2x128xf32>, vector<128x512xf32>, vector<2x512xf32> -> vector<2x512xf32>
    %559 = arith.addf %557, %558 : vector<2x512xf32>
    %560 = vector.extract_strided_slice %559 {offsets = [0, 0], sizes = [2, 128], strides = [1, 1]} : vector<2x512xf32> to vector<2x128xf32>
    %561 = arith.negf %560 : vector<2x128xf32>
    %562 = math.exp %561 : vector<2x128xf32>
    %cst_155 = arith.constant 1.000000e+00 : f32
    %563 = vector.broadcast %cst_155 : f32 to vector<2x128xf32>
    %564 = arith.addf %563, %562 : vector<2x128xf32>
    %565 = arith.divf %563, %564 : vector<2x128xf32>
    %566 = vector.extract_strided_slice %559 {offsets = [0, 128], sizes = [2, 128], strides = [1, 1]} : vector<2x512xf32> to vector<2x128xf32>
    %567 = arith.negf %566 : vector<2x128xf32>
    %568 = math.exp %567 : vector<2x128xf32>
    %cst_156 = arith.constant 1.000000e+00 : f32
    %569 = vector.broadcast %cst_156 : f32 to vector<2x128xf32>
    %570 = arith.addf %569, %568 : vector<2x128xf32>
    %571 = arith.divf %569, %570 : vector<2x128xf32>
    %572 = vector.extract_strided_slice %559 {offsets = [0, 256], sizes = [2, 128], strides = [1, 1]} : vector<2x512xf32> to vector<2x128xf32>
    %573 = math.tanh %572 : vector<2x128xf32>
    %574 = vector.extract_strided_slice %559 {offsets = [0, 384], sizes = [2, 128], strides = [1, 1]} : vector<2x512xf32> to vector<2x128xf32>
    %575 = arith.negf %574 : vector<2x128xf32>
    %576 = math.exp %575 : vector<2x128xf32>
    %cst_157 = arith.constant 1.000000e+00 : f32
    %577 = vector.broadcast %cst_157 : f32 to vector<2x128xf32>
    %578 = arith.addf %577, %576 : vector<2x128xf32>
    %579 = arith.divf %577, %578 : vector<2x128xf32>
    %580 = arith.mulf %571, %520 : vector<2x128xf32>
    %581 = arith.mulf %565, %573 : vector<2x128xf32>
    %582 = arith.addf %580, %581 : vector<2x128xf32>
    %583 = math.tanh %582 : vector<2x128xf32>
    %584 = arith.mulf %579, %583 : vector<2x128xf32>
    %cst_158 = arith.constant dense<0.000000e+00> : vector<2x512xf32>
    %585 = tpu.matmul %584, %115, %cst_158 {dimension_numbers = #tpu.dot_dimension_numbers<[1], [0], [0], [1], [0, 0, 1, 1], [], []>} : vector<2x128xf32>, vector<128x512xf32>, vector<2x512xf32> -> vector<2x512xf32>
    %586 = vector.broadcast %116 : vector<1x512xf32> to vector<2x512xf32>
    %587 = arith.addf %585, %586 : vector<2x512xf32>
    %cst_159 = arith.constant dense<0.000000e+00> : vector<2x512xf32>
    %588 = tpu.matmul %552, %114, %cst_159 {dimension_numbers = #tpu.dot_dimension_numbers<[1], [0], [0], [1], [0, 0, 1, 1], [], []>} : vector<2x128xf32>, vector<128x512xf32>, vector<2x512xf32> -> vector<2x512xf32>
    %589 = arith.addf %587, %588 : vector<2x512xf32>
    %590 = vector.extract_strided_slice %589 {offsets = [0, 0], sizes = [2, 128], strides = [1, 1]} : vector<2x512xf32> to vector<2x128xf32>
    %591 = arith.negf %590 : vector<2x128xf32>
    %592 = math.exp %591 : vector<2x128xf32>
    %cst_160 = arith.constant 1.000000e+00 : f32
    %593 = vector.broadcast %cst_160 : f32 to vector<2x128xf32>
    %594 = arith.addf %593, %592 : vector<2x128xf32>
    %595 = arith.divf %593, %594 : vector<2x128xf32>
    %596 = vector.extract_strided_slice %589 {offsets = [0, 128], sizes = [2, 128], strides = [1, 1]} : vector<2x512xf32> to vector<2x128xf32>
    %597 = arith.negf %596 : vector<2x128xf32>
    %598 = math.exp %597 : vector<2x128xf32>
    %cst_161 = arith.constant 1.000000e+00 : f32
    %599 = vector.broadcast %cst_161 : f32 to vector<2x128xf32>
    %600 = arith.addf %599, %598 : vector<2x128xf32>
    %601 = arith.divf %599, %600 : vector<2x128xf32>
    %602 = vector.extract_strided_slice %589 {offsets = [0, 256], sizes = [2, 128], strides = [1, 1]} : vector<2x512xf32> to vector<2x128xf32>
    %603 = math.tanh %602 : vector<2x128xf32>
    %604 = vector.extract_strided_slice %589 {offsets = [0, 384], sizes = [2, 128], strides = [1, 1]} : vector<2x512xf32> to vector<2x128xf32>
    %605 = arith.negf %604 : vector<2x128xf32>
    %606 = math.exp %605 : vector<2x128xf32>
    %cst_162 = arith.constant 1.000000e+00 : f32
    %607 = vector.broadcast %cst_162 : f32 to vector<2x128xf32>
    %608 = arith.addf %607, %606 : vector<2x128xf32>
    %609 = arith.divf %607, %608 : vector<2x128xf32>
    %610 = arith.mulf %601, %550 : vector<2x128xf32>
    %611 = arith.mulf %595, %603 : vector<2x128xf32>
    %612 = arith.addf %610, %611 : vector<2x128xf32>
    %613 = math.tanh %612 : vector<2x128xf32>
    %614 = arith.mulf %609, %613 : vector<2x128xf32>
    %615 = vector.extract_strided_slice %614 {offsets = [0, 0], sizes = [1, 128], strides = [1, 1]} : vector<2x128xf32> to vector<1x128xf32>
    %c7_163 = arith.constant 7 : index
    %c0_164 = arith.constant 0 : index
    %616 = vector.load %arg12[%c7_163, %c0_164] : memref<16x128xf32, #tpu.memory_space<vmem>>, vector<1x128xf32>
    tpu.vector_store %arg12[%c7_163, %c0_164], %615 {strides = array<i32>} : memref<16x128xf32, #tpu.memory_space<vmem>>, vector<1x128xf32>,
    %617 = vector.extract_strided_slice %614 {offsets = [1, 0], sizes = [1, 128], strides = [1, 1]} : vector<2x128xf32> to vector<1x128xf32>
    %c15 = arith.constant 15 : index
    %c0_165 = arith.constant 0 : index
    %618 = vector.load %arg12[%c15, %c0_165] : memref<16x128xf32, #tpu.memory_space<vmem>>, vector<1x128xf32>
    tpu.vector_store %arg12[%c15, %c0_165], %617 {strides = array<i32>} : memref<16x128xf32, #tpu.memory_space<vmem>>, vector<1x128xf32>,
    %619 = vector.extract_strided_slice %584 {offsets = [0, 0], sizes = [2, 32], strides = [1, 1]} : vector<2x128xf32> to vector<2x32xf32>
    %c0_166 = arith.constant 0 : index
    %c0_167 = arith.constant 0 : index
    %c0_168 = arith.constant 0 : index
    %620 = vector.load %arg9[%c0_166, %c0_167, %c0_168] : memref<2x2x32xf32, #tpu.memory_space<vmem>>, vector<1x2x32xf32>
    %621 = vector.shape_cast %620 : vector<1x2x32xf32> to vector<2x32xf32>
    %622 = vector.shape_cast %619 : vector<2x32xf32> to vector<1x2x32xf32>
    tpu.vector_store %arg9[%c0_166, %c0_167, %c0_168], %622 {strides = array<i32>} : memref<2x2x32xf32, #tpu.memory_space<vmem>>, vector<1x2x32xf32>,
    %623 = vector.extract_strided_slice %582 {offsets = [0, 0], sizes = [2, 32], strides = [1, 1]} : vector<2x128xf32> to vector<2x32xf32>
    %c0_169 = arith.constant 0 : index
    %c0_170 = arith.constant 0 : index
    %c0_171 = arith.constant 0 : index
    %624 = vector.load %arg10[%c0_169, %c0_170, %c0_171] : memref<2x2x32xf32, #tpu.memory_space<vmem>>, vector<1x2x32xf32>
    %625 = vector.shape_cast %624 : vector<1x2x32xf32> to vector<2x32xf32>
    %626 = vector.shape_cast %623 : vector<2x32xf32> to vector<1x2x32xf32>
    tpu.vector_store %arg10[%c0_169, %c0_170, %c0_171], %626 {strides = array<i32>} : memref<2x2x32xf32, #tpu.memory_space<vmem>>, vector<1x2x32xf32>,
    %627 = vector.extract_strided_slice %614 {offsets = [0, 0], sizes = [2, 32], strides = [1, 1]} : vector<2x128xf32> to vector<2x32xf32>
    %c1_172 = arith.constant 1 : index
    %c0_173 = arith.constant 0 : index
    %c0_174 = arith.constant 0 : index
    %628 = vector.load %arg9[%c1_172, %c0_173, %c0_174] : memref<2x2x32xf32, #tpu.memory_space<vmem>>, vector<1x2x32xf32>
    %629 = vector.shape_cast %628 : vector<1x2x32xf32> to vector<2x32xf32>
    %630 = vector.shape_cast %627 : vector<2x32xf32> to vector<1x2x32xf32>
    tpu.vector_store %arg9[%c1_172, %c0_173, %c0_174], %630 {strides = array<i32>} : memref<2x2x32xf32, #tpu.memory_space<vmem>>, vector<1x2x32xf32>,
    %631 = vector.extract_strided_slice %612 {offsets = [0, 0], sizes = [2, 32], strides = [1, 1]} : vector<2x128xf32> to vector<2x32xf32>
    %c1_175 = arith.constant 1 : index
    %c0_176 = arith.constant 0 : index
    %c0_177 = arith.constant 0 : index
    %632 = vector.load %arg10[%c1_175, %c0_176, %c0_177] : memref<2x2x32xf32, #tpu.memory_space<vmem>>, vector<1x2x32xf32>
    %633 = vector.shape_cast %632 : vector<1x2x32xf32> to vector<2x32xf32>
    %634 = vector.shape_cast %631 : vector<2x32xf32> to vector<1x2x32xf32>
    tpu.vector_store %arg10[%c1_175, %c0_176, %c0_177], %634 {strides = array<i32>} : memref<2x2x32xf32, #tpu.memory_space<vmem>>, vector<1x2x32xf32>,
    %c0_178 = arith.constant 0 : index
    %c0_179 = arith.constant 0 : index
    %635 = vector.load %arg12[%c0_178, %c0_179] : memref<16x128xf32, #tpu.memory_space<vmem>>, vector<16x128xf32>
    %c0_180 = arith.constant 0 : index
    %c0_181 = arith.constant 0 : index
    %636 = vector.load %arg4[%c0_180, %c0_181] : memref<128x128xf32, #tpu.memory_space<vmem>>, vector<128x128xf32>
    %cst_182 = arith.constant dense<0.000000e+00> : vector<16x128xf32>
    %637 = tpu.matmul %635, %636, %cst_182 {dimension_numbers = #tpu.dot_dimension_numbers<[1], [0], [0], [1], [0, 0, 1, 1], [], []>} : vector<16x128xf32>, vector<128x128xf32>, vector<16x128xf32> -> vector<16x128xf32>
    %c0_183 = arith.constant 0 : index
    %c0_184 = arith.constant 0 : index
    %638 = vector.load %arg5[%c0_183, %c0_184] : memref<1x128xf32, #tpu.memory_space<vmem>>, vector<1x128xf32>
    %639 = vector.broadcast %638 : vector<1x128xf32> to vector<16x128xf32>
    %640 = arith.addf %637, %639 : vector<16x128xf32>
    %c0_185 = arith.constant 0 : index
    %c0_186 = arith.constant 0 : index
    %641 = vector.load %arg8[%c0_185, %c0_186] : memref<16x128xf32, #tpu.memory_space<vmem>>, vector<16x128xf32>
    tpu.vector_store %arg8[%c0_185, %c0_186], %640 {strides = array<i32>} : memref<16x128xf32, #tpu.memory_space<vmem>>, vector<16x128xf32>,
    return
  }
}

</mosaic_0001>

<llo_original>
// kernel: tpu_custom_call.1
$region0: #{tpu_custom_call.1}
  #allocation0 [shape = 'u32[]', space=smem, size = 0x4, offset = 0x4, fixed_abs, tag = 'smem constant byte address 0x4 - core index']
  #allocation1 [shape = 'u32[144,128]{1,0:T(1,128)}', space=vmem, size = 0x12000, scoped, tag = 'internal scratch']
  #allocation2 [shape = 'f32[16,512]{1,0:T(8,128)}', space=vmem, size = 0x8000, scoped, tag = 'scratch operand']
  #allocation3 [shape = 'f32[16,128]{1,0:T(8,128)}', space=vmem, size = 0x2000, scoped, tag = 'scratch operand']
  %s0 = inlined_call_operand.hbm [shape: s32[2,8], index: 0, kind: input, shape index: {}]
  %s1 = inlined_call_operand.hbm [shape: s32[2], index: 1, kind: input, shape index: {}]
  %s2 = inlined_call_operand.hbm [shape: f32[8,16], index: 2, kind: input, shape index: {}]
  %s3 = inlined_call_operand.hbm [shape: f32[514,512], index: 3, kind: input, shape index: {}]
  %s4 = inlined_call_operand.hbm [shape: f32[128,128], index: 4, kind: input, shape index: {}]
  %s5 = inlined_call_operand.hbm [shape: f32[1,128], index: 5, kind: input, shape index: {}]
  %s6 = inlined_call_operand.hbm [shape: f32[2,2,32], index: 6, kind: input, shape index: {}]
  %s7 = inlined_call_operand.hbm [shape: f32[2,2,32], index: 7, kind: input, shape index: {}]
  %s8 = inlined_call_operand.hbm [shape: f32[16,128], index: 8, kind: output, shape index: {0}]
  %s9 = inlined_call_operand.hbm [shape: f32[2,2,32], index: 9, kind: output, shape index: {1}]
  %s10 = inlined_call_operand.hbm [shape: f32[2,2,32], index: 10, kind: output, shape index: {2}]
  %11 = xla_tuple %s8, %s9, %s10
  %s12 = sld [smem:[#allocation0]]
  $region90: #{tpu_custom_call.1} parent=0
    _
  %s14 = ssub.s32 1, %s12
  %s15 = scalar_select 0, %s14, %s12
  $region1: #{tpu_custom_call.1} parent=0
    #allocation4 [shape = 'u8[1024]{0}', space=smem, size = 0x400, scoped, tag = 'input window, operand 0, single buffered']
    #allocation5 [shape = 's32[1]{0}', space=sflag, size = 0x4, scoped, tag = 'scoped memory for tpu_custom_call.1']
    #allocation6 [shape = 's32[1]{0}', space=sflag, size = 0x4, scoped, tag = 'scoped memory for tpu_custom_call.1']
    #allocation7 [shape = 's32[1]{0}', space=sflag, size = 0x4, scoped, tag = 'scoped memory for tpu_custom_call.1']
    #allocation8 [shape = 'u8[512]{0}', space=smem, size = 0x200, scoped, tag = 'input window, operand 1, single buffered']
    #allocation9 [shape = 's32[1]{0}', space=sflag, size = 0x4, scoped, tag = 'scoped memory for tpu_custom_call.1']
    #allocation10 [shape = 'u8[4096]{0}', space=vmem, size = 0x1000, scoped, tag = 'input window, operand 2, single buffered']
    #allocation11 [shape = 'u8[1064960]{0}', space=vmem, size = 0x104000, scoped, tag = 'input window, operand 3, single buffered']
    #allocation12 [shape = 's32[1]{0}', space=sflag, size = 0x4, scoped, tag = 'scoped memory for tpu_custom_call.1']
    #allocation13 [shape = 'u8[65536]{0}', space=vmem, size = 0x10000, scoped, tag = 'input window, operand 4, single buffered']
    #allocation14 [shape = 'u8[512]{0}', space=vmem, size = 0x400, scoped, tag = 'input window, operand 5, single buffered']
    #allocation15 [shape = 's32[1]{0}', space=sflag, size = 0x4, scoped, tag = 'scoped memory for tpu_custom_call.1']
    #allocation16 [shape = 'u8[2048]{0}', space=vmem, size = 0x800, scoped, tag = 'input window, operand 6, single buffered']
    #allocation17 [shape = 'u8[2048]{0}', space=vmem, size = 0x800, scoped, tag = 'input window, operand 7, single buffered']
    #allocation18 [shape = 's32[1]{0}', space=sflag, size = 0x4, scoped, tag = 'scoped memory for tpu_custom_call.1']
    #allocation19 [shape = 'u8[8192]{0}', space=vmem, size = 0x2000, scoped, tag = 'output window, operand 0, single buffered']
    #allocation20 [shape = 'u8[2048]{0}', space=vmem, size = 0x800, scoped, tag = 'output window, operand 1, single buffered']
    #allocation21 [shape = 's32[1]{0}', space=sflag, size = 0x4, scoped, tag = 'scoped memory for tpu_custom_call.1']
    #allocation22 [shape = 'u8[2048]{0}', space=vmem, size = 0x800, scoped, tag = 'output window, operand 2, single buffered']
    %16 = vsyncpa [#allocation7], 0
    %17 = vsyncpa [#allocation9], 0
    %18 = vsyncpa [#allocation5], 0
    %19 = vsyncpa [#allocation12], 0
    %20 = vsyncpa [#allocation15], 0
    %21 = vsyncpa [#allocation18], 0
    %22 = vsyncpa [#allocation6], 0
    %23 = vsyncpa [#allocation21], 0
    // Predicated region
    $region2: #{tpu_custom_call.1} parent=1 // pred_check
      _
    $region3: #{tpu_custom_call.1} parent=1 // pred_check_branch
      %25 = sbr.rel (0) target = $region5
    $region4: #{tpu_custom_call.1} parent=1 // pred_region
      %s27 = ssub.s32 32, 32
      %28 = vsyncadd [#allocation7], %s27
      %31 = dma.hbm_to_smem %s0, 32, [#allocation4], [#allocation7]
    $region5: #{tpu_custom_call.1} parent=1 // pred_fallthru
      _
    // Predicated region
    $region6: #{tpu_custom_call.1} parent=1 // pred_check
      _
    $region7: #{tpu_custom_call.1} parent=1 // pred_check_branch
      %33 = sbr.rel (0) target = $region9
    $region8: #{tpu_custom_call.1} parent=1 // pred_region
      %s35 = ssub.s32 16, 16
      %36 = vsyncadd [#allocation9], %s35
      %39 = dma.hbm_to_smem %s1, 16, [#allocation8], [#allocation9]
    $region9: #{tpu_custom_call.1} parent=1 // pred_fallthru
      _
    // Predicated region
    $region10: #{tpu_custom_call.1} parent=1 // pred_check
      _
    $region11: #{tpu_custom_call.1} parent=1 // pred_check_branch
      %41 = sbr.rel (0) target = $region13
    $region12: #{tpu_custom_call.1} parent=1 // pred_region
      %s43 = ssub.s32 128, 128
      %44 = vsyncadd [#allocation5], %s43
      %s46 = sshll.u32 [#allocation10], 4
      %s47 = int_to_ptr.vmem [resolvable:$true] %s46
      %49 = dma.hbm_to_vmem [thread:$0]  %s2, 128, %s47, [#allocation5]
    $region13: #{tpu_custom_call.1} parent=1 // pred_fallthru
      _
    // Predicated region
    $region14: #{tpu_custom_call.1} parent=1 // pred_check
      _
    $region15: #{tpu_custom_call.1} parent=1 // pred_check_branch
      %51 = sbr.rel (0) target = $region17
    $region16: #{tpu_custom_call.1} parent=1 // pred_region
      %s53 = ssub.s32 33280, 33280
      %54 = vsyncadd [#allocation12], %s53
      %s55 = sshll.u32 [#allocation11], 4
      %s56 = int_to_ptr.vmem [resolvable:$true] %s55
      %61 = dma.hbm_to_vmem [thread:$0]  %s3, 33280, %s56, [#allocation12], 512, 512, 32
    $region17: #{tpu_custom_call.1} parent=1 // pred_fallthru
      _
    // Predicated region
    $region18: #{tpu_custom_call.1} parent=1 // pred_check
      _
    $region19: #{tpu_custom_call.1} parent=1 // pred_check_branch
      %63 = sbr.rel (0) target = $region21
    $region20: #{tpu_custom_call.1} parent=1 // pred_region
      %s65 = ssub.s32 2048, 2048
      %66 = vsyncadd [#allocation12], %s65
      %s67 = sshll.u32 [#allocation13], 4
      %s68 = int_to_ptr.vmem [resolvable:$true] %s67
      %73 = dma.hbm_to_vmem [thread:$0]  %s4, 2048, %s68, [#allocation12], 128, 128, 8
    $region21: #{tpu_custom_call.1} parent=1 // pred_fallthru
      _
    // Predicated region
    $region22: #{tpu_custom_call.1} parent=1 // pred_check
      _
    $region23: #{tpu_custom_call.1} parent=1 // pred_check_branch
      %75 = sbr.rel (0) target = $region25
    $region24: #{tpu_custom_call.1} parent=1 // pred_region
      %s77 = ssub.s32 16, 16
      %78 = vsyncadd [#allocation15], %s77
      %s80 = sshll.u32 [#allocation14], 4
      %s81 = int_to_ptr.vmem [resolvable:$true] %s80
      %83 = dma.hbm_to_vmem [thread:$0]  %s5, 16, %s81, [#allocation15]
    $region25: #{tpu_custom_call.1} parent=1 // pred_fallthru
      _
    // Predicated region
    $region26: #{tpu_custom_call.1} parent=1 // pred_check
      _
    $region27: #{tpu_custom_call.1} parent=1 // pred_check_branch
      %85 = sbr.rel (0) target = $region29
    $region28: #{tpu_custom_call.1} parent=1 // pred_region
      %s87 = ssub.s32 64, 64
      %88 = vsyncadd [#allocation15], %s87
      %s89 = sshll.u32 [#allocation16], 4
      %s90 = int_to_ptr.vmem [resolvable:$true] %s89
      %95 = dma.hbm_to_vmem [thread:$0]  %s6, 64, %s90, [#allocation15], 32, 32, 2
    $region29: #{tpu_custom_call.1} parent=1 // pred_fallthru
      _
    // Predicated region
    $region30: #{tpu_custom_call.1} parent=1 // pred_check
      _
    $region31: #{tpu_custom_call.1} parent=1 // pred_check_branch
      %97 = sbr.rel (0) target = $region33
    $region32: #{tpu_custom_call.1} parent=1 // pred_region
      %s99 = ssub.s32 64, 64
      %100 = vsyncadd [#allocation18], %s99
      %s101 = sshll.u32 [#allocation17], 4
      %s102 = int_to_ptr.vmem [resolvable:$true] %s101
      %107 = dma.hbm_to_vmem [thread:$0]  %s7, 64, %s102, [#allocation18], 32, 32, 2
    $region33: #{tpu_custom_call.1} parent=1 // pred_fallthru
      _
    // Predicated region
    $region34: #{tpu_custom_call.1} parent=1 // pred_check
      _
    $region35: #{tpu_custom_call.1} parent=1 // pred_check_branch
      %109 = sbr.rel (0) target = $region37
    $region36: #{tpu_custom_call.1} parent=1 // pred_region
      %110 = dma.done [#allocation7], 32
    $region37: #{tpu_custom_call.1} parent=1 // pred_fallthru
      _
    // Predicated region
    $region38: #{tpu_custom_call.1} parent=1 // pred_check
      _
    $region39: #{tpu_custom_call.1} parent=1 // pred_check_branch
      %112 = sbr.rel (0) target = $region41
    $region40: #{tpu_custom_call.1} parent=1 // pred_region
      %113 = dma.done [#allocation9], 16
    $region41: #{tpu_custom_call.1} parent=1 // pred_fallthru
      _
    // Predicated region
    $region42: #{tpu_custom_call.1} parent=1 // pred_check
      _
    $region43: #{tpu_custom_call.1} parent=1 // pred_check_branch
      %115 = sbr.rel (0) target = $region45
    $region44: #{tpu_custom_call.1} parent=1 // pred_region
      %116 = dma.done [#allocation5], 128
    $region45: #{tpu_custom_call.1} parent=1 // pred_fallthru
      _
    // Predicated region
    $region46: #{tpu_custom_call.1} parent=1 // pred_check
      _
    $region47: #{tpu_custom_call.1} parent=1 // pred_check_branch
      %118 = sbr.rel (0) target = $region49
    $region48: #{tpu_custom_call.1} parent=1 // pred_region
      %119 = dma.done [#allocation12], 33280
    $region49: #{tpu_custom_call.1} parent=1 // pred_fallthru
      _
    // Predicated region
    $region50: #{tpu_custom_call.1} parent=1 // pred_check
      _
    $region51: #{tpu_custom_call.1} parent=1 // pred_check_branch
      %121 = sbr.rel (0) target = $region53
    $region52: #{tpu_custom_call.1} parent=1 // pred_region
      %122 = dma.done [#allocation12], 2048
    $region53: #{tpu_custom_call.1} parent=1 // pred_fallthru
      _
    // Predicated region
    $region54: #{tpu_custom_call.1} parent=1 // pred_check
      _
    $region55: #{tpu_custom_call.1} parent=1 // pred_check_branch
      %124 = sbr.rel (0) target = $region57
    $region56: #{tpu_custom_call.1} parent=1 // pred_region
      %125 = dma.done [#allocation15], 16
    $region57: #{tpu_custom_call.1} parent=1 // pred_fallthru
      _
    // Predicated region
    $region58: #{tpu_custom_call.1} parent=1 // pred_check
      _
    $region59: #{tpu_custom_call.1} parent=1 // pred_check_branch
      %127 = sbr.rel (0) target = $region61
    $region60: #{tpu_custom_call.1} parent=1 // pred_region
      %128 = dma.done [#allocation15], 64
    $region61: #{tpu_custom_call.1} parent=1 // pred_fallthru
      _
    // Predicated region
    $region62: #{tpu_custom_call.1} parent=1 // pred_check
      _
    $region63: #{tpu_custom_call.1} parent=1 // pred_check_branch
      %130 = sbr.rel (0) target = $region65
    $region64: #{tpu_custom_call.1} parent=1 // pred_region
      %131 = dma.done [#allocation18], 64
    $region65: #{tpu_custom_call.1} parent=1 // pred_fallthru
      _
    %132 = sfence
    %v133 = vlaneseq
    %v134 = vand.u32 %v133, 127
    %s135 = sld [smem:[#allocation4]]
    %v136 = vstv %s135
    %vm137 = vcmp.eq.s32.totalorder %v134, %v136
    %v138 = vsel %vm137, 1, 0
    %v139 = vcvt.s32.f32 %v138
    %s140 = sld [smem:[#allocation4 + $0x80]]
    %v141 = vstv %s140
    %vm142 = vcmp.eq.s32.totalorder %v134, %v141
    %v143 = vsel %vm142, 1, 0
    %v144 = vcvt.s32.f32 %v143
    %s145 = sld [smem:[#allocation4 + $0x1]]
    %v146 = vstv %s145
    %vm147 = vcmp.eq.s32.totalorder %v134, %v146
    %v148 = vsel %vm147, 1, 0
    %v149 = vcvt.s32.f32 %v148
    %s150 = sld [smem:[#allocation4 + $0x81]]
    %v151 = vstv %s150
    %vm152 = vcmp.eq.s32.totalorder %v134, %v151
    %v153 = vsel %vm152, 1, 0
    %v154 = vcvt.s32.f32 %v153
    %s155 = sld [smem:[#allocation4 + $0x2]]
    %v156 = vstv %s155
    %vm157 = vcmp.eq.s32.totalorder %v134, %v156
    %v158 = vsel %vm157, 1, 0
    %v159 = vcvt.s32.f32 %v158
    %s160 = sld [smem:[#allocation4 + $0x82]]
    %v161 = vstv %s160
    %vm162 = vcmp.eq.s32.totalorder %v134, %v161
    %v163 = vsel %vm162, 1, 0
    %v164 = vcvt.s32.f32 %v163
    %s165 = sld [smem:[#allocation4 + $0x3]]
    %v166 = vstv %s165
    %vm167 = vcmp.eq.s32.totalorder %v134, %v166
    %v168 = vsel %vm167, 1, 0
    %v169 = vcvt.s32.f32 %v168
    %s170 = sld [smem:[#allocation4 + $0x83]]
    %v171 = vstv %s170
    %vm172 = vcmp.eq.s32.totalorder %v134, %v171
    %v173 = vsel %vm172, 1, 0
    %v174 = vcvt.s32.f32 %v173
    %s175 = sld [smem:[#allocation4 + $0x4]]
    %v176 = vstv %s175
    %vm177 = vcmp.eq.s32.totalorder %v134, %v176
    %v178 = vsel %vm177, 1, 0
    %v179 = vcvt.s32.f32 %v178
    %s180 = sld [smem:[#allocation4 + $0x84]]
    %v181 = vstv %s180
    %vm182 = vcmp.eq.s32.totalorder %v134, %v181
    %v183 = vsel %vm182, 1, 0
    %v184 = vcvt.s32.f32 %v183
    %s185 = sld [smem:[#allocation4 + $0x5]]
    %v186 = vstv %s185
    %vm187 = vcmp.eq.s32.totalorder %v134, %v186
    %v188 = vsel %vm187, 1, 0
    %v189 = vcvt.s32.f32 %v188
    %s190 = sld [smem:[#allocation4 + $0x85]]
    %v191 = vstv %s190
    %vm192 = vcmp.eq.s32.totalorder %v134, %v191
    %v193 = vsel %vm192, 1, 0
    %v194 = vcvt.s32.f32 %v193
    %s195 = sld [smem:[#allocation4 + $0x6]]
    %v196 = vstv %s195
    %vm197 = vcmp.eq.s32.totalorder %v134, %v196
    %v198 = vsel %vm197, 1, 0
    %v199 = vcvt.s32.f32 %v198
    %s200 = sld [smem:[#allocation4 + $0x86]]
    %v201 = vstv %s200
    %vm202 = vcmp.eq.s32.totalorder %v134, %v201
    %v203 = vsel %vm202, 1, 0
    %v204 = vcvt.s32.f32 %v203
    %s205 = sld [smem:[#allocation4 + $0x7]]
    %v206 = vstv %s205
    %vm207 = vcmp.eq.s32.totalorder %v134, %v206
    %v208 = vsel %vm207, 1, 0
    %v209 = vcvt.s32.f32 %v208
    %s210 = sld [smem:[#allocation4 + $0x87]]
    %v211 = vstv %s210
    %vm212 = vcmp.eq.s32.totalorder %v134, %v211
    %v213 = vsel %vm212, 1, 0
    %v214 = vcvt.s32.f32 %v213
    %vm215 = vcmask 1040384
    %v216 = vsel %vm215, %v139, %v144
    %vm217 = vcmask 1041408
    %v218 = vsel %vm217, %v216, %v149
    %vm219 = vcmask 1042432
    %v220 = vsel %vm219, %v218, %v154
    %vm221 = vcmask 1043456
    %v222 = vsel %vm221, %v220, %v159
    %vm223 = vcmask 1044480
    %v224 = vsel %vm223, %v222, %v164
    %vm225 = vcmask 1045504
    %v226 = vsel %vm225, %v224, %v169
    %vm227 = vcmask 1046528
    %v228 = vsel %vm227, %v226, %v174
    %v229 = vsel %vm215, %v179, %v184
    %v230 = vsel %vm217, %v229, %v189
    %v231 = vsel %vm219, %v230, %v194
    %v232 = vsel %vm221, %v231, %v199
    %v233 = vsel %vm223, %v232, %v204
    %v234 = vsel %vm225, %v233, %v209
    %v235 = vsel %vm227, %v234, %v214
    %s236 = sld [smem:[#allocation8]]
    %v237 = vstv %s236
    %vm238 = vcmp.eq.s32.totalorder %v134, %v237
    %v239 = vsel %vm238, 1, 0
    %v240 = vcvt.s32.f32 %v239
    %s241 = sld [smem:[#allocation8 + $0x1]]
    %v242 = vstv %s241
    %vm243 = vcmp.eq.s32.totalorder %v134, %v242
    %v244 = vsel %vm243, 1, 0
    %v245 = vcvt.s32.f32 %v244
    %v246 = vsel %vm215, %v240, %v245
    %v247 = vld [vmem:[#allocation10] sm:$0xff]
    %v248 = vld [vmem:[#allocation11] sm:$0xff]
    %v249 = vld [vmem:[#allocation11 + $0x8] sm:$0xff]
    %v250 = vld [vmem:[#allocation11 + $0x10] sm:$0xff]
    %v251 = vld [vmem:[#allocation11 + $0x18] sm:$0xff]
    %v252 = vld [vmem:[#allocation11 + $0x20] sm:$0xff]
    %v253 = vld [vmem:[#allocation11 + $0x28] sm:$0xff]
    %v254 = vld [vmem:[#allocation11 + $0x30] sm:$0xff]
    %v255 = vld [vmem:[#allocation11 + $0x38] sm:$0xff]
    %v256 = vld [vmem:[#allocation11 + $0x40] sm:$0xff]
    %v257 = vld [vmem:[#allocation11 + $0x48] sm:$0xff]
    %v258 = vld [vmem:[#allocation11 + $0x50] sm:$0xff]
    %v259 = vld [vmem:[#allocation11 + $0x58] sm:$0xff]
    %v260 = vld [vmem:[#allocation11 + $0x60] sm:$0xff]
    %v261 = vld [vmem:[#allocation11 + $0x68] sm:$0xff]
    %v262 = vld [vmem:[#allocation11 + $0x70] sm:$0xff]
    %v263 = vld [vmem:[#allocation11 + $0x78] sm:$0xff]
    %s264 = scalar_lea.vmem [#allocation11], 2048
    %v265 = vld [vmem:[%s264] ss:$8 sm:$0xf]
    %vm266 = vcmask 64512
    %v268 = vsel %vm266, %v228, 0
    %v271 = vsel %vm266, %v235, 0
    %273 = vmatprep.subr.mxu0 0.0
    %274 = vmatpush1.msra.mxu0 %v247
    %275 = vmatprep.subr.mxu0 0.0
    %276 = vmatpush1.msra.mxu0 0.0
    %277 = vmatprep.subr.mxu0 0.0
    %278 = vmatpush1.msra.mxu0 0.0
    %279 = vmatprep.subr.mxu0 0.0
    %280 = vmatpush1.msra.mxu0 0.0
    %281 = vmatprep.subr.mxu0 0.0
    %282 = vmatpush1.msra.mxu0 0.0
    %283 = vmatprep.subr.mxu0 0.0
    %284 = vmatpush1.msra.mxu0 0.0
    %285 = vmatprep.subr.mxu0 0.0
    %286 = vmatpush1.msra.mxu0 0.0
    %287 = vmatprep.subr.mxu0 0.0
    %288 = vmatpush1.msra.mxu0 0.0
    %289 = vmatprep.subr.mxu0 0.0
    %290 = vmatpush1.msra.mxu0 0.0
    %291 = vmatprep.subr.mxu0 0.0
    %292 = vmatpush1.msra.mxu0 0.0
    %293 = vmatprep.subr.mxu0 0.0
    %294 = vmatpush1.msra.mxu0 0.0
    %295 = vmatprep.subr.mxu0 0.0
    %296 = vmatpush1.msra.mxu0 0.0
    %297 = vmatprep.subr.mxu0 0.0
    %298 = vmatpush1.msra.mxu0 0.0
    %299 = vmatprep.subr.mxu0 0.0
    %300 = vmatpush1.msra.mxu0 0.0
    %301 = vmatprep.subr.mxu0 0.0
    %302 = vmatpush1.msra.mxu0 0.0
    %303 = vmatprep.subr.mxu0 0.0
    %304 = vmatpush1.msra.mxu0 0.0
    %305 = vmatprep.subr.mxu0 0.0
    %306 = vmatpush1.msra.mxu0 0.0
    %307 = vmatprep.subr.mxu0 0.0
    %308 = vmatpush1.msra.mxu0 0.0
    %309 = vmatprep.subr.mxu0 0.0
    %310 = vmatpush1.msra.mxu0 0.0
    %311 = vmatprep.subr.mxu0 0.0
    %312 = vmatpush1.msra.mxu0 0.0
    %313 = vmatprep.subr.mxu0 0.0
    %314 = vmatpush1.msra.mxu0 0.0
    %315 = vmatprep.subr.mxu0 0.0
    %316 = vmatpush1.msra.mxu0 0.0
    %317 = vmatprep.subr.mxu0 0.0
    %318 = vmatpush1.msra.mxu0 0.0
    %319 = vmatprep.subr.mxu0 0.0
    %320 = vmatpush1.msra.mxu0 0.0
    %321 = vmatprep.subr.mxu0 0.0
    %322 = vmatpush1.msra.mxu0 0.0
    %323 = vmatprep.subr.mxu0 0.0
    %324 = vmatpush1.msra.mxu0 0.0
    %325 = vmatprep.subr.mxu0 0.0
    %326 = vmatpush1.msra.mxu0 0.0
    %327 = vmatprep.subr.mxu0 0.0
    %328 = vmatpush1.msra.mxu0 0.0
    %329 = vmatprep.subr.mxu0 0.0
    %330 = vmatpush1.msra.mxu0 0.0
    %331 = vmatprep.subr.mxu0 0.0
    %332 = vmatpush1.msra.mxu0 0.0
    %333 = vmatprep.subr.mxu0 0.0
    %334 = vmatpush1.msra.mxu0 0.0
    %335 = vmatprep.subr.mxu0 0.0
    %336 = vmatpush1.msra.mxu0 0.0
    %337 = vmatprep.mubr.f32.mxu0 0.0
    %338 = vmatmul.mubr.f32.gmra.mrb[0].mxu0 %v268
    %v339 = vpop.f32.mrb[0].mxu0
    %v340 = vadd.f32 0.0, %v339
    %v341 = vpop.f32.mrb[0].mxu0
    %342 = vmatprep.mubr.f32.mxu0 0.0
    %343 = vmatmul.mubr.f32.gmra.mrb[0].mxu0 %v271
    %v344 = vpop.f32.mrb[0].mxu0
    %v345 = vadd.f32 0.0, %v344
    %v346 = vpop.f32.mrb[0].mxu0
    %347 = vdwg.mxu0
    %v349 = vsel %vm266, %v246, 0
    %351 = vmatprep.subr.mxu0 0.0
    %352 = vmatpush1.msra.mxu0 %v247
    %353 = vmatprep.subr.mxu0 0.0
    %354 = vmatpush1.msra.mxu0 0.0
    %355 = vmatprep.subr.mxu0 0.0
    %356 = vmatpush1.msra.mxu0 0.0
    %357 = vmatprep.subr.mxu0 0.0
    %358 = vmatpush1.msra.mxu0 0.0
    %359 = vmatprep.subr.mxu0 0.0
    %360 = vmatpush1.msra.mxu0 0.0
    %361 = vmatprep.subr.mxu0 0.0
    %362 = vmatpush1.msra.mxu0 0.0
    %363 = vmatprep.subr.mxu0 0.0
    %364 = vmatpush1.msra.mxu0 0.0
    %365 = vmatprep.subr.mxu0 0.0
    %366 = vmatpush1.msra.mxu0 0.0
    %367 = vmatprep.subr.mxu0 0.0
    %368 = vmatpush1.msra.mxu0 0.0
    %369 = vmatprep.subr.mxu0 0.0
    %370 = vmatpush1.msra.mxu0 0.0
    %371 = vmatprep.subr.mxu0 0.0
    %372 = vmatpush1.msra.mxu0 0.0
    %373 = vmatprep.subr.mxu0 0.0
    %374 = vmatpush1.msra.mxu0 0.0
    %375 = vmatprep.subr.mxu0 0.0
    %376 = vmatpush1.msra.mxu0 0.0
    %377 = vmatprep.subr.mxu0 0.0
    %378 = vmatpush1.msra.mxu0 0.0
    %379 = vmatprep.subr.mxu0 0.0
    %380 = vmatpush1.msra.mxu0 0.0
    %381 = vmatprep.subr.mxu0 0.0
    %382 = vmatpush1.msra.mxu0 0.0
    %383 = vmatprep.subr.mxu0 0.0
    %384 = vmatpush1.msra.mxu0 0.0
    %385 = vmatprep.subr.mxu0 0.0
    %386 = vmatpush1.msra.mxu0 0.0
    %387 = vmatprep.subr.mxu0 0.0
    %388 = vmatpush1.msra.mxu0 0.0
    %389 = vmatprep.subr.mxu0 0.0
    %390 = vmatpush1.msra.mxu0 0.0
    %391 = vmatprep.subr.mxu0 0.0
    %392 = vmatpush1.msra.mxu0 0.0
    %393 = vmatprep.subr.mxu0 0.0
    %394 = vmatpush1.msra.mxu0 0.0
    %395 = vmatprep.subr.mxu0 0.0
    %396 = vmatpush1.msra.mxu0 0.0
    %397 = vmatprep.subr.mxu0 0.0
    %398 = vmatpush1.msra.mxu0 0.0
    %399 = vmatprep.subr.mxu0 0.0
    %400 = vmatpush1.msra.mxu0 0.0
    %401 = vmatprep.subr.mxu0 0.0
    %402 = vmatpush1.msra.mxu0 0.0
    %403 = vmatprep.subr.mxu0 0.0
    %404 = vmatpush1.msra.mxu0 0.0
    %405 = vmatprep.subr.mxu0 0.0
    %406 = vmatpush1.msra.mxu0 0.0
    %407 = vmatprep.subr.mxu0 0.0
    %408 = vmatpush1.msra.mxu0 0.0
    %409 = vmatprep.subr.mxu0 0.0
    %410 = vmatpush1.msra.mxu0 0.0
    %411 = vmatprep.subr.mxu0 0.0
    %412 = vmatpush1.msra.mxu0 0.0
    %413 = vmatprep.subr.mxu0 0.0
    %414 = vmatpush1.msra.mxu0 0.0
    %415 = vmatprep.mubr.f32.mxu0 0.0
    %416 = vmatmul.mubr.f32.gmra.mrb[0].mxu0 %v349
    %v417 = vpop.f32.mrb[0].mxu0
    %v418 = vadd.f32 0.0, %v417
    %v419 = vpop.f32.mrb[0].mxu0
    %420 = vdwg.mxu0
    %v422 = vlaneseq
    %v423 = vshrl.u32 %v422, 7
    %v424 = vsub.s32 0, %v423
    %v425 = vrot.slane %v265, %v424
    %v426 = vlaneseq
    %v427 = vshrl.u32 %v426, 7
    %v428 = vsub.s32 1, %v427
    %v429 = vrot.slane %v265, %v428
    %v430 = vlaneseq
    %v431 = vshrl.u32 %v430, 7
    %v432 = vsub.s32 2, %v431
    %v433 = vrot.slane %v265, %v432
    %v434 = vlaneseq
    %v435 = vshrl.u32 %v434, 7
    %v436 = vsub.s32 3, %v435
    %v437 = vrot.slane %v265, %v436
    %vm442 = vcmask 130048
    %v444 = vsel %vm442, %v418, 0
    %446 = vmatprep.subr.mxu0 %v257
    %447 = vmatpush1.msra.mxu0 %v256
    %448 = vmatprep.subr.mxu0 %v261
    %449 = vmatpush1.msra.mxu0 %v260
    %450 = vmatprep.subr.mxu0 0.0
    %451 = vmatpush1.msra.mxu0 0.0
    %452 = vmatprep.subr.mxu0 0.0
    %453 = vmatpush1.msra.mxu0 0.0
    %454 = vmatprep.subr.mxu0 0.0
    %455 = vmatpush1.msra.mxu0 0.0
    %456 = vmatprep.subr.mxu0 0.0
    %457 = vmatpush1.msra.mxu0 0.0
    %458 = vmatprep.subr.mxu0 0.0
    %459 = vmatpush1.msra.mxu0 0.0
    %460 = vmatprep.subr.mxu0 0.0
    %461 = vmatpush1.msra.mxu0 0.0
    %462 = vmatprep.subr.mxu0 0.0
    %463 = vmatpush1.msra.mxu0 0.0
    %464 = vmatprep.subr.mxu0 0.0
    %465 = vmatpush1.msra.mxu0 0.0
    %466 = vmatprep.subr.mxu0 0.0
    %467 = vmatpush1.msra.mxu0 0.0
    %468 = vmatprep.subr.mxu0 0.0
    %469 = vmatpush1.msra.mxu0 0.0
    %470 = vmatprep.subr.mxu0 0.0
    %471 = vmatpush1.msra.mxu0 0.0
    %472 = vmatprep.subr.mxu0 0.0
    %473 = vmatpush1.msra.mxu0 0.0
    %474 = vmatprep.subr.mxu0 0.0
    %475 = vmatpush1.msra.mxu0 0.0
    %476 = vmatprep.subr.mxu0 0.0
    %477 = vmatpush1.msra.mxu0 0.0
    %478 = vmatprep.subr.mxu0 0.0
    %479 = vmatpush1.msra.mxu0 0.0
    %480 = vmatprep.subr.mxu0 0.0
    %481 = vmatpush1.msra.mxu0 0.0
    %482 = vmatprep.subr.mxu0 0.0
    %483 = vmatpush1.msra.mxu0 0.0
    %484 = vmatprep.subr.mxu0 0.0
    %485 = vmatpush1.msra.mxu0 0.0
    %486 = vmatprep.subr.mxu0 0.0
    %487 = vmatpush1.msra.mxu0 0.0
    %488 = vmatprep.subr.mxu0 0.0
    %489 = vmatpush1.msra.mxu0 0.0
    %490 = vmatprep.subr.mxu0 0.0
    %491 = vmatpush1.msra.mxu0 0.0
    %492 = vmatprep.subr.mxu0 0.0
    %493 = vmatpush1.msra.mxu0 0.0
    %494 = vmatprep.subr.mxu0 0.0
    %495 = vmatpush1.msra.mxu0 0.0
    %496 = vmatprep.subr.mxu0 0.0
    %497 = vmatpush1.msra.mxu0 0.0
    %498 = vmatprep.subr.mxu0 0.0
    %499 = vmatpush1.msra.mxu0 0.0
    %500 = vmatprep.subr.mxu0 0.0
    %501 = vmatpush1.msra.mxu0 0.0
    %502 = vmatprep.subr.mxu0 0.0
    %503 = vmatpush1.msra.mxu0 0.0
    %504 = vmatprep.subr.mxu0 0.0
    %505 = vmatpush1.msra.mxu0 0.0
    %506 = vmatprep.subr.mxu0 0.0
    %507 = vmatpush1.msra.mxu0 0.0
    %508 = vmatprep.subr.mxu0 0.0
    %509 = vmatpush1.msra.mxu0 0.0
    %510 = vmatprep.mubr.f32.mxu0 0.0
    %511 = vmatmul.mubr.f32.gmra.mrb[0].mxu0 %v444
    %v512 = vpop.f32.mrb[0].mxu0
    %v513 = vadd.f32 %v425, %v512
    %v514 = vpop.f32.mrb[0].mxu0
    %v515 = vadd.f32 %v429, %v514
    %516 = vdwg.mxu0
    %517 = vmatprep.subr.mxu0 %v259
    %518 = vmatpush1.msra.mxu0 %v258
    %519 = vmatprep.subr.mxu0 %v263
    %520 = vmatpush1.msra.mxu0 %v262
    %521 = vmatprep.subr.mxu0 0.0
    %522 = vmatpush1.msra.mxu0 0.0
    %523 = vmatprep.subr.mxu0 0.0
    %524 = vmatpush1.msra.mxu0 0.0
    %525 = vmatprep.subr.mxu0 0.0
    %526 = vmatpush1.msra.mxu0 0.0
    %527 = vmatprep.subr.mxu0 0.0
    %528 = vmatpush1.msra.mxu0 0.0
    %529 = vmatprep.subr.mxu0 0.0
    %530 = vmatpush1.msra.mxu0 0.0
    %531 = vmatprep.subr.mxu0 0.0
    %532 = vmatpush1.msra.mxu0 0.0
    %533 = vmatprep.subr.mxu0 0.0
    %534 = vmatpush1.msra.mxu0 0.0
    %535 = vmatprep.subr.mxu0 0.0
    %536 = vmatpush1.msra.mxu0 0.0
    %537 = vmatprep.subr.mxu0 0.0
    %538 = vmatpush1.msra.mxu0 0.0
    %539 = vmatprep.subr.mxu0 0.0
    %540 = vmatpush1.msra.mxu0 0.0
    %541 = vmatprep.subr.mxu0 0.0
    %542 = vmatpush1.msra.mxu0 0.0
    %543 = vmatprep.subr.mxu0 0.0
    %544 = vmatpush1.msra.mxu0 0.0
    %545 = vmatprep.subr.mxu0 0.0
    %546 = vmatpush1.msra.mxu0 0.0
    %547 = vmatprep.subr.mxu0 0.0
    %548 = vmatpush1.msra.mxu0 0.0
    %549 = vmatprep.subr.mxu0 0.0
    %550 = vmatpush1.msra.mxu0 0.0
    %551 = vmatprep.subr.mxu0 0.0
    %552 = vmatpush1.msra.mxu0 0.0
    %553 = vmatprep.subr.mxu0 0.0
    %554 = vmatpush1.msra.mxu0 0.0
    %555 = vmatprep.subr.mxu0 0.0
    %556 = vmatpush1.msra.mxu0 0.0
    %557 = vmatprep.subr.mxu0 0.0
    %558 = vmatpush1.msra.mxu0 0.0
    %559 = vmatprep.subr.mxu0 0.0
    %560 = vmatpush1.msra.mxu0 0.0
    %561 = vmatprep.subr.mxu0 0.0
    %562 = vmatpush1.msra.mxu0 0.0
    %563 = vmatprep.subr.mxu0 0.0
    %564 = vmatpush1.msra.mxu0 0.0
    %565 = vmatprep.subr.mxu0 0.0
    %566 = vmatpush1.msra.mxu0 0.0
    %567 = vmatprep.subr.mxu0 0.0
    %568 = vmatpush1.msra.mxu0 0.0
    %569 = vmatprep.subr.mxu0 0.0
    %570 = vmatpush1.msra.mxu0 0.0
    %571 = vmatprep.subr.mxu0 0.0
    %572 = vmatpush1.msra.mxu0 0.0
    %573 = vmatprep.subr.mxu0 0.0
    %574 = vmatpush1.msra.mxu0 0.0
    %575 = vmatprep.subr.mxu0 0.0
    %576 = vmatpush1.msra.mxu0 0.0
    %577 = vmatprep.subr.mxu0 0.0
    %578 = vmatpush1.msra.mxu0 0.0
    %579 = vmatprep.subr.mxu0 0.0
    %580 = vmatpush1.msra.mxu0 0.0
    %581 = vmatprep.mubr.f32.mxu0 0.0
    %582 = vmatmul.mubr.f32.gmra.mrb[0].mxu0 %v444
    %v583 = vpop.f32.mrb[0].mxu0
    %v584 = vadd.f32 %v433, %v583
    %v585 = vpop.f32.mrb[0].mxu0
    %v586 = vadd.f32 %v437, %v585
    %587 = vdwg.mxu0
    %v592 = vrot.slane %v513, 6
    %v593 = vrot.slane %v515, 6
    %v594 = vrot.slane %v584, 6
    %v595 = vrot.slane %v586, 6
    %v600 = vrot.slane %v513, 4
    %v601 = vrot.slane %v515, 4
    %v602 = vrot.slane %v584, 4
    %v603 = vrot.slane %v586, 4
    %v608 = vrot.slane %v513, 2
    %v609 = vrot.slane %v515, 2
    %v610 = vrot.slane %v584, 2
    %v611 = vrot.slane %v586, 2
    %v616 = vsel %vm217, %v513, %v592
    %v617 = vsel %vm217, %v515, %v593
    %v618 = vsel %vm217, %v584, %v594
    %v619 = vsel %vm217, %v586, %v595
    %v620 = vsel %vm221, %v616, %v600
    %v621 = vsel %vm221, %v617, %v601
    %v622 = vsel %vm221, %v618, %v602
    %v623 = vsel %vm221, %v619, %v603
    %v624 = vsel %vm225, %v620, %v608
    %v625 = vsel %vm225, %v621, %v609
    %v626 = vsel %vm225, %v622, %v610
    %v627 = vsel %vm225, %v623, %v611
    %v629 = vsel %vm442, %v340, 0
    %v632 = vsel %vm442, %v345, 0
    %634 = vmatprep.subr.mxu0 %v249
    %635 = vmatpush1.msra.mxu0 %v248
    %636 = vmatprep.subr.mxu0 %v253
    %637 = vmatpush1.msra.mxu0 %v252
    %638 = vmatprep.subr.mxu0 0.0
    %639 = vmatpush1.msra.mxu0 0.0
    %640 = vmatprep.subr.mxu0 0.0
    %641 = vmatpush1.msra.mxu0 0.0
    %642 = vmatprep.subr.mxu0 0.0
    %643 = vmatpush1.msra.mxu0 0.0
    %644 = vmatprep.subr.mxu0 0.0
    %645 = vmatpush1.msra.mxu0 0.0
    %646 = vmatprep.subr.mxu0 0.0
    %647 = vmatpush1.msra.mxu0 0.0
    %648 = vmatprep.subr.mxu0 0.0
    %649 = vmatpush1.msra.mxu0 0.0
    %650 = vmatprep.subr.mxu0 0.0
    %651 = vmatpush1.msra.mxu0 0.0
    %652 = vmatprep.subr.mxu0 0.0
    %653 = vmatpush1.msra.mxu0 0.0
    %654 = vmatprep.subr.mxu0 0.0
    %655 = vmatpush1.msra.mxu0 0.0
    %656 = vmatprep.subr.mxu0 0.0
    %657 = vmatpush1.msra.mxu0 0.0
    %658 = vmatprep.subr.mxu0 0.0
    %659 = vmatpush1.msra.mxu0 0.0
    %660 = vmatprep.subr.mxu0 0.0
    %661 = vmatpush1.msra.mxu0 0.0
    %662 = vmatprep.subr.mxu0 0.0
    %663 = vmatpush1.msra.mxu0 0.0
    %664 = vmatprep.subr.mxu0 0.0
    %665 = vmatpush1.msra.mxu0 0.0
    %666 = vmatprep.subr.mxu0 0.0
    %667 = vmatpush1.msra.mxu0 0.0
    %668 = vmatprep.subr.mxu0 0.0
    %669 = vmatpush1.msra.mxu0 0.0
    %670 = vmatprep.subr.mxu0 0.0
    %671 = vmatpush1.msra.mxu0 0.0
    %672 = vmatprep.subr.mxu0 0.0
    %673 = vmatpush1.msra.mxu0 0.0
    %674 = vmatprep.subr.mxu0 0.0
    %675 = vmatpush1.msra.mxu0 0.0
    %676 = vmatprep.subr.mxu0 0.0
    %677 = vmatpush1.msra.mxu0 0.0
    %678 = vmatprep.subr.mxu0 0.0
    %679 = vmatpush1.msra.mxu0 0.0
    %680 = vmatprep.subr.mxu0 0.0
    %681 = vmatpush1.msra.mxu0 0.0
    %682 = vmatprep.subr.mxu0 0.0
    %683 = vmatpush1.msra.mxu0 0.0
    %684 = vmatprep.subr.mxu0 0.0
    %685 = vmatpush1.msra.mxu0 0.0
    %686 = vmatprep.subr.mxu0 0.0
    %687 = vmatpush1.msra.mxu0 0.0
    %688 = vmatprep.subr.mxu0 0.0
    %689 = vmatpush1.msra.mxu0 0.0
    %690 = vmatprep.subr.mxu0 0.0
    %691 = vmatpush1.msra.mxu0 0.0
    %692 = vmatprep.subr.mxu0 0.0
    %693 = vmatpush1.msra.mxu0 0.0
    %694 = vmatprep.subr.mxu0 0.0
    %695 = vmatpush1.msra.mxu0 0.0
    %696 = vmatprep.subr.mxu0 0.0
    %697 = vmatpush1.msra.mxu0 0.0
    %698 = vmatprep.mubr.f32.mxu0 0.0
    %699 = vmatmul.mubr.f32.gmra.mrb[0].mxu0 %v629
    %v700 = vpop.f32.mrb[0].mxu0
    %v701 = vadd.f32 %v624, %v700
    %v702 = vpop.f32.mrb[0].mxu0
    %v703 = vadd.f32 %v625, %v702
    %704 = vmatprep.mubr.f32.mxu0 0.0
    %705 = vmatmul.mubr.f32.gmra.mrb[0].mxu0 %v632
    %v706 = vpop.f32.mrb[0].mxu0
    %v707 = vadd.f32 %v624, %v706
    %v708 = vpop.f32.mrb[0].mxu0
    %v709 = vadd.f32 %v625, %v708
    %710 = vdwg.mxu0
    %711 = vmatprep.subr.mxu0 %v251
    %712 = vmatpush1.msra.mxu0 %v250
    %713 = vmatprep.subr.mxu0 %v255
    %714 = vmatpush1.msra.mxu0 %v254
    %715 = vmatprep.subr.mxu0 0.0
    %716 = vmatpush1.msra.mxu0 0.0
    %717 = vmatprep.subr.mxu0 0.0
    %718 = vmatpush1.msra.mxu0 0.0
    %719 = vmatprep.subr.mxu0 0.0
    %720 = vmatpush1.msra.mxu0 0.0
    %721 = vmatprep.subr.mxu0 0.0
    %722 = vmatpush1.msra.mxu0 0.0
    %723 = vmatprep.subr.mxu0 0.0
    %724 = vmatpush1.msra.mxu0 0.0
    %725 = vmatprep.subr.mxu0 0.0
    %726 = vmatpush1.msra.mxu0 0.0
    %727 = vmatprep.subr.mxu0 0.0
    %728 = vmatpush1.msra.mxu0 0.0
    %729 = vmatprep.subr.mxu0 0.0
    %730 = vmatpush1.msra.mxu0 0.0
    %731 = vmatprep.subr.mxu0 0.0
    %732 = vmatpush1.msra.mxu0 0.0
    %733 = vmatprep.subr.mxu0 0.0
    %734 = vmatpush1.msra.mxu0 0.0
    %735 = vmatprep.subr.mxu0 0.0
    %736 = vmatpush1.msra.mxu0 0.0
    %737 = vmatprep.subr.mxu0 0.0
    %738 = vmatpush1.msra.mxu0 0.0
    %739 = vmatprep.subr.mxu0 0.0
    %740 = vmatpush1.msra.mxu0 0.0
    %741 = vmatprep.subr.mxu0 0.0
    %742 = vmatpush1.msra.mxu0 0.0
    %743 = vmatprep.subr.mxu0 0.0
    %744 = vmatpush1.msra.mxu0 0.0
    %745 = vmatprep.subr.mxu0 0.0
    %746 = vmatpush1.msra.mxu0 0.0
    %747 = vmatprep.subr.mxu0 0.0
    %748 = vmatpush1.msra.mxu0 0.0
    %749 = vmatprep.subr.mxu0 0.0
    %750 = vmatpush1.msra.mxu0 0.0
    %751 = vmatprep.subr.mxu0 0.0
    %752 = vmatpush1.msra.mxu0 0.0
    %753 = vmatprep.subr.mxu0 0.0
    %754 = vmatpush1.msra.mxu0 0.0
    %755 = vmatprep.subr.mxu0 0.0
    %756 = vmatpush1.msra.mxu0 0.0
    %757 = vmatprep.subr.mxu0 0.0
    %758 = vmatpush1.msra.mxu0 0.0
    %759 = vmatprep.subr.mxu0 0.0
    %760 = vmatpush1.msra.mxu0 0.0
    %761 = vmatprep.subr.mxu0 0.0
    %762 = vmatpush1.msra.mxu0 0.0
    %763 = vmatprep.subr.mxu0 0.0
    %764 = vmatpush1.msra.mxu0 0.0
    %765 = vmatprep.subr.mxu0 0.0
    %766 = vmatpush1.msra.mxu0 0.0
    %767 = vmatprep.subr.mxu0 0.0
    %768 = vmatpush1.msra.mxu0 0.0
    %769 = vmatprep.subr.mxu0 0.0
    %770 = vmatpush1.msra.mxu0 0.0
    %771 = vmatprep.subr.mxu0 0.0
    %772 = vmatpush1.msra.mxu0 0.0
    %773 = vmatprep.subr.mxu0 0.0
    %774 = vmatpush1.msra.mxu0 0.0
    %775 = vmatprep.mubr.f32.mxu0 0.0
    %776 = vmatmul.mubr.f32.gmra.mrb[0].mxu0 %v629
    %v777 = vpop.f32.mrb[0].mxu0
    %v778 = vadd.f32 %v626, %v777
    %v779 = vpop.f32.mrb[0].mxu0
    %v780 = vadd.f32 %v627, %v779
    %781 = vmatprep.mubr.f32.mxu0 0.0
    %782 = vmatmul.mubr.f32.gmra.mrb[0].mxu0 %v632
    %v783 = vpop.f32.mrb[0].mxu0
    %v784 = vadd.f32 %v626, %v783
    %v785 = vpop.f32.mrb[0].mxu0
    %v786 = vadd.f32 %v627, %v785
    %787 = vdwg.mxu0
    %788 = vst [vmem:[#allocation2] sm:$0xff] %v701
    %789 = vst [vmem:[#allocation2 + $0x8] sm:$0xff] %v703
    %790 = vst [vmem:[#allocation2 + $0x10] sm:$0xff] %v778
    %791 = vst [vmem:[#allocation2 + $0x18] sm:$0xff] %v780
    %792 = vst [vmem:[#allocation2 + $0x20] sm:$0xff] %v707
    %793 = vst [vmem:[#allocation2 + $0x28] sm:$0xff] %v709
    %794 = vst [vmem:[#allocation2 + $0x30] sm:$0xff] %v784
    %795 = vst [vmem:[#allocation2 + $0x38] sm:$0xff] %v786
    %v796 = vld [vmem:[#allocation11 + $0x200] sm:$0xff]
    %v797 = vld [vmem:[#allocation11 + $0x208] sm:$0xff]
    %v798 = vld [vmem:[#allocation11 + $0x210] sm:$0xff]
    %v799 = vld [vmem:[#allocation11 + $0x218] sm:$0xff]
    %v800 = vld [vmem:[#allocation11 + $0x220] sm:$0xff]
    %v801 = vld [vmem:[#allocation11 + $0x228] sm:$0xff]
    %v802 = vld [vmem:[#allocation11 + $0x230] sm:$0xff]
    %v803 = vld [vmem:[#allocation11 + $0x238] sm:$0xff]
    %v804 = vld [vmem:[#allocation11 + $0x240] sm:$0xff]
    %v805 = vld [vmem:[#allocation11 + $0x248] sm:$0xff]
    %v806 = vld [vmem:[#allocation11 + $0x250] sm:$0xff]
    %v807 = vld [vmem:[#allocation11 + $0x258] sm:$0xff]
    %v808 = vld [vmem:[#allocation11 + $0x260] sm:$0xff]
    %v809 = vld [vmem:[#allocation11 + $0x268] sm:$0xff]
    %v810 = vld [vmem:[#allocation11 + $0x270] sm:$0xff]
    %v811 = vld [vmem:[#allocation11 + $0x278] sm:$0xff]
    %v812 = vld [vmem:[#allocation11 + $0x280] sm:$0xff]
    %v813 = vld [vmem:[#allocation11 + $0x288] sm:$0xff]
    %v814 = vld [vmem:[#allocation11 + $0x290] sm:$0xff]
    %v815 = vld [vmem:[#allocation11 + $0x298] sm:$0xff]
    %v816 = vld [vmem:[#allocation11 + $0x2a0] sm:$0xff]
    %v817 = vld [vmem:[#allocation11 + $0x2a8] sm:$0xff]
    %v818 = vld [vmem:[#allocation11 + $0x2b0] sm:$0xff]
    %v819 = vld [vmem:[#allocation11 + $0x2b8] sm:$0xff]
    %v820 = vld [vmem:[#allocation11 + $0x2c0] sm:$0xff]
    %v821 = vld [vmem:[#allocation11 + $0x2c8] sm:$0xff]
    %v822 = vld [vmem:[#allocation11 + $0x2d0] sm:$0xff]
    %v823 = vld [vmem:[#allocation11 + $0x2d8] sm:$0xff]
    %v824 = vld [vmem:[#allocation11 + $0x2e0] sm:$0xff]
    %v825 = vld [vmem:[#allocation11 + $0x2e8] sm:$0xff]
    %v826 = vld [vmem:[#allocation11 + $0x2f0] sm:$0xff]
    %v827 = vld [vmem:[#allocation11 + $0x2f8] sm:$0xff]
    %v828 = vld [vmem:[#allocation11 + $0x300] sm:$0xff]
    %v829 = vld [vmem:[#allocation11 + $0x308] sm:$0xff]
    %v830 = vld [vmem:[#allocation11 + $0x310] sm:$0xff]
    %v831 = vld [vmem:[#allocation11 + $0x318] sm:$0xff]
    %v832 = vld [vmem:[#allocation11 + $0x320] sm:$0xff]
    %v833 = vld [vmem:[#allocation11 + $0x328] sm:$0xff]
    %v834 = vld [vmem:[#allocation11 + $0x330] sm:$0xff]
    %v835 = vld [vmem:[#allocation11 + $0x338] sm:$0xff]
    %v836 = vld [vmem:[#allocation11 + $0x340] sm:$0xff]
    %v837 = vld [vmem:[#allocation11 + $0x348] sm:$0xff]
    %v838 = vld [vmem:[#allocation11 + $0x350] sm:$0xff]
    %v839 = vld [vmem:[#allocation11 + $0x358] sm:$0xff]
    %v840 = vld [vmem:[#allocation11 + $0x360] sm:$0xff]
    %v841 = vld [vmem:[#allocation11 + $0x368] sm:$0xff]
    %v842 = vld [vmem:[#allocation11 + $0x370] sm:$0xff]
    %v843 = vld [vmem:[#allocation11 + $0x378] sm:$0xff]
    %v844 = vld [vmem:[#allocation11 + $0x380] sm:$0xff]
    %v845 = vld [vmem:[#allocation11 + $0x388] sm:$0xff]
    %v846 = vld [vmem:[#allocation11 + $0x390] sm:$0xff]
    %v847 = vld [vmem:[#allocation11 + $0x398] sm:$0xff]
    %v848 = vld [vmem:[#allocation11 + $0x3a0] sm:$0xff]
    %v849 = vld [vmem:[#allocation11 + $0x3a8] sm:$0xff]
    %v850 = vld [vmem:[#allocation11 + $0x3b0] sm:$0xff]
    %v851 = vld [vmem:[#allocation11 + $0x3b8] sm:$0xff]
    %v852 = vld [vmem:[#allocation11 + $0x3c0] sm:$0xff]
    %v853 = vld [vmem:[#allocation11 + $0x3c8] sm:$0xff]
    %v854 = vld [vmem:[#allocation11 + $0x3d0] sm:$0xff]
    %v855 = vld [vmem:[#allocation11 + $0x3d8] sm:$0xff]
    %v856 = vld [vmem:[#allocation11 + $0x3e0] sm:$0xff]
    %v857 = vld [vmem:[#allocation11 + $0x3e8] sm:$0xff]
    %v858 = vld [vmem:[#allocation11 + $0x3f0] sm:$0xff]
    %v859 = vld [vmem:[#allocation11 + $0x3f8] sm:$0xff]
    %v860 = vld [vmem:[#allocation16] sm:$0x3]
    %vm861 = vcmask 261120
    %v862 = vsel %vm861, %v860, 0.0
    %v863 = vld [vmem:[#allocation17] sm:$0x3]
    %v864 = vsel %vm861, %v863, 0.0
    %v865 = vld [vmem:[#allocation11 + $0x600] sm:$0xff]
    %v866 = vld [vmem:[#allocation11 + $0x608] sm:$0xff]
    %v867 = vld [vmem:[#allocation11 + $0x610] sm:$0xff]
    %v868 = vld [vmem:[#allocation11 + $0x618] sm:$0xff]
    %v869 = vld [vmem:[#allocation11 + $0x620] sm:$0xff]
    %v870 = vld [vmem:[#allocation11 + $0x628] sm:$0xff]
    %v871 = vld [vmem:[#allocation11 + $0x630] sm:$0xff]
    %v872 = vld [vmem:[#allocation11 + $0x638] sm:$0xff]
    %v873 = vld [vmem:[#allocation11 + $0x640] sm:$0xff]
    %v874 = vld [vmem:[#allocation11 + $0x648] sm:$0xff]
    %v875 = vld [vmem:[#allocation11 + $0x650] sm:$0xff]
    %v876 = vld [vmem:[#allocation11 + $0x658] sm:$0xff]
    %v877 = vld [vmem:[#allocation11 + $0x660] sm:$0xff]
    %v878 = vld [vmem:[#allocation11 + $0x668] sm:$0xff]
    %v879 = vld [vmem:[#allocation11 + $0x670] sm:$0xff]
    %v880 = vld [vmem:[#allocation11 + $0x678] sm:$0xff]
    %v881 = vld [vmem:[#allocation11 + $0x680] sm:$0xff]
    %v882 = vld [vmem:[#allocation11 + $0x688] sm:$0xff]
    %v883 = vld [vmem:[#allocation11 + $0x690] sm:$0xff]
    %v884 = vld [vmem:[#allocation11 + $0x698] sm:$0xff]
    %v885 = vld [vmem:[#allocation11 + $0x6a0] sm:$0xff]
    %v886 = vld [vmem:[#allocation11 + $0x6a8] sm:$0xff]
    %v887 = vld [vmem:[#allocation11 + $0x6b0] sm:$0xff]
    %v888 = vld [vmem:[#allocation11 + $0x6b8] sm:$0xff]
    %v889 = vld [vmem:[#allocation11 + $0x6c0] sm:$0xff]
    %v890 = vld [vmem:[#allocation11 + $0x6c8] sm:$0xff]
    %v891 = vld [vmem:[#allocation11 + $0x6d0] sm:$0xff]
    %v892 = vld [vmem:[#allocation11 + $0x6d8] sm:$0xff]
    %v893 = vld [vmem:[#allocation11 + $0x6e0] sm:$0xff]
    %v894 = vld [vmem:[#allocation11 + $0x6e8] sm:$0xff]
    %v895 = vld [vmem:[#allocation11 + $0x6f0] sm:$0xff]
    %v896 = vld [vmem:[#allocation11 + $0x6f8] sm:$0xff]
    %v897 = vld [vmem:[#allocation11 + $0x700] sm:$0xff]
    %v898 = vld [vmem:[#allocation11 + $0x708] sm:$0xff]
    %v899 = vld [vmem:[#allocation11 + $0x710] sm:$0xff]
    %v900 = vld [vmem:[#allocation11 + $0x718] sm:$0xff]
    %v901 = vld [vmem:[#allocation11 + $0x720] sm:$0xff]
    %v902 = vld [vmem:[#allocation11 + $0x728] sm:$0xff]
    %v903 = vld [vmem:[#allocation11 + $0x730] sm:$0xff]
    %v904 = vld [vmem:[#allocation11 + $0x738] sm:$0xff]
    %v905 = vld [vmem:[#allocation11 + $0x740] sm:$0xff]
    %v906 = vld [vmem:[#allocation11 + $0x748] sm:$0xff]
    %v907 = vld [vmem:[#allocation11 + $0x750] sm:$0xff]
    %v908 = vld [vmem:[#allocation11 + $0x758] sm:$0xff]
    %v909 = vld [vmem:[#allocation11 + $0x760] sm:$0xff]
    %v910 = vld [vmem:[#allocation11 + $0x768] sm:$0xff]
    %v911 = vld [vmem:[#allocation11 + $0x770] sm:$0xff]
    %v912 = vld [vmem:[#allocation11 + $0x778] sm:$0xff]
    %v913 = vld [vmem:[#allocation11 + $0x780] sm:$0xff]
    %v914 = vld [vmem:[#allocation11 + $0x788] sm:$0xff]
    %v915 = vld [vmem:[#allocation11 + $0x790] sm:$0xff]
    %v916 = vld [vmem:[#allocation11 + $0x798] sm:$0xff]
    %v917 = vld [vmem:[#allocation11 + $0x7a0] sm:$0xff]
    %v918 = vld [vmem:[#allocation11 + $0x7a8] sm:$0xff]
    %v919 = vld [vmem:[#allocation11 + $0x7b0] sm:$0xff]
    %v920 = vld [vmem:[#allocation11 + $0x7b8] sm:$0xff]
    %v921 = vld [vmem:[#allocation11 + $0x7c0] sm:$0xff]
    %v922 = vld [vmem:[#allocation11 + $0x7c8] sm:$0xff]
    %v923 = vld [vmem:[#allocation11 + $0x7d0] sm:$0xff]
    %v924 = vld [vmem:[#allocation11 + $0x7d8] sm:$0xff]
    %v925 = vld [vmem:[#allocation11 + $0x7e0] sm:$0xff]
    %v926 = vld [vmem:[#allocation11 + $0x7e8] sm:$0xff]
    %v927 = vld [vmem:[#allocation11 + $0x7f0] sm:$0xff]
    %v928 = vld [vmem:[#allocation11 + $0x7f8] sm:$0xff]
    %v929 = vld [vmem:[#allocation11 + $0x400] sm:$0xff]
    %v930 = vld [vmem:[#allocation11 + $0x408] sm:$0xff]
    %v931 = vld [vmem:[#allocation11 + $0x410] sm:$0xff]
    %v932 = vld [vmem:[#allocation11 + $0x418] sm:$0xff]
    %v933 = vld [vmem:[#allocation11 + $0x420] sm:$0xff]
    %v934 = vld [vmem:[#allocation11 + $0x428] sm:$0xff]
    %v935 = vld [vmem:[#allocation11 + $0x430] sm:$0xff]
    %v936 = vld [vmem:[#allocation11 + $0x438] sm:$0xff]
    %v937 = vld [vmem:[#allocation11 + $0x440] sm:$0xff]
    %v938 = vld [vmem:[#allocation11 + $0x448] sm:$0xff]
    %v939 = vld [vmem:[#allocation11 + $0x450] sm:$0xff]
    %v940 = vld [vmem:[#allocation11 + $0x458] sm:$0xff]
    %v941 = vld [vmem:[#allocation11 + $0x460] sm:$0xff]
    %v942 = vld [vmem:[#allocation11 + $0x468] sm:$0xff]
    %v943 = vld [vmem:[#allocation11 + $0x470] sm:$0xff]
    %v944 = vld [vmem:[#allocation11 + $0x478] sm:$0xff]
    %v945 = vld [vmem:[#allocation11 + $0x480] sm:$0xff]
    %v946 = vld [vmem:[#allocation11 + $0x488] sm:$0xff]
    %v947 = vld [vmem:[#allocation11 + $0x490] sm:$0xff]
    %v948 = vld [vmem:[#allocation11 + $0x498] sm:$0xff]
    %v949 = vld [vmem:[#allocation11 + $0x4a0] sm:$0xff]
    %v950 = vld [vmem:[#allocation11 + $0x4a8] sm:$0xff]
    %v951 = vld [vmem:[#allocation11 + $0x4b0] sm:$0xff]
    %v952 = vld [vmem:[#allocation11 + $0x4b8] sm:$0xff]
    %v953 = vld [vmem:[#allocation11 + $0x4c0] sm:$0xff]
    %v954 = vld [vmem:[#allocation11 + $0x4c8] sm:$0xff]
    %v955 = vld [vmem:[#allocation11 + $0x4d0] sm:$0xff]
    %v956 = vld [vmem:[#allocation11 + $0x4d8] sm:$0xff]
    %v957 = vld [vmem:[#allocation11 + $0x4e0] sm:$0xff]
    %v958 = vld [vmem:[#allocation11 + $0x4e8] sm:$0xff]
    %v959 = vld [vmem:[#allocation11 + $0x4f0] sm:$0xff]
    %v960 = vld [vmem:[#allocation11 + $0x4f8] sm:$0xff]
    %v961 = vld [vmem:[#allocation11 + $0x500] sm:$0xff]
    %v962 = vld [vmem:[#allocation11 + $0x508] sm:$0xff]
    %v963 = vld [vmem:[#allocation11 + $0x510] sm:$0xff]
    %v964 = vld [vmem:[#allocation11 + $0x518] sm:$0xff]
    %v965 = vld [vmem:[#allocation11 + $0x520] sm:$0xff]
    %v966 = vld [vmem:[#allocation11 + $0x528] sm:$0xff]
    %v967 = vld [vmem:[#allocation11 + $0x530] sm:$0xff]
    %v968 = vld [vmem:[#allocation11 + $0x538] sm:$0xff]
    %v969 = vld [vmem:[#allocation11 + $0x540] sm:$0xff]
    %v970 = vld [vmem:[#allocation11 + $0x548] sm:$0xff]
    %v971 = vld [vmem:[#allocation11 + $0x550] sm:$0xff]
    %v972 = vld [vmem:[#allocation11 + $0x558] sm:$0xff]
    %v973 = vld [vmem:[#allocation11 + $0x560] sm:$0xff]
    %v974 = vld [vmem:[#allocation11 + $0x568] sm:$0xff]
    %v975 = vld [vmem:[#allocation11 + $0x570] sm:$0xff]
    %v976 = vld [vmem:[#allocation11 + $0x578] sm:$0xff]
    %v977 = vld [vmem:[#allocation11 + $0x580] sm:$0xff]
    %v978 = vld [vmem:[#allocation11 + $0x588] sm:$0xff]
    %v979 = vld [vmem:[#allocation11 + $0x590] sm:$0xff]
    %v980 = vld [vmem:[#allocation11 + $0x598] sm:$0xff]
    %v981 = vld [vmem:[#allocation11 + $0x5a0] sm:$0xff]
    %v982 = vld [vmem:[#allocation11 + $0x5a8] sm:$0xff]
    %v983 = vld [vmem:[#allocation11 + $0x5b0] sm:$0xff]
    %v984 = vld [vmem:[#allocation11 + $0x5b8] sm:$0xff]
    %v985 = vld [vmem:[#allocation11 + $0x5c0] sm:$0xff]
    %v986 = vld [vmem:[#allocation11 + $0x5c8] sm:$0xff]
    %v987 = vld [vmem:[#allocation11 + $0x5d0] sm:$0xff]
    %v988 = vld [vmem:[#allocation11 + $0x5d8] sm:$0xff]
    %v989 = vld [vmem:[#allocation11 + $0x5e0] sm:$0xff]
    %v990 = vld [vmem:[#allocation11 + $0x5e8] sm:$0xff]
    %v991 = vld [vmem:[#allocation11 + $0x5f0] sm:$0xff]
    %v992 = vld [vmem:[#allocation11 + $0x5f8] sm:$0xff]
    %s993 = scalar_lea.vmem [#allocation11], 2049
    %v994 = vld [vmem:[%s993] ss:$8 sm:$0xf]
    %s995 = scalar_lea.vmem [#allocation16], 2
    %v996 = vld [vmem:[%s995] sm:$0x3]
    %v997 = vsel %vm861, %v996, 0.0
    %s998 = scalar_lea.vmem [#allocation17], 2
    %v999 = vld [vmem:[%s998] sm:$0x3]
    %v1000 = vsel %vm861, %v999, 0.0
    %v1001 = vld [vmem:[#allocation2] sm:$0x3]
    %v1002 = vld [vmem:[#allocation2 + $0x8] sm:$0x3]
    %v1003 = vld [vmem:[#allocation2 + $0x10] sm:$0x3]
    %v1004 = vld [vmem:[#allocation2 + $0x18] sm:$0x3]
    %1005 = vmatprep.subr.mxu0 %v797
    %1006 = vmatpush1.msra.mxu0 %v796
    %1007 = vmatprep.subr.mxu0 %v801
    %1008 = vmatpush1.msra.mxu0 %v800
    %1009 = vmatprep.subr.mxu0 %v805
    %1010 = vmatpush1.msra.mxu0 %v804
    %1011 = vmatprep.subr.mxu0 %v809
    %1012 = vmatpush1.msra.mxu0 %v808
    %1013 = vmatprep.subr.mxu0 %v813
    %1014 = vmatpush1.msra.mxu0 %v812
    %1015 = vmatprep.subr.mxu0 %v817
    %1016 = vmatpush1.msra.mxu0 %v816
    %1017 = vmatprep.subr.mxu0 %v821
    %1018 = vmatpush1.msra.mxu0 %v820
    %1019 = vmatprep.subr.mxu0 %v825
    %1020 = vmatpush1.msra.mxu0 %v824
    %1021 = vmatprep.subr.mxu0 %v829
    %1022 = vmatpush1.msra.mxu0 %v828
    %1023 = vmatprep.subr.mxu0 %v833
    %1024 = vmatpush1.msra.mxu0 %v832
    %1025 = vmatprep.subr.mxu0 %v837
    %1026 = vmatpush1.msra.mxu0 %v836
    %1027 = vmatprep.subr.mxu0 %v841
    %1028 = vmatpush1.msra.mxu0 %v840
    %1029 = vmatprep.subr.mxu0 %v845
    %1030 = vmatpush1.msra.mxu0 %v844
    %1031 = vmatprep.subr.mxu0 %v849
    %1032 = vmatpush1.msra.mxu0 %v848
    %1033 = vmatprep.subr.mxu0 %v853
    %1034 = vmatpush1.msra.mxu0 %v852
    %1035 = vmatprep.subr.mxu0 %v857
    %1036 = vmatpush1.msra.mxu0 %v856
    %1037 = vmatprep.subr.mxu0 0.0
    %1038 = vmatpush1.msra.mxu0 0.0
    %1039 = vmatprep.subr.mxu0 0.0
    %1040 = vmatpush1.msra.mxu0 0.0
    %1041 = vmatprep.subr.mxu0 0.0
    %1042 = vmatpush1.msra.mxu0 0.0
    %1043 = vmatprep.subr.mxu0 0.0
    %1044 = vmatpush1.msra.mxu0 0.0
    %1045 = vmatprep.subr.mxu0 0.0
    %1046 = vmatpush1.msra.mxu0 0.0
    %1047 = vmatprep.subr.mxu0 0.0
    %1048 = vmatpush1.msra.mxu0 0.0
    %1049 = vmatprep.subr.mxu0 0.0
    %1050 = vmatpush1.msra.mxu0 0.0
    %1051 = vmatprep.subr.mxu0 0.0
    %1052 = vmatpush1.msra.mxu0 0.0
    %1053 = vmatprep.subr.mxu0 0.0
    %1054 = vmatpush1.msra.mxu0 0.0
    %1055 = vmatprep.subr.mxu0 0.0
    %1056 = vmatpush1.msra.mxu0 0.0
    %1057 = vmatprep.subr.mxu0 0.0
    %1058 = vmatpush1.msra.mxu0 0.0
    %1059 = vmatprep.subr.mxu0 0.0
    %1060 = vmatpush1.msra.mxu0 0.0
    %1061 = vmatprep.subr.mxu0 0.0
    %1062 = vmatpush1.msra.mxu0 0.0
    %1063 = vmatprep.subr.mxu0 0.0
    %1064 = vmatpush1.msra.mxu0 0.0
    %1065 = vmatprep.subr.mxu0 0.0
    %1066 = vmatpush1.msra.mxu0 0.0
    %1067 = vmatprep.subr.mxu0 0.0
    %1068 = vmatpush1.msra.mxu0 0.0
    %1069 = vmatprep.mubr.f32.mxu0 0.0
    %1070 = vmatmul.mubr.f32.gmra.mrb[0].mxu0 %v862
    %v1071 = vpop.f32.mrb[0].mxu0
    %v1072 = vadd.f32 0.0, %v1071
    %v1073 = vpop.f32.mrb[0].mxu0
    %v1074 = vadd.f32 0.0, %v1073
    %1075 = vdwg.mxu0
    %1076 = vmatprep.subr.mxu0 %v799
    %1077 = vmatpush1.msra.mxu0 %v798
    %1078 = vmatprep.subr.mxu0 %v803
    %1079 = vmatpush1.msra.mxu0 %v802
    %1080 = vmatprep.subr.mxu0 %v807
    %1081 = vmatpush1.msra.mxu0 %v806
    %1082 = vmatprep.subr.mxu0 %v811
    %1083 = vmatpush1.msra.mxu0 %v810
    %1084 = vmatprep.subr.mxu0 %v815
    %1085 = vmatpush1.msra.mxu0 %v814
    %1086 = vmatprep.subr.mxu0 %v819
    %1087 = vmatpush1.msra.mxu0 %v818
    %1088 = vmatprep.subr.mxu0 %v823
    %1089 = vmatpush1.msra.mxu0 %v822
    %1090 = vmatprep.subr.mxu0 %v827
    %1091 = vmatpush1.msra.mxu0 %v826
    %1092 = vmatprep.subr.mxu0 %v831
    %1093 = vmatpush1.msra.mxu0 %v830
    %1094 = vmatprep.subr.mxu0 %v835
    %1095 = vmatpush1.msra.mxu0 %v834
    %1096 = vmatprep.subr.mxu0 %v839
    %1097 = vmatpush1.msra.mxu0 %v838
    %1098 = vmatprep.subr.mxu0 %v843
    %1099 = vmatpush1.msra.mxu0 %v842
    %1100 = vmatprep.subr.mxu0 %v847
    %1101 = vmatpush1.msra.mxu0 %v846
    %1102 = vmatprep.subr.mxu0 %v851
    %1103 = vmatpush1.msra.mxu0 %v850
    %1104 = vmatprep.subr.mxu0 %v855
    %1105 = vmatpush1.msra.mxu0 %v854
    %1106 = vmatprep.subr.mxu0 %v859
    %1107 = vmatpush1.msra.mxu0 %v858
    %1108 = vmatprep.subr.mxu0 0.0
    %1109 = vmatpush1.msra.mxu0 0.0
    %1110 = vmatprep.subr.mxu0 0.0
    %1111 = vmatpush1.msra.mxu0 0.0
    %1112 = vmatprep.subr.mxu0 0.0
    %1113 = vmatpush1.msra.mxu0 0.0
    %1114 = vmatprep.subr.mxu0 0.0
    %1115 = vmatpush1.msra.mxu0 0.0
    %1116 = vmatprep.subr.mxu0 0.0
    %1117 = vmatpush1.msra.mxu0 0.0
    %1118 = vmatprep.subr.mxu0 0.0
    %1119 = vmatpush1.msra.mxu0 0.0
    %1120 = vmatprep.subr.mxu0 0.0
    %1121 = vmatpush1.msra.mxu0 0.0
    %1122 = vmatprep.subr.mxu0 0.0
    %1123 = vmatpush1.msra.mxu0 0.0
    %1124 = vmatprep.subr.mxu0 0.0
    %1125 = vmatpush1.msra.mxu0 0.0
    %1126 = vmatprep.subr.mxu0 0.0
    %1127 = vmatpush1.msra.mxu0 0.0
    %1128 = vmatprep.subr.mxu0 0.0
    %1129 = vmatpush1.msra.mxu0 0.0
    %1130 = vmatprep.subr.mxu0 0.0
    %1131 = vmatpush1.msra.mxu0 0.0
    %1132 = vmatprep.subr.mxu0 0.0
    %1133 = vmatpush1.msra.mxu0 0.0
    %1134 = vmatprep.subr.mxu0 0.0
    %1135 = vmatpush1.msra.mxu0 0.0
    %1136 = vmatprep.subr.mxu0 0.0
    %1137 = vmatpush1.msra.mxu0 0.0
    %1138 = vmatprep.subr.mxu0 0.0
    %1139 = vmatpush1.msra.mxu0 0.0
    %1140 = vmatprep.mubr.f32.mxu0 0.0
    %1141 = vmatmul.mubr.f32.gmra.mrb[0].mxu0 %v862
    %v1142 = vpop.f32.mrb[0].mxu0
    %v1143 = vadd.f32 0.0, %v1142
    %v1144 = vpop.f32.mrb[0].mxu0
    %v1145 = vadd.f32 0.0, %v1144
    %1146 = vdwg.mxu0
    %v1147 = vadd.f32 %v1001, %v1072
    %v1148 = vadd.f32 %v1002, %v1074
    %v1149 = vadd.f32 %v1003, %v1143
    %v1150 = vadd.f32 %v1004, %v1145
    %v1151 = vxor.u32 %v1147, 2147483648
    %v1152 = vmul.f32 %v1151, 1.442695
    %v1153 = vpow.pop %v1152
    %v1154 = vadd.f32 %v1153, 1.0
    %v1155 = vrcp.pop %v1154
    %v1156 = vmul.f32 1.0, %v1155
    %v1157 = vxor.u32 %v1148, 2147483648
    %v1158 = vmul.f32 %v1157, 1.442695
    %v1159 = vpow.pop %v1158
    %v1160 = vadd.f32 %v1159, 1.0
    %v1161 = vrcp.pop %v1160
    %v1162 = vmul.f32 1.0, %v1161
    %v1163 = vtanh.pop %v1149
    %v1164 = vxor.u32 %v1150, 2147483648
    %v1165 = vmul.f32 %v1164, 1.442695
    %v1166 = vpow.pop %v1165
    %v1167 = vadd.f32 %v1166, 1.0
    %v1168 = vrcp.pop %v1167
    %v1169 = vmul.f32 1.0, %v1168
    %v1170 = vmul.f32 %v1162, %v864
    %v1171 = vmul.f32 %v1156, %v1163
    %v1172 = vadd.f32 %v1170, %v1171
    %v1173 = vtanh.pop %v1172
    %v1174 = vmul.f32 %v1169, %v1173
    %v1176 = vlaneseq
    %v1177 = vshrl.u32 %v1176, 7
    %v1178 = vsub.s32 0, %v1177
    %v1179 = vrot.slane %v994, %v1178
    %v1180 = vlaneseq
    %v1181 = vshrl.u32 %v1180, 7
    %v1182 = vsub.s32 1, %v1181
    %v1183 = vrot.slane %v994, %v1182
    %v1184 = vlaneseq
    %v1185 = vshrl.u32 %v1184, 7
    %v1186 = vsub.s32 2, %v1185
    %v1187 = vrot.slane %v994, %v1186
    %v1188 = vlaneseq
    %v1189 = vshrl.u32 %v1188, 7
    %v1190 = vsub.s32 3, %v1189
    %v1191 = vrot.slane %v994, %v1190
    %1196 = vmatprep.subr.mxu0 %v930
    %1197 = vmatpush1.msra.mxu0 %v929
    %1198 = vmatprep.subr.mxu0 %v934
    %1199 = vmatpush1.msra.mxu0 %v933
    %1200 = vmatprep.subr.mxu0 %v938
    %1201 = vmatpush1.msra.mxu0 %v937
    %1202 = vmatprep.subr.mxu0 %v942
    %1203 = vmatpush1.msra.mxu0 %v941
    %1204 = vmatprep.subr.mxu0 %v946
    %1205 = vmatpush1.msra.mxu0 %v945
    %1206 = vmatprep.subr.mxu0 %v950
    %1207 = vmatpush1.msra.mxu0 %v949
    %1208 = vmatprep.subr.mxu0 %v954
    %1209 = vmatpush1.msra.mxu0 %v953
    %1210 = vmatprep.subr.mxu0 %v958
    %1211 = vmatpush1.msra.mxu0 %v957
    %1212 = vmatprep.subr.mxu0 %v962
    %1213 = vmatpush1.msra.mxu0 %v961
    %1214 = vmatprep.subr.mxu0 %v966
    %1215 = vmatpush1.msra.mxu0 %v965
    %1216 = vmatprep.subr.mxu0 %v970
    %1217 = vmatpush1.msra.mxu0 %v969
    %1218 = vmatprep.subr.mxu0 %v974
    %1219 = vmatpush1.msra.mxu0 %v973
    %1220 = vmatprep.subr.mxu0 %v978
    %1221 = vmatpush1.msra.mxu0 %v977
    %1222 = vmatprep.subr.mxu0 %v982
    %1223 = vmatpush1.msra.mxu0 %v981
    %1224 = vmatprep.subr.mxu0 %v986
    %1225 = vmatpush1.msra.mxu0 %v985
    %1226 = vmatprep.subr.mxu0 %v990
    %1227 = vmatpush1.msra.mxu0 %v989
    %1228 = vmatprep.subr.mxu0 0.0
    %1229 = vmatpush1.msra.mxu0 0.0
    %1230 = vmatprep.subr.mxu0 0.0
    %1231 = vmatpush1.msra.mxu0 0.0
    %1232 = vmatprep.subr.mxu0 0.0
    %1233 = vmatpush1.msra.mxu0 0.0
    %1234 = vmatprep.subr.mxu0 0.0
    %1235 = vmatpush1.msra.mxu0 0.0
    %1236 = vmatprep.subr.mxu0 0.0
    %1237 = vmatpush1.msra.mxu0 0.0
    %1238 = vmatprep.subr.mxu0 0.0
    %1239 = vmatpush1.msra.mxu0 0.0
    %1240 = vmatprep.subr.mxu0 0.0
    %1241 = vmatpush1.msra.mxu0 0.0
    %1242 = vmatprep.subr.mxu0 0.0
    %1243 = vmatpush1.msra.mxu0 0.0
    %1244 = vmatprep.subr.mxu0 0.0
    %1245 = vmatpush1.msra.mxu0 0.0
    %1246 = vmatprep.subr.mxu0 0.0
    %1247 = vmatpush1.msra.mxu0 0.0
    %1248 = vmatprep.subr.mxu0 0.0
    %1249 = vmatpush1.msra.mxu0 0.0
    %1250 = vmatprep.subr.mxu0 0.0
    %1251 = vmatpush1.msra.mxu0 0.0
    %1252 = vmatprep.subr.mxu0 0.0
    %1253 = vmatpush1.msra.mxu0 0.0
    %1254 = vmatprep.subr.mxu0 0.0
    %1255 = vmatpush1.msra.mxu0 0.0
    %1256 = vmatprep.subr.mxu0 0.0
    %1257 = vmatpush1.msra.mxu0 0.0
    %1258 = vmatprep.subr.mxu0 0.0
    %1259 = vmatpush1.msra.mxu0 0.0
    %1260 = vmatprep.mubr.f32.mxu0 0.0
    %1261 = vmatmul.mubr.f32.gmra.mrb[0].mxu0 %v1174
    %v1262 = vpop.f32.mrb[0].mxu0
    %v1263 = vadd.f32 %v1179, %v1262
    %v1264 = vpop.f32.mrb[0].mxu0
    %v1265 = vadd.f32 %v1183, %v1264
    %1266 = vdwg.mxu0
    %1267 = vmatprep.subr.mxu0 %v932
    %1268 = vmatpush1.msra.mxu0 %v931
    %1269 = vmatprep.subr.mxu0 %v936
    %1270 = vmatpush1.msra.mxu0 %v935
    %1271 = vmatprep.subr.mxu0 %v940
    %1272 = vmatpush1.msra.mxu0 %v939
    %1273 = vmatprep.subr.mxu0 %v944
    %1274 = vmatpush1.msra.mxu0 %v943
    %1275 = vmatprep.subr.mxu0 %v948
    %1276 = vmatpush1.msra.mxu0 %v947
    %1277 = vmatprep.subr.mxu0 %v952
    %1278 = vmatpush1.msra.mxu0 %v951
    %1279 = vmatprep.subr.mxu0 %v956
    %1280 = vmatpush1.msra.mxu0 %v955
    %1281 = vmatprep.subr.mxu0 %v960
    %1282 = vmatpush1.msra.mxu0 %v959
    %1283 = vmatprep.subr.mxu0 %v964
    %1284 = vmatpush1.msra.mxu0 %v963
    %1285 = vmatprep.subr.mxu0 %v968
    %1286 = vmatpush1.msra.mxu0 %v967
    %1287 = vmatprep.subr.mxu0 %v972
    %1288 = vmatpush1.msra.mxu0 %v971
    %1289 = vmatprep.subr.mxu0 %v976
    %1290 = vmatpush1.msra.mxu0 %v975
    %1291 = vmatprep.subr.mxu0 %v980
    %1292 = vmatpush1.msra.mxu0 %v979
    %1293 = vmatprep.subr.mxu0 %v984
    %1294 = vmatpush1.msra.mxu0 %v983
    %1295 = vmatprep.subr.mxu0 %v988
    %1296 = vmatpush1.msra.mxu0 %v987
    %1297 = vmatprep.subr.mxu0 %v992
    %1298 = vmatpush1.msra.mxu0 %v991
    %1299 = vmatprep.subr.mxu0 0.0
    %1300 = vmatpush1.msra.mxu0 0.0
    %1301 = vmatprep.subr.mxu0 0.0
    %1302 = vmatpush1.msra.mxu0 0.0
    %1303 = vmatprep.subr.mxu0 0.0
    %1304 = vmatpush1.msra.mxu0 0.0
    %1305 = vmatprep.subr.mxu0 0.0
    %1306 = vmatpush1.msra.mxu0 0.0
    %1307 = vmatprep.subr.mxu0 0.0
    %1308 = vmatpush1.msra.mxu0 0.0
    %1309 = vmatprep.subr.mxu0 0.0
    %1310 = vmatpush1.msra.mxu0 0.0
    %1311 = vmatprep.subr.mxu0 0.0
    %1312 = vmatpush1.msra.mxu0 0.0
    %1313 = vmatprep.subr.mxu0 0.0
    %1314 = vmatpush1.msra.mxu0 0.0
    %1315 = vmatprep.subr.mxu0 0.0
    %1316 = vmatpush1.msra.mxu0 0.0
    %1317 = vmatprep.subr.mxu0 0.0
    %1318 = vmatpush1.msra.mxu0 0.0
    %1319 = vmatprep.subr.mxu0 0.0
    %1320 = vmatpush1.msra.mxu0 0.0
    %1321 = vmatprep.subr.mxu0 0.0
    %1322 = vmatpush1.msra.mxu0 0.0
    %1323 = vmatprep.subr.mxu0 0.0
    %1324 = vmatpush1.msra.mxu0 0.0
    %1325 = vmatprep.subr.mxu0 0.0
    %1326 = vmatpush1.msra.mxu0 0.0
    %1327 = vmatprep.subr.mxu0 0.0
    %1328 = vmatpush1.msra.mxu0 0.0
    %1329 = vmatprep.subr.mxu0 0.0
    %1330 = vmatpush1.msra.mxu0 0.0
    %1331 = vmatprep.mubr.f32.mxu0 0.0
    %1332 = vmatmul.mubr.f32.gmra.mrb[0].mxu0 %v1174
    %v1333 = vpop.f32.mrb[0].mxu0
    %v1334 = vadd.f32 %v1187, %v1333
    %v1335 = vpop.f32.mrb[0].mxu0
    %v1336 = vadd.f32 %v1191, %v1335
    %1337 = vdwg.mxu0
    %1338 = vmatprep.subr.mxu0 %v866
    %1339 = vmatpush1.msra.mxu0 %v865
    %1340 = vmatprep.subr.mxu0 %v870
    %1341 = vmatpush1.msra.mxu0 %v869
    %1342 = vmatprep.subr.mxu0 %v874
    %1343 = vmatpush1.msra.mxu0 %v873
    %1344 = vmatprep.subr.mxu0 %v878
    %1345 = vmatpush1.msra.mxu0 %v877
    %1346 = vmatprep.subr.mxu0 %v882
    %1347 = vmatpush1.msra.mxu0 %v881
    %1348 = vmatprep.subr.mxu0 %v886
    %1349 = vmatpush1.msra.mxu0 %v885
    %1350 = vmatprep.subr.mxu0 %v890
    %1351 = vmatpush1.msra.mxu0 %v889
    %1352 = vmatprep.subr.mxu0 %v894
    %1353 = vmatpush1.msra.mxu0 %v893
    %1354 = vmatprep.subr.mxu0 %v898
    %1355 = vmatpush1.msra.mxu0 %v897
    %1356 = vmatprep.subr.mxu0 %v902
    %1357 = vmatpush1.msra.mxu0 %v901
    %1358 = vmatprep.subr.mxu0 %v906
    %1359 = vmatpush1.msra.mxu0 %v905
    %1360 = vmatprep.subr.mxu0 %v910
    %1361 = vmatpush1.msra.mxu0 %v909
    %1362 = vmatprep.subr.mxu0 %v914
    %1363 = vmatpush1.msra.mxu0 %v913
    %1364 = vmatprep.subr.mxu0 %v918
    %1365 = vmatpush1.msra.mxu0 %v917
    %1366 = vmatprep.subr.mxu0 %v922
    %1367 = vmatpush1.msra.mxu0 %v921
    %1368 = vmatprep.subr.mxu0 %v926
    %1369 = vmatpush1.msra.mxu0 %v925
    %1370 = vmatprep.subr.mxu0 0.0
    %1371 = vmatpush1.msra.mxu0 0.0
    %1372 = vmatprep.subr.mxu0 0.0
    %1373 = vmatpush1.msra.mxu0 0.0
    %1374 = vmatprep.subr.mxu0 0.0
    %1375 = vmatpush1.msra.mxu0 0.0
    %1376 = vmatprep.subr.mxu0 0.0
    %1377 = vmatpush1.msra.mxu0 0.0
    %1378 = vmatprep.subr.mxu0 0.0
    %1379 = vmatpush1.msra.mxu0 0.0
    %1380 = vmatprep.subr.mxu0 0.0
    %1381 = vmatpush1.msra.mxu0 0.0
    %1382 = vmatprep.subr.mxu0 0.0
    %1383 = vmatpush1.msra.mxu0 0.0
    %1384 = vmatprep.subr.mxu0 0.0
    %1385 = vmatpush1.msra.mxu0 0.0
    %1386 = vmatprep.subr.mxu0 0.0
    %1387 = vmatpush1.msra.mxu0 0.0
    %1388 = vmatprep.subr.mxu0 0.0
    %1389 = vmatpush1.msra.mxu0 0.0
    %1390 = vmatprep.subr.mxu0 0.0
    %1391 = vmatpush1.msra.mxu0 0.0
    %1392 = vmatprep.subr.mxu0 0.0
    %1393 = vmatpush1.msra.mxu0 0.0
    %1394 = vmatprep.subr.mxu0 0.0
    %1395 = vmatpush1.msra.mxu0 0.0
    %1396 = vmatprep.subr.mxu0 0.0
    %1397 = vmatpush1.msra.mxu0 0.0
    %1398 = vmatprep.subr.mxu0 0.0
    %1399 = vmatpush1.msra.mxu0 0.0
    %1400 = vmatprep.subr.mxu0 0.0
    %1401 = vmatpush1.msra.mxu0 0.0
    %1402 = vmatprep.mubr.f32.mxu0 0.0
    %1403 = vmatmul.mubr.f32.gmra.mrb[0].mxu0 %v997
    %v1404 = vpop.f32.mrb[0].mxu0
    %v1405 = vadd.f32 0.0, %v1404
    %v1406 = vpop.f32.mrb[0].mxu0
    %v1407 = vadd.f32 0.0, %v1406
    %1408 = vdwg.mxu0
    %1409 = vmatprep.subr.mxu0 %v868
    %1410 = vmatpush1.msra.mxu0 %v867
    %1411 = vmatprep.subr.mxu0 %v872
    %1412 = vmatpush1.msra.mxu0 %v871
    %1413 = vmatprep.subr.mxu0 %v876
    %1414 = vmatpush1.msra.mxu0 %v875
    %1415 = vmatprep.subr.mxu0 %v880
    %1416 = vmatpush1.msra.mxu0 %v879
    %1417 = vmatprep.subr.mxu0 %v884
    %1418 = vmatpush1.msra.mxu0 %v883
    %1419 = vmatprep.subr.mxu0 %v888
    %1420 = vmatpush1.msra.mxu0 %v887
    %1421 = vmatprep.subr.mxu0 %v892
    %1422 = vmatpush1.msra.mxu0 %v891
    %1423 = vmatprep.subr.mxu0 %v896
    %1424 = vmatpush1.msra.mxu0 %v895
    %1425 = vmatprep.subr.mxu0 %v900
    %1426 = vmatpush1.msra.mxu0 %v899
    %1427 = vmatprep.subr.mxu0 %v904
    %1428 = vmatpush1.msra.mxu0 %v903
    %1429 = vmatprep.subr.mxu0 %v908
    %1430 = vmatpush1.msra.mxu0 %v907
    %1431 = vmatprep.subr.mxu0 %v912
    %1432 = vmatpush1.msra.mxu0 %v911
    %1433 = vmatprep.subr.mxu0 %v916
    %1434 = vmatpush1.msra.mxu0 %v915
    %1435 = vmatprep.subr.mxu0 %v920
    %1436 = vmatpush1.msra.mxu0 %v919
    %1437 = vmatprep.subr.mxu0 %v924
    %1438 = vmatpush1.msra.mxu0 %v923
    %1439 = vmatprep.subr.mxu0 %v928
    %1440 = vmatpush1.msra.mxu0 %v927
    %1441 = vmatprep.subr.mxu0 0.0
    %1442 = vmatpush1.msra.mxu0 0.0
    %1443 = vmatprep.subr.mxu0 0.0
    %1444 = vmatpush1.msra.mxu0 0.0
    %1445 = vmatprep.subr.mxu0 0.0
    %1446 = vmatpush1.msra.mxu0 0.0
    %1447 = vmatprep.subr.mxu0 0.0
    %1448 = vmatpush1.msra.mxu0 0.0
    %1449 = vmatprep.subr.mxu0 0.0
    %1450 = vmatpush1.msra.mxu0 0.0
    %1451 = vmatprep.subr.mxu0 0.0
    %1452 = vmatpush1.msra.mxu0 0.0
    %1453 = vmatprep.subr.mxu0 0.0
    %1454 = vmatpush1.msra.mxu0 0.0
    %1455 = vmatprep.subr.mxu0 0.0
    %1456 = vmatpush1.msra.mxu0 0.0
    %1457 = vmatprep.subr.mxu0 0.0
    %1458 = vmatpush1.msra.mxu0 0.0
    %1459 = vmatprep.subr.mxu0 0.0
    %1460 = vmatpush1.msra.mxu0 0.0
    %1461 = vmatprep.subr.mxu0 0.0
    %1462 = vmatpush1.msra.mxu0 0.0
    %1463 = vmatprep.subr.mxu0 0.0
    %1464 = vmatpush1.msra.mxu0 0.0
    %1465 = vmatprep.subr.mxu0 0.0
    %1466 = vmatpush1.msra.mxu0 0.0
    %1467 = vmatprep.subr.mxu0 0.0
    %1468 = vmatpush1.msra.mxu0 0.0
    %1469 = vmatprep.subr.mxu0 0.0
    %1470 = vmatpush1.msra.mxu0 0.0
    %1471 = vmatprep.subr.mxu0 0.0
    %1472 = vmatpush1.msra.mxu0 0.0
    %1473 = vmatprep.mubr.f32.mxu0 0.0
    %1474 = vmatmul.mubr.f32.gmra.mrb[0].mxu0 %v997
    %v1475 = vpop.f32.mrb[0].mxu0
    %v1476 = vadd.f32 0.0, %v1475
    %v1477 = vpop.f32.mrb[0].mxu0
    %v1478 = vadd.f32 0.0, %v1477
    %1479 = vdwg.mxu0
    %v1480 = vadd.f32 %v1263, %v1405
    %v1481 = vadd.f32 %v1265, %v1407
    %v1482 = vadd.f32 %v1334, %v1476
    %v1483 = vadd.f32 %v1336, %v1478
    %v1484 = vxor.u32 %v1480, 2147483648
    %v1485 = vmul.f32 %v1484, 1.442695
    %v1486 = vpow.pop %v1485
    %v1487 = vadd.f32 %v1486, 1.0
    %v1488 = vrcp.pop %v1487
    %v1489 = vmul.f32 1.0, %v1488
    %v1490 = vxor.u32 %v1481, 2147483648
    %v1491 = vmul.f32 %v1490, 1.442695
    %v1492 = vpow.pop %v1491
    %v1493 = vadd.f32 %v1492, 1.0
    %v1494 = vrcp.pop %v1493
    %v1495 = vmul.f32 1.0, %v1494
    %v1496 = vtanh.pop %v1482
    %v1497 = vxor.u32 %v1483, 2147483648
    %v1498 = vmul.f32 %v1497, 1.442695
    %v1499 = vpow.pop %v1498
    %v1500 = vadd.f32 %v1499, 1.0
    %v1501 = vrcp.pop %v1500
    %v1502 = vmul.f32 1.0, %v1501
    %v1503 = vmul.f32 %v1495, %v1000
    %v1504 = vmul.f32 %v1489, %v1496
    %v1505 = vadd.f32 %v1503, %v1504
    %v1506 = vtanh.pop %v1505
    %v1507 = vmul.f32 %v1502, %v1506
    %1508 = vst [vmem:[#allocation3] sm:$0x1] %v1507
    %1509 = vst [vmem:[#allocation3 + $0x7] sm:$0x2] %v1507
    %v1510 = vld [vmem:[#allocation2] sm:$0xc]
    %v1511 = vld [vmem:[#allocation2 + $0x8] sm:$0xc]
    %v1512 = vld [vmem:[#allocation2 + $0x10] sm:$0xc]
    %v1513 = vld [vmem:[#allocation2 + $0x18] sm:$0xc]
    %1514 = vmatprep.subr.mxu0 %v797
    %1515 = vmatpush1.msra.mxu0 %v796
    %1516 = vmatprep.subr.mxu0 %v801
    %1517 = vmatpush1.msra.mxu0 %v800
    %1518 = vmatprep.subr.mxu0 %v805
    %1519 = vmatpush1.msra.mxu0 %v804
    %1520 = vmatprep.subr.mxu0 %v809
    %1521 = vmatpush1.msra.mxu0 %v808
    %1522 = vmatprep.subr.mxu0 %v813
    %1523 = vmatpush1.msra.mxu0 %v812
    %1524 = vmatprep.subr.mxu0 %v817
    %1525 = vmatpush1.msra.mxu0 %v816
    %1526 = vmatprep.subr.mxu0 %v821
    %1527 = vmatpush1.msra.mxu0 %v820
    %1528 = vmatprep.subr.mxu0 %v825
    %1529 = vmatpush1.msra.mxu0 %v824
    %1530 = vmatprep.subr.mxu0 %v829
    %1531 = vmatpush1.msra.mxu0 %v828
    %1532 = vmatprep.subr.mxu0 %v833
    %1533 = vmatpush1.msra.mxu0 %v832
    %1534 = vmatprep.subr.mxu0 %v837
    %1535 = vmatpush1.msra.mxu0 %v836
    %1536 = vmatprep.subr.mxu0 %v841
    %1537 = vmatpush1.msra.mxu0 %v840
    %1538 = vmatprep.subr.mxu0 %v845
    %1539 = vmatpush1.msra.mxu0 %v844
    %1540 = vmatprep.subr.mxu0 %v849
    %1541 = vmatpush1.msra.mxu0 %v848
    %1542 = vmatprep.subr.mxu0 %v853
    %1543 = vmatpush1.msra.mxu0 %v852
    %1544 = vmatprep.subr.mxu0 %v857
    %1545 = vmatpush1.msra.mxu0 %v856
    %1546 = vmatprep.subr.mxu0 0.0
    %1547 = vmatpush1.msra.mxu0 0.0
    %1548 = vmatprep.subr.mxu0 0.0
    %1549 = vmatpush1.msra.mxu0 0.0
    %1550 = vmatprep.subr.mxu0 0.0
    %1551 = vmatpush1.msra.mxu0 0.0
    %1552 = vmatprep.subr.mxu0 0.0
    %1553 = vmatpush1.msra.mxu0 0.0
    %1554 = vmatprep.subr.mxu0 0.0
    %1555 = vmatpush1.msra.mxu0 0.0
    %1556 = vmatprep.subr.mxu0 0.0
    %1557 = vmatpush1.msra.mxu0 0.0
    %1558 = vmatprep.subr.mxu0 0.0
    %1559 = vmatpush1.msra.mxu0 0.0
    %1560 = vmatprep.subr.mxu0 0.0
    %1561 = vmatpush1.msra.mxu0 0.0
    %1562 = vmatprep.subr.mxu0 0.0
    %1563 = vmatpush1.msra.mxu0 0.0
    %1564 = vmatprep.subr.mxu0 0.0
    %1565 = vmatpush1.msra.mxu0 0.0
    %1566 = vmatprep.subr.mxu0 0.0
    %1567 = vmatpush1.msra.mxu0 0.0
    %1568 = vmatprep.subr.mxu0 0.0
    %1569 = vmatpush1.msra.mxu0 0.0
    %1570 = vmatprep.subr.mxu0 0.0
    %1571 = vmatpush1.msra.mxu0 0.0
    %1572 = vmatprep.subr.mxu0 0.0
    %1573 = vmatpush1.msra.mxu0 0.0
    %1574 = vmatprep.subr.mxu0 0.0
    %1575 = vmatpush1.msra.mxu0 0.0
    %1576 = vmatprep.subr.mxu0 0.0
    %1577 = vmatpush1.msra.mxu0 0.0
    %1578 = vmatprep.mubr.f32.mxu0 0.0
    %1579 = vmatmul.mubr.f32.gmra.mrb[0].mxu0 %v1174
    %v1580 = vpop.f32.mrb[0].mxu0
    %v1581 = vadd.f32 0.0, %v1580
    %v1582 = vpop.f32.mrb[0].mxu0
    %v1583 = vadd.f32 0.0, %v1582
    %1584 = vdwg.mxu0
    %1585 = vmatprep.subr.mxu0 %v799
    %1586 = vmatpush1.msra.mxu0 %v798
    %1587 = vmatprep.subr.mxu0 %v803
    %1588 = vmatpush1.msra.mxu0 %v802
    %1589 = vmatprep.subr.mxu0 %v807
    %1590 = vmatpush1.msra.mxu0 %v806
    %1591 = vmatprep.subr.mxu0 %v811
    %1592 = vmatpush1.msra.mxu0 %v810
    %1593 = vmatprep.subr.mxu0 %v815
    %1594 = vmatpush1.msra.mxu0 %v814
    %1595 = vmatprep.subr.mxu0 %v819
    %1596 = vmatpush1.msra.mxu0 %v818
    %1597 = vmatprep.subr.mxu0 %v823
    %1598 = vmatpush1.msra.mxu0 %v822
    %1599 = vmatprep.subr.mxu0 %v827
    %1600 = vmatpush1.msra.mxu0 %v826
    %1601 = vmatprep.subr.mxu0 %v831
    %1602 = vmatpush1.msra.mxu0 %v830
    %1603 = vmatprep.subr.mxu0 %v835
    %1604 = vmatpush1.msra.mxu0 %v834
    %1605 = vmatprep.subr.mxu0 %v839
    %1606 = vmatpush1.msra.mxu0 %v838
    %1607 = vmatprep.subr.mxu0 %v843
    %1608 = vmatpush1.msra.mxu0 %v842
    %1609 = vmatprep.subr.mxu0 %v847
    %1610 = vmatpush1.msra.mxu0 %v846
    %1611 = vmatprep.subr.mxu0 %v851
    %1612 = vmatpush1.msra.mxu0 %v850
    %1613 = vmatprep.subr.mxu0 %v855
    %1614 = vmatpush1.msra.mxu0 %v854
    %1615 = vmatprep.subr.mxu0 %v859
    %1616 = vmatpush1.msra.mxu0 %v858
    %1617 = vmatprep.subr.mxu0 0.0
    %1618 = vmatpush1.msra.mxu0 0.0
    %1619 = vmatprep.subr.mxu0 0.0
    %1620 = vmatpush1.msra.mxu0 0.0
    %1621 = vmatprep.subr.mxu0 0.0
    %1622 = vmatpush1.msra.mxu0 0.0
    %1623 = vmatprep.subr.mxu0 0.0
    %1624 = vmatpush1.msra.mxu0 0.0
    %1625 = vmatprep.subr.mxu0 0.0
    %1626 = vmatpush1.msra.mxu0 0.0
    %1627 = vmatprep.subr.mxu0 0.0
    %1628 = vmatpush1.msra.mxu0 0.0
    %1629 = vmatprep.subr.mxu0 0.0
    %1630 = vmatpush1.msra.mxu0 0.0
    %1631 = vmatprep.subr.mxu0 0.0
    %1632 = vmatpush1.msra.mxu0 0.0
    %1633 = vmatprep.subr.mxu0 0.0
    %1634 = vmatpush1.msra.mxu0 0.0
    %1635 = vmatprep.subr.mxu0 0.0
    %1636 = vmatpush1.msra.mxu0 0.0
    %1637 = vmatprep.subr.mxu0 0.0
    %1638 = vmatpush1.msra.mxu0 0.0
    %1639 = vmatprep.subr.mxu0 0.0
    %1640 = vmatpush1.msra.mxu0 0.0
    %1641 = vmatprep.subr.mxu0 0.0
    %1642 = vmatpush1.msra.mxu0 0.0
    %1643 = vmatprep.subr.mxu0 0.0
    %1644 = vmatpush1.msra.mxu0 0.0
    %1645 = vmatprep.subr.mxu0 0.0
    %1646 = vmatpush1.msra.mxu0 0.0
    %1647 = vmatprep.subr.mxu0 0.0
    %1648 = vmatpush1.msra.mxu0 0.0
    %1649 = vmatprep.mubr.f32.mxu0 0.0
    %1650 = vmatmul.mubr.f32.gmra.mrb[0].mxu0 %v1174
    %v1651 = vpop.f32.mrb[0].mxu0
    %v1652 = vadd.f32 0.0, %v1651
    %v1653 = vpop.f32.mrb[0].mxu0
    %v1654 = vadd.f32 0.0, %v1653
    %1655 = vdwg.mxu0
    %v1660 = vrot.slane %v1581, 6
    %v1661 = vrot.slane %v1583, 6
    %v1662 = vrot.slane %v1652, 6
    %v1663 = vrot.slane %v1654, 6
    %v1668 = vadd.f32 %v1510, %v1660
    %v1669 = vadd.f32 %v1511, %v1661
    %v1670 = vadd.f32 %v1512, %v1662
    %v1671 = vadd.f32 %v1513, %v1663
    %v1672 = vxor.u32 %v1668, 2147483648
    %v1673 = vmul.f32 %v1672, 1.442695
    %v1674 = vpow.pop %v1673
    %v1675 = vadd.f32 %v1674, 1.0
    %v1676 = vrcp.pop %v1675
    %v1677 = vmul.f32 1.0, %v1676
    %v1678 = vxor.u32 %v1669, 2147483648
    %v1679 = vmul.f32 %v1678, 1.442695
    %v1680 = vpow.pop %v1679
    %v1681 = vadd.f32 %v1680, 1.0
    %v1682 = vrcp.pop %v1681
    %v1683 = vmul.f32 1.0, %v1682
    %v1684 = vtanh.pop %v1670
    %v1685 = vxor.u32 %v1671, 2147483648
    %v1686 = vmul.f32 %v1685, 1.442695
    %v1687 = vpow.pop %v1686
    %v1688 = vadd.f32 %v1687, 1.0
    %v1689 = vrcp.pop %v1688
    %v1690 = vmul.f32 1.0, %v1689
    %v1692 = vrot.slane %v1172, 6
    %v1694 = vmul.f32 %v1683, %v1692
    %v1695 = vmul.f32 %v1677, %v1684
    %v1696 = vadd.f32 %v1694, %v1695
    %v1697 = vtanh.pop %v1696
    %v1698 = vmul.f32 %v1690, %v1697
    %v1700 = vrot.slane %v1698, 2
    %1702 = vmatprep.subr.mxu0 %v930
    %1703 = vmatpush1.msra.mxu0 %v929
    %1704 = vmatprep.subr.mxu0 %v934
    %1705 = vmatpush1.msra.mxu0 %v933
    %1706 = vmatprep.subr.mxu0 %v938
    %1707 = vmatpush1.msra.mxu0 %v937
    %1708 = vmatprep.subr.mxu0 %v942
    %1709 = vmatpush1.msra.mxu0 %v941
    %1710 = vmatprep.subr.mxu0 %v946
    %1711 = vmatpush1.msra.mxu0 %v945
    %1712 = vmatprep.subr.mxu0 %v950
    %1713 = vmatpush1.msra.mxu0 %v949
    %1714 = vmatprep.subr.mxu0 %v954
    %1715 = vmatpush1.msra.mxu0 %v953
    %1716 = vmatprep.subr.mxu0 %v958
    %1717 = vmatpush1.msra.mxu0 %v957
    %1718 = vmatprep.subr.mxu0 %v962
    %1719 = vmatpush1.msra.mxu0 %v961
    %1720 = vmatprep.subr.mxu0 %v966
    %1721 = vmatpush1.msra.mxu0 %v965
    %1722 = vmatprep.subr.mxu0 %v970
    %1723 = vmatpush1.msra.mxu0 %v969
    %1724 = vmatprep.subr.mxu0 %v974
    %1725 = vmatpush1.msra.mxu0 %v973
    %1726 = vmatprep.subr.mxu0 %v978
    %1727 = vmatpush1.msra.mxu0 %v977
    %1728 = vmatprep.subr.mxu0 %v982
    %1729 = vmatpush1.msra.mxu0 %v981
    %1730 = vmatprep.subr.mxu0 %v986
    %1731 = vmatpush1.msra.mxu0 %v985
    %1732 = vmatprep.subr.mxu0 %v990
    %1733 = vmatpush1.msra.mxu0 %v989
    %1734 = vmatprep.subr.mxu0 0.0
    %1735 = vmatpush1.msra.mxu0 0.0
    %1736 = vmatprep.subr.mxu0 0.0
    %1737 = vmatpush1.msra.mxu0 0.0
    %1738 = vmatprep.subr.mxu0 0.0
    %1739 = vmatpush1.msra.mxu0 0.0
    %1740 = vmatprep.subr.mxu0 0.0
    %1741 = vmatpush1.msra.mxu0 0.0
    %1742 = vmatprep.subr.mxu0 0.0
    %1743 = vmatpush1.msra.mxu0 0.0
    %1744 = vmatprep.subr.mxu0 0.0
    %1745 = vmatpush1.msra.mxu0 0.0
    %1746 = vmatprep.subr.mxu0 0.0
    %1747 = vmatpush1.msra.mxu0 0.0
    %1748 = vmatprep.subr.mxu0 0.0
    %1749 = vmatpush1.msra.mxu0 0.0
    %1750 = vmatprep.subr.mxu0 0.0
    %1751 = vmatpush1.msra.mxu0 0.0
    %1752 = vmatprep.subr.mxu0 0.0
    %1753 = vmatpush1.msra.mxu0 0.0
    %1754 = vmatprep.subr.mxu0 0.0
    %1755 = vmatpush1.msra.mxu0 0.0
    %1756 = vmatprep.subr.mxu0 0.0
    %1757 = vmatpush1.msra.mxu0 0.0
    %1758 = vmatprep.subr.mxu0 0.0
    %1759 = vmatpush1.msra.mxu0 0.0
    %1760 = vmatprep.subr.mxu0 0.0
    %1761 = vmatpush1.msra.mxu0 0.0
    %1762 = vmatprep.subr.mxu0 0.0
    %1763 = vmatpush1.msra.mxu0 0.0
    %1764 = vmatprep.subr.mxu0 0.0
    %1765 = vmatpush1.msra.mxu0 0.0
    %1766 = vmatprep.mubr.f32.mxu0 0.0
    %1767 = vmatmul.mubr.f32.gmra.mrb[0].mxu0 %v1700
    %v1768 = vpop.f32.mrb[0].mxu0
    %v1769 = vadd.f32 %v1179, %v1768
    %v1770 = vpop.f32.mrb[0].mxu0
    %v1771 = vadd.f32 %v1183, %v1770
    %1772 = vdwg.mxu0
    %1773 = vmatprep.subr.mxu0 %v932
    %1774 = vmatpush1.msra.mxu0 %v931
    %1775 = vmatprep.subr.mxu0 %v936
    %1776 = vmatpush1.msra.mxu0 %v935
    %1777 = vmatprep.subr.mxu0 %v940
    %1778 = vmatpush1.msra.mxu0 %v939
    %1779 = vmatprep.subr.mxu0 %v944
    %1780 = vmatpush1.msra.mxu0 %v943
    %1781 = vmatprep.subr.mxu0 %v948
    %1782 = vmatpush1.msra.mxu0 %v947
    %1783 = vmatprep.subr.mxu0 %v952
    %1784 = vmatpush1.msra.mxu0 %v951
    %1785 = vmatprep.subr.mxu0 %v956
    %1786 = vmatpush1.msra.mxu0 %v955
    %1787 = vmatprep.subr.mxu0 %v960
    %1788 = vmatpush1.msra.mxu0 %v959
    %1789 = vmatprep.subr.mxu0 %v964
    %1790 = vmatpush1.msra.mxu0 %v963
    %1791 = vmatprep.subr.mxu0 %v968
    %1792 = vmatpush1.msra.mxu0 %v967
    %1793 = vmatprep.subr.mxu0 %v972
    %1794 = vmatpush1.msra.mxu0 %v971
    %1795 = vmatprep.subr.mxu0 %v976
    %1796 = vmatpush1.msra.mxu0 %v975
    %1797 = vmatprep.subr.mxu0 %v980
    %1798 = vmatpush1.msra.mxu0 %v979
    %1799 = vmatprep.subr.mxu0 %v984
    %1800 = vmatpush1.msra.mxu0 %v983
    %1801 = vmatprep.subr.mxu0 %v988
    %1802 = vmatpush1.msra.mxu0 %v987
    %1803 = vmatprep.subr.mxu0 %v992
    %1804 = vmatpush1.msra.mxu0 %v991
    %1805 = vmatprep.subr.mxu0 0.0
    %1806 = vmatpush1.msra.mxu0 0.0
    %1807 = vmatprep.subr.mxu0 0.0
    %1808 = vmatpush1.msra.mxu0 0.0
    %1809 = vmatprep.subr.mxu0 0.0
    %1810 = vmatpush1.msra.mxu0 0.0
    %1811 = vmatprep.subr.mxu0 0.0
    %1812 = vmatpush1.msra.mxu0 0.0
    %1813 = vmatprep.subr.mxu0 0.0
    %1814 = vmatpush1.msra.mxu0 0.0
    %1815 = vmatprep.subr.mxu0 0.0
    %1816 = vmatpush1.msra.mxu0 0.0
    %1817 = vmatprep.subr.mxu0 0.0
    %1818 = vmatpush1.msra.mxu0 0.0
    %1819 = vmatprep.subr.mxu0 0.0
    %1820 = vmatpush1.msra.mxu0 0.0
    %1821 = vmatprep.subr.mxu0 0.0
    %1822 = vmatpush1.msra.mxu0 0.0
    %1823 = vmatprep.subr.mxu0 0.0
    %1824 = vmatpush1.msra.mxu0 0.0
    %1825 = vmatprep.subr.mxu0 0.0
    %1826 = vmatpush1.msra.mxu0 0.0
    %1827 = vmatprep.subr.mxu0 0.0
    %1828 = vmatpush1.msra.mxu0 0.0
    %1829 = vmatprep.subr.mxu0 0.0
    %1830 = vmatpush1.msra.mxu0 0.0
    %1831 = vmatprep.subr.mxu0 0.0
    %1832 = vmatpush1.msra.mxu0 0.0
    %1833 = vmatprep.subr.mxu0 0.0
    %1834 = vmatpush1.msra.mxu0 0.0
    %1835 = vmatprep.subr.mxu0 0.0
    %1836 = vmatpush1.msra.mxu0 0.0
    %1837 = vmatprep.mubr.f32.mxu0 0.0
    %1838 = vmatmul.mubr.f32.gmra.mrb[0].mxu0 %v1700
    %v1839 = vpop.f32.mrb[0].mxu0
    %v1840 = vadd.f32 %v1187, %v1839
    %v1841 = vpop.f32.mrb[0].mxu0
    %v1842 = vadd.f32 %v1191, %v1841
    %1843 = vdwg.mxu0
    %1844 = vmatprep.subr.mxu0 %v866
    %1845 = vmatpush1.msra.mxu0 %v865
    %1846 = vmatprep.subr.mxu0 %v870
    %1847 = vmatpush1.msra.mxu0 %v869
    %1848 = vmatprep.subr.mxu0 %v874
    %1849 = vmatpush1.msra.mxu0 %v873
    %1850 = vmatprep.subr.mxu0 %v878
    %1851 = vmatpush1.msra.mxu0 %v877
    %1852 = vmatprep.subr.mxu0 %v882
    %1853 = vmatpush1.msra.mxu0 %v881
    %1854 = vmatprep.subr.mxu0 %v886
    %1855 = vmatpush1.msra.mxu0 %v885
    %1856 = vmatprep.subr.mxu0 %v890
    %1857 = vmatpush1.msra.mxu0 %v889
    %1858 = vmatprep.subr.mxu0 %v894
    %1859 = vmatpush1.msra.mxu0 %v893
    %1860 = vmatprep.subr.mxu0 %v898
    %1861 = vmatpush1.msra.mxu0 %v897
    %1862 = vmatprep.subr.mxu0 %v902
    %1863 = vmatpush1.msra.mxu0 %v901
    %1864 = vmatprep.subr.mxu0 %v906
    %1865 = vmatpush1.msra.mxu0 %v905
    %1866 = vmatprep.subr.mxu0 %v910
    %1867 = vmatpush1.msra.mxu0 %v909
    %1868 = vmatprep.subr.mxu0 %v914
    %1869 = vmatpush1.msra.mxu0 %v913
    %1870 = vmatprep.subr.mxu0 %v918
    %1871 = vmatpush1.msra.mxu0 %v917
    %1872 = vmatprep.subr.mxu0 %v922
    %1873 = vmatpush1.msra.mxu0 %v921
    %1874 = vmatprep.subr.mxu0 %v926
    %1875 = vmatpush1.msra.mxu0 %v925
    %1876 = vmatprep.subr.mxu0 0.0
    %1877 = vmatpush1.msra.mxu0 0.0
    %1878 = vmatprep.subr.mxu0 0.0
    %1879 = vmatpush1.msra.mxu0 0.0
    %1880 = vmatprep.subr.mxu0 0.0
    %1881 = vmatpush1.msra.mxu0 0.0
    %1882 = vmatprep.subr.mxu0 0.0
    %1883 = vmatpush1.msra.mxu0 0.0
    %1884 = vmatprep.subr.mxu0 0.0
    %1885 = vmatpush1.msra.mxu0 0.0
    %1886 = vmatprep.subr.mxu0 0.0
    %1887 = vmatpush1.msra.mxu0 0.0
    %1888 = vmatprep.subr.mxu0 0.0
    %1889 = vmatpush1.msra.mxu0 0.0
    %1890 = vmatprep.subr.mxu0 0.0
    %1891 = vmatpush1.msra.mxu0 0.0
    %1892 = vmatprep.subr.mxu0 0.0
    %1893 = vmatpush1.msra.mxu0 0.0
    %1894 = vmatprep.subr.mxu0 0.0
    %1895 = vmatpush1.msra.mxu0 0.0
    %1896 = vmatprep.subr.mxu0 0.0
    %1897 = vmatpush1.msra.mxu0 0.0
    %1898 = vmatprep.subr.mxu0 0.0
    %1899 = vmatpush1.msra.mxu0 0.0
    %1900 = vmatprep.subr.mxu0 0.0
    %1901 = vmatpush1.msra.mxu0 0.0
    %1902 = vmatprep.subr.mxu0 0.0
    %1903 = vmatpush1.msra.mxu0 0.0
    %1904 = vmatprep.subr.mxu0 0.0
    %1905 = vmatpush1.msra.mxu0 0.0
    %1906 = vmatprep.subr.mxu0 0.0
    %1907 = vmatpush1.msra.mxu0 0.0
    %1908 = vmatprep.mubr.f32.mxu0 0.0
    %1909 = vmatmul.mubr.f32.gmra.mrb[0].mxu0 %v1507
    %v1910 = vpop.f32.mrb[0].mxu0
    %v1911 = vadd.f32 0.0, %v1910
    %v1912 = vpop.f32.mrb[0].mxu0
    %v1913 = vadd.f32 0.0, %v1912
    %1914 = vdwg.mxu0
    %1915 = vmatprep.subr.mxu0 %v868
    %1916 = vmatpush1.msra.mxu0 %v867
    %1917 = vmatprep.subr.mxu0 %v872
    %1918 = vmatpush1.msra.mxu0 %v871
    %1919 = vmatprep.subr.mxu0 %v876
    %1920 = vmatpush1.msra.mxu0 %v875
    %1921 = vmatprep.subr.mxu0 %v880
    %1922 = vmatpush1.msra.mxu0 %v879
    %1923 = vmatprep.subr.mxu0 %v884
    %1924 = vmatpush1.msra.mxu0 %v883
    %1925 = vmatprep.subr.mxu0 %v888
    %1926 = vmatpush1.msra.mxu0 %v887
    %1927 = vmatprep.subr.mxu0 %v892
    %1928 = vmatpush1.msra.mxu0 %v891
    %1929 = vmatprep.subr.mxu0 %v896
    %1930 = vmatpush1.msra.mxu0 %v895
    %1931 = vmatprep.subr.mxu0 %v900
    %1932 = vmatpush1.msra.mxu0 %v899
    %1933 = vmatprep.subr.mxu0 %v904
    %1934 = vmatpush1.msra.mxu0 %v903
    %1935 = vmatprep.subr.mxu0 %v908
    %1936 = vmatpush1.msra.mxu0 %v907
    %1937 = vmatprep.subr.mxu0 %v912
    %1938 = vmatpush1.msra.mxu0 %v911
    %1939 = vmatprep.subr.mxu0 %v916
    %1940 = vmatpush1.msra.mxu0 %v915
    %1941 = vmatprep.subr.mxu0 %v920
    %1942 = vmatpush1.msra.mxu0 %v919
    %1943 = vmatprep.subr.mxu0 %v924
    %1944 = vmatpush1.msra.mxu0 %v923
    %1945 = vmatprep.subr.mxu0 %v928
    %1946 = vmatpush1.msra.mxu0 %v927
    %1947 = vmatprep.subr.mxu0 0.0
    %1948 = vmatpush1.msra.mxu0 0.0
    %1949 = vmatprep.subr.mxu0 0.0
    %1950 = vmatpush1.msra.mxu0 0.0
    %1951 = vmatprep.subr.mxu0 0.0
    %1952 = vmatpush1.msra.mxu0 0.0
    %1953 = vmatprep.subr.mxu0 0.0
    %1954 = vmatpush1.msra.mxu0 0.0
    %1955 = vmatprep.subr.mxu0 0.0
    %1956 = vmatpush1.msra.mxu0 0.0
    %1957 = vmatprep.subr.mxu0 0.0
    %1958 = vmatpush1.msra.mxu0 0.0
    %1959 = vmatprep.subr.mxu0 0.0
    %1960 = vmatpush1.msra.mxu0 0.0
    %1961 = vmatprep.subr.mxu0 0.0
    %1962 = vmatpush1.msra.mxu0 0.0
    %1963 = vmatprep.subr.mxu0 0.0
    %1964 = vmatpush1.msra.mxu0 0.0
    %1965 = vmatprep.subr.mxu0 0.0
    %1966 = vmatpush1.msra.mxu0 0.0
    %1967 = vmatprep.subr.mxu0 0.0
    %1968 = vmatpush1.msra.mxu0 0.0
    %1969 = vmatprep.subr.mxu0 0.0
    %1970 = vmatpush1.msra.mxu0 0.0
    %1971 = vmatprep.subr.mxu0 0.0
    %1972 = vmatpush1.msra.mxu0 0.0
    %1973 = vmatprep.subr.mxu0 0.0
    %1974 = vmatpush1.msra.mxu0 0.0
    %1975 = vmatprep.subr.mxu0 0.0
    %1976 = vmatpush1.msra.mxu0 0.0
    %1977 = vmatprep.subr.mxu0 0.0
    %1978 = vmatpush1.msra.mxu0 0.0
    %1979 = vmatprep.mubr.f32.mxu0 0.0
    %1980 = vmatmul.mubr.f32.gmra.mrb[0].mxu0 %v1507
    %v1981 = vpop.f32.mrb[0].mxu0
    %v1982 = vadd.f32 0.0, %v1981
    %v1983 = vpop.f32.mrb[0].mxu0
    %v1984 = vadd.f32 0.0, %v1983
    %1985 = vdwg.mxu0
    %v1986 = vadd.f32 %v1769, %v1911
    %v1987 = vadd.f32 %v1771, %v1913
    %v1988 = vadd.f32 %v1840, %v1982
    %v1989 = vadd.f32 %v1842, %v1984
    %v1990 = vxor.u32 %v1986, 2147483648
    %v1991 = vmul.f32 %v1990, 1.442695
    %v1992 = vpow.pop %v1991
    %v1993 = vadd.f32 %v1992, 1.0
    %v1994 = vrcp.pop %v1993
    %v1995 = vmul.f32 1.0, %v1994
    %v1996 = vxor.u32 %v1987, 2147483648
    %v1997 = vmul.f32 %v1996, 1.442695
    %v1998 = vpow.pop %v1997
    %v1999 = vadd.f32 %v1998, 1.0
    %v2000 = vrcp.pop %v1999
    %v2001 = vmul.f32 1.0, %v2000
    %v2002 = vtanh.pop %v1988
    %v2003 = vxor.u32 %v1989, 2147483648
    %v2004 = vmul.f32 %v2003, 1.442695
    %v2005 = vpow.pop %v2004
    %v2006 = vadd.f32 %v2005, 1.0
    %v2007 = vrcp.pop %v2006
    %v2008 = vmul.f32 1.0, %v2007
    %v2009 = vmul.f32 %v2001, %v1505
    %v2010 = vmul.f32 %v1995, %v2002
    %v2011 = vadd.f32 %v2009, %v2010
    %v2012 = vtanh.pop %v2011
    %v2013 = vmul.f32 %v2008, %v2012
    %2014 = vst [vmem:[#allocation3 + $0x1] sm:$0x1] %v2013
    %2015 = vst [vmem:[#allocation3 + $0x8] sm:$0x2] %v2013
    %v2016 = vld [vmem:[#allocation2] sm:$0x30]
    %v2017 = vld [vmem:[#allocation2 + $0x8] sm:$0x30]
    %v2018 = vld [vmem:[#allocation2 + $0x10] sm:$0x30]
    %v2019 = vld [vmem:[#allocation2 + $0x18] sm:$0x30]
    %2020 = vmatprep.subr.mxu0 %v797
    %2021 = vmatpush1.msra.mxu0 %v796
    %2022 = vmatprep.subr.mxu0 %v801
    %2023 = vmatpush1.msra.mxu0 %v800
    %2024 = vmatprep.subr.mxu0 %v805
    %2025 = vmatpush1.msra.mxu0 %v804
    %2026 = vmatprep.subr.mxu0 %v809
    %2027 = vmatpush1.msra.mxu0 %v808
    %2028 = vmatprep.subr.mxu0 %v813
    %2029 = vmatpush1.msra.mxu0 %v812
    %2030 = vmatprep.subr.mxu0 %v817
    %2031 = vmatpush1.msra.mxu0 %v816
    %2032 = vmatprep.subr.mxu0 %v821
    %2033 = vmatpush1.msra.mxu0 %v820
    %2034 = vmatprep.subr.mxu0 %v825
    %2035 = vmatpush1.msra.mxu0 %v824
    %2036 = vmatprep.subr.mxu0 %v829
    %2037 = vmatpush1.msra.mxu0 %v828
    %2038 = vmatprep.subr.mxu0 %v833
    %2039 = vmatpush1.msra.mxu0 %v832
    %2040 = vmatprep.subr.mxu0 %v837
    %2041 = vmatpush1.msra.mxu0 %v836
    %2042 = vmatprep.subr.mxu0 %v841
    %2043 = vmatpush1.msra.mxu0 %v840
    %2044 = vmatprep.subr.mxu0 %v845
    %2045 = vmatpush1.msra.mxu0 %v844
    %2046 = vmatprep.subr.mxu0 %v849
    %2047 = vmatpush1.msra.mxu0 %v848
    %2048 = vmatprep.subr.mxu0 %v853
    %2049 = vmatpush1.msra.mxu0 %v852
    %2050 = vmatprep.subr.mxu0 %v857
    %2051 = vmatpush1.msra.mxu0 %v856
    %2052 = vmatprep.subr.mxu0 0.0
    %2053 = vmatpush1.msra.mxu0 0.0
    %2054 = vmatprep.subr.mxu0 0.0
    %2055 = vmatpush1.msra.mxu0 0.0
    %2056 = vmatprep.subr.mxu0 0.0
    %2057 = vmatpush1.msra.mxu0 0.0
    %2058 = vmatprep.subr.mxu0 0.0
    %2059 = vmatpush1.msra.mxu0 0.0
    %2060 = vmatprep.subr.mxu0 0.0
    %2061 = vmatpush1.msra.mxu0 0.0
    %2062 = vmatprep.subr.mxu0 0.0
    %2063 = vmatpush1.msra.mxu0 0.0
    %2064 = vmatprep.subr.mxu0 0.0
    %2065 = vmatpush1.msra.mxu0 0.0
    %2066 = vmatprep.subr.mxu0 0.0
    %2067 = vmatpush1.msra.mxu0 0.0
    %2068 = vmatprep.subr.mxu0 0.0
    %2069 = vmatpush1.msra.mxu0 0.0
    %2070 = vmatprep.subr.mxu0 0.0
    %2071 = vmatpush1.msra.mxu0 0.0
    %2072 = vmatprep.subr.mxu0 0.0
    %2073 = vmatpush1.msra.mxu0 0.0
    %2074 = vmatprep.subr.mxu0 0.0
    %2075 = vmatpush1.msra.mxu0 0.0
    %2076 = vmatprep.subr.mxu0 0.0
    %2077 = vmatpush1.msra.mxu0 0.0
    %2078 = vmatprep.subr.mxu0 0.0
    %2079 = vmatpush1.msra.mxu0 0.0
    %2080 = vmatprep.subr.mxu0 0.0
    %2081 = vmatpush1.msra.mxu0 0.0
    %2082 = vmatprep.subr.mxu0 0.0
    %2083 = vmatpush1.msra.mxu0 0.0
    %2084 = vmatprep.mubr.f32.mxu0 0.0
    %2085 = vmatmul.mubr.f32.gmra.mrb[0].mxu0 %v1700
    %v2086 = vpop.f32.mrb[0].mxu0
    %v2087 = vadd.f32 0.0, %v2086
    %v2088 = vpop.f32.mrb[0].mxu0
    %v2089 = vadd.f32 0.0, %v2088
    %2090 = vdwg.mxu0
    %2091 = vmatprep.subr.mxu0 %v799
    %2092 = vmatpush1.msra.mxu0 %v798
    %2093 = vmatprep.subr.mxu0 %v803
    %2094 = vmatpush1.msra.mxu0 %v802
    %2095 = vmatprep.subr.mxu0 %v807
    %2096 = vmatpush1.msra.mxu0 %v806
    %2097 = vmatprep.subr.mxu0 %v811
    %2098 = vmatpush1.msra.mxu0 %v810
    %2099 = vmatprep.subr.mxu0 %v815
    %2100 = vmatpush1.msra.mxu0 %v814
    %2101 = vmatprep.subr.mxu0 %v819
    %2102 = vmatpush1.msra.mxu0 %v818
    %2103 = vmatprep.subr.mxu0 %v823
    %2104 = vmatpush1.msra.mxu0 %v822
    %2105 = vmatprep.subr.mxu0 %v827
    %2106 = vmatpush1.msra.mxu0 %v826
    %2107 = vmatprep.subr.mxu0 %v831
    %2108 = vmatpush1.msra.mxu0 %v830
    %2109 = vmatprep.subr.mxu0 %v835
    %2110 = vmatpush1.msra.mxu0 %v834
    %2111 = vmatprep.subr.mxu0 %v839
    %2112 = vmatpush1.msra.mxu0 %v838
    %2113 = vmatprep.subr.mxu0 %v843
    %2114 = vmatpush1.msra.mxu0 %v842
    %2115 = vmatprep.subr.mxu0 %v847
    %2116 = vmatpush1.msra.mxu0 %v846
    %2117 = vmatprep.subr.mxu0 %v851
    %2118 = vmatpush1.msra.mxu0 %v850
    %2119 = vmatprep.subr.mxu0 %v855
    %2120 = vmatpush1.msra.mxu0 %v854
    %2121 = vmatprep.subr.mxu0 %v859
    %2122 = vmatpush1.msra.mxu0 %v858
    %2123 = vmatprep.subr.mxu0 0.0
    %2124 = vmatpush1.msra.mxu0 0.0
    %2125 = vmatprep.subr.mxu0 0.0
    %2126 = vmatpush1.msra.mxu0 0.0
    %2127 = vmatprep.subr.mxu0 0.0
    %2128 = vmatpush1.msra.mxu0 0.0
    %2129 = vmatprep.subr.mxu0 0.0
    %2130 = vmatpush1.msra.mxu0 0.0
    %2131 = vmatprep.subr.mxu0 0.0
    %2132 = vmatpush1.msra.mxu0 0.0
    %2133 = vmatprep.subr.mxu0 0.0
    %2134 = vmatpush1.msra.mxu0 0.0
    %2135 = vmatprep.subr.mxu0 0.0
    %2136 = vmatpush1.msra.mxu0 0.0
    %2137 = vmatprep.subr.mxu0 0.0
    %2138 = vmatpush1.msra.mxu0 0.0
    %2139 = vmatprep.subr.mxu0 0.0
    %2140 = vmatpush1.msra.mxu0 0.0
    %2141 = vmatprep.subr.mxu0 0.0
    %2142 = vmatpush1.msra.mxu0 0.0
    %2143 = vmatprep.subr.mxu0 0.0
    %2144 = vmatpush1.msra.mxu0 0.0
    %2145 = vmatprep.subr.mxu0 0.0
    %2146 = vmatpush1.msra.mxu0 0.0
    %2147 = vmatprep.subr.mxu0 0.0
    %2148 = vmatpush1.msra.mxu0 0.0
    %2149 = vmatprep.subr.mxu0 0.0
    %2150 = vmatpush1.msra.mxu0 0.0
    %2151 = vmatprep.subr.mxu0 0.0
    %2152 = vmatpush1.msra.mxu0 0.0
    %2153 = vmatprep.subr.mxu0 0.0
    %2154 = vmatpush1.msra.mxu0 0.0
    %2155 = vmatprep.mubr.f32.mxu0 0.0
    %2156 = vmatmul.mubr.f32.gmra.mrb[0].mxu0 %v1700
    %v2157 = vpop.f32.mrb[0].mxu0
    %v2158 = vadd.f32 0.0, %v2157
    %v2159 = vpop.f32.mrb[0].mxu0
    %v2160 = vadd.f32 0.0, %v2159
    %2161 = vdwg.mxu0
    %v2166 = vrot.slane %v2087, 4
    %v2167 = vrot.slane %v2089, 4
    %v2168 = vrot.slane %v2158, 4
    %v2169 = vrot.slane %v2160, 4
    %v2174 = vadd.f32 %v2016, %v2166
    %v2175 = vadd.f32 %v2017, %v2167
    %v2176 = vadd.f32 %v2018, %v2168
    %v2177 = vadd.f32 %v2019, %v2169
    %v2178 = vxor.u32 %v2174, 2147483648
    %v2179 = vmul.f32 %v2178, 1.442695
    %v2180 = vpow.pop %v2179
    %v2181 = vadd.f32 %v2180, 1.0
    %v2182 = vrcp.pop %v2181
    %v2183 = vmul.f32 1.0, %v2182
    %v2184 = vxor.u32 %v2175, 2147483648
    %v2185 = vmul.f32 %v2184, 1.442695
    %v2186 = vpow.pop %v2185
    %v2187 = vadd.f32 %v2186, 1.0
    %v2188 = vrcp.pop %v2187
    %v2189 = vmul.f32 1.0, %v2188
    %v2190 = vtanh.pop %v2176
    %v2191 = vxor.u32 %v2177, 2147483648
    %v2192 = vmul.f32 %v2191, 1.442695
    %v2193 = vpow.pop %v2192
    %v2194 = vadd.f32 %v2193, 1.0
    %v2195 = vrcp.pop %v2194
    %v2196 = vmul.f32 1.0, %v2195
    %v2198 = vrot.slane %v1696, 6
    %v2200 = vmul.f32 %v2189, %v2198
    %v2201 = vmul.f32 %v2183, %v2190
    %v2202 = vadd.f32 %v2200, %v2201
    %v2203 = vtanh.pop %v2202
    %v2204 = vmul.f32 %v2196, %v2203
    %v2206 = vrot.slane %v2204, 4
    %2208 = vmatprep.subr.mxu0 %v930
    %2209 = vmatpush1.msra.mxu0 %v929
    %2210 = vmatprep.subr.mxu0 %v934
    %2211 = vmatpush1.msra.mxu0 %v933
    %2212 = vmatprep.subr.mxu0 %v938
    %2213 = vmatpush1.msra.mxu0 %v937
    %2214 = vmatprep.subr.mxu0 %v942
    %2215 = vmatpush1.msra.mxu0 %v941
    %2216 = vmatprep.subr.mxu0 %v946
    %2217 = vmatpush1.msra.mxu0 %v945
    %2218 = vmatprep.subr.mxu0 %v950
    %2219 = vmatpush1.msra.mxu0 %v949
    %2220 = vmatprep.subr.mxu0 %v954
    %2221 = vmatpush1.msra.mxu0 %v953
    %2222 = vmatprep.subr.mxu0 %v958
    %2223 = vmatpush1.msra.mxu0 %v957
    %2224 = vmatprep.subr.mxu0 %v962
    %2225 = vmatpush1.msra.mxu0 %v961
    %2226 = vmatprep.subr.mxu0 %v966
    %2227 = vmatpush1.msra.mxu0 %v965
    %2228 = vmatprep.subr.mxu0 %v970
    %2229 = vmatpush1.msra.mxu0 %v969
    %2230 = vmatprep.subr.mxu0 %v974
    %2231 = vmatpush1.msra.mxu0 %v973
    %2232 = vmatprep.subr.mxu0 %v978
    %2233 = vmatpush1.msra.mxu0 %v977
    %2234 = vmatprep.subr.mxu0 %v982
    %2235 = vmatpush1.msra.mxu0 %v981
    %2236 = vmatprep.subr.mxu0 %v986
    %2237 = vmatpush1.msra.mxu0 %v985
    %2238 = vmatprep.subr.mxu0 %v990
    %2239 = vmatpush1.msra.mxu0 %v989
    %2240 = vmatprep.subr.mxu0 0.0
    %2241 = vmatpush1.msra.mxu0 0.0
    %2242 = vmatprep.subr.mxu0 0.0
    %2243 = vmatpush1.msra.mxu0 0.0
    %2244 = vmatprep.subr.mxu0 0.0
    %2245 = vmatpush1.msra.mxu0 0.0
    %2246 = vmatprep.subr.mxu0 0.0
    %2247 = vmatpush1.msra.mxu0 0.0
    %2248 = vmatprep.subr.mxu0 0.0
    %2249 = vmatpush1.msra.mxu0 0.0
    %2250 = vmatprep.subr.mxu0 0.0
    %2251 = vmatpush1.msra.mxu0 0.0
    %2252 = vmatprep.subr.mxu0 0.0
    %2253 = vmatpush1.msra.mxu0 0.0
    %2254 = vmatprep.subr.mxu0 0.0
    %2255 = vmatpush1.msra.mxu0 0.0
    %2256 = vmatprep.subr.mxu0 0.0
    %2257 = vmatpush1.msra.mxu0 0.0
    %2258 = vmatprep.subr.mxu0 0.0
    %2259 = vmatpush1.msra.mxu0 0.0
    %2260 = vmatprep.subr.mxu0 0.0
    %2261 = vmatpush1.msra.mxu0 0.0
    %2262 = vmatprep.subr.mxu0 0.0
    %2263 = vmatpush1.msra.mxu0 0.0
    %2264 = vmatprep.subr.mxu0 0.0
    %2265 = vmatpush1.msra.mxu0 0.0
    %2266 = vmatprep.subr.mxu0 0.0
    %2267 = vmatpush1.msra.mxu0 0.0
    %2268 = vmatprep.subr.mxu0 0.0
    %2269 = vmatpush1.msra.mxu0 0.0
    %2270 = vmatprep.subr.mxu0 0.0
    %2271 = vmatpush1.msra.mxu0 0.0
    %2272 = vmatprep.mubr.f32.mxu0 0.0
    %2273 = vmatmul.mubr.f32.gmra.mrb[0].mxu0 %v2206
    %v2274 = vpop.f32.mrb[0].mxu0
    %v2275 = vadd.f32 %v1179, %v2274
    %v2276 = vpop.f32.mrb[0].mxu0
    %v2277 = vadd.f32 %v1183, %v2276
    %2278 = vdwg.mxu0
    %2279 = vmatprep.subr.mxu0 %v932
    %2280 = vmatpush1.msra.mxu0 %v931
    %2281 = vmatprep.subr.mxu0 %v936
    %2282 = vmatpush1.msra.mxu0 %v935
    %2283 = vmatprep.subr.mxu0 %v940
    %2284 = vmatpush1.msra.mxu0 %v939
    %2285 = vmatprep.subr.mxu0 %v944
    %2286 = vmatpush1.msra.mxu0 %v943
    %2287 = vmatprep.subr.mxu0 %v948
    %2288 = vmatpush1.msra.mxu0 %v947
    %2289 = vmatprep.subr.mxu0 %v952
    %2290 = vmatpush1.msra.mxu0 %v951
    %2291 = vmatprep.subr.mxu0 %v956
    %2292 = vmatpush1.msra.mxu0 %v955
    %2293 = vmatprep.subr.mxu0 %v960
    %2294 = vmatpush1.msra.mxu0 %v959
    %2295 = vmatprep.subr.mxu0 %v964
    %2296 = vmatpush1.msra.mxu0 %v963
    %2297 = vmatprep.subr.mxu0 %v968
    %2298 = vmatpush1.msra.mxu0 %v967
    %2299 = vmatprep.subr.mxu0 %v972
    %2300 = vmatpush1.msra.mxu0 %v971
    %2301 = vmatprep.subr.mxu0 %v976
    %2302 = vmatpush1.msra.mxu0 %v975
    %2303 = vmatprep.subr.mxu0 %v980
    %2304 = vmatpush1.msra.mxu0 %v979
    %2305 = vmatprep.subr.mxu0 %v984
    %2306 = vmatpush1.msra.mxu0 %v983
    %2307 = vmatprep.subr.mxu0 %v988
    %2308 = vmatpush1.msra.mxu0 %v987
    %2309 = vmatprep.subr.mxu0 %v992
    %2310 = vmatpush1.msra.mxu0 %v991
    %2311 = vmatprep.subr.mxu0 0.0
    %2312 = vmatpush1.msra.mxu0 0.0
    %2313 = vmatprep.subr.mxu0 0.0
    %2314 = vmatpush1.msra.mxu0 0.0
    %2315 = vmatprep.subr.mxu0 0.0
    %2316 = vmatpush1.msra.mxu0 0.0
    %2317 = vmatprep.subr.mxu0 0.0
    %2318 = vmatpush1.msra.mxu0 0.0
    %2319 = vmatprep.subr.mxu0 0.0
    %2320 = vmatpush1.msra.mxu0 0.0
    %2321 = vmatprep.subr.mxu0 0.0
    %2322 = vmatpush1.msra.mxu0 0.0
    %2323 = vmatprep.subr.mxu0 0.0
    %2324 = vmatpush1.msra.mxu0 0.0
    %2325 = vmatprep.subr.mxu0 0.0
    %2326 = vmatpush1.msra.mxu0 0.0
    %2327 = vmatprep.subr.mxu0 0.0
    %2328 = vmatpush1.msra.mxu0 0.0
    %2329 = vmatprep.subr.mxu0 0.0
    %2330 = vmatpush1.msra.mxu0 0.0
    %2331 = vmatprep.subr.mxu0 0.0
    %2332 = vmatpush1.msra.mxu0 0.0
    %2333 = vmatprep.subr.mxu0 0.0
    %2334 = vmatpush1.msra.mxu0 0.0
    %2335 = vmatprep.subr.mxu0 0.0
    %2336 = vmatpush1.msra.mxu0 0.0
    %2337 = vmatprep.subr.mxu0 0.0
    %2338 = vmatpush1.msra.mxu0 0.0
    %2339 = vmatprep.subr.mxu0 0.0
    %2340 = vmatpush1.msra.mxu0 0.0
    %2341 = vmatprep.subr.mxu0 0.0
    %2342 = vmatpush1.msra.mxu0 0.0
    %2343 = vmatprep.mubr.f32.mxu0 0.0
    %2344 = vmatmul.mubr.f32.gmra.mrb[0].mxu0 %v2206
    %v2345 = vpop.f32.mrb[0].mxu0
    %v2346 = vadd.f32 %v1187, %v2345
    %v2347 = vpop.f32.mrb[0].mxu0
    %v2348 = vadd.f32 %v1191, %v2347
    %2349 = vdwg.mxu0
    %2350 = vmatprep.subr.mxu0 %v866
    %2351 = vmatpush1.msra.mxu0 %v865
    %2352 = vmatprep.subr.mxu0 %v870
    %2353 = vmatpush1.msra.mxu0 %v869
    %2354 = vmatprep.subr.mxu0 %v874
    %2355 = vmatpush1.msra.mxu0 %v873
    %2356 = vmatprep.subr.mxu0 %v878
    %2357 = vmatpush1.msra.mxu0 %v877
    %2358 = vmatprep.subr.mxu0 %v882
    %2359 = vmatpush1.msra.mxu0 %v881
    %2360 = vmatprep.subr.mxu0 %v886
    %2361 = vmatpush1.msra.mxu0 %v885
    %2362 = vmatprep.subr.mxu0 %v890
    %2363 = vmatpush1.msra.mxu0 %v889
    %2364 = vmatprep.subr.mxu0 %v894
    %2365 = vmatpush1.msra.mxu0 %v893
    %2366 = vmatprep.subr.mxu0 %v898
    %2367 = vmatpush1.msra.mxu0 %v897
    %2368 = vmatprep.subr.mxu0 %v902
    %2369 = vmatpush1.msra.mxu0 %v901
    %2370 = vmatprep.subr.mxu0 %v906
    %2371 = vmatpush1.msra.mxu0 %v905
    %2372 = vmatprep.subr.mxu0 %v910
    %2373 = vmatpush1.msra.mxu0 %v909
    %2374 = vmatprep.subr.mxu0 %v914
    %2375 = vmatpush1.msra.mxu0 %v913
    %2376 = vmatprep.subr.mxu0 %v918
    %2377 = vmatpush1.msra.mxu0 %v917
    %2378 = vmatprep.subr.mxu0 %v922
    %2379 = vmatpush1.msra.mxu0 %v921
    %2380 = vmatprep.subr.mxu0 %v926
    %2381 = vmatpush1.msra.mxu0 %v925
    %2382 = vmatprep.subr.mxu0 0.0
    %2383 = vmatpush1.msra.mxu0 0.0
    %2384 = vmatprep.subr.mxu0 0.0
    %2385 = vmatpush1.msra.mxu0 0.0
    %2386 = vmatprep.subr.mxu0 0.0
    %2387 = vmatpush1.msra.mxu0 0.0
    %2388 = vmatprep.subr.mxu0 0.0
    %2389 = vmatpush1.msra.mxu0 0.0
    %2390 = vmatprep.subr.mxu0 0.0
    %2391 = vmatpush1.msra.mxu0 0.0
    %2392 = vmatprep.subr.mxu0 0.0
    %2393 = vmatpush1.msra.mxu0 0.0
    %2394 = vmatprep.subr.mxu0 0.0
    %2395 = vmatpush1.msra.mxu0 0.0
    %2396 = vmatprep.subr.mxu0 0.0
    %2397 = vmatpush1.msra.mxu0 0.0
    %2398 = vmatprep.subr.mxu0 0.0
    %2399 = vmatpush1.msra.mxu0 0.0
    %2400 = vmatprep.subr.mxu0 0.0
    %2401 = vmatpush1.msra.mxu0 0.0
    %2402 = vmatprep.subr.mxu0 0.0
    %2403 = vmatpush1.msra.mxu0 0.0
    %2404 = vmatprep.subr.mxu0 0.0
    %2405 = vmatpush1.msra.mxu0 0.0
    %2406 = vmatprep.subr.mxu0 0.0
    %2407 = vmatpush1.msra.mxu0 0.0
    %2408 = vmatprep.subr.mxu0 0.0
    %2409 = vmatpush1.msra.mxu0 0.0
    %2410 = vmatprep.subr.mxu0 0.0
    %2411 = vmatpush1.msra.mxu0 0.0
    %2412 = vmatprep.subr.mxu0 0.0
    %2413 = vmatpush1.msra.mxu0 0.0
    %2414 = vmatprep.mubr.f32.mxu0 0.0
    %2415 = vmatmul.mubr.f32.gmra.mrb[0].mxu0 %v2013
    %v2416 = vpop.f32.mrb[0].mxu0
    %v2417 = vadd.f32 0.0, %v2416
    %v2418 = vpop.f32.mrb[0].mxu0
    %v2419 = vadd.f32 0.0, %v2418
    %2420 = vdwg.mxu0
    %2421 = vmatprep.subr.mxu0 %v868
    %2422 = vmatpush1.msra.mxu0 %v867
    %2423 = vmatprep.subr.mxu0 %v872
    %2424 = vmatpush1.msra.mxu0 %v871
    %2425 = vmatprep.subr.mxu0 %v876
    %2426 = vmatpush1.msra.mxu0 %v875
    %2427 = vmatprep.subr.mxu0 %v880
    %2428 = vmatpush1.msra.mxu0 %v879
    %2429 = vmatprep.subr.mxu0 %v884
    %2430 = vmatpush1.msra.mxu0 %v883
    %2431 = vmatprep.subr.mxu0 %v888
    %2432 = vmatpush1.msra.mxu0 %v887
    %2433 = vmatprep.subr.mxu0 %v892
    %2434 = vmatpush1.msra.mxu0 %v891
    %2435 = vmatprep.subr.mxu0 %v896
    %2436 = vmatpush1.msra.mxu0 %v895
    %2437 = vmatprep.subr.mxu0 %v900
    %2438 = vmatpush1.msra.mxu0 %v899
    %2439 = vmatprep.subr.mxu0 %v904
    %2440 = vmatpush1.msra.mxu0 %v903
    %2441 = vmatprep.subr.mxu0 %v908
    %2442 = vmatpush1.msra.mxu0 %v907
    %2443 = vmatprep.subr.mxu0 %v912
    %2444 = vmatpush1.msra.mxu0 %v911
    %2445 = vmatprep.subr.mxu0 %v916
    %2446 = vmatpush1.msra.mxu0 %v915
    %2447 = vmatprep.subr.mxu0 %v920
    %2448 = vmatpush1.msra.mxu0 %v919
    %2449 = vmatprep.subr.mxu0 %v924
    %2450 = vmatpush1.msra.mxu0 %v923
    %2451 = vmatprep.subr.mxu0 %v928
    %2452 = vmatpush1.msra.mxu0 %v927
    %2453 = vmatprep.subr.mxu0 0.0
    %2454 = vmatpush1.msra.mxu0 0.0
    %2455 = vmatprep.subr.mxu0 0.0
    %2456 = vmatpush1.msra.mxu0 0.0
    %2457 = vmatprep.subr.mxu0 0.0
    %2458 = vmatpush1.msra.mxu0 0.0
    %2459 = vmatprep.subr.mxu0 0.0
    %2460 = vmatpush1.msra.mxu0 0.0
    %2461 = vmatprep.subr.mxu0 0.0
    %2462 = vmatpush1.msra.mxu0 0.0
    %2463 = vmatprep.subr.mxu0 0.0
    %2464 = vmatpush1.msra.mxu0 0.0
    %2465 = vmatprep.subr.mxu0 0.0
    %2466 = vmatpush1.msra.mxu0 0.0
    %2467 = vmatprep.subr.mxu0 0.0
    %2468 = vmatpush1.msra.mxu0 0.0
    %2469 = vmatprep.subr.mxu0 0.0
    %2470 = vmatpush1.msra.mxu0 0.0
    %2471 = vmatprep.subr.mxu0 0.0
    %2472 = vmatpush1.msra.mxu0 0.0
    %2473 = vmatprep.subr.mxu0 0.0
    %2474 = vmatpush1.msra.mxu0 0.0
    %2475 = vmatprep.subr.mxu0 0.0
    %2476 = vmatpush1.msra.mxu0 0.0
    %2477 = vmatprep.subr.mxu0 0.0
    %2478 = vmatpush1.msra.mxu0 0.0
    %2479 = vmatprep.subr.mxu0 0.0
    %2480 = vmatpush1.msra.mxu0 0.0
    %2481 = vmatprep.subr.mxu0 0.0
    %2482 = vmatpush1.msra.mxu0 0.0
    %2483 = vmatprep.subr.mxu0 0.0
    %2484 = vmatpush1.msra.mxu0 0.0
    %2485 = vmatprep.mubr.f32.mxu0 0.0
    %2486 = vmatmul.mubr.f32.gmra.mrb[0].mxu0 %v2013
    %v2487 = vpop.f32.mrb[0].mxu0
    %v2488 = vadd.f32 0.0, %v2487
    %v2489 = vpop.f32.mrb[0].mxu0
    %v2490 = vadd.f32 0.0, %v2489
    %2491 = vdwg.mxu0
    %v2492 = vadd.f32 %v2275, %v2417
    %v2493 = vadd.f32 %v2277, %v2419
    %v2494 = vadd.f32 %v2346, %v2488
    %v2495 = vadd.f32 %v2348, %v2490
    %v2496 = vxor.u32 %v2492, 2147483648
    %v2497 = vmul.f32 %v2496, 1.442695
    %v2498 = vpow.pop %v2497
    %v2499 = vadd.f32 %v2498, 1.0
    %v2500 = vrcp.pop %v2499
    %v2501 = vmul.f32 1.0, %v2500
    %v2502 = vxor.u32 %v2493, 2147483648
    %v2503 = vmul.f32 %v2502, 1.442695
    %v2504 = vpow.pop %v2503
    %v2505 = vadd.f32 %v2504, 1.0
    %v2506 = vrcp.pop %v2505
    %v2507 = vmul.f32 1.0, %v2506
    %v2508 = vtanh.pop %v2494
    %v2509 = vxor.u32 %v2495, 2147483648
    %v2510 = vmul.f32 %v2509, 1.442695
    %v2511 = vpow.pop %v2510
    %v2512 = vadd.f32 %v2511, 1.0
    %v2513 = vrcp.pop %v2512
    %v2514 = vmul.f32 1.0, %v2513
    %v2515 = vmul.f32 %v2507, %v2011
    %v2516 = vmul.f32 %v2501, %v2508
    %v2517 = vadd.f32 %v2515, %v2516
    %v2518 = vtanh.pop %v2517
    %v2519 = vmul.f32 %v2514, %v2518
    %2520 = vst [vmem:[#allocation3 + $0x2] sm:$0x1] %v2519
    %2521 = vst [vmem:[#allocation3 + $0x9] sm:$0x2] %v2519
    %v2522 = vld [vmem:[#allocation2] sm:$0xc0]
    %v2523 = vld [vmem:[#allocation2 + $0x8] sm:$0xc0]
    %v2524 = vld [vmem:[#allocation2 + $0x10] sm:$0xc0]
    %v2525 = vld [vmem:[#allocation2 + $0x18] sm:$0xc0]
    %2526 = vmatprep.subr.mxu0 %v797
    %2527 = vmatpush1.msra.mxu0 %v796
    %2528 = vmatprep.subr.mxu0 %v801
    %2529 = vmatpush1.msra.mxu0 %v800
    %2530 = vmatprep.subr.mxu0 %v805
    %2531 = vmatpush1.msra.mxu0 %v804
    %2532 = vmatprep.subr.mxu0 %v809
    %2533 = vmatpush1.msra.mxu0 %v808
    %2534 = vmatprep.subr.mxu0 %v813
    %2535 = vmatpush1.msra.mxu0 %v812
    %2536 = vmatprep.subr.mxu0 %v817
    %2537 = vmatpush1.msra.mxu0 %v816
    %2538 = vmatprep.subr.mxu0 %v821
    %2539 = vmatpush1.msra.mxu0 %v820
    %2540 = vmatprep.subr.mxu0 %v825
    %2541 = vmatpush1.msra.mxu0 %v824
    %2542 = vmatprep.subr.mxu0 %v829
    %2543 = vmatpush1.msra.mxu0 %v828
    %2544 = vmatprep.subr.mxu0 %v833
    %2545 = vmatpush1.msra.mxu0 %v832
    %2546 = vmatprep.subr.mxu0 %v837
    %2547 = vmatpush1.msra.mxu0 %v836
    %2548 = vmatprep.subr.mxu0 %v841
    %2549 = vmatpush1.msra.mxu0 %v840
    %2550 = vmatprep.subr.mxu0 %v845
    %2551 = vmatpush1.msra.mxu0 %v844
    %2552 = vmatprep.subr.mxu0 %v849
    %2553 = vmatpush1.msra.mxu0 %v848
    %2554 = vmatprep.subr.mxu0 %v853
    %2555 = vmatpush1.msra.mxu0 %v852
    %2556 = vmatprep.subr.mxu0 %v857
    %2557 = vmatpush1.msra.mxu0 %v856
    %2558 = vmatprep.subr.mxu0 0.0
    %2559 = vmatpush1.msra.mxu0 0.0
    %2560 = vmatprep.subr.mxu0 0.0
    %2561 = vmatpush1.msra.mxu0 0.0
    %2562 = vmatprep.subr.mxu0 0.0
    %2563 = vmatpush1.msra.mxu0 0.0
    %2564 = vmatprep.subr.mxu0 0.0
    %2565 = vmatpush1.msra.mxu0 0.0
    %2566 = vmatprep.subr.mxu0 0.0
    %2567 = vmatpush1.msra.mxu0 0.0
    %2568 = vmatprep.subr.mxu0 0.0
    %2569 = vmatpush1.msra.mxu0 0.0
    %2570 = vmatprep.subr.mxu0 0.0
    %2571 = vmatpush1.msra.mxu0 0.0
    %2572 = vmatprep.subr.mxu0 0.0
    %2573 = vmatpush1.msra.mxu0 0.0
    %2574 = vmatprep.subr.mxu0 0.0
    %2575 = vmatpush1.msra.mxu0 0.0
    %2576 = vmatprep.subr.mxu0 0.0
    %2577 = vmatpush1.msra.mxu0 0.0
    %2578 = vmatprep.subr.mxu0 0.0
    %2579 = vmatpush1.msra.mxu0 0.0
    %2580 = vmatprep.subr.mxu0 0.0
    %2581 = vmatpush1.msra.mxu0 0.0
    %2582 = vmatprep.subr.mxu0 0.0
    %2583 = vmatpush1.msra.mxu0 0.0
    %2584 = vmatprep.subr.mxu0 0.0
    %2585 = vmatpush1.msra.mxu0 0.0
    %2586 = vmatprep.subr.mxu0 0.0
    %2587 = vmatpush1.msra.mxu0 0.0
    %2588 = vmatprep.subr.mxu0 0.0
    %2589 = vmatpush1.msra.mxu0 0.0
    %2590 = vmatprep.mubr.f32.mxu0 0.0
    %2591 = vmatmul.mubr.f32.gmra.mrb[0].mxu0 %v2206
    %v2592 = vpop.f32.mrb[0].mxu0
    %v2593 = vadd.f32 0.0, %v2592
    %v2594 = vpop.f32.mrb[0].mxu0
    %v2595 = vadd.f32 0.0, %v2594
    %2596 = vdwg.mxu0
    %2597 = vmatprep.subr.mxu0 %v799
    %2598 = vmatpush1.msra.mxu0 %v798
    %2599 = vmatprep.subr.mxu0 %v803
    %2600 = vmatpush1.msra.mxu0 %v802
    %2601 = vmatprep.subr.mxu0 %v807
    %2602 = vmatpush1.msra.mxu0 %v806
    %2603 = vmatprep.subr.mxu0 %v811
    %2604 = vmatpush1.msra.mxu0 %v810
    %2605 = vmatprep.subr.mxu0 %v815
    %2606 = vmatpush1.msra.mxu0 %v814
    %2607 = vmatprep.subr.mxu0 %v819
    %2608 = vmatpush1.msra.mxu0 %v818
    %2609 = vmatprep.subr.mxu0 %v823
    %2610 = vmatpush1.msra.mxu0 %v822
    %2611 = vmatprep.subr.mxu0 %v827
    %2612 = vmatpush1.msra.mxu0 %v826
    %2613 = vmatprep.subr.mxu0 %v831
    %2614 = vmatpush1.msra.mxu0 %v830
    %2615 = vmatprep.subr.mxu0 %v835
    %2616 = vmatpush1.msra.mxu0 %v834
    %2617 = vmatprep.subr.mxu0 %v839
    %2618 = vmatpush1.msra.mxu0 %v838
    %2619 = vmatprep.subr.mxu0 %v843
    %2620 = vmatpush1.msra.mxu0 %v842
    %2621 = vmatprep.subr.mxu0 %v847
    %2622 = vmatpush1.msra.mxu0 %v846
    %2623 = vmatprep.subr.mxu0 %v851
    %2624 = vmatpush1.msra.mxu0 %v850
    %2625 = vmatprep.subr.mxu0 %v855
    %2626 = vmatpush1.msra.mxu0 %v854
    %2627 = vmatprep.subr.mxu0 %v859
    %2628 = vmatpush1.msra.mxu0 %v858
    %2629 = vmatprep.subr.mxu0 0.0
    %2630 = vmatpush1.msra.mxu0 0.0
    %2631 = vmatprep.subr.mxu0 0.0
    %2632 = vmatpush1.msra.mxu0 0.0
    %2633 = vmatprep.subr.mxu0 0.0
    %2634 = vmatpush1.msra.mxu0 0.0
    %2635 = vmatprep.subr.mxu0 0.0
    %2636 = vmatpush1.msra.mxu0 0.0
    %2637 = vmatprep.subr.mxu0 0.0
    %2638 = vmatpush1.msra.mxu0 0.0
    %2639 = vmatprep.subr.mxu0 0.0
    %2640 = vmatpush1.msra.mxu0 0.0
    %2641 = vmatprep.subr.mxu0 0.0
    %2642 = vmatpush1.msra.mxu0 0.0
    %2643 = vmatprep.subr.mxu0 0.0
    %2644 = vmatpush1.msra.mxu0 0.0
    %2645 = vmatprep.subr.mxu0 0.0
    %2646 = vmatpush1.msra.mxu0 0.0
    %2647 = vmatprep.subr.mxu0 0.0
    %2648 = vmatpush1.msra.mxu0 0.0
    %2649 = vmatprep.subr.mxu0 0.0
    %2650 = vmatpush1.msra.mxu0 0.0
    %2651 = vmatprep.subr.mxu0 0.0
    %2652 = vmatpush1.msra.mxu0 0.0
    %2653 = vmatprep.subr.mxu0 0.0
    %2654 = vmatpush1.msra.mxu0 0.0
    %2655 = vmatprep.subr.mxu0 0.0
    %2656 = vmatpush1.msra.mxu0 0.0
    %2657 = vmatprep.subr.mxu0 0.0
    %2658 = vmatpush1.msra.mxu0 0.0
    %2659 = vmatprep.subr.mxu0 0.0
    %2660 = vmatpush1.msra.mxu0 0.0
    %2661 = vmatprep.mubr.f32.mxu0 0.0
    %2662 = vmatmul.mubr.f32.gmra.mrb[0].mxu0 %v2206
    %v2663 = vpop.f32.mrb[0].mxu0
    %v2664 = vadd.f32 0.0, %v2663
    %v2665 = vpop.f32.mrb[0].mxu0
    %v2666 = vadd.f32 0.0, %v2665
    %2667 = vdwg.mxu0
    %v2672 = vrot.slane %v2593, 2
    %v2673 = vrot.slane %v2595, 2
    %v2674 = vrot.slane %v2664, 2
    %v2675 = vrot.slane %v2666, 2
    %v2680 = vadd.f32 %v2522, %v2672
    %v2681 = vadd.f32 %v2523, %v2673
    %v2682 = vadd.f32 %v2524, %v2674
    %v2683 = vadd.f32 %v2525, %v2675
    %v2684 = vxor.u32 %v2680, 2147483648
    %v2685 = vmul.f32 %v2684, 1.442695
    %v2686 = vpow.pop %v2685
    %v2687 = vadd.f32 %v2686, 1.0
    %v2688 = vrcp.pop %v2687
    %v2689 = vmul.f32 1.0, %v2688
    %v2690 = vxor.u32 %v2681, 2147483648
    %v2691 = vmul.f32 %v2690, 1.442695
    %v2692 = vpow.pop %v2691
    %v2693 = vadd.f32 %v2692, 1.0
    %v2694 = vrcp.pop %v2693
    %v2695 = vmul.f32 1.0, %v2694
    %v2696 = vtanh.pop %v2682
    %v2697 = vxor.u32 %v2683, 2147483648
    %v2698 = vmul.f32 %v2697, 1.442695
    %v2699 = vpow.pop %v2698
    %v2700 = vadd.f32 %v2699, 1.0
    %v2701 = vrcp.pop %v2700
    %v2702 = vmul.f32 1.0, %v2701
    %v2704 = vrot.slane %v2202, 6
    %v2706 = vmul.f32 %v2695, %v2704
    %v2707 = vmul.f32 %v2689, %v2696
    %v2708 = vadd.f32 %v2706, %v2707
    %v2709 = vtanh.pop %v2708
    %v2710 = vmul.f32 %v2702, %v2709
    %v2712 = vrot.slane %v2710, 6
    %2714 = vmatprep.subr.mxu0 %v930
    %2715 = vmatpush1.msra.mxu0 %v929
    %2716 = vmatprep.subr.mxu0 %v934
    %2717 = vmatpush1.msra.mxu0 %v933
    %2718 = vmatprep.subr.mxu0 %v938
    %2719 = vmatpush1.msra.mxu0 %v937
    %2720 = vmatprep.subr.mxu0 %v942
    %2721 = vmatpush1.msra.mxu0 %v941
    %2722 = vmatprep.subr.mxu0 %v946
    %2723 = vmatpush1.msra.mxu0 %v945
    %2724 = vmatprep.subr.mxu0 %v950
    %2725 = vmatpush1.msra.mxu0 %v949
    %2726 = vmatprep.subr.mxu0 %v954
    %2727 = vmatpush1.msra.mxu0 %v953
    %2728 = vmatprep.subr.mxu0 %v958
    %2729 = vmatpush1.msra.mxu0 %v957
    %2730 = vmatprep.subr.mxu0 %v962
    %2731 = vmatpush1.msra.mxu0 %v961
    %2732 = vmatprep.subr.mxu0 %v966
    %2733 = vmatpush1.msra.mxu0 %v965
    %2734 = vmatprep.subr.mxu0 %v970
    %2735 = vmatpush1.msra.mxu0 %v969
    %2736 = vmatprep.subr.mxu0 %v974
    %2737 = vmatpush1.msra.mxu0 %v973
    %2738 = vmatprep.subr.mxu0 %v978
    %2739 = vmatpush1.msra.mxu0 %v977
    %2740 = vmatprep.subr.mxu0 %v982
    %2741 = vmatpush1.msra.mxu0 %v981
    %2742 = vmatprep.subr.mxu0 %v986
    %2743 = vmatpush1.msra.mxu0 %v985
    %2744 = vmatprep.subr.mxu0 %v990
    %2745 = vmatpush1.msra.mxu0 %v989
    %2746 = vmatprep.subr.mxu0 0.0
    %2747 = vmatpush1.msra.mxu0 0.0
    %2748 = vmatprep.subr.mxu0 0.0
    %2749 = vmatpush1.msra.mxu0 0.0
    %2750 = vmatprep.subr.mxu0 0.0
    %2751 = vmatpush1.msra.mxu0 0.0
    %2752 = vmatprep.subr.mxu0 0.0
    %2753 = vmatpush1.msra.mxu0 0.0
    %2754 = vmatprep.subr.mxu0 0.0
    %2755 = vmatpush1.msra.mxu0 0.0
    %2756 = vmatprep.subr.mxu0 0.0
    %2757 = vmatpush1.msra.mxu0 0.0
    %2758 = vmatprep.subr.mxu0 0.0
    %2759 = vmatpush1.msra.mxu0 0.0
    %2760 = vmatprep.subr.mxu0 0.0
    %2761 = vmatpush1.msra.mxu0 0.0
    %2762 = vmatprep.subr.mxu0 0.0
    %2763 = vmatpush1.msra.mxu0 0.0
    %2764 = vmatprep.subr.mxu0 0.0
    %2765 = vmatpush1.msra.mxu0 0.0
    %2766 = vmatprep.subr.mxu0 0.0
    %2767 = vmatpush1.msra.mxu0 0.0
    %2768 = vmatprep.subr.mxu0 0.0
    %2769 = vmatpush1.msra.mxu0 0.0
    %2770 = vmatprep.subr.mxu0 0.0
    %2771 = vmatpush1.msra.mxu0 0.0
    %2772 = vmatprep.subr.mxu0 0.0
    %2773 = vmatpush1.msra.mxu0 0.0
    %2774 = vmatprep.subr.mxu0 0.0
    %2775 = vmatpush1.msra.mxu0 0.0
    %2776 = vmatprep.subr.mxu0 0.0
    %2777 = vmatpush1.msra.mxu0 0.0
    %2778 = vmatprep.mubr.f32.mxu0 0.0
    %2779 = vmatmul.mubr.f32.gmra.mrb[0].mxu0 %v2712
    %v2780 = vpop.f32.mrb[0].mxu0
    %v2781 = vadd.f32 %v1179, %v2780
    %v2782 = vpop.f32.mrb[0].mxu0
    %v2783 = vadd.f32 %v1183, %v2782
    %2784 = vdwg.mxu0
    %2785 = vmatprep.subr.mxu0 %v932
    %2786 = vmatpush1.msra.mxu0 %v931
    %2787 = vmatprep.subr.mxu0 %v936
    %2788 = vmatpush1.msra.mxu0 %v935
    %2789 = vmatprep.subr.mxu0 %v940
    %2790 = vmatpush1.msra.mxu0 %v939
    %2791 = vmatprep.subr.mxu0 %v944
    %2792 = vmatpush1.msra.mxu0 %v943
    %2793 = vmatprep.subr.mxu0 %v948
    %2794 = vmatpush1.msra.mxu0 %v947
    %2795 = vmatprep.subr.mxu0 %v952
    %2796 = vmatpush1.msra.mxu0 %v951
    %2797 = vmatprep.subr.mxu0 %v956
    %2798 = vmatpush1.msra.mxu0 %v955
    %2799 = vmatprep.subr.mxu0 %v960
    %2800 = vmatpush1.msra.mxu0 %v959
    %2801 = vmatprep.subr.mxu0 %v964
    %2802 = vmatpush1.msra.mxu0 %v963
    %2803 = vmatprep.subr.mxu0 %v968
    %2804 = vmatpush1.msra.mxu0 %v967
    %2805 = vmatprep.subr.mxu0 %v972
    %2806 = vmatpush1.msra.mxu0 %v971
    %2807 = vmatprep.subr.mxu0 %v976
    %2808 = vmatpush1.msra.mxu0 %v975
    %2809 = vmatprep.subr.mxu0 %v980
    %2810 = vmatpush1.msra.mxu0 %v979
    %2811 = vmatprep.subr.mxu0 %v984
    %2812 = vmatpush1.msra.mxu0 %v983
    %2813 = vmatprep.subr.mxu0 %v988
    %2814 = vmatpush1.msra.mxu0 %v987
    %2815 = vmatprep.subr.mxu0 %v992
    %2816 = vmatpush1.msra.mxu0 %v991
    %2817 = vmatprep.subr.mxu0 0.0
    %2818 = vmatpush1.msra.mxu0 0.0
    %2819 = vmatprep.subr.mxu0 0.0
    %2820 = vmatpush1.msra.mxu0 0.0
    %2821 = vmatprep.subr.mxu0 0.0
    %2822 = vmatpush1.msra.mxu0 0.0
    %2823 = vmatprep.subr.mxu0 0.0
    %2824 = vmatpush1.msra.mxu0 0.0
    %2825 = vmatprep.subr.mxu0 0.0
    %2826 = vmatpush1.msra.mxu0 0.0
    %2827 = vmatprep.subr.mxu0 0.0
    %2828 = vmatpush1.msra.mxu0 0.0
    %2829 = vmatprep.subr.mxu0 0.0
    %2830 = vmatpush1.msra.mxu0 0.0
    %2831 = vmatprep.subr.mxu0 0.0
    %2832 = vmatpush1.msra.mxu0 0.0
    %2833 = vmatprep.subr.mxu0 0.0
    %2834 = vmatpush1.msra.mxu0 0.0
    %2835 = vmatprep.subr.mxu0 0.0
    %2836 = vmatpush1.msra.mxu0 0.0
    %2837 = vmatprep.subr.mxu0 0.0
    %2838 = vmatpush1.msra.mxu0 0.0
    %2839 = vmatprep.subr.mxu0 0.0
    %2840 = vmatpush1.msra.mxu0 0.0
    %2841 = vmatprep.subr.mxu0 0.0
    %2842 = vmatpush1.msra.mxu0 0.0
    %2843 = vmatprep.subr.mxu0 0.0
    %2844 = vmatpush1.msra.mxu0 0.0
    %2845 = vmatprep.subr.mxu0 0.0
    %2846 = vmatpush1.msra.mxu0 0.0
    %2847 = vmatprep.subr.mxu0 0.0
    %2848 = vmatpush1.msra.mxu0 0.0
    %2849 = vmatprep.mubr.f32.mxu0 0.0
    %2850 = vmatmul.mubr.f32.gmra.mrb[0].mxu0 %v2712
    %v2851 = vpop.f32.mrb[0].mxu0
    %v2852 = vadd.f32 %v1187, %v2851
    %v2853 = vpop.f32.mrb[0].mxu0
    %v2854 = vadd.f32 %v1191, %v2853
    %2855 = vdwg.mxu0
    %2856 = vmatprep.subr.mxu0 %v866
    %2857 = vmatpush1.msra.mxu0 %v865
    %2858 = vmatprep.subr.mxu0 %v870
    %2859 = vmatpush1.msra.mxu0 %v869
    %2860 = vmatprep.subr.mxu0 %v874
    %2861 = vmatpush1.msra.mxu0 %v873
    %2862 = vmatprep.subr.mxu0 %v878
    %2863 = vmatpush1.msra.mxu0 %v877
    %2864 = vmatprep.subr.mxu0 %v882
    %2865 = vmatpush1.msra.mxu0 %v881
    %2866 = vmatprep.subr.mxu0 %v886
    %2867 = vmatpush1.msra.mxu0 %v885
    %2868 = vmatprep.subr.mxu0 %v890
    %2869 = vmatpush1.msra.mxu0 %v889
    %2870 = vmatprep.subr.mxu0 %v894
    %2871 = vmatpush1.msra.mxu0 %v893
    %2872 = vmatprep.subr.mxu0 %v898
    %2873 = vmatpush1.msra.mxu0 %v897
    %2874 = vmatprep.subr.mxu0 %v902
    %2875 = vmatpush1.msra.mxu0 %v901
    %2876 = vmatprep.subr.mxu0 %v906
    %2877 = vmatpush1.msra.mxu0 %v905
    %2878 = vmatprep.subr.mxu0 %v910
    %2879 = vmatpush1.msra.mxu0 %v909
    %2880 = vmatprep.subr.mxu0 %v914
    %2881 = vmatpush1.msra.mxu0 %v913
    %2882 = vmatprep.subr.mxu0 %v918
    %2883 = vmatpush1.msra.mxu0 %v917
    %2884 = vmatprep.subr.mxu0 %v922
    %2885 = vmatpush1.msra.mxu0 %v921
    %2886 = vmatprep.subr.mxu0 %v926
    %2887 = vmatpush1.msra.mxu0 %v925
    %2888 = vmatprep.subr.mxu0 0.0
    %2889 = vmatpush1.msra.mxu0 0.0
    %2890 = vmatprep.subr.mxu0 0.0
    %2891 = vmatpush1.msra.mxu0 0.0
    %2892 = vmatprep.subr.mxu0 0.0
    %2893 = vmatpush1.msra.mxu0 0.0
    %2894 = vmatprep.subr.mxu0 0.0
    %2895 = vmatpush1.msra.mxu0 0.0
    %2896 = vmatprep.subr.mxu0 0.0
    %2897 = vmatpush1.msra.mxu0 0.0
    %2898 = vmatprep.subr.mxu0 0.0
    %2899 = vmatpush1.msra.mxu0 0.0
    %2900 = vmatprep.subr.mxu0 0.0
    %2901 = vmatpush1.msra.mxu0 0.0
    %2902 = vmatprep.subr.mxu0 0.0
    %2903 = vmatpush1.msra.mxu0 0.0
    %2904 = vmatprep.subr.mxu0 0.0
    %2905 = vmatpush1.msra.mxu0 0.0
    %2906 = vmatprep.subr.mxu0 0.0
    %2907 = vmatpush1.msra.mxu0 0.0
    %2908 = vmatprep.subr.mxu0 0.0
    %2909 = vmatpush1.msra.mxu0 0.0
    %2910 = vmatprep.subr.mxu0 0.0
    %2911 = vmatpush1.msra.mxu0 0.0
    %2912 = vmatprep.subr.mxu0 0.0
    %2913 = vmatpush1.msra.mxu0 0.0
    %2914 = vmatprep.subr.mxu0 0.0
    %2915 = vmatpush1.msra.mxu0 0.0
    %2916 = vmatprep.subr.mxu0 0.0
    %2917 = vmatpush1.msra.mxu0 0.0
    %2918 = vmatprep.subr.mxu0 0.0
    %2919 = vmatpush1.msra.mxu0 0.0
    %2920 = vmatprep.mubr.f32.mxu0 0.0
    %2921 = vmatmul.mubr.f32.gmra.mrb[0].mxu0 %v2519
    %v2922 = vpop.f32.mrb[0].mxu0
    %v2923 = vadd.f32 0.0, %v2922
    %v2924 = vpop.f32.mrb[0].mxu0
    %v2925 = vadd.f32 0.0, %v2924
    %2926 = vdwg.mxu0
    %2927 = vmatprep.subr.mxu0 %v868
    %2928 = vmatpush1.msra.mxu0 %v867
    %2929 = vmatprep.subr.mxu0 %v872
    %2930 = vmatpush1.msra.mxu0 %v871
    %2931 = vmatprep.subr.mxu0 %v876
    %2932 = vmatpush1.msra.mxu0 %v875
    %2933 = vmatprep.subr.mxu0 %v880
    %2934 = vmatpush1.msra.mxu0 %v879
    %2935 = vmatprep.subr.mxu0 %v884
    %2936 = vmatpush1.msra.mxu0 %v883
    %2937 = vmatprep.subr.mxu0 %v888
    %2938 = vmatpush1.msra.mxu0 %v887
    %2939 = vmatprep.subr.mxu0 %v892
    %2940 = vmatpush1.msra.mxu0 %v891
    %2941 = vmatprep.subr.mxu0 %v896
    %2942 = vmatpush1.msra.mxu0 %v895
    %2943 = vmatprep.subr.mxu0 %v900
    %2944 = vmatpush1.msra.mxu0 %v899
    %2945 = vmatprep.subr.mxu0 %v904
    %2946 = vmatpush1.msra.mxu0 %v903
    %2947 = vmatprep.subr.mxu0 %v908
    %2948 = vmatpush1.msra.mxu0 %v907
    %2949 = vmatprep.subr.mxu0 %v912
    %2950 = vmatpush1.msra.mxu0 %v911
    %2951 = vmatprep.subr.mxu0 %v916
    %2952 = vmatpush1.msra.mxu0 %v915
    %2953 = vmatprep.subr.mxu0 %v920
    %2954 = vmatpush1.msra.mxu0 %v919
    %2955 = vmatprep.subr.mxu0 %v924
    %2956 = vmatpush1.msra.mxu0 %v923
    %2957 = vmatprep.subr.mxu0 %v928
    %2958 = vmatpush1.msra.mxu0 %v927
    %2959 = vmatprep.subr.mxu0 0.0
    %2960 = vmatpush1.msra.mxu0 0.0
    %2961 = vmatprep.subr.mxu0 0.0
    %2962 = vmatpush1.msra.mxu0 0.0
    %2963 = vmatprep.subr.mxu0 0.0
    %2964 = vmatpush1.msra.mxu0 0.0
    %2965 = vmatprep.subr.mxu0 0.0
    %2966 = vmatpush1.msra.mxu0 0.0
    %2967 = vmatprep.subr.mxu0 0.0
    %2968 = vmatpush1.msra.mxu0 0.0
    %2969 = vmatprep.subr.mxu0 0.0
    %2970 = vmatpush1.msra.mxu0 0.0
    %2971 = vmatprep.subr.mxu0 0.0
    %2972 = vmatpush1.msra.mxu0 0.0
    %2973 = vmatprep.subr.mxu0 0.0
    %2974 = vmatpush1.msra.mxu0 0.0
    %2975 = vmatprep.subr.mxu0 0.0
    %2976 = vmatpush1.msra.mxu0 0.0
    %2977 = vmatprep.subr.mxu0 0.0
    %2978 = vmatpush1.msra.mxu0 0.0
    %2979 = vmatprep.subr.mxu0 0.0
    %2980 = vmatpush1.msra.mxu0 0.0
    %2981 = vmatprep.subr.mxu0 0.0
    %2982 = vmatpush1.msra.mxu0 0.0
    %2983 = vmatprep.subr.mxu0 0.0
    %2984 = vmatpush1.msra.mxu0 0.0
    %2985 = vmatprep.subr.mxu0 0.0
    %2986 = vmatpush1.msra.mxu0 0.0
    %2987 = vmatprep.subr.mxu0 0.0
    %2988 = vmatpush1.msra.mxu0 0.0
    %2989 = vmatprep.subr.mxu0 0.0
    %2990 = vmatpush1.msra.mxu0 0.0
    %2991 = vmatprep.mubr.f32.mxu0 0.0
    %2992 = vmatmul.mubr.f32.gmra.mrb[0].mxu0 %v2519
    %v2993 = vpop.f32.mrb[0].mxu0
    %v2994 = vadd.f32 0.0, %v2993
    %v2995 = vpop.f32.mrb[0].mxu0
    %v2996 = vadd.f32 0.0, %v2995
    %2997 = vdwg.mxu0
    %v2998 = vadd.f32 %v2781, %v2923
    %v2999 = vadd.f32 %v2783, %v2925
    %v3000 = vadd.f32 %v2852, %v2994
    %v3001 = vadd.f32 %v2854, %v2996
    %v3002 = vxor.u32 %v2998, 2147483648
    %v3003 = vmul.f32 %v3002, 1.442695
    %v3004 = vpow.pop %v3003
    %v3005 = vadd.f32 %v3004, 1.0
    %v3006 = vrcp.pop %v3005
    %v3007 = vmul.f32 1.0, %v3006
    %v3008 = vxor.u32 %v2999, 2147483648
    %v3009 = vmul.f32 %v3008, 1.442695
    %v3010 = vpow.pop %v3009
    %v3011 = vadd.f32 %v3010, 1.0
    %v3012 = vrcp.pop %v3011
    %v3013 = vmul.f32 1.0, %v3012
    %v3014 = vtanh.pop %v3000
    %v3015 = vxor.u32 %v3001, 2147483648
    %v3016 = vmul.f32 %v3015, 1.442695
    %v3017 = vpow.pop %v3016
    %v3018 = vadd.f32 %v3017, 1.0
    %v3019 = vrcp.pop %v3018
    %v3020 = vmul.f32 1.0, %v3019
    %v3021 = vmul.f32 %v3013, %v2517
    %v3022 = vmul.f32 %v3007, %v3014
    %v3023 = vadd.f32 %v3021, %v3022
    %v3024 = vtanh.pop %v3023
    %v3025 = vmul.f32 %v3020, %v3024
    %3026 = vst [vmem:[#allocation3 + $0x3] sm:$0x1] %v3025
    %3027 = vst [vmem:[#allocation3 + $0xa] sm:$0x2] %v3025
    %v3028 = vld [vmem:[#allocation2 + $0x20] sm:$0x3]
    %v3029 = vld [vmem:[#allocation2 + $0x28] sm:$0x3]
    %v3030 = vld [vmem:[#allocation2 + $0x30] sm:$0x3]
    %v3031 = vld [vmem:[#allocation2 + $0x38] sm:$0x3]
    %3032 = vmatprep.subr.mxu0 %v797
    %3033 = vmatpush1.msra.mxu0 %v796
    %3034 = vmatprep.subr.mxu0 %v801
    %3035 = vmatpush1.msra.mxu0 %v800
    %3036 = vmatprep.subr.mxu0 %v805
    %3037 = vmatpush1.msra.mxu0 %v804
    %3038 = vmatprep.subr.mxu0 %v809
    %3039 = vmatpush1.msra.mxu0 %v808
    %3040 = vmatprep.subr.mxu0 %v813
    %3041 = vmatpush1.msra.mxu0 %v812
    %3042 = vmatprep.subr.mxu0 %v817
    %3043 = vmatpush1.msra.mxu0 %v816
    %3044 = vmatprep.subr.mxu0 %v821
    %3045 = vmatpush1.msra.mxu0 %v820
    %3046 = vmatprep.subr.mxu0 %v825
    %3047 = vmatpush1.msra.mxu0 %v824
    %3048 = vmatprep.subr.mxu0 %v829
    %3049 = vmatpush1.msra.mxu0 %v828
    %3050 = vmatprep.subr.mxu0 %v833
    %3051 = vmatpush1.msra.mxu0 %v832
    %3052 = vmatprep.subr.mxu0 %v837
    %3053 = vmatpush1.msra.mxu0 %v836
    %3054 = vmatprep.subr.mxu0 %v841
    %3055 = vmatpush1.msra.mxu0 %v840
    %3056 = vmatprep.subr.mxu0 %v845
    %3057 = vmatpush1.msra.mxu0 %v844
    %3058 = vmatprep.subr.mxu0 %v849
    %3059 = vmatpush1.msra.mxu0 %v848
    %3060 = vmatprep.subr.mxu0 %v853
    %3061 = vmatpush1.msra.mxu0 %v852
    %3062 = vmatprep.subr.mxu0 %v857
    %3063 = vmatpush1.msra.mxu0 %v856
    %3064 = vmatprep.subr.mxu0 0.0
    %3065 = vmatpush1.msra.mxu0 0.0
    %3066 = vmatprep.subr.mxu0 0.0
    %3067 = vmatpush1.msra.mxu0 0.0
    %3068 = vmatprep.subr.mxu0 0.0
    %3069 = vmatpush1.msra.mxu0 0.0
    %3070 = vmatprep.subr.mxu0 0.0
    %3071 = vmatpush1.msra.mxu0 0.0
    %3072 = vmatprep.subr.mxu0 0.0
    %3073 = vmatpush1.msra.mxu0 0.0
    %3074 = vmatprep.subr.mxu0 0.0
    %3075 = vmatpush1.msra.mxu0 0.0
    %3076 = vmatprep.subr.mxu0 0.0
    %3077 = vmatpush1.msra.mxu0 0.0
    %3078 = vmatprep.subr.mxu0 0.0
    %3079 = vmatpush1.msra.mxu0 0.0
    %3080 = vmatprep.subr.mxu0 0.0
    %3081 = vmatpush1.msra.mxu0 0.0
    %3082 = vmatprep.subr.mxu0 0.0
    %3083 = vmatpush1.msra.mxu0 0.0
    %3084 = vmatprep.subr.mxu0 0.0
    %3085 = vmatpush1.msra.mxu0 0.0
    %3086 = vmatprep.subr.mxu0 0.0
    %3087 = vmatpush1.msra.mxu0 0.0
    %3088 = vmatprep.subr.mxu0 0.0
    %3089 = vmatpush1.msra.mxu0 0.0
    %3090 = vmatprep.subr.mxu0 0.0
    %3091 = vmatpush1.msra.mxu0 0.0
    %3092 = vmatprep.subr.mxu0 0.0
    %3093 = vmatpush1.msra.mxu0 0.0
    %3094 = vmatprep.subr.mxu0 0.0
    %3095 = vmatpush1.msra.mxu0 0.0
    %3096 = vmatprep.mubr.f32.mxu0 0.0
    %3097 = vmatmul.mubr.f32.gmra.mrb[0].mxu0 %v2712
    %v3098 = vpop.f32.mrb[0].mxu0
    %v3099 = vadd.f32 0.0, %v3098
    %v3100 = vpop.f32.mrb[0].mxu0
    %v3101 = vadd.f32 0.0, %v3100
    %3102 = vdwg.mxu0
    %3103 = vmatprep.subr.mxu0 %v799
    %3104 = vmatpush1.msra.mxu0 %v798
    %3105 = vmatprep.subr.mxu0 %v803
    %3106 = vmatpush1.msra.mxu0 %v802
    %3107 = vmatprep.subr.mxu0 %v807
    %3108 = vmatpush1.msra.mxu0 %v806
    %3109 = vmatprep.subr.mxu0 %v811
    %3110 = vmatpush1.msra.mxu0 %v810
    %3111 = vmatprep.subr.mxu0 %v815
    %3112 = vmatpush1.msra.mxu0 %v814
    %3113 = vmatprep.subr.mxu0 %v819
    %3114 = vmatpush1.msra.mxu0 %v818
    %3115 = vmatprep.subr.mxu0 %v823
    %3116 = vmatpush1.msra.mxu0 %v822
    %3117 = vmatprep.subr.mxu0 %v827
    %3118 = vmatpush1.msra.mxu0 %v826
    %3119 = vmatprep.subr.mxu0 %v831
    %3120 = vmatpush1.msra.mxu0 %v830
    %3121 = vmatprep.subr.mxu0 %v835
    %3122 = vmatpush1.msra.mxu0 %v834
    %3123 = vmatprep.subr.mxu0 %v839
    %3124 = vmatpush1.msra.mxu0 %v838
    %3125 = vmatprep.subr.mxu0 %v843
    %3126 = vmatpush1.msra.mxu0 %v842
    %3127 = vmatprep.subr.mxu0 %v847
    %3128 = vmatpush1.msra.mxu0 %v846
    %3129 = vmatprep.subr.mxu0 %v851
    %3130 = vmatpush1.msra.mxu0 %v850
    %3131 = vmatprep.subr.mxu0 %v855
    %3132 = vmatpush1.msra.mxu0 %v854
    %3133 = vmatprep.subr.mxu0 %v859
    %3134 = vmatpush1.msra.mxu0 %v858
    %3135 = vmatprep.subr.mxu0 0.0
    %3136 = vmatpush1.msra.mxu0 0.0
    %3137 = vmatprep.subr.mxu0 0.0
    %3138 = vmatpush1.msra.mxu0 0.0
    %3139 = vmatprep.subr.mxu0 0.0
    %3140 = vmatpush1.msra.mxu0 0.0
    %3141 = vmatprep.subr.mxu0 0.0
    %3142 = vmatpush1.msra.mxu0 0.0
    %3143 = vmatprep.subr.mxu0 0.0
    %3144 = vmatpush1.msra.mxu0 0.0
    %3145 = vmatprep.subr.mxu0 0.0
    %3146 = vmatpush1.msra.mxu0 0.0
    %3147 = vmatprep.subr.mxu0 0.0
    %3148 = vmatpush1.msra.mxu0 0.0
    %3149 = vmatprep.subr.mxu0 0.0
    %3150 = vmatpush1.msra.mxu0 0.0
    %3151 = vmatprep.subr.mxu0 0.0
    %3152 = vmatpush1.msra.mxu0 0.0
    %3153 = vmatprep.subr.mxu0 0.0
    %3154 = vmatpush1.msra.mxu0 0.0
    %3155 = vmatprep.subr.mxu0 0.0
    %3156 = vmatpush1.msra.mxu0 0.0
    %3157 = vmatprep.subr.mxu0 0.0
    %3158 = vmatpush1.msra.mxu0 0.0
    %3159 = vmatprep.subr.mxu0 0.0
    %3160 = vmatpush1.msra.mxu0 0.0
    %3161 = vmatprep.subr.mxu0 0.0
    %3162 = vmatpush1.msra.mxu0 0.0
    %3163 = vmatprep.subr.mxu0 0.0
    %3164 = vmatpush1.msra.mxu0 0.0
    %3165 = vmatprep.subr.mxu0 0.0
    %3166 = vmatpush1.msra.mxu0 0.0
    %3167 = vmatprep.mubr.f32.mxu0 0.0
    %3168 = vmatmul.mubr.f32.gmra.mrb[0].mxu0 %v2712
    %v3169 = vpop.f32.mrb[0].mxu0
    %v3170 = vadd.f32 0.0, %v3169
    %v3171 = vpop.f32.mrb[0].mxu0
    %v3172 = vadd.f32 0.0, %v3171
    %3173 = vdwg.mxu0
    %v3174 = vadd.f32 %v3028, %v3099
    %v3175 = vadd.f32 %v3029, %v3101
    %v3176 = vadd.f32 %v3030, %v3170
    %v3177 = vadd.f32 %v3031, %v3172
    %v3178 = vxor.u32 %v3174, 2147483648
    %v3179 = vmul.f32 %v3178, 1.442695
    %v3180 = vpow.pop %v3179
    %v3181 = vadd.f32 %v3180, 1.0
    %v3182 = vrcp.pop %v3181
    %v3183 = vmul.f32 1.0, %v3182
    %v3184 = vxor.u32 %v3175, 2147483648
    %v3185 = vmul.f32 %v3184, 1.442695
    %v3186 = vpow.pop %v3185
    %v3187 = vadd.f32 %v3186, 1.0
    %v3188 = vrcp.pop %v3187
    %v3189 = vmul.f32 1.0, %v3188
    %v3190 = vtanh.pop %v3176
    %v3191 = vxor.u32 %v3177, 2147483648
    %v3192 = vmul.f32 %v3191, 1.442695
    %v3193 = vpow.pop %v3192
    %v3194 = vadd.f32 %v3193, 1.0
    %v3195 = vrcp.pop %v3194
    %v3196 = vmul.f32 1.0, %v3195
    %v3198 = vrot.slane %v2708, 6
    %v3200 = vmul.f32 %v3189, %v3198
    %v3201 = vmul.f32 %v3183, %v3190
    %v3202 = vadd.f32 %v3200, %v3201
    %v3203 = vtanh.pop %v3202
    %v3204 = vmul.f32 %v3196, %v3203
    %3205 = vmatprep.subr.mxu0 %v930
    %3206 = vmatpush1.msra.mxu0 %v929
    %3207 = vmatprep.subr.mxu0 %v934
    %3208 = vmatpush1.msra.mxu0 %v933
    %3209 = vmatprep.subr.mxu0 %v938
    %3210 = vmatpush1.msra.mxu0 %v937
    %3211 = vmatprep.subr.mxu0 %v942
    %3212 = vmatpush1.msra.mxu0 %v941
    %3213 = vmatprep.subr.mxu0 %v946
    %3214 = vmatpush1.msra.mxu0 %v945
    %3215 = vmatprep.subr.mxu0 %v950
    %3216 = vmatpush1.msra.mxu0 %v949
    %3217 = vmatprep.subr.mxu0 %v954
    %3218 = vmatpush1.msra.mxu0 %v953
    %3219 = vmatprep.subr.mxu0 %v958
    %3220 = vmatpush1.msra.mxu0 %v957
    %3221 = vmatprep.subr.mxu0 %v962
    %3222 = vmatpush1.msra.mxu0 %v961
    %3223 = vmatprep.subr.mxu0 %v966
    %3224 = vmatpush1.msra.mxu0 %v965
    %3225 = vmatprep.subr.mxu0 %v970
    %3226 = vmatpush1.msra.mxu0 %v969
    %3227 = vmatprep.subr.mxu0 %v974
    %3228 = vmatpush1.msra.mxu0 %v973
    %3229 = vmatprep.subr.mxu0 %v978
    %3230 = vmatpush1.msra.mxu0 %v977
    %3231 = vmatprep.subr.mxu0 %v982
    %3232 = vmatpush1.msra.mxu0 %v981
    %3233 = vmatprep.subr.mxu0 %v986
    %3234 = vmatpush1.msra.mxu0 %v985
    %3235 = vmatprep.subr.mxu0 %v990
    %3236 = vmatpush1.msra.mxu0 %v989
    %3237 = vmatprep.subr.mxu0 0.0
    %3238 = vmatpush1.msra.mxu0 0.0
    %3239 = vmatprep.subr.mxu0 0.0
    %3240 = vmatpush1.msra.mxu0 0.0
    %3241 = vmatprep.subr.mxu0 0.0
    %3242 = vmatpush1.msra.mxu0 0.0
    %3243 = vmatprep.subr.mxu0 0.0
    %3244 = vmatpush1.msra.mxu0 0.0
    %3245 = vmatprep.subr.mxu0 0.0
    %3246 = vmatpush1.msra.mxu0 0.0
    %3247 = vmatprep.subr.mxu0 0.0
    %3248 = vmatpush1.msra.mxu0 0.0
    %3249 = vmatprep.subr.mxu0 0.0
    %3250 = vmatpush1.msra.mxu0 0.0
    %3251 = vmatprep.subr.mxu0 0.0
    %3252 = vmatpush1.msra.mxu0 0.0
    %3253 = vmatprep.subr.mxu0 0.0
    %3254 = vmatpush1.msra.mxu0 0.0
    %3255 = vmatprep.subr.mxu0 0.0
    %3256 = vmatpush1.msra.mxu0 0.0
    %3257 = vmatprep.subr.mxu0 0.0
    %3258 = vmatpush1.msra.mxu0 0.0
    %3259 = vmatprep.subr.mxu0 0.0
    %3260 = vmatpush1.msra.mxu0 0.0
    %3261 = vmatprep.subr.mxu0 0.0
    %3262 = vmatpush1.msra.mxu0 0.0
    %3263 = vmatprep.subr.mxu0 0.0
    %3264 = vmatpush1.msra.mxu0 0.0
    %3265 = vmatprep.subr.mxu0 0.0
    %3266 = vmatpush1.msra.mxu0 0.0
    %3267 = vmatprep.subr.mxu0 0.0
    %3268 = vmatpush1.msra.mxu0 0.0
    %3269 = vmatprep.mubr.f32.mxu0 0.0
    %3270 = vmatmul.mubr.f32.gmra.mrb[0].mxu0 %v3204
    %v3271 = vpop.f32.mrb[0].mxu0
    %v3272 = vadd.f32 %v1179, %v3271
    %v3273 = vpop.f32.mrb[0].mxu0
    %v3274 = vadd.f32 %v1183, %v3273
    %3275 = vdwg.mxu0
    %3276 = vmatprep.subr.mxu0 %v932
    %3277 = vmatpush1.msra.mxu0 %v931
    %3278 = vmatprep.subr.mxu0 %v936
    %3279 = vmatpush1.msra.mxu0 %v935
    %3280 = vmatprep.subr.mxu0 %v940
    %3281 = vmatpush1.msra.mxu0 %v939
    %3282 = vmatprep.subr.mxu0 %v944
    %3283 = vmatpush1.msra.mxu0 %v943
    %3284 = vmatprep.subr.mxu0 %v948
    %3285 = vmatpush1.msra.mxu0 %v947
    %3286 = vmatprep.subr.mxu0 %v952
    %3287 = vmatpush1.msra.mxu0 %v951
    %3288 = vmatprep.subr.mxu0 %v956
    %3289 = vmatpush1.msra.mxu0 %v955
    %3290 = vmatprep.subr.mxu0 %v960
    %3291 = vmatpush1.msra.mxu0 %v959
    %3292 = vmatprep.subr.mxu0 %v964
    %3293 = vmatpush1.msra.mxu0 %v963
    %3294 = vmatprep.subr.mxu0 %v968
    %3295 = vmatpush1.msra.mxu0 %v967
    %3296 = vmatprep.subr.mxu0 %v972
    %3297 = vmatpush1.msra.mxu0 %v971
    %3298 = vmatprep.subr.mxu0 %v976
    %3299 = vmatpush1.msra.mxu0 %v975
    %3300 = vmatprep.subr.mxu0 %v980
    %3301 = vmatpush1.msra.mxu0 %v979
    %3302 = vmatprep.subr.mxu0 %v984
    %3303 = vmatpush1.msra.mxu0 %v983
    %3304 = vmatprep.subr.mxu0 %v988
    %3305 = vmatpush1.msra.mxu0 %v987
    %3306 = vmatprep.subr.mxu0 %v992
    %3307 = vmatpush1.msra.mxu0 %v991
    %3308 = vmatprep.subr.mxu0 0.0
    %3309 = vmatpush1.msra.mxu0 0.0
    %3310 = vmatprep.subr.mxu0 0.0
    %3311 = vmatpush1.msra.mxu0 0.0
    %3312 = vmatprep.subr.mxu0 0.0
    %3313 = vmatpush1.msra.mxu0 0.0
    %3314 = vmatprep.subr.mxu0 0.0
    %3315 = vmatpush1.msra.mxu0 0.0
    %3316 = vmatprep.subr.mxu0 0.0
    %3317 = vmatpush1.msra.mxu0 0.0
    %3318 = vmatprep.subr.mxu0 0.0
    %3319 = vmatpush1.msra.mxu0 0.0
    %3320 = vmatprep.subr.mxu0 0.0
    %3321 = vmatpush1.msra.mxu0 0.0
    %3322 = vmatprep.subr.mxu0 0.0
    %3323 = vmatpush1.msra.mxu0 0.0
    %3324 = vmatprep.subr.mxu0 0.0
    %3325 = vmatpush1.msra.mxu0 0.0
    %3326 = vmatprep.subr.mxu0 0.0
    %3327 = vmatpush1.msra.mxu0 0.0
    %3328 = vmatprep.subr.mxu0 0.0
    %3329 = vmatpush1.msra.mxu0 0.0
    %3330 = vmatprep.subr.mxu0 0.0
    %3331 = vmatpush1.msra.mxu0 0.0
    %3332 = vmatprep.subr.mxu0 0.0
    %3333 = vmatpush1.msra.mxu0 0.0
    %3334 = vmatprep.subr.mxu0 0.0
    %3335 = vmatpush1.msra.mxu0 0.0
    %3336 = vmatprep.subr.mxu0 0.0
    %3337 = vmatpush1.msra.mxu0 0.0
    %3338 = vmatprep.subr.mxu0 0.0
    %3339 = vmatpush1.msra.mxu0 0.0
    %3340 = vmatprep.mubr.f32.mxu0 0.0
    %3341 = vmatmul.mubr.f32.gmra.mrb[0].mxu0 %v3204
    %v3342 = vpop.f32.mrb[0].mxu0
    %v3343 = vadd.f32 %v1187, %v3342
    %v3344 = vpop.f32.mrb[0].mxu0
    %v3345 = vadd.f32 %v1191, %v3344
    %3346 = vdwg.mxu0
    %3347 = vmatprep.subr.mxu0 %v866
    %3348 = vmatpush1.msra.mxu0 %v865
    %3349 = vmatprep.subr.mxu0 %v870
    %3350 = vmatpush1.msra.mxu0 %v869
    %3351 = vmatprep.subr.mxu0 %v874
    %3352 = vmatpush1.msra.mxu0 %v873
    %3353 = vmatprep.subr.mxu0 %v878
    %3354 = vmatpush1.msra.mxu0 %v877
    %3355 = vmatprep.subr.mxu0 %v882
    %3356 = vmatpush1.msra.mxu0 %v881
    %3357 = vmatprep.subr.mxu0 %v886
    %3358 = vmatpush1.msra.mxu0 %v885
    %3359 = vmatprep.subr.mxu0 %v890
    %3360 = vmatpush1.msra.mxu0 %v889
    %3361 = vmatprep.subr.mxu0 %v894
    %3362 = vmatpush1.msra.mxu0 %v893
    %3363 = vmatprep.subr.mxu0 %v898
    %3364 = vmatpush1.msra.mxu0 %v897
    %3365 = vmatprep.subr.mxu0 %v902
    %3366 = vmatpush1.msra.mxu0 %v901
    %3367 = vmatprep.subr.mxu0 %v906
    %3368 = vmatpush1.msra.mxu0 %v905
    %3369 = vmatprep.subr.mxu0 %v910
    %3370 = vmatpush1.msra.mxu0 %v909
    %3371 = vmatprep.subr.mxu0 %v914
    %3372 = vmatpush1.msra.mxu0 %v913
    %3373 = vmatprep.subr.mxu0 %v918
    %3374 = vmatpush1.msra.mxu0 %v917
    %3375 = vmatprep.subr.mxu0 %v922
    %3376 = vmatpush1.msra.mxu0 %v921
    %3377 = vmatprep.subr.mxu0 %v926
    %3378 = vmatpush1.msra.mxu0 %v925
    %3379 = vmatprep.subr.mxu0 0.0
    %3380 = vmatpush1.msra.mxu0 0.0
    %3381 = vmatprep.subr.mxu0 0.0
    %3382 = vmatpush1.msra.mxu0 0.0
    %3383 = vmatprep.subr.mxu0 0.0
    %3384 = vmatpush1.msra.mxu0 0.0
    %3385 = vmatprep.subr.mxu0 0.0
    %3386 = vmatpush1.msra.mxu0 0.0
    %3387 = vmatprep.subr.mxu0 0.0
    %3388 = vmatpush1.msra.mxu0 0.0
    %3389 = vmatprep.subr.mxu0 0.0
    %3390 = vmatpush1.msra.mxu0 0.0
    %3391 = vmatprep.subr.mxu0 0.0
    %3392 = vmatpush1.msra.mxu0 0.0
    %3393 = vmatprep.subr.mxu0 0.0
    %3394 = vmatpush1.msra.mxu0 0.0
    %3395 = vmatprep.subr.mxu0 0.0
    %3396 = vmatpush1.msra.mxu0 0.0
    %3397 = vmatprep.subr.mxu0 0.0
    %3398 = vmatpush1.msra.mxu0 0.0
    %3399 = vmatprep.subr.mxu0 0.0
    %3400 = vmatpush1.msra.mxu0 0.0
    %3401 = vmatprep.subr.mxu0 0.0
    %3402 = vmatpush1.msra.mxu0 0.0
    %3403 = vmatprep.subr.mxu0 0.0
    %3404 = vmatpush1.msra.mxu0 0.0
    %3405 = vmatprep.subr.mxu0 0.0
    %3406 = vmatpush1.msra.mxu0 0.0
    %3407 = vmatprep.subr.mxu0 0.0
    %3408 = vmatpush1.msra.mxu0 0.0
    %3409 = vmatprep.subr.mxu0 0.0
    %3410 = vmatpush1.msra.mxu0 0.0
    %3411 = vmatprep.mubr.f32.mxu0 0.0
    %3412 = vmatmul.mubr.f32.gmra.mrb[0].mxu0 %v3025
    %v3413 = vpop.f32.mrb[0].mxu0
    %v3414 = vadd.f32 0.0, %v3413
    %v3415 = vpop.f32.mrb[0].mxu0
    %v3416 = vadd.f32 0.0, %v3415
    %3417 = vdwg.mxu0
    %3418 = vmatprep.subr.mxu0 %v868
    %3419 = vmatpush1.msra.mxu0 %v867
    %3420 = vmatprep.subr.mxu0 %v872
    %3421 = vmatpush1.msra.mxu0 %v871
    %3422 = vmatprep.subr.mxu0 %v876
    %3423 = vmatpush1.msra.mxu0 %v875
    %3424 = vmatprep.subr.mxu0 %v880
    %3425 = vmatpush1.msra.mxu0 %v879
    %3426 = vmatprep.subr.mxu0 %v884
    %3427 = vmatpush1.msra.mxu0 %v883
    %3428 = vmatprep.subr.mxu0 %v888
    %3429 = vmatpush1.msra.mxu0 %v887
    %3430 = vmatprep.subr.mxu0 %v892
    %3431 = vmatpush1.msra.mxu0 %v891
    %3432 = vmatprep.subr.mxu0 %v896
    %3433 = vmatpush1.msra.mxu0 %v895
    %3434 = vmatprep.subr.mxu0 %v900
    %3435 = vmatpush1.msra.mxu0 %v899
    %3436 = vmatprep.subr.mxu0 %v904
    %3437 = vmatpush1.msra.mxu0 %v903
    %3438 = vmatprep.subr.mxu0 %v908
    %3439 = vmatpush1.msra.mxu0 %v907
    %3440 = vmatprep.subr.mxu0 %v912
    %3441 = vmatpush1.msra.mxu0 %v911
    %3442 = vmatprep.subr.mxu0 %v916
    %3443 = vmatpush1.msra.mxu0 %v915
    %3444 = vmatprep.subr.mxu0 %v920
    %3445 = vmatpush1.msra.mxu0 %v919
    %3446 = vmatprep.subr.mxu0 %v924
    %3447 = vmatpush1.msra.mxu0 %v923
    %3448 = vmatprep.subr.mxu0 %v928
    %3449 = vmatpush1.msra.mxu0 %v927
    %3450 = vmatprep.subr.mxu0 0.0
    %3451 = vmatpush1.msra.mxu0 0.0
    %3452 = vmatprep.subr.mxu0 0.0
    %3453 = vmatpush1.msra.mxu0 0.0
    %3454 = vmatprep.subr.mxu0 0.0
    %3455 = vmatpush1.msra.mxu0 0.0
    %3456 = vmatprep.subr.mxu0 0.0
    %3457 = vmatpush1.msra.mxu0 0.0
    %3458 = vmatprep.subr.mxu0 0.0
    %3459 = vmatpush1.msra.mxu0 0.0
    %3460 = vmatprep.subr.mxu0 0.0
    %3461 = vmatpush1.msra.mxu0 0.0
    %3462 = vmatprep.subr.mxu0 0.0
    %3463 = vmatpush1.msra.mxu0 0.0
    %3464 = vmatprep.subr.mxu0 0.0
    %3465 = vmatpush1.msra.mxu0 0.0
    %3466 = vmatprep.subr.mxu0 0.0
    %3467 = vmatpush1.msra.mxu0 0.0
    %3468 = vmatprep.subr.mxu0 0.0
    %3469 = vmatpush1.msra.mxu0 0.0
    %3470 = vmatprep.subr.mxu0 0.0
    %3471 = vmatpush1.msra.mxu0 0.0
    %3472 = vmatprep.subr.mxu0 0.0
    %3473 = vmatpush1.msra.mxu0 0.0
    %3474 = vmatprep.subr.mxu0 0.0
    %3475 = vmatpush1.msra.mxu0 0.0
    %3476 = vmatprep.subr.mxu0 0.0
    %3477 = vmatpush1.msra.mxu0 0.0
    %3478 = vmatprep.subr.mxu0 0.0
    %3479 = vmatpush1.msra.mxu0 0.0
    %3480 = vmatprep.subr.mxu0 0.0
    %3481 = vmatpush1.msra.mxu0 0.0
    %3482 = vmatprep.mubr.f32.mxu0 0.0
    %3483 = vmatmul.mubr.f32.gmra.mrb[0].mxu0 %v3025
    %v3484 = vpop.f32.mrb[0].mxu0
    %v3485 = vadd.f32 0.0, %v3484
    %v3486 = vpop.f32.mrb[0].mxu0
    %v3487 = vadd.f32 0.0, %v3486
    %3488 = vdwg.mxu0
    %v3489 = vadd.f32 %v3272, %v3414
    %v3490 = vadd.f32 %v3274, %v3416
    %v3491 = vadd.f32 %v3343, %v3485
    %v3492 = vadd.f32 %v3345, %v3487
    %v3493 = vxor.u32 %v3489, 2147483648
    %v3494 = vmul.f32 %v3493, 1.442695
    %v3495 = vpow.pop %v3494
    %v3496 = vadd.f32 %v3495, 1.0
    %v3497 = vrcp.pop %v3496
    %v3498 = vmul.f32 1.0, %v3497
    %v3499 = vxor.u32 %v3490, 2147483648
    %v3500 = vmul.f32 %v3499, 1.442695
    %v3501 = vpow.pop %v3500
    %v3502 = vadd.f32 %v3501, 1.0
    %v3503 = vrcp.pop %v3502
    %v3504 = vmul.f32 1.0, %v3503
    %v3505 = vtanh.pop %v3491
    %v3506 = vxor.u32 %v3492, 2147483648
    %v3507 = vmul.f32 %v3506, 1.442695
    %v3508 = vpow.pop %v3507
    %v3509 = vadd.f32 %v3508, 1.0
    %v3510 = vrcp.pop %v3509
    %v3511 = vmul.f32 1.0, %v3510
    %v3512 = vmul.f32 %v3504, %v3023
    %v3513 = vmul.f32 %v3498, %v3505
    %v3514 = vadd.f32 %v3512, %v3513
    %v3515 = vtanh.pop %v3514
    %v3516 = vmul.f32 %v3511, %v3515
    %3517 = vst [vmem:[#allocation3 + $0x4] sm:$0x1] %v3516
    %3518 = vst [vmem:[#allocation3 + $0xb] sm:$0x2] %v3516
    %v3519 = vld [vmem:[#allocation2 + $0x20] sm:$0xc]
    %v3520 = vld [vmem:[#allocation2 + $0x28] sm:$0xc]
    %v3521 = vld [vmem:[#allocation2 + $0x30] sm:$0xc]
    %v3522 = vld [vmem:[#allocation2 + $0x38] sm:$0xc]
    %3523 = vmatprep.subr.mxu0 %v797
    %3524 = vmatpush1.msra.mxu0 %v796
    %3525 = vmatprep.subr.mxu0 %v801
    %3526 = vmatpush1.msra.mxu0 %v800
    %3527 = vmatprep.subr.mxu0 %v805
    %3528 = vmatpush1.msra.mxu0 %v804
    %3529 = vmatprep.subr.mxu0 %v809
    %3530 = vmatpush1.msra.mxu0 %v808
    %3531 = vmatprep.subr.mxu0 %v813
    %3532 = vmatpush1.msra.mxu0 %v812
    %3533 = vmatprep.subr.mxu0 %v817
    %3534 = vmatpush1.msra.mxu0 %v816
    %3535 = vmatprep.subr.mxu0 %v821
    %3536 = vmatpush1.msra.mxu0 %v820
    %3537 = vmatprep.subr.mxu0 %v825
    %3538 = vmatpush1.msra.mxu0 %v824
    %3539 = vmatprep.subr.mxu0 %v829
    %3540 = vmatpush1.msra.mxu0 %v828
    %3541 = vmatprep.subr.mxu0 %v833
    %3542 = vmatpush1.msra.mxu0 %v832
    %3543 = vmatprep.subr.mxu0 %v837
    %3544 = vmatpush1.msra.mxu0 %v836
    %3545 = vmatprep.subr.mxu0 %v841
    %3546 = vmatpush1.msra.mxu0 %v840
    %3547 = vmatprep.subr.mxu0 %v845
    %3548 = vmatpush1.msra.mxu0 %v844
    %3549 = vmatprep.subr.mxu0 %v849
    %3550 = vmatpush1.msra.mxu0 %v848
    %3551 = vmatprep.subr.mxu0 %v853
    %3552 = vmatpush1.msra.mxu0 %v852
    %3553 = vmatprep.subr.mxu0 %v857
    %3554 = vmatpush1.msra.mxu0 %v856
    %3555 = vmatprep.subr.mxu0 0.0
    %3556 = vmatpush1.msra.mxu0 0.0
    %3557 = vmatprep.subr.mxu0 0.0
    %3558 = vmatpush1.msra.mxu0 0.0
    %3559 = vmatprep.subr.mxu0 0.0
    %3560 = vmatpush1.msra.mxu0 0.0
    %3561 = vmatprep.subr.mxu0 0.0
    %3562 = vmatpush1.msra.mxu0 0.0
    %3563 = vmatprep.subr.mxu0 0.0
    %3564 = vmatpush1.msra.mxu0 0.0
    %3565 = vmatprep.subr.mxu0 0.0
    %3566 = vmatpush1.msra.mxu0 0.0
    %3567 = vmatprep.subr.mxu0 0.0
    %3568 = vmatpush1.msra.mxu0 0.0
    %3569 = vmatprep.subr.mxu0 0.0
    %3570 = vmatpush1.msra.mxu0 0.0
    %3571 = vmatprep.subr.mxu0 0.0
    %3572 = vmatpush1.msra.mxu0 0.0
    %3573 = vmatprep.subr.mxu0 0.0
    %3574 = vmatpush1.msra.mxu0 0.0
    %3575 = vmatprep.subr.mxu0 0.0
    %3576 = vmatpush1.msra.mxu0 0.0
    %3577 = vmatprep.subr.mxu0 0.0
    %3578 = vmatpush1.msra.mxu0 0.0
    %3579 = vmatprep.subr.mxu0 0.0
    %3580 = vmatpush1.msra.mxu0 0.0
    %3581 = vmatprep.subr.mxu0 0.0
    %3582 = vmatpush1.msra.mxu0 0.0
    %3583 = vmatprep.subr.mxu0 0.0
    %3584 = vmatpush1.msra.mxu0 0.0
    %3585 = vmatprep.subr.mxu0 0.0
    %3586 = vmatpush1.msra.mxu0 0.0
    %3587 = vmatprep.mubr.f32.mxu0 0.0
    %3588 = vmatmul.mubr.f32.gmra.mrb[0].mxu0 %v3204
    %v3589 = vpop.f32.mrb[0].mxu0
    %v3590 = vadd.f32 0.0, %v3589
    %v3591 = vpop.f32.mrb[0].mxu0
    %v3592 = vadd.f32 0.0, %v3591
    %3593 = vdwg.mxu0
    %3594 = vmatprep.subr.mxu0 %v799
    %3595 = vmatpush1.msra.mxu0 %v798
    %3596 = vmatprep.subr.mxu0 %v803
    %3597 = vmatpush1.msra.mxu0 %v802
    %3598 = vmatprep.subr.mxu0 %v807
    %3599 = vmatpush1.msra.mxu0 %v806
    %3600 = vmatprep.subr.mxu0 %v811
    %3601 = vmatpush1.msra.mxu0 %v810
    %3602 = vmatprep.subr.mxu0 %v815
    %3603 = vmatpush1.msra.mxu0 %v814
    %3604 = vmatprep.subr.mxu0 %v819
    %3605 = vmatpush1.msra.mxu0 %v818
    %3606 = vmatprep.subr.mxu0 %v823
    %3607 = vmatpush1.msra.mxu0 %v822
    %3608 = vmatprep.subr.mxu0 %v827
    %3609 = vmatpush1.msra.mxu0 %v826
    %3610 = vmatprep.subr.mxu0 %v831
    %3611 = vmatpush1.msra.mxu0 %v830
    %3612 = vmatprep.subr.mxu0 %v835
    %3613 = vmatpush1.msra.mxu0 %v834
    %3614 = vmatprep.subr.mxu0 %v839
    %3615 = vmatpush1.msra.mxu0 %v838
    %3616 = vmatprep.subr.mxu0 %v843
    %3617 = vmatpush1.msra.mxu0 %v842
    %3618 = vmatprep.subr.mxu0 %v847
    %3619 = vmatpush1.msra.mxu0 %v846
    %3620 = vmatprep.subr.mxu0 %v851
    %3621 = vmatpush1.msra.mxu0 %v850
    %3622 = vmatprep.subr.mxu0 %v855
    %3623 = vmatpush1.msra.mxu0 %v854
    %3624 = vmatprep.subr.mxu0 %v859
    %3625 = vmatpush1.msra.mxu0 %v858
    %3626 = vmatprep.subr.mxu0 0.0
    %3627 = vmatpush1.msra.mxu0 0.0
    %3628 = vmatprep.subr.mxu0 0.0
    %3629 = vmatpush1.msra.mxu0 0.0
    %3630 = vmatprep.subr.mxu0 0.0
    %3631 = vmatpush1.msra.mxu0 0.0
    %3632 = vmatprep.subr.mxu0 0.0
    %3633 = vmatpush1.msra.mxu0 0.0
    %3634 = vmatprep.subr.mxu0 0.0
    %3635 = vmatpush1.msra.mxu0 0.0
    %3636 = vmatprep.subr.mxu0 0.0
    %3637 = vmatpush1.msra.mxu0 0.0
    %3638 = vmatprep.subr.mxu0 0.0
    %3639 = vmatpush1.msra.mxu0 0.0
    %3640 = vmatprep.subr.mxu0 0.0
    %3641 = vmatpush1.msra.mxu0 0.0
    %3642 = vmatprep.subr.mxu0 0.0
    %3643 = vmatpush1.msra.mxu0 0.0
    %3644 = vmatprep.subr.mxu0 0.0
    %3645 = vmatpush1.msra.mxu0 0.0
    %3646 = vmatprep.subr.mxu0 0.0
    %3647 = vmatpush1.msra.mxu0 0.0
    %3648 = vmatprep.subr.mxu0 0.0
    %3649 = vmatpush1.msra.mxu0 0.0
    %3650 = vmatprep.subr.mxu0 0.0
    %3651 = vmatpush1.msra.mxu0 0.0
    %3652 = vmatprep.subr.mxu0 0.0
    %3653 = vmatpush1.msra.mxu0 0.0
    %3654 = vmatprep.subr.mxu0 0.0
    %3655 = vmatpush1.msra.mxu0 0.0
    %3656 = vmatprep.subr.mxu0 0.0
    %3657 = vmatpush1.msra.mxu0 0.0
    %3658 = vmatprep.mubr.f32.mxu0 0.0
    %3659 = vmatmul.mubr.f32.gmra.mrb[0].mxu0 %v3204
    %v3660 = vpop.f32.mrb[0].mxu0
    %v3661 = vadd.f32 0.0, %v3660
    %v3662 = vpop.f32.mrb[0].mxu0
    %v3663 = vadd.f32 0.0, %v3662
    %3664 = vdwg.mxu0
    %v3669 = vrot.slane %v3590, 6
    %v3670 = vrot.slane %v3592, 6
    %v3671 = vrot.slane %v3661, 6
    %v3672 = vrot.slane %v3663, 6
    %v3677 = vadd.f32 %v3519, %v3669
    %v3678 = vadd.f32 %v3520, %v3670
    %v3679 = vadd.f32 %v3521, %v3671
    %v3680 = vadd.f32 %v3522, %v3672
    %v3681 = vxor.u32 %v3677, 2147483648
    %v3682 = vmul.f32 %v3681, 1.442695
    %v3683 = vpow.pop %v3682
    %v3684 = vadd.f32 %v3683, 1.0
    %v3685 = vrcp.pop %v3684
    %v3686 = vmul.f32 1.0, %v3685
    %v3687 = vxor.u32 %v3678, 2147483648
    %v3688 = vmul.f32 %v3687, 1.442695
    %v3689 = vpow.pop %v3688
    %v3690 = vadd.f32 %v3689, 1.0
    %v3691 = vrcp.pop %v3690
    %v3692 = vmul.f32 1.0, %v3691
    %v3693 = vtanh.pop %v3679
    %v3694 = vxor.u32 %v3680, 2147483648
    %v3695 = vmul.f32 %v3694, 1.442695
    %v3696 = vpow.pop %v3695
    %v3697 = vadd.f32 %v3696, 1.0
    %v3698 = vrcp.pop %v3697
    %v3699 = vmul.f32 1.0, %v3698
    %v3701 = vrot.slane %v3202, 6
    %v3703 = vmul.f32 %v3692, %v3701
    %v3704 = vmul.f32 %v3686, %v3693
    %v3705 = vadd.f32 %v3703, %v3704
    %v3706 = vtanh.pop %v3705
    %v3707 = vmul.f32 %v3699, %v3706
    %v3709 = vrot.slane %v3707, 2
    %3711 = vmatprep.subr.mxu0 %v930
    %3712 = vmatpush1.msra.mxu0 %v929
    %3713 = vmatprep.subr.mxu0 %v934
    %3714 = vmatpush1.msra.mxu0 %v933
    %3715 = vmatprep.subr.mxu0 %v938
    %3716 = vmatpush1.msra.mxu0 %v937
    %3717 = vmatprep.subr.mxu0 %v942
    %3718 = vmatpush1.msra.mxu0 %v941
    %3719 = vmatprep.subr.mxu0 %v946
    %3720 = vmatpush1.msra.mxu0 %v945
    %3721 = vmatprep.subr.mxu0 %v950
    %3722 = vmatpush1.msra.mxu0 %v949
    %3723 = vmatprep.subr.mxu0 %v954
    %3724 = vmatpush1.msra.mxu0 %v953
    %3725 = vmatprep.subr.mxu0 %v958
    %3726 = vmatpush1.msra.mxu0 %v957
    %3727 = vmatprep.subr.mxu0 %v962
    %3728 = vmatpush1.msra.mxu0 %v961
    %3729 = vmatprep.subr.mxu0 %v966
    %3730 = vmatpush1.msra.mxu0 %v965
    %3731 = vmatprep.subr.mxu0 %v970
    %3732 = vmatpush1.msra.mxu0 %v969
    %3733 = vmatprep.subr.mxu0 %v974
    %3734 = vmatpush1.msra.mxu0 %v973
    %3735 = vmatprep.subr.mxu0 %v978
    %3736 = vmatpush1.msra.mxu0 %v977
    %3737 = vmatprep.subr.mxu0 %v982
    %3738 = vmatpush1.msra.mxu0 %v981
    %3739 = vmatprep.subr.mxu0 %v986
    %3740 = vmatpush1.msra.mxu0 %v985
    %3741 = vmatprep.subr.mxu0 %v990
    %3742 = vmatpush1.msra.mxu0 %v989
    %3743 = vmatprep.subr.mxu0 0.0
    %3744 = vmatpush1.msra.mxu0 0.0
    %3745 = vmatprep.subr.mxu0 0.0
    %3746 = vmatpush1.msra.mxu0 0.0
    %3747 = vmatprep.subr.mxu0 0.0
    %3748 = vmatpush1.msra.mxu0 0.0
    %3749 = vmatprep.subr.mxu0 0.0
    %3750 = vmatpush1.msra.mxu0 0.0
    %3751 = vmatprep.subr.mxu0 0.0
    %3752 = vmatpush1.msra.mxu0 0.0
    %3753 = vmatprep.subr.mxu0 0.0
    %3754 = vmatpush1.msra.mxu0 0.0
    %3755 = vmatprep.subr.mxu0 0.0
    %3756 = vmatpush1.msra.mxu0 0.0
    %3757 = vmatprep.subr.mxu0 0.0
    %3758 = vmatpush1.msra.mxu0 0.0
    %3759 = vmatprep.subr.mxu0 0.0
    %3760 = vmatpush1.msra.mxu0 0.0
    %3761 = vmatprep.subr.mxu0 0.0
    %3762 = vmatpush1.msra.mxu0 0.0
    %3763 = vmatprep.subr.mxu0 0.0
    %3764 = vmatpush1.msra.mxu0 0.0
    %3765 = vmatprep.subr.mxu0 0.0
    %3766 = vmatpush1.msra.mxu0 0.0
    %3767 = vmatprep.subr.mxu0 0.0
    %3768 = vmatpush1.msra.mxu0 0.0
    %3769 = vmatprep.subr.mxu0 0.0
    %3770 = vmatpush1.msra.mxu0 0.0
    %3771 = vmatprep.subr.mxu0 0.0
    %3772 = vmatpush1.msra.mxu0 0.0
    %3773 = vmatprep.subr.mxu0 0.0
    %3774 = vmatpush1.msra.mxu0 0.0
    %3775 = vmatprep.mubr.f32.mxu0 0.0
    %3776 = vmatmul.mubr.f32.gmra.mrb[0].mxu0 %v3709
    %v3777 = vpop.f32.mrb[0].mxu0
    %v3778 = vadd.f32 %v1179, %v3777
    %v3779 = vpop.f32.mrb[0].mxu0
    %v3780 = vadd.f32 %v1183, %v3779
    %3781 = vdwg.mxu0
    %3782 = vmatprep.subr.mxu0 %v932
    %3783 = vmatpush1.msra.mxu0 %v931
    %3784 = vmatprep.subr.mxu0 %v936
    %3785 = vmatpush1.msra.mxu0 %v935
    %3786 = vmatprep.subr.mxu0 %v940
    %3787 = vmatpush1.msra.mxu0 %v939
    %3788 = vmatprep.subr.mxu0 %v944
    %3789 = vmatpush1.msra.mxu0 %v943
    %3790 = vmatprep.subr.mxu0 %v948
    %3791 = vmatpush1.msra.mxu0 %v947
    %3792 = vmatprep.subr.mxu0 %v952
    %3793 = vmatpush1.msra.mxu0 %v951
    %3794 = vmatprep.subr.mxu0 %v956
    %3795 = vmatpush1.msra.mxu0 %v955
    %3796 = vmatprep.subr.mxu0 %v960
    %3797 = vmatpush1.msra.mxu0 %v959
    %3798 = vmatprep.subr.mxu0 %v964
    %3799 = vmatpush1.msra.mxu0 %v963
    %3800 = vmatprep.subr.mxu0 %v968
    %3801 = vmatpush1.msra.mxu0 %v967
    %3802 = vmatprep.subr.mxu0 %v972
    %3803 = vmatpush1.msra.mxu0 %v971
    %3804 = vmatprep.subr.mxu0 %v976
    %3805 = vmatpush1.msra.mxu0 %v975
    %3806 = vmatprep.subr.mxu0 %v980
    %3807 = vmatpush1.msra.mxu0 %v979
    %3808 = vmatprep.subr.mxu0 %v984
    %3809 = vmatpush1.msra.mxu0 %v983
    %3810 = vmatprep.subr.mxu0 %v988
    %3811 = vmatpush1.msra.mxu0 %v987
    %3812 = vmatprep.subr.mxu0 %v992
    %3813 = vmatpush1.msra.mxu0 %v991
    %3814 = vmatprep.subr.mxu0 0.0
    %3815 = vmatpush1.msra.mxu0 0.0
    %3816 = vmatprep.subr.mxu0 0.0
    %3817 = vmatpush1.msra.mxu0 0.0
    %3818 = vmatprep.subr.mxu0 0.0
    %3819 = vmatpush1.msra.mxu0 0.0
    %3820 = vmatprep.subr.mxu0 0.0
    %3821 = vmatpush1.msra.mxu0 0.0
    %3822 = vmatprep.subr.mxu0 0.0
    %3823 = vmatpush1.msra.mxu0 0.0
    %3824 = vmatprep.subr.mxu0 0.0
    %3825 = vmatpush1.msra.mxu0 0.0
    %3826 = vmatprep.subr.mxu0 0.0
    %3827 = vmatpush1.msra.mxu0 0.0
    %3828 = vmatprep.subr.mxu0 0.0
    %3829 = vmatpush1.msra.mxu0 0.0
    %3830 = vmatprep.subr.mxu0 0.0
    %3831 = vmatpush1.msra.mxu0 0.0
    %3832 = vmatprep.subr.mxu0 0.0
    %3833 = vmatpush1.msra.mxu0 0.0
    %3834 = vmatprep.subr.mxu0 0.0
    %3835 = vmatpush1.msra.mxu0 0.0
    %3836 = vmatprep.subr.mxu0 0.0
    %3837 = vmatpush1.msra.mxu0 0.0
    %3838 = vmatprep.subr.mxu0 0.0
    %3839 = vmatpush1.msra.mxu0 0.0
    %3840 = vmatprep.subr.mxu0 0.0
    %3841 = vmatpush1.msra.mxu0 0.0
    %3842 = vmatprep.subr.mxu0 0.0
    %3843 = vmatpush1.msra.mxu0 0.0
    %3844 = vmatprep.subr.mxu0 0.0
    %3845 = vmatpush1.msra.mxu0 0.0
    %3846 = vmatprep.mubr.f32.mxu0 0.0
    %3847 = vmatmul.mubr.f32.gmra.mrb[0].mxu0 %v3709
    %v3848 = vpop.f32.mrb[0].mxu0
    %v3849 = vadd.f32 %v1187, %v3848
    %v3850 = vpop.f32.mrb[0].mxu0
    %v3851 = vadd.f32 %v1191, %v3850
    %3852 = vdwg.mxu0
    %3853 = vmatprep.subr.mxu0 %v866
    %3854 = vmatpush1.msra.mxu0 %v865
    %3855 = vmatprep.subr.mxu0 %v870
    %3856 = vmatpush1.msra.mxu0 %v869
    %3857 = vmatprep.subr.mxu0 %v874
    %3858 = vmatpush1.msra.mxu0 %v873
    %3859 = vmatprep.subr.mxu0 %v878
    %3860 = vmatpush1.msra.mxu0 %v877
    %3861 = vmatprep.subr.mxu0 %v882
    %3862 = vmatpush1.msra.mxu0 %v881
    %3863 = vmatprep.subr.mxu0 %v886
    %3864 = vmatpush1.msra.mxu0 %v885
    %3865 = vmatprep.subr.mxu0 %v890
    %3866 = vmatpush1.msra.mxu0 %v889
    %3867 = vmatprep.subr.mxu0 %v894
    %3868 = vmatpush1.msra.mxu0 %v893
    %3869 = vmatprep.subr.mxu0 %v898
    %3870 = vmatpush1.msra.mxu0 %v897
    %3871 = vmatprep.subr.mxu0 %v902
    %3872 = vmatpush1.msra.mxu0 %v901
    %3873 = vmatprep.subr.mxu0 %v906
    %3874 = vmatpush1.msra.mxu0 %v905
    %3875 = vmatprep.subr.mxu0 %v910
    %3876 = vmatpush1.msra.mxu0 %v909
    %3877 = vmatprep.subr.mxu0 %v914
    %3878 = vmatpush1.msra.mxu0 %v913
    %3879 = vmatprep.subr.mxu0 %v918
    %3880 = vmatpush1.msra.mxu0 %v917
    %3881 = vmatprep.subr.mxu0 %v922
    %3882 = vmatpush1.msra.mxu0 %v921
    %3883 = vmatprep.subr.mxu0 %v926
    %3884 = vmatpush1.msra.mxu0 %v925
    %3885 = vmatprep.subr.mxu0 0.0
    %3886 = vmatpush1.msra.mxu0 0.0
    %3887 = vmatprep.subr.mxu0 0.0
    %3888 = vmatpush1.msra.mxu0 0.0
    %3889 = vmatprep.subr.mxu0 0.0
    %3890 = vmatpush1.msra.mxu0 0.0
    %3891 = vmatprep.subr.mxu0 0.0
    %3892 = vmatpush1.msra.mxu0 0.0
    %3893 = vmatprep.subr.mxu0 0.0
    %3894 = vmatpush1.msra.mxu0 0.0
    %3895 = vmatprep.subr.mxu0 0.0
    %3896 = vmatpush1.msra.mxu0 0.0
    %3897 = vmatprep.subr.mxu0 0.0
    %3898 = vmatpush1.msra.mxu0 0.0
    %3899 = vmatprep.subr.mxu0 0.0
    %3900 = vmatpush1.msra.mxu0 0.0
    %3901 = vmatprep.subr.mxu0 0.0
    %3902 = vmatpush1.msra.mxu0 0.0
    %3903 = vmatprep.subr.mxu0 0.0
    %3904 = vmatpush1.msra.mxu0 0.0
    %3905 = vmatprep.subr.mxu0 0.0
    %3906 = vmatpush1.msra.mxu0 0.0
    %3907 = vmatprep.subr.mxu0 0.0
    %3908 = vmatpush1.msra.mxu0 0.0
    %3909 = vmatprep.subr.mxu0 0.0
    %3910 = vmatpush1.msra.mxu0 0.0
    %3911 = vmatprep.subr.mxu0 0.0
    %3912 = vmatpush1.msra.mxu0 0.0
    %3913 = vmatprep.subr.mxu0 0.0
    %3914 = vmatpush1.msra.mxu0 0.0
    %3915 = vmatprep.subr.mxu0 0.0
    %3916 = vmatpush1.msra.mxu0 0.0
    %3917 = vmatprep.mubr.f32.mxu0 0.0
    %3918 = vmatmul.mubr.f32.gmra.mrb[0].mxu0 %v3516
    %v3919 = vpop.f32.mrb[0].mxu0
    %v3920 = vadd.f32 0.0, %v3919
    %v3921 = vpop.f32.mrb[0].mxu0
    %v3922 = vadd.f32 0.0, %v3921
    %3923 = vdwg.mxu0
    %3924 = vmatprep.subr.mxu0 %v868
    %3925 = vmatpush1.msra.mxu0 %v867
    %3926 = vmatprep.subr.mxu0 %v872
    %3927 = vmatpush1.msra.mxu0 %v871
    %3928 = vmatprep.subr.mxu0 %v876
    %3929 = vmatpush1.msra.mxu0 %v875
    %3930 = vmatprep.subr.mxu0 %v880
    %3931 = vmatpush1.msra.mxu0 %v879
    %3932 = vmatprep.subr.mxu0 %v884
    %3933 = vmatpush1.msra.mxu0 %v883
    %3934 = vmatprep.subr.mxu0 %v888
    %3935 = vmatpush1.msra.mxu0 %v887
    %3936 = vmatprep.subr.mxu0 %v892
    %3937 = vmatpush1.msra.mxu0 %v891
    %3938 = vmatprep.subr.mxu0 %v896
    %3939 = vmatpush1.msra.mxu0 %v895
    %3940 = vmatprep.subr.mxu0 %v900
    %3941 = vmatpush1.msra.mxu0 %v899
    %3942 = vmatprep.subr.mxu0 %v904
    %3943 = vmatpush1.msra.mxu0 %v903
    %3944 = vmatprep.subr.mxu0 %v908
    %3945 = vmatpush1.msra.mxu0 %v907
    %3946 = vmatprep.subr.mxu0 %v912
    %3947 = vmatpush1.msra.mxu0 %v911
    %3948 = vmatprep.subr.mxu0 %v916
    %3949 = vmatpush1.msra.mxu0 %v915
    %3950 = vmatprep.subr.mxu0 %v920
    %3951 = vmatpush1.msra.mxu0 %v919
    %3952 = vmatprep.subr.mxu0 %v924
    %3953 = vmatpush1.msra.mxu0 %v923
    %3954 = vmatprep.subr.mxu0 %v928
    %3955 = vmatpush1.msra.mxu0 %v927
    %3956 = vmatprep.subr.mxu0 0.0
    %3957 = vmatpush1.msra.mxu0 0.0
    %3958 = vmatprep.subr.mxu0 0.0
    %3959 = vmatpush1.msra.mxu0 0.0
    %3960 = vmatprep.subr.mxu0 0.0
    %3961 = vmatpush1.msra.mxu0 0.0
    %3962 = vmatprep.subr.mxu0 0.0
    %3963 = vmatpush1.msra.mxu0 0.0
    %3964 = vmatprep.subr.mxu0 0.0
    %3965 = vmatpush1.msra.mxu0 0.0
    %3966 = vmatprep.subr.mxu0 0.0
    %3967 = vmatpush1.msra.mxu0 0.0
    %3968 = vmatprep.subr.mxu0 0.0
    %3969 = vmatpush1.msra.mxu0 0.0
    %3970 = vmatprep.subr.mxu0 0.0
    %3971 = vmatpush1.msra.mxu0 0.0
    %3972 = vmatprep.subr.mxu0 0.0
    %3973 = vmatpush1.msra.mxu0 0.0
    %3974 = vmatprep.subr.mxu0 0.0
    %3975 = vmatpush1.msra.mxu0 0.0
    %3976 = vmatprep.subr.mxu0 0.0
    %3977 = vmatpush1.msra.mxu0 0.0
    %3978 = vmatprep.subr.mxu0 0.0
    %3979 = vmatpush1.msra.mxu0 0.0
    %3980 = vmatprep.subr.mxu0 0.0
    %3981 = vmatpush1.msra.mxu0 0.0
    %3982 = vmatprep.subr.mxu0 0.0
    %3983 = vmatpush1.msra.mxu0 0.0
    %3984 = vmatprep.subr.mxu0 0.0
    %3985 = vmatpush1.msra.mxu0 0.0
    %3986 = vmatprep.subr.mxu0 0.0
    %3987 = vmatpush1.msra.mxu0 0.0
    %3988 = vmatprep.mubr.f32.mxu0 0.0
    %3989 = vmatmul.mubr.f32.gmra.mrb[0].mxu0 %v3516
    %v3990 = vpop.f32.mrb[0].mxu0
    %v3991 = vadd.f32 0.0, %v3990
    %v3992 = vpop.f32.mrb[0].mxu0
    %v3993 = vadd.f32 0.0, %v3992
    %3994 = vdwg.mxu0
    %v3995 = vadd.f32 %v3778, %v3920
    %v3996 = vadd.f32 %v3780, %v3922
    %v3997 = vadd.f32 %v3849, %v3991
    %v3998 = vadd.f32 %v3851, %v3993
    %v3999 = vxor.u32 %v3995, 2147483648
    %v4000 = vmul.f32 %v3999, 1.442695
    %v4001 = vpow.pop %v4000
    %v4002 = vadd.f32 %v4001, 1.0
    %v4003 = vrcp.pop %v4002
    %v4004 = vmul.f32 1.0, %v4003
    %v4005 = vxor.u32 %v3996, 2147483648
    %v4006 = vmul.f32 %v4005, 1.442695
    %v4007 = vpow.pop %v4006
    %v4008 = vadd.f32 %v4007, 1.0
    %v4009 = vrcp.pop %v4008
    %v4010 = vmul.f32 1.0, %v4009
    %v4011 = vtanh.pop %v3997
    %v4012 = vxor.u32 %v3998, 2147483648
    %v4013 = vmul.f32 %v4012, 1.442695
    %v4014 = vpow.pop %v4013
    %v4015 = vadd.f32 %v4014, 1.0
    %v4016 = vrcp.pop %v4015
    %v4017 = vmul.f32 1.0, %v4016
    %v4018 = vmul.f32 %v4010, %v3514
    %v4019 = vmul.f32 %v4004, %v4011
    %v4020 = vadd.f32 %v4018, %v4019
    %v4021 = vtanh.pop %v4020
    %v4022 = vmul.f32 %v4017, %v4021
    %4023 = vst [vmem:[#allocation3 + $0x5] sm:$0x1] %v4022
    %4024 = vst [vmem:[#allocation3 + $0xc] sm:$0x2] %v4022
    %v4025 = vld [vmem:[#allocation2 + $0x20] sm:$0x30]
    %v4026 = vld [vmem:[#allocation2 + $0x28] sm:$0x30]
    %v4027 = vld [vmem:[#allocation2 + $0x30] sm:$0x30]
    %v4028 = vld [vmem:[#allocation2 + $0x38] sm:$0x30]
    %4029 = vmatprep.subr.mxu0 %v797
    %4030 = vmatpush1.msra.mxu0 %v796
    %4031 = vmatprep.subr.mxu0 %v801
    %4032 = vmatpush1.msra.mxu0 %v800
    %4033 = vmatprep.subr.mxu0 %v805
    %4034 = vmatpush1.msra.mxu0 %v804
    %4035 = vmatprep.subr.mxu0 %v809
    %4036 = vmatpush1.msra.mxu0 %v808
    %4037 = vmatprep.subr.mxu0 %v813
    %4038 = vmatpush1.msra.mxu0 %v812
    %4039 = vmatprep.subr.mxu0 %v817
    %4040 = vmatpush1.msra.mxu0 %v816
    %4041 = vmatprep.subr.mxu0 %v821
    %4042 = vmatpush1.msra.mxu0 %v820
    %4043 = vmatprep.subr.mxu0 %v825
    %4044 = vmatpush1.msra.mxu0 %v824
    %4045 = vmatprep.subr.mxu0 %v829
    %4046 = vmatpush1.msra.mxu0 %v828
    %4047 = vmatprep.subr.mxu0 %v833
    %4048 = vmatpush1.msra.mxu0 %v832
    %4049 = vmatprep.subr.mxu0 %v837
    %4050 = vmatpush1.msra.mxu0 %v836
    %4051 = vmatprep.subr.mxu0 %v841
    %4052 = vmatpush1.msra.mxu0 %v840
    %4053 = vmatprep.subr.mxu0 %v845
    %4054 = vmatpush1.msra.mxu0 %v844
    %4055 = vmatprep.subr.mxu0 %v849
    %4056 = vmatpush1.msra.mxu0 %v848
    %4057 = vmatprep.subr.mxu0 %v853
    %4058 = vmatpush1.msra.mxu0 %v852
    %4059 = vmatprep.subr.mxu0 %v857
    %4060 = vmatpush1.msra.mxu0 %v856
    %4061 = vmatprep.subr.mxu0 0.0
    %4062 = vmatpush1.msra.mxu0 0.0
    %4063 = vmatprep.subr.mxu0 0.0
    %4064 = vmatpush1.msra.mxu0 0.0
    %4065 = vmatprep.subr.mxu0 0.0
    %4066 = vmatpush1.msra.mxu0 0.0
    %4067 = vmatprep.subr.mxu0 0.0
    %4068 = vmatpush1.msra.mxu0 0.0
    %4069 = vmatprep.subr.mxu0 0.0
    %4070 = vmatpush1.msra.mxu0 0.0
    %4071 = vmatprep.subr.mxu0 0.0
    %4072 = vmatpush1.msra.mxu0 0.0
    %4073 = vmatprep.subr.mxu0 0.0
    %4074 = vmatpush1.msra.mxu0 0.0
    %4075 = vmatprep.subr.mxu0 0.0
    %4076 = vmatpush1.msra.mxu0 0.0
    %4077 = vmatprep.subr.mxu0 0.0
    %4078 = vmatpush1.msra.mxu0 0.0
    %4079 = vmatprep.subr.mxu0 0.0
    %4080 = vmatpush1.msra.mxu0 0.0
    %4081 = vmatprep.subr.mxu0 0.0
    %4082 = vmatpush1.msra.mxu0 0.0
    %4083 = vmatprep.subr.mxu0 0.0
    %4084 = vmatpush1.msra.mxu0 0.0
    %4085 = vmatprep.subr.mxu0 0.0
    %4086 = vmatpush1.msra.mxu0 0.0
    %4087 = vmatprep.subr.mxu0 0.0
    %4088 = vmatpush1.msra.mxu0 0.0
    %4089 = vmatprep.subr.mxu0 0.0
    %4090 = vmatpush1.msra.mxu0 0.0
    %4091 = vmatprep.subr.mxu0 0.0
    %4092 = vmatpush1.msra.mxu0 0.0
    %4093 = vmatprep.mubr.f32.mxu0 0.0
    %4094 = vmatmul.mubr.f32.gmra.mrb[0].mxu0 %v3709
    %v4095 = vpop.f32.mrb[0].mxu0
    %v4096 = vadd.f32 0.0, %v4095
    %v4097 = vpop.f32.mrb[0].mxu0
    %v4098 = vadd.f32 0.0, %v4097
    %4099 = vdwg.mxu0
    %4100 = vmatprep.subr.mxu0 %v799
    %4101 = vmatpush1.msra.mxu0 %v798
    %4102 = vmatprep.subr.mxu0 %v803
    %4103 = vmatpush1.msra.mxu0 %v802
    %4104 = vmatprep.subr.mxu0 %v807
    %4105 = vmatpush1.msra.mxu0 %v806
    %4106 = vmatprep.subr.mxu0 %v811
    %4107 = vmatpush1.msra.mxu0 %v810
    %4108 = vmatprep.subr.mxu0 %v815
    %4109 = vmatpush1.msra.mxu0 %v814
    %4110 = vmatprep.subr.mxu0 %v819
    %4111 = vmatpush1.msra.mxu0 %v818
    %4112 = vmatprep.subr.mxu0 %v823
    %4113 = vmatpush1.msra.mxu0 %v822
    %4114 = vmatprep.subr.mxu0 %v827
    %4115 = vmatpush1.msra.mxu0 %v826
    %4116 = vmatprep.subr.mxu0 %v831
    %4117 = vmatpush1.msra.mxu0 %v830
    %4118 = vmatprep.subr.mxu0 %v835
    %4119 = vmatpush1.msra.mxu0 %v834
    %4120 = vmatprep.subr.mxu0 %v839
    %4121 = vmatpush1.msra.mxu0 %v838
    %4122 = vmatprep.subr.mxu0 %v843
    %4123 = vmatpush1.msra.mxu0 %v842
    %4124 = vmatprep.subr.mxu0 %v847
    %4125 = vmatpush1.msra.mxu0 %v846
    %4126 = vmatprep.subr.mxu0 %v851
    %4127 = vmatpush1.msra.mxu0 %v850
    %4128 = vmatprep.subr.mxu0 %v855
    %4129 = vmatpush1.msra.mxu0 %v854
    %4130 = vmatprep.subr.mxu0 %v859
    %4131 = vmatpush1.msra.mxu0 %v858
    %4132 = vmatprep.subr.mxu0 0.0
    %4133 = vmatpush1.msra.mxu0 0.0
    %4134 = vmatprep.subr.mxu0 0.0
    %4135 = vmatpush1.msra.mxu0 0.0
    %4136 = vmatprep.subr.mxu0 0.0
    %4137 = vmatpush1.msra.mxu0 0.0
    %4138 = vmatprep.subr.mxu0 0.0
    %4139 = vmatpush1.msra.mxu0 0.0
    %4140 = vmatprep.subr.mxu0 0.0
    %4141 = vmatpush1.msra.mxu0 0.0
    %4142 = vmatprep.subr.mxu0 0.0
    %4143 = vmatpush1.msra.mxu0 0.0
    %4144 = vmatprep.subr.mxu0 0.0
    %4145 = vmatpush1.msra.mxu0 0.0
    %4146 = vmatprep.subr.mxu0 0.0
    %4147 = vmatpush1.msra.mxu0 0.0
    %4148 = vmatprep.subr.mxu0 0.0
    %4149 = vmatpush1.msra.mxu0 0.0
    %4150 = vmatprep.subr.mxu0 0.0
    %4151 = vmatpush1.msra.mxu0 0.0
    %4152 = vmatprep.subr.mxu0 0.0
    %4153 = vmatpush1.msra.mxu0 0.0
    %4154 = vmatprep.subr.mxu0 0.0
    %4155 = vmatpush1.msra.mxu0 0.0
    %4156 = vmatprep.subr.mxu0 0.0
    %4157 = vmatpush1.msra.mxu0 0.0
    %4158 = vmatprep.subr.mxu0 0.0
    %4159 = vmatpush1.msra.mxu0 0.0
    %4160 = vmatprep.subr.mxu0 0.0
    %4161 = vmatpush1.msra.mxu0 0.0
    %4162 = vmatprep.subr.mxu0 0.0
    %4163 = vmatpush1.msra.mxu0 0.0
    %4164 = vmatprep.mubr.f32.mxu0 0.0
    %4165 = vmatmul.mubr.f32.gmra.mrb[0].mxu0 %v3709
    %v4166 = vpop.f32.mrb[0].mxu0
    %v4167 = vadd.f32 0.0, %v4166
    %v4168 = vpop.f32.mrb[0].mxu0
    %v4169 = vadd.f32 0.0, %v4168
    %4170 = vdwg.mxu0
    %v4175 = vrot.slane %v4096, 4
    %v4176 = vrot.slane %v4098, 4
    %v4177 = vrot.slane %v4167, 4
    %v4178 = vrot.slane %v4169, 4
    %v4183 = vadd.f32 %v4025, %v4175
    %v4184 = vadd.f32 %v4026, %v4176
    %v4185 = vadd.f32 %v4027, %v4177
    %v4186 = vadd.f32 %v4028, %v4178
    %v4187 = vxor.u32 %v4183, 2147483648
    %v4188 = vmul.f32 %v4187, 1.442695
    %v4189 = vpow.pop %v4188
    %v4190 = vadd.f32 %v4189, 1.0
    %v4191 = vrcp.pop %v4190
    %v4192 = vmul.f32 1.0, %v4191
    %v4193 = vxor.u32 %v4184, 2147483648
    %v4194 = vmul.f32 %v4193, 1.442695
    %v4195 = vpow.pop %v4194
    %v4196 = vadd.f32 %v4195, 1.0
    %v4197 = vrcp.pop %v4196
    %v4198 = vmul.f32 1.0, %v4197
    %v4199 = vtanh.pop %v4185
    %v4200 = vxor.u32 %v4186, 2147483648
    %v4201 = vmul.f32 %v4200, 1.442695
    %v4202 = vpow.pop %v4201
    %v4203 = vadd.f32 %v4202, 1.0
    %v4204 = vrcp.pop %v4203
    %v4205 = vmul.f32 1.0, %v4204
    %v4207 = vrot.slane %v3705, 6
    %v4209 = vmul.f32 %v4198, %v4207
    %v4210 = vmul.f32 %v4192, %v4199
    %v4211 = vadd.f32 %v4209, %v4210
    %v4212 = vtanh.pop %v4211
    %v4213 = vmul.f32 %v4205, %v4212
    %v4215 = vrot.slane %v4213, 4
    %4217 = vmatprep.subr.mxu0 %v930
    %4218 = vmatpush1.msra.mxu0 %v929
    %4219 = vmatprep.subr.mxu0 %v934
    %4220 = vmatpush1.msra.mxu0 %v933
    %4221 = vmatprep.subr.mxu0 %v938
    %4222 = vmatpush1.msra.mxu0 %v937
    %4223 = vmatprep.subr.mxu0 %v942
    %4224 = vmatpush1.msra.mxu0 %v941
    %4225 = vmatprep.subr.mxu0 %v946
    %4226 = vmatpush1.msra.mxu0 %v945
    %4227 = vmatprep.subr.mxu0 %v950
    %4228 = vmatpush1.msra.mxu0 %v949
    %4229 = vmatprep.subr.mxu0 %v954
    %4230 = vmatpush1.msra.mxu0 %v953
    %4231 = vmatprep.subr.mxu0 %v958
    %4232 = vmatpush1.msra.mxu0 %v957
    %4233 = vmatprep.subr.mxu0 %v962
    %4234 = vmatpush1.msra.mxu0 %v961
    %4235 = vmatprep.subr.mxu0 %v966
    %4236 = vmatpush1.msra.mxu0 %v965
    %4237 = vmatprep.subr.mxu0 %v970
    %4238 = vmatpush1.msra.mxu0 %v969
    %4239 = vmatprep.subr.mxu0 %v974
    %4240 = vmatpush1.msra.mxu0 %v973
    %4241 = vmatprep.subr.mxu0 %v978
    %4242 = vmatpush1.msra.mxu0 %v977
    %4243 = vmatprep.subr.mxu0 %v982
    %4244 = vmatpush1.msra.mxu0 %v981
    %4245 = vmatprep.subr.mxu0 %v986
    %4246 = vmatpush1.msra.mxu0 %v985
    %4247 = vmatprep.subr.mxu0 %v990
    %4248 = vmatpush1.msra.mxu0 %v989
    %4249 = vmatprep.subr.mxu0 0.0
    %4250 = vmatpush1.msra.mxu0 0.0
    %4251 = vmatprep.subr.mxu0 0.0
    %4252 = vmatpush1.msra.mxu0 0.0
    %4253 = vmatprep.subr.mxu0 0.0
    %4254 = vmatpush1.msra.mxu0 0.0
    %4255 = vmatprep.subr.mxu0 0.0
    %4256 = vmatpush1.msra.mxu0 0.0
    %4257 = vmatprep.subr.mxu0 0.0
    %4258 = vmatpush1.msra.mxu0 0.0
    %4259 = vmatprep.subr.mxu0 0.0
    %4260 = vmatpush1.msra.mxu0 0.0
    %4261 = vmatprep.subr.mxu0 0.0
    %4262 = vmatpush1.msra.mxu0 0.0
    %4263 = vmatprep.subr.mxu0 0.0
    %4264 = vmatpush1.msra.mxu0 0.0
    %4265 = vmatprep.subr.mxu0 0.0
    %4266 = vmatpush1.msra.mxu0 0.0
    %4267 = vmatprep.subr.mxu0 0.0
    %4268 = vmatpush1.msra.mxu0 0.0
    %4269 = vmatprep.subr.mxu0 0.0
    %4270 = vmatpush1.msra.mxu0 0.0
    %4271 = vmatprep.subr.mxu0 0.0
    %4272 = vmatpush1.msra.mxu0 0.0
    %4273 = vmatprep.subr.mxu0 0.0
    %4274 = vmatpush1.msra.mxu0 0.0
    %4275 = vmatprep.subr.mxu0 0.0
    %4276 = vmatpush1.msra.mxu0 0.0
    %4277 = vmatprep.subr.mxu0 0.0
    %4278 = vmatpush1.msra.mxu0 0.0
    %4279 = vmatprep.subr.mxu0 0.0
    %4280 = vmatpush1.msra.mxu0 0.0
    %4281 = vmatprep.mubr.f32.mxu0 0.0
    %4282 = vmatmul.mubr.f32.gmra.mrb[0].mxu0 %v4215
    %v4283 = vpop.f32.mrb[0].mxu0
    %v4284 = vadd.f32 %v1179, %v4283
    %v4285 = vpop.f32.mrb[0].mxu0
    %v4286 = vadd.f32 %v1183, %v4285
    %4287 = vdwg.mxu0
    %4288 = vmatprep.subr.mxu0 %v932
    %4289 = vmatpush1.msra.mxu0 %v931
    %4290 = vmatprep.subr.mxu0 %v936
    %4291 = vmatpush1.msra.mxu0 %v935
    %4292 = vmatprep.subr.mxu0 %v940
    %4293 = vmatpush1.msra.mxu0 %v939
    %4294 = vmatprep.subr.mxu0 %v944
    %4295 = vmatpush1.msra.mxu0 %v943
    %4296 = vmatprep.subr.mxu0 %v948
    %4297 = vmatpush1.msra.mxu0 %v947
    %4298 = vmatprep.subr.mxu0 %v952
    %4299 = vmatpush1.msra.mxu0 %v951
    %4300 = vmatprep.subr.mxu0 %v956
    %4301 = vmatpush1.msra.mxu0 %v955
    %4302 = vmatprep.subr.mxu0 %v960
    %4303 = vmatpush1.msra.mxu0 %v959
    %4304 = vmatprep.subr.mxu0 %v964
    %4305 = vmatpush1.msra.mxu0 %v963
    %4306 = vmatprep.subr.mxu0 %v968
    %4307 = vmatpush1.msra.mxu0 %v967
    %4308 = vmatprep.subr.mxu0 %v972
    %4309 = vmatpush1.msra.mxu0 %v971
    %4310 = vmatprep.subr.mxu0 %v976
    %4311 = vmatpush1.msra.mxu0 %v975
    %4312 = vmatprep.subr.mxu0 %v980
    %4313 = vmatpush1.msra.mxu0 %v979
    %4314 = vmatprep.subr.mxu0 %v984
    %4315 = vmatpush1.msra.mxu0 %v983
    %4316 = vmatprep.subr.mxu0 %v988
    %4317 = vmatpush1.msra.mxu0 %v987
    %4318 = vmatprep.subr.mxu0 %v992
    %4319 = vmatpush1.msra.mxu0 %v991
    %4320 = vmatprep.subr.mxu0 0.0
    %4321 = vmatpush1.msra.mxu0 0.0
    %4322 = vmatprep.subr.mxu0 0.0
    %4323 = vmatpush1.msra.mxu0 0.0
    %4324 = vmatprep.subr.mxu0 0.0
    %4325 = vmatpush1.msra.mxu0 0.0
    %4326 = vmatprep.subr.mxu0 0.0
    %4327 = vmatpush1.msra.mxu0 0.0
    %4328 = vmatprep.subr.mxu0 0.0
    %4329 = vmatpush1.msra.mxu0 0.0
    %4330 = vmatprep.subr.mxu0 0.0
    %4331 = vmatpush1.msra.mxu0 0.0
    %4332 = vmatprep.subr.mxu0 0.0
    %4333 = vmatpush1.msra.mxu0 0.0
    %4334 = vmatprep.subr.mxu0 0.0
    %4335 = vmatpush1.msra.mxu0 0.0
    %4336 = vmatprep.subr.mxu0 0.0
    %4337 = vmatpush1.msra.mxu0 0.0
    %4338 = vmatprep.subr.mxu0 0.0
    %4339 = vmatpush1.msra.mxu0 0.0
    %4340 = vmatprep.subr.mxu0 0.0
    %4341 = vmatpush1.msra.mxu0 0.0
    %4342 = vmatprep.subr.mxu0 0.0
    %4343 = vmatpush1.msra.mxu0 0.0
    %4344 = vmatprep.subr.mxu0 0.0
    %4345 = vmatpush1.msra.mxu0 0.0
    %4346 = vmatprep.subr.mxu0 0.0
    %4347 = vmatpush1.msra.mxu0 0.0
    %4348 = vmatprep.subr.mxu0 0.0
    %4349 = vmatpush1.msra.mxu0 0.0
    %4350 = vmatprep.subr.mxu0 0.0
    %4351 = vmatpush1.msra.mxu0 0.0
    %4352 = vmatprep.mubr.f32.mxu0 0.0
    %4353 = vmatmul.mubr.f32.gmra.mrb[0].mxu0 %v4215
    %v4354 = vpop.f32.mrb[0].mxu0
    %v4355 = vadd.f32 %v1187, %v4354
    %v4356 = vpop.f32.mrb[0].mxu0
    %v4357 = vadd.f32 %v1191, %v4356
    %4358 = vdwg.mxu0
    %4359 = vmatprep.subr.mxu0 %v866
    %4360 = vmatpush1.msra.mxu0 %v865
    %4361 = vmatprep.subr.mxu0 %v870
    %4362 = vmatpush1.msra.mxu0 %v869
    %4363 = vmatprep.subr.mxu0 %v874
    %4364 = vmatpush1.msra.mxu0 %v873
    %4365 = vmatprep.subr.mxu0 %v878
    %4366 = vmatpush1.msra.mxu0 %v877
    %4367 = vmatprep.subr.mxu0 %v882
    %4368 = vmatpush1.msra.mxu0 %v881
    %4369 = vmatprep.subr.mxu0 %v886
    %4370 = vmatpush1.msra.mxu0 %v885
    %4371 = vmatprep.subr.mxu0 %v890
    %4372 = vmatpush1.msra.mxu0 %v889
    %4373 = vmatprep.subr.mxu0 %v894
    %4374 = vmatpush1.msra.mxu0 %v893
    %4375 = vmatprep.subr.mxu0 %v898
    %4376 = vmatpush1.msra.mxu0 %v897
    %4377 = vmatprep.subr.mxu0 %v902
    %4378 = vmatpush1.msra.mxu0 %v901
    %4379 = vmatprep.subr.mxu0 %v906
    %4380 = vmatpush1.msra.mxu0 %v905
    %4381 = vmatprep.subr.mxu0 %v910
    %4382 = vmatpush1.msra.mxu0 %v909
    %4383 = vmatprep.subr.mxu0 %v914
    %4384 = vmatpush1.msra.mxu0 %v913
    %4385 = vmatprep.subr.mxu0 %v918
    %4386 = vmatpush1.msra.mxu0 %v917
    %4387 = vmatprep.subr.mxu0 %v922
    %4388 = vmatpush1.msra.mxu0 %v921
    %4389 = vmatprep.subr.mxu0 %v926
    %4390 = vmatpush1.msra.mxu0 %v925
    %4391 = vmatprep.subr.mxu0 0.0
    %4392 = vmatpush1.msra.mxu0 0.0
    %4393 = vmatprep.subr.mxu0 0.0
    %4394 = vmatpush1.msra.mxu0 0.0
    %4395 = vmatprep.subr.mxu0 0.0
    %4396 = vmatpush1.msra.mxu0 0.0
    %4397 = vmatprep.subr.mxu0 0.0
    %4398 = vmatpush1.msra.mxu0 0.0
    %4399 = vmatprep.subr.mxu0 0.0
    %4400 = vmatpush1.msra.mxu0 0.0
    %4401 = vmatprep.subr.mxu0 0.0
    %4402 = vmatpush1.msra.mxu0 0.0
    %4403 = vmatprep.subr.mxu0 0.0
    %4404 = vmatpush1.msra.mxu0 0.0
    %4405 = vmatprep.subr.mxu0 0.0
    %4406 = vmatpush1.msra.mxu0 0.0
    %4407 = vmatprep.subr.mxu0 0.0
    %4408 = vmatpush1.msra.mxu0 0.0
    %4409 = vmatprep.subr.mxu0 0.0
    %4410 = vmatpush1.msra.mxu0 0.0
    %4411 = vmatprep.subr.mxu0 0.0
    %4412 = vmatpush1.msra.mxu0 0.0
    %4413 = vmatprep.subr.mxu0 0.0
    %4414 = vmatpush1.msra.mxu0 0.0
    %4415 = vmatprep.subr.mxu0 0.0
    %4416 = vmatpush1.msra.mxu0 0.0
    %4417 = vmatprep.subr.mxu0 0.0
    %4418 = vmatpush1.msra.mxu0 0.0
    %4419 = vmatprep.subr.mxu0 0.0
    %4420 = vmatpush1.msra.mxu0 0.0
    %4421 = vmatprep.subr.mxu0 0.0
    %4422 = vmatpush1.msra.mxu0 0.0
    %4423 = vmatprep.mubr.f32.mxu0 0.0
    %4424 = vmatmul.mubr.f32.gmra.mrb[0].mxu0 %v4022
    %v4425 = vpop.f32.mrb[0].mxu0
    %v4426 = vadd.f32 0.0, %v4425
    %v4427 = vpop.f32.mrb[0].mxu0
    %v4428 = vadd.f32 0.0, %v4427
    %4429 = vdwg.mxu0
    %4430 = vmatprep.subr.mxu0 %v868
    %4431 = vmatpush1.msra.mxu0 %v867
    %4432 = vmatprep.subr.mxu0 %v872
    %4433 = vmatpush1.msra.mxu0 %v871
    %4434 = vmatprep.subr.mxu0 %v876
    %4435 = vmatpush1.msra.mxu0 %v875
    %4436 = vmatprep.subr.mxu0 %v880
    %4437 = vmatpush1.msra.mxu0 %v879
    %4438 = vmatprep.subr.mxu0 %v884
    %4439 = vmatpush1.msra.mxu0 %v883
    %4440 = vmatprep.subr.mxu0 %v888
    %4441 = vmatpush1.msra.mxu0 %v887
    %4442 = vmatprep.subr.mxu0 %v892
    %4443 = vmatpush1.msra.mxu0 %v891
    %4444 = vmatprep.subr.mxu0 %v896
    %4445 = vmatpush1.msra.mxu0 %v895
    %4446 = vmatprep.subr.mxu0 %v900
    %4447 = vmatpush1.msra.mxu0 %v899
    %4448 = vmatprep.subr.mxu0 %v904
    %4449 = vmatpush1.msra.mxu0 %v903
    %4450 = vmatprep.subr.mxu0 %v908
    %4451 = vmatpush1.msra.mxu0 %v907
    %4452 = vmatprep.subr.mxu0 %v912
    %4453 = vmatpush1.msra.mxu0 %v911
    %4454 = vmatprep.subr.mxu0 %v916
    %4455 = vmatpush1.msra.mxu0 %v915
    %4456 = vmatprep.subr.mxu0 %v920
    %4457 = vmatpush1.msra.mxu0 %v919
    %4458 = vmatprep.subr.mxu0 %v924
    %4459 = vmatpush1.msra.mxu0 %v923
    %4460 = vmatprep.subr.mxu0 %v928
    %4461 = vmatpush1.msra.mxu0 %v927
    %4462 = vmatprep.subr.mxu0 0.0
    %4463 = vmatpush1.msra.mxu0 0.0
    %4464 = vmatprep.subr.mxu0 0.0
    %4465 = vmatpush1.msra.mxu0 0.0
    %4466 = vmatprep.subr.mxu0 0.0
    %4467 = vmatpush1.msra.mxu0 0.0
    %4468 = vmatprep.subr.mxu0 0.0
    %4469 = vmatpush1.msra.mxu0 0.0
    %4470 = vmatprep.subr.mxu0 0.0
    %4471 = vmatpush1.msra.mxu0 0.0
    %4472 = vmatprep.subr.mxu0 0.0
    %4473 = vmatpush1.msra.mxu0 0.0
    %4474 = vmatprep.subr.mxu0 0.0
    %4475 = vmatpush1.msra.mxu0 0.0
    %4476 = vmatprep.subr.mxu0 0.0
    %4477 = vmatpush1.msra.mxu0 0.0
    %4478 = vmatprep.subr.mxu0 0.0
    %4479 = vmatpush1.msra.mxu0 0.0
    %4480 = vmatprep.subr.mxu0 0.0
    %4481 = vmatpush1.msra.mxu0 0.0
    %4482 = vmatprep.subr.mxu0 0.0
    %4483 = vmatpush1.msra.mxu0 0.0
    %4484 = vmatprep.subr.mxu0 0.0
    %4485 = vmatpush1.msra.mxu0 0.0
    %4486 = vmatprep.subr.mxu0 0.0
    %4487 = vmatpush1.msra.mxu0 0.0
    %4488 = vmatprep.subr.mxu0 0.0
    %4489 = vmatpush1.msra.mxu0 0.0
    %4490 = vmatprep.subr.mxu0 0.0
    %4491 = vmatpush1.msra.mxu0 0.0
    %4492 = vmatprep.subr.mxu0 0.0
    %4493 = vmatpush1.msra.mxu0 0.0
    %4494 = vmatprep.mubr.f32.mxu0 0.0
    %4495 = vmatmul.mubr.f32.gmra.mrb[0].mxu0 %v4022
    %v4496 = vpop.f32.mrb[0].mxu0
    %v4497 = vadd.f32 0.0, %v4496
    %v4498 = vpop.f32.mrb[0].mxu0
    %v4499 = vadd.f32 0.0, %v4498
    %4500 = vdwg.mxu0
    %v4501 = vadd.f32 %v4284, %v4426
    %v4502 = vadd.f32 %v4286, %v4428
    %v4503 = vadd.f32 %v4355, %v4497
    %v4504 = vadd.f32 %v4357, %v4499
    %v4505 = vxor.u32 %v4501, 2147483648
    %v4506 = vmul.f32 %v4505, 1.442695
    %v4507 = vpow.pop %v4506
    %v4508 = vadd.f32 %v4507, 1.0
    %v4509 = vrcp.pop %v4508
    %v4510 = vmul.f32 1.0, %v4509
    %v4511 = vxor.u32 %v4502, 2147483648
    %v4512 = vmul.f32 %v4511, 1.442695
    %v4513 = vpow.pop %v4512
    %v4514 = vadd.f32 %v4513, 1.0
    %v4515 = vrcp.pop %v4514
    %v4516 = vmul.f32 1.0, %v4515
    %v4517 = vtanh.pop %v4503
    %v4518 = vxor.u32 %v4504, 2147483648
    %v4519 = vmul.f32 %v4518, 1.442695
    %v4520 = vpow.pop %v4519
    %v4521 = vadd.f32 %v4520, 1.0
    %v4522 = vrcp.pop %v4521
    %v4523 = vmul.f32 1.0, %v4522
    %v4524 = vmul.f32 %v4516, %v4020
    %v4525 = vmul.f32 %v4510, %v4517
    %v4526 = vadd.f32 %v4524, %v4525
    %v4527 = vtanh.pop %v4526
    %v4528 = vmul.f32 %v4523, %v4527
    %4529 = vst [vmem:[#allocation3 + $0x6] sm:$0x1] %v4528
    %4530 = vst [vmem:[#allocation3 + $0xd] sm:$0x2] %v4528
    %v4531 = vld [vmem:[#allocation2 + $0x20] sm:$0xc0]
    %v4532 = vld [vmem:[#allocation2 + $0x28] sm:$0xc0]
    %v4533 = vld [vmem:[#allocation2 + $0x30] sm:$0xc0]
    %v4534 = vld [vmem:[#allocation2 + $0x38] sm:$0xc0]
    %4535 = vmatprep.subr.mxu0 %v797
    %4536 = vmatpush1.msra.mxu0 %v796
    %4537 = vmatprep.subr.mxu0 %v801
    %4538 = vmatpush1.msra.mxu0 %v800
    %4539 = vmatprep.subr.mxu0 %v805
    %4540 = vmatpush1.msra.mxu0 %v804
    %4541 = vmatprep.subr.mxu0 %v809
    %4542 = vmatpush1.msra.mxu0 %v808
    %4543 = vmatprep.subr.mxu0 %v813
    %4544 = vmatpush1.msra.mxu0 %v812
    %4545 = vmatprep.subr.mxu0 %v817
    %4546 = vmatpush1.msra.mxu0 %v816
    %4547 = vmatprep.subr.mxu0 %v821
    %4548 = vmatpush1.msra.mxu0 %v820
    %4549 = vmatprep.subr.mxu0 %v825
    %4550 = vmatpush1.msra.mxu0 %v824
    %4551 = vmatprep.subr.mxu0 %v829
    %4552 = vmatpush1.msra.mxu0 %v828
    %4553 = vmatprep.subr.mxu0 %v833
    %4554 = vmatpush1.msra.mxu0 %v832
    %4555 = vmatprep.subr.mxu0 %v837
    %4556 = vmatpush1.msra.mxu0 %v836
    %4557 = vmatprep.subr.mxu0 %v841
    %4558 = vmatpush1.msra.mxu0 %v840
    %4559 = vmatprep.subr.mxu0 %v845
    %4560 = vmatpush1.msra.mxu0 %v844
    %4561 = vmatprep.subr.mxu0 %v849
    %4562 = vmatpush1.msra.mxu0 %v848
    %4563 = vmatprep.subr.mxu0 %v853
    %4564 = vmatpush1.msra.mxu0 %v852
    %4565 = vmatprep.subr.mxu0 %v857
    %4566 = vmatpush1.msra.mxu0 %v856
    %4567 = vmatprep.subr.mxu0 0.0
    %4568 = vmatpush1.msra.mxu0 0.0
    %4569 = vmatprep.subr.mxu0 0.0
    %4570 = vmatpush1.msra.mxu0 0.0
    %4571 = vmatprep.subr.mxu0 0.0
    %4572 = vmatpush1.msra.mxu0 0.0
    %4573 = vmatprep.subr.mxu0 0.0
    %4574 = vmatpush1.msra.mxu0 0.0
    %4575 = vmatprep.subr.mxu0 0.0
    %4576 = vmatpush1.msra.mxu0 0.0
    %4577 = vmatprep.subr.mxu0 0.0
    %4578 = vmatpush1.msra.mxu0 0.0
    %4579 = vmatprep.subr.mxu0 0.0
    %4580 = vmatpush1.msra.mxu0 0.0
    %4581 = vmatprep.subr.mxu0 0.0
    %4582 = vmatpush1.msra.mxu0 0.0
    %4583 = vmatprep.subr.mxu0 0.0
    %4584 = vmatpush1.msra.mxu0 0.0
    %4585 = vmatprep.subr.mxu0 0.0
    %4586 = vmatpush1.msra.mxu0 0.0
    %4587 = vmatprep.subr.mxu0 0.0
    %4588 = vmatpush1.msra.mxu0 0.0
    %4589 = vmatprep.subr.mxu0 0.0
    %4590 = vmatpush1.msra.mxu0 0.0
    %4591 = vmatprep.subr.mxu0 0.0
    %4592 = vmatpush1.msra.mxu0 0.0
    %4593 = vmatprep.subr.mxu0 0.0
    %4594 = vmatpush1.msra.mxu0 0.0
    %4595 = vmatprep.subr.mxu0 0.0
    %4596 = vmatpush1.msra.mxu0 0.0
    %4597 = vmatprep.subr.mxu0 0.0
    %4598 = vmatpush1.msra.mxu0 0.0
    %4599 = vmatprep.mubr.f32.mxu0 0.0
    %4600 = vmatmul.mubr.f32.gmra.mrb[0].mxu0 %v4215
    %v4601 = vpop.f32.mrb[0].mxu0
    %v4602 = vadd.f32 0.0, %v4601
    %v4603 = vpop.f32.mrb[0].mxu0
    %v4604 = vadd.f32 0.0, %v4603
    %4605 = vdwg.mxu0
    %4606 = vmatprep.subr.mxu0 %v799
    %4607 = vmatpush1.msra.mxu0 %v798
    %4608 = vmatprep.subr.mxu0 %v803
    %4609 = vmatpush1.msra.mxu0 %v802
    %4610 = vmatprep.subr.mxu0 %v807
    %4611 = vmatpush1.msra.mxu0 %v806
    %4612 = vmatprep.subr.mxu0 %v811
    %4613 = vmatpush1.msra.mxu0 %v810
    %4614 = vmatprep.subr.mxu0 %v815
    %4615 = vmatpush1.msra.mxu0 %v814
    %4616 = vmatprep.subr.mxu0 %v819
    %4617 = vmatpush1.msra.mxu0 %v818
    %4618 = vmatprep.subr.mxu0 %v823
    %4619 = vmatpush1.msra.mxu0 %v822
    %4620 = vmatprep.subr.mxu0 %v827
    %4621 = vmatpush1.msra.mxu0 %v826
    %4622 = vmatprep.subr.mxu0 %v831
    %4623 = vmatpush1.msra.mxu0 %v830
    %4624 = vmatprep.subr.mxu0 %v835
    %4625 = vmatpush1.msra.mxu0 %v834
    %4626 = vmatprep.subr.mxu0 %v839
    %4627 = vmatpush1.msra.mxu0 %v838
    %4628 = vmatprep.subr.mxu0 %v843
    %4629 = vmatpush1.msra.mxu0 %v842
    %4630 = vmatprep.subr.mxu0 %v847
    %4631 = vmatpush1.msra.mxu0 %v846
    %4632 = vmatprep.subr.mxu0 %v851
    %4633 = vmatpush1.msra.mxu0 %v850
    %4634 = vmatprep.subr.mxu0 %v855
    %4635 = vmatpush1.msra.mxu0 %v854
    %4636 = vmatprep.subr.mxu0 %v859
    %4637 = vmatpush1.msra.mxu0 %v858
    %4638 = vmatprep.subr.mxu0 0.0
    %4639 = vmatpush1.msra.mxu0 0.0
    %4640 = vmatprep.subr.mxu0 0.0
    %4641 = vmatpush1.msra.mxu0 0.0
    %4642 = vmatprep.subr.mxu0 0.0
    %4643 = vmatpush1.msra.mxu0 0.0
    %4644 = vmatprep.subr.mxu0 0.0
    %4645 = vmatpush1.msra.mxu0 0.0
    %4646 = vmatprep.subr.mxu0 0.0
    %4647 = vmatpush1.msra.mxu0 0.0
    %4648 = vmatprep.subr.mxu0 0.0
    %4649 = vmatpush1.msra.mxu0 0.0
    %4650 = vmatprep.subr.mxu0 0.0
    %4651 = vmatpush1.msra.mxu0 0.0
    %4652 = vmatprep.subr.mxu0 0.0
    %4653 = vmatpush1.msra.mxu0 0.0
    %4654 = vmatprep.subr.mxu0 0.0
    %4655 = vmatpush1.msra.mxu0 0.0
    %4656 = vmatprep.subr.mxu0 0.0
    %4657 = vmatpush1.msra.mxu0 0.0
    %4658 = vmatprep.subr.mxu0 0.0
    %4659 = vmatpush1.msra.mxu0 0.0
    %4660 = vmatprep.subr.mxu0 0.0
    %4661 = vmatpush1.msra.mxu0 0.0
    %4662 = vmatprep.subr.mxu0 0.0
    %4663 = vmatpush1.msra.mxu0 0.0
    %4664 = vmatprep.subr.mxu0 0.0
    %4665 = vmatpush1.msra.mxu0 0.0
    %4666 = vmatprep.subr.mxu0 0.0
    %4667 = vmatpush1.msra.mxu0 0.0
    %4668 = vmatprep.subr.mxu0 0.0
    %4669 = vmatpush1.msra.mxu0 0.0
    %4670 = vmatprep.mubr.f32.mxu0 0.0
    %4671 = vmatmul.mubr.f32.gmra.mrb[0].mxu0 %v4215
    %v4672 = vpop.f32.mrb[0].mxu0
    %v4673 = vadd.f32 0.0, %v4672
    %v4674 = vpop.f32.mrb[0].mxu0
    %v4675 = vadd.f32 0.0, %v4674
    %4676 = vdwg.mxu0
    %v4681 = vrot.slane %v4602, 2
    %v4682 = vrot.slane %v4604, 2
    %v4683 = vrot.slane %v4673, 2
    %v4684 = vrot.slane %v4675, 2
    %v4689 = vadd.f32 %v4531, %v4681
    %v4690 = vadd.f32 %v4532, %v4682
    %v4691 = vadd.f32 %v4533, %v4683
    %v4692 = vadd.f32 %v4534, %v4684
    %v4693 = vxor.u32 %v4689, 2147483648
    %v4694 = vmul.f32 %v4693, 1.442695
    %v4695 = vpow.pop %v4694
    %v4696 = vadd.f32 %v4695, 1.0
    %v4697 = vrcp.pop %v4696
    %v4698 = vmul.f32 1.0, %v4697
    %v4699 = vxor.u32 %v4690, 2147483648
    %v4700 = vmul.f32 %v4699, 1.442695
    %v4701 = vpow.pop %v4700
    %v4702 = vadd.f32 %v4701, 1.0
    %v4703 = vrcp.pop %v4702
    %v4704 = vmul.f32 1.0, %v4703
    %v4705 = vtanh.pop %v4691
    %v4706 = vxor.u32 %v4692, 2147483648
    %v4707 = vmul.f32 %v4706, 1.442695
    %v4708 = vpow.pop %v4707
    %v4709 = vadd.f32 %v4708, 1.0
    %v4710 = vrcp.pop %v4709
    %v4711 = vmul.f32 1.0, %v4710
    %v4713 = vrot.slane %v4211, 6
    %v4715 = vmul.f32 %v4704, %v4713
    %v4716 = vmul.f32 %v4698, %v4705
    %v4717 = vadd.f32 %v4715, %v4716
    %v4718 = vtanh.pop %v4717
    %v4719 = vmul.f32 %v4711, %v4718
    %v4721 = vrot.slane %v4719, 6
    %4723 = vmatprep.subr.mxu0 %v930
    %4724 = vmatpush1.msra.mxu0 %v929
    %4725 = vmatprep.subr.mxu0 %v934
    %4726 = vmatpush1.msra.mxu0 %v933
    %4727 = vmatprep.subr.mxu0 %v938
    %4728 = vmatpush1.msra.mxu0 %v937
    %4729 = vmatprep.subr.mxu0 %v942
    %4730 = vmatpush1.msra.mxu0 %v941
    %4731 = vmatprep.subr.mxu0 %v946
    %4732 = vmatpush1.msra.mxu0 %v945
    %4733 = vmatprep.subr.mxu0 %v950
    %4734 = vmatpush1.msra.mxu0 %v949
    %4735 = vmatprep.subr.mxu0 %v954
    %4736 = vmatpush1.msra.mxu0 %v953
    %4737 = vmatprep.subr.mxu0 %v958
    %4738 = vmatpush1.msra.mxu0 %v957
    %4739 = vmatprep.subr.mxu0 %v962
    %4740 = vmatpush1.msra.mxu0 %v961
    %4741 = vmatprep.subr.mxu0 %v966
    %4742 = vmatpush1.msra.mxu0 %v965
    %4743 = vmatprep.subr.mxu0 %v970
    %4744 = vmatpush1.msra.mxu0 %v969
    %4745 = vmatprep.subr.mxu0 %v974
    %4746 = vmatpush1.msra.mxu0 %v973
    %4747 = vmatprep.subr.mxu0 %v978
    %4748 = vmatpush1.msra.mxu0 %v977
    %4749 = vmatprep.subr.mxu0 %v982
    %4750 = vmatpush1.msra.mxu0 %v981
    %4751 = vmatprep.subr.mxu0 %v986
    %4752 = vmatpush1.msra.mxu0 %v985
    %4753 = vmatprep.subr.mxu0 %v990
    %4754 = vmatpush1.msra.mxu0 %v989
    %4755 = vmatprep.subr.mxu0 0.0
    %4756 = vmatpush1.msra.mxu0 0.0
    %4757 = vmatprep.subr.mxu0 0.0
    %4758 = vmatpush1.msra.mxu0 0.0
    %4759 = vmatprep.subr.mxu0 0.0
    %4760 = vmatpush1.msra.mxu0 0.0
    %4761 = vmatprep.subr.mxu0 0.0
    %4762 = vmatpush1.msra.mxu0 0.0
    %4763 = vmatprep.subr.mxu0 0.0
    %4764 = vmatpush1.msra.mxu0 0.0
    %4765 = vmatprep.subr.mxu0 0.0
    %4766 = vmatpush1.msra.mxu0 0.0
    %4767 = vmatprep.subr.mxu0 0.0
    %4768 = vmatpush1.msra.mxu0 0.0
    %4769 = vmatprep.subr.mxu0 0.0
    %4770 = vmatpush1.msra.mxu0 0.0
    %4771 = vmatprep.subr.mxu0 0.0
    %4772 = vmatpush1.msra.mxu0 0.0
    %4773 = vmatprep.subr.mxu0 0.0
    %4774 = vmatpush1.msra.mxu0 0.0
    %4775 = vmatprep.subr.mxu0 0.0
    %4776 = vmatpush1.msra.mxu0 0.0
    %4777 = vmatprep.subr.mxu0 0.0
    %4778 = vmatpush1.msra.mxu0 0.0
    %4779 = vmatprep.subr.mxu0 0.0
    %4780 = vmatpush1.msra.mxu0 0.0
    %4781 = vmatprep.subr.mxu0 0.0
    %4782 = vmatpush1.msra.mxu0 0.0
    %4783 = vmatprep.subr.mxu0 0.0
    %4784 = vmatpush1.msra.mxu0 0.0
    %4785 = vmatprep.subr.mxu0 0.0
    %4786 = vmatpush1.msra.mxu0 0.0
    %4787 = vmatprep.mubr.f32.mxu0 0.0
    %4788 = vmatmul.mubr.f32.gmra.mrb[0].mxu0 %v4721
    %v4789 = vpop.f32.mrb[0].mxu0
    %v4790 = vadd.f32 %v1179, %v4789
    %v4791 = vpop.f32.mrb[0].mxu0
    %v4792 = vadd.f32 %v1183, %v4791
    %4793 = vdwg.mxu0
    %4794 = vmatprep.subr.mxu0 %v932
    %4795 = vmatpush1.msra.mxu0 %v931
    %4796 = vmatprep.subr.mxu0 %v936
    %4797 = vmatpush1.msra.mxu0 %v935
    %4798 = vmatprep.subr.mxu0 %v940
    %4799 = vmatpush1.msra.mxu0 %v939
    %4800 = vmatprep.subr.mxu0 %v944
    %4801 = vmatpush1.msra.mxu0 %v943
    %4802 = vmatprep.subr.mxu0 %v948
    %4803 = vmatpush1.msra.mxu0 %v947
    %4804 = vmatprep.subr.mxu0 %v952
    %4805 = vmatpush1.msra.mxu0 %v951
    %4806 = vmatprep.subr.mxu0 %v956
    %4807 = vmatpush1.msra.mxu0 %v955
    %4808 = vmatprep.subr.mxu0 %v960
    %4809 = vmatpush1.msra.mxu0 %v959
    %4810 = vmatprep.subr.mxu0 %v964
    %4811 = vmatpush1.msra.mxu0 %v963
    %4812 = vmatprep.subr.mxu0 %v968
    %4813 = vmatpush1.msra.mxu0 %v967
    %4814 = vmatprep.subr.mxu0 %v972
    %4815 = vmatpush1.msra.mxu0 %v971
    %4816 = vmatprep.subr.mxu0 %v976
    %4817 = vmatpush1.msra.mxu0 %v975
    %4818 = vmatprep.subr.mxu0 %v980
    %4819 = vmatpush1.msra.mxu0 %v979
    %4820 = vmatprep.subr.mxu0 %v984
    %4821 = vmatpush1.msra.mxu0 %v983
    %4822 = vmatprep.subr.mxu0 %v988
    %4823 = vmatpush1.msra.mxu0 %v987
    %4824 = vmatprep.subr.mxu0 %v992
    %4825 = vmatpush1.msra.mxu0 %v991
    %4826 = vmatprep.subr.mxu0 0.0
    %4827 = vmatpush1.msra.mxu0 0.0
    %4828 = vmatprep.subr.mxu0 0.0
    %4829 = vmatpush1.msra.mxu0 0.0
    %4830 = vmatprep.subr.mxu0 0.0
    %4831 = vmatpush1.msra.mxu0 0.0
    %4832 = vmatprep.subr.mxu0 0.0
    %4833 = vmatpush1.msra.mxu0 0.0
    %4834 = vmatprep.subr.mxu0 0.0
    %4835 = vmatpush1.msra.mxu0 0.0
    %4836 = vmatprep.subr.mxu0 0.0
    %4837 = vmatpush1.msra.mxu0 0.0
    %4838 = vmatprep.subr.mxu0 0.0
    %4839 = vmatpush1.msra.mxu0 0.0
    %4840 = vmatprep.subr.mxu0 0.0
    %4841 = vmatpush1.msra.mxu0 0.0
    %4842 = vmatprep.subr.mxu0 0.0
    %4843 = vmatpush1.msra.mxu0 0.0
    %4844 = vmatprep.subr.mxu0 0.0
    %4845 = vmatpush1.msra.mxu0 0.0
    %4846 = vmatprep.subr.mxu0 0.0
    %4847 = vmatpush1.msra.mxu0 0.0
    %4848 = vmatprep.subr.mxu0 0.0
    %4849 = vmatpush1.msra.mxu0 0.0
    %4850 = vmatprep.subr.mxu0 0.0
    %4851 = vmatpush1.msra.mxu0 0.0
    %4852 = vmatprep.subr.mxu0 0.0
    %4853 = vmatpush1.msra.mxu0 0.0
    %4854 = vmatprep.subr.mxu0 0.0
    %4855 = vmatpush1.msra.mxu0 0.0
    %4856 = vmatprep.subr.mxu0 0.0
    %4857 = vmatpush1.msra.mxu0 0.0
    %4858 = vmatprep.mubr.f32.mxu0 0.0
    %4859 = vmatmul.mubr.f32.gmra.mrb[0].mxu0 %v4721
    %v4860 = vpop.f32.mrb[0].mxu0
    %v4861 = vadd.f32 %v1187, %v4860
    %v4862 = vpop.f32.mrb[0].mxu0
    %v4863 = vadd.f32 %v1191, %v4862
    %4864 = vdwg.mxu0
    %4865 = vmatprep.subr.mxu0 %v866
    %4866 = vmatpush1.msra.mxu0 %v865
    %4867 = vmatprep.subr.mxu0 %v870
    %4868 = vmatpush1.msra.mxu0 %v869
    %4869 = vmatprep.subr.mxu0 %v874
    %4870 = vmatpush1.msra.mxu0 %v873
    %4871 = vmatprep.subr.mxu0 %v878
    %4872 = vmatpush1.msra.mxu0 %v877
    %4873 = vmatprep.subr.mxu0 %v882
    %4874 = vmatpush1.msra.mxu0 %v881
    %4875 = vmatprep.subr.mxu0 %v886
    %4876 = vmatpush1.msra.mxu0 %v885
    %4877 = vmatprep.subr.mxu0 %v890
    %4878 = vmatpush1.msra.mxu0 %v889
    %4879 = vmatprep.subr.mxu0 %v894
    %4880 = vmatpush1.msra.mxu0 %v893
    %4881 = vmatprep.subr.mxu0 %v898
    %4882 = vmatpush1.msra.mxu0 %v897
    %4883 = vmatprep.subr.mxu0 %v902
    %4884 = vmatpush1.msra.mxu0 %v901
    %4885 = vmatprep.subr.mxu0 %v906
    %4886 = vmatpush1.msra.mxu0 %v905
    %4887 = vmatprep.subr.mxu0 %v910
    %4888 = vmatpush1.msra.mxu0 %v909
    %4889 = vmatprep.subr.mxu0 %v914
    %4890 = vmatpush1.msra.mxu0 %v913
    %4891 = vmatprep.subr.mxu0 %v918
    %4892 = vmatpush1.msra.mxu0 %v917
    %4893 = vmatprep.subr.mxu0 %v922
    %4894 = vmatpush1.msra.mxu0 %v921
    %4895 = vmatprep.subr.mxu0 %v926
    %4896 = vmatpush1.msra.mxu0 %v925
    %4897 = vmatprep.subr.mxu0 0.0
    %4898 = vmatpush1.msra.mxu0 0.0
    %4899 = vmatprep.subr.mxu0 0.0
    %4900 = vmatpush1.msra.mxu0 0.0
    %4901 = vmatprep.subr.mxu0 0.0
    %4902 = vmatpush1.msra.mxu0 0.0
    %4903 = vmatprep.subr.mxu0 0.0
    %4904 = vmatpush1.msra.mxu0 0.0
    %4905 = vmatprep.subr.mxu0 0.0
    %4906 = vmatpush1.msra.mxu0 0.0
    %4907 = vmatprep.subr.mxu0 0.0
    %4908 = vmatpush1.msra.mxu0 0.0
    %4909 = vmatprep.subr.mxu0 0.0
    %4910 = vmatpush1.msra.mxu0 0.0
    %4911 = vmatprep.subr.mxu0 0.0
    %4912 = vmatpush1.msra.mxu0 0.0
    %4913 = vmatprep.subr.mxu0 0.0
    %4914 = vmatpush1.msra.mxu0 0.0
    %4915 = vmatprep.subr.mxu0 0.0
    %4916 = vmatpush1.msra.mxu0 0.0
    %4917 = vmatprep.subr.mxu0 0.0
    %4918 = vmatpush1.msra.mxu0 0.0
    %4919 = vmatprep.subr.mxu0 0.0
    %4920 = vmatpush1.msra.mxu0 0.0
    %4921 = vmatprep.subr.mxu0 0.0
    %4922 = vmatpush1.msra.mxu0 0.0
    %4923 = vmatprep.subr.mxu0 0.0
    %4924 = vmatpush1.msra.mxu0 0.0
    %4925 = vmatprep.subr.mxu0 0.0
    %4926 = vmatpush1.msra.mxu0 0.0
    %4927 = vmatprep.subr.mxu0 0.0
    %4928 = vmatpush1.msra.mxu0 0.0
    %4929 = vmatprep.mubr.f32.mxu0 0.0
    %4930 = vmatmul.mubr.f32.gmra.mrb[0].mxu0 %v4528
    %v4931 = vpop.f32.mrb[0].mxu0
    %v4932 = vadd.f32 0.0, %v4931
    %v4933 = vpop.f32.mrb[0].mxu0
    %v4934 = vadd.f32 0.0, %v4933
    %4935 = vdwg.mxu0
    %4936 = vmatprep.subr.mxu0 %v868
    %4937 = vmatpush1.msra.mxu0 %v867
    %4938 = vmatprep.subr.mxu0 %v872
    %4939 = vmatpush1.msra.mxu0 %v871
    %4940 = vmatprep.subr.mxu0 %v876
    %4941 = vmatpush1.msra.mxu0 %v875
    %4942 = vmatprep.subr.mxu0 %v880
    %4943 = vmatpush1.msra.mxu0 %v879
    %4944 = vmatprep.subr.mxu0 %v884
    %4945 = vmatpush1.msra.mxu0 %v883
    %4946 = vmatprep.subr.mxu0 %v888
    %4947 = vmatpush1.msra.mxu0 %v887
    %4948 = vmatprep.subr.mxu0 %v892
    %4949 = vmatpush1.msra.mxu0 %v891
    %4950 = vmatprep.subr.mxu0 %v896
    %4951 = vmatpush1.msra.mxu0 %v895
    %4952 = vmatprep.subr.mxu0 %v900
    %4953 = vmatpush1.msra.mxu0 %v899
    %4954 = vmatprep.subr.mxu0 %v904
    %4955 = vmatpush1.msra.mxu0 %v903
    %4956 = vmatprep.subr.mxu0 %v908
    %4957 = vmatpush1.msra.mxu0 %v907
    %4958 = vmatprep.subr.mxu0 %v912
    %4959 = vmatpush1.msra.mxu0 %v911
    %4960 = vmatprep.subr.mxu0 %v916
    %4961 = vmatpush1.msra.mxu0 %v915
    %4962 = vmatprep.subr.mxu0 %v920
    %4963 = vmatpush1.msra.mxu0 %v919
    %4964 = vmatprep.subr.mxu0 %v924
    %4965 = vmatpush1.msra.mxu0 %v923
    %4966 = vmatprep.subr.mxu0 %v928
    %4967 = vmatpush1.msra.mxu0 %v927
    %4968 = vmatprep.subr.mxu0 0.0
    %4969 = vmatpush1.msra.mxu0 0.0
    %4970 = vmatprep.subr.mxu0 0.0
    %4971 = vmatpush1.msra.mxu0 0.0
    %4972 = vmatprep.subr.mxu0 0.0
    %4973 = vmatpush1.msra.mxu0 0.0
    %4974 = vmatprep.subr.mxu0 0.0
    %4975 = vmatpush1.msra.mxu0 0.0
    %4976 = vmatprep.subr.mxu0 0.0
    %4977 = vmatpush1.msra.mxu0 0.0
    %4978 = vmatprep.subr.mxu0 0.0
    %4979 = vmatpush1.msra.mxu0 0.0
    %4980 = vmatprep.subr.mxu0 0.0
    %4981 = vmatpush1.msra.mxu0 0.0
    %4982 = vmatprep.subr.mxu0 0.0
    %4983 = vmatpush1.msra.mxu0 0.0
    %4984 = vmatprep.subr.mxu0 0.0
    %4985 = vmatpush1.msra.mxu0 0.0
    %4986 = vmatprep.subr.mxu0 0.0
    %4987 = vmatpush1.msra.mxu0 0.0
    %4988 = vmatprep.subr.mxu0 0.0
    %4989 = vmatpush1.msra.mxu0 0.0
    %4990 = vmatprep.subr.mxu0 0.0
    %4991 = vmatpush1.msra.mxu0 0.0
    %4992 = vmatprep.subr.mxu0 0.0
    %4993 = vmatpush1.msra.mxu0 0.0
    %4994 = vmatprep.subr.mxu0 0.0
    %4995 = vmatpush1.msra.mxu0 0.0
    %4996 = vmatprep.subr.mxu0 0.0
    %4997 = vmatpush1.msra.mxu0 0.0
    %4998 = vmatprep.subr.mxu0 0.0
    %4999 = vmatpush1.msra.mxu0 0.0
    %5000 = vmatprep.mubr.f32.mxu0 0.0
    %5001 = vmatmul.mubr.f32.gmra.mrb[0].mxu0 %v4528
    %v5002 = vpop.f32.mrb[0].mxu0
    %v5003 = vadd.f32 0.0, %v5002
    %v5004 = vpop.f32.mrb[0].mxu0
    %v5005 = vadd.f32 0.0, %v5004
    %5006 = vdwg.mxu0
    %v5007 = vadd.f32 %v4790, %v4932
    %v5008 = vadd.f32 %v4792, %v4934
    %v5009 = vadd.f32 %v4861, %v5003
    %v5010 = vadd.f32 %v4863, %v5005
    %v5011 = vxor.u32 %v5007, 2147483648
    %v5012 = vmul.f32 %v5011, 1.442695
    %v5013 = vpow.pop %v5012
    %v5014 = vadd.f32 %v5013, 1.0
    %v5015 = vrcp.pop %v5014
    %v5016 = vmul.f32 1.0, %v5015
    %v5017 = vxor.u32 %v5008, 2147483648
    %v5018 = vmul.f32 %v5017, 1.442695
    %v5019 = vpow.pop %v5018
    %v5020 = vadd.f32 %v5019, 1.0
    %v5021 = vrcp.pop %v5020
    %v5022 = vmul.f32 1.0, %v5021
    %v5023 = vtanh.pop %v5009
    %v5024 = vxor.u32 %v5010, 2147483648
    %v5025 = vmul.f32 %v5024, 1.442695
    %v5026 = vpow.pop %v5025
    %v5027 = vadd.f32 %v5026, 1.0
    %v5028 = vrcp.pop %v5027
    %v5029 = vmul.f32 1.0, %v5028
    %v5030 = vmul.f32 %v5022, %v4526
    %v5031 = vmul.f32 %v5016, %v5023
    %v5032 = vadd.f32 %v5030, %v5031
    %v5033 = vtanh.pop %v5032
    %v5034 = vmul.f32 %v5029, %v5033
    %5035 = vst [vmem:[#allocation3 + $0x7] sm:$0x1] %v5034
    %5036 = vst [vmem:[#allocation3 + $0xe] sm:$0x2] %v5034
    %vm5037 = vcmask 261126
    %5038 = vst.msk [vmem:[#allocation20 - $0x6] sm:$0xc0] %vm5037, %v4719
    %5039 = vst.msk [vmem:[#allocation22 - $0x6] sm:$0xc0] %vm5037, %v4717
    %s5040 = scalar_lea.vmem [#allocation20], 2
    %vm5041 = vcmask 254976
    %5042 = vst.msk [vmem:[%s5040] sm:$0x3] %vm5041, %v5034
    %s5043 = scalar_lea.vmem [#allocation22], 2
    %5044 = vst.msk [vmem:[%s5043] sm:$0x3] %vm5041, %v5032
    %v5045 = vld [vmem:[#allocation3] sm:$0xff]
    %v5046 = vld [vmem:[#allocation3 + $0x8] sm:$0xff]
    %v5047 = vld [vmem:[#allocation13] sm:$0xff]
    %v5048 = vld [vmem:[#allocation13 + $0x8] sm:$0xff]
    %v5049 = vld [vmem:[#allocation13 + $0x10] sm:$0xff]
    %v5050 = vld [vmem:[#allocation13 + $0x18] sm:$0xff]
    %v5051 = vld [vmem:[#allocation13 + $0x20] sm:$0xff]
    %v5052 = vld [vmem:[#allocation13 + $0x28] sm:$0xff]
    %v5053 = vld [vmem:[#allocation13 + $0x30] sm:$0xff]
    %v5054 = vld [vmem:[#allocation13 + $0x38] sm:$0xff]
    %v5055 = vld [vmem:[#allocation13 + $0x40] sm:$0xff]
    %v5056 = vld [vmem:[#allocation13 + $0x48] sm:$0xff]
    %v5057 = vld [vmem:[#allocation13 + $0x50] sm:$0xff]
    %v5058 = vld [vmem:[#allocation13 + $0x58] sm:$0xff]
    %v5059 = vld [vmem:[#allocation13 + $0x60] sm:$0xff]
    %v5060 = vld [vmem:[#allocation13 + $0x68] sm:$0xff]
    %v5061 = vld [vmem:[#allocation13 + $0x70] sm:$0xff]
    %v5062 = vld [vmem:[#allocation13 + $0x78] sm:$0xff]
    %v5063 = vld [vmem:[#allocation14] sm:$0x1]
    %v5065 = vlaneseq
    %v5066 = vshrl.u32 %v5065, 7
    %v5067 = vsub.s32 0, %v5066
    %v5068 = vrot.slane %v5063, %v5067
    %5070 = vmatprep.subr.mxu0 0.0
    %5071 = vmatpush1.msra.mxu0 %v5047
    %5072 = vmatprep.subr.mxu0 0.0
    %5073 = vmatpush1.msra.mxu0 %v5048
    %5074 = vmatprep.subr.mxu0 0.0
    %5075 = vmatpush1.msra.mxu0 %v5049
    %5076 = vmatprep.subr.mxu0 0.0
    %5077 = vmatpush1.msra.mxu0 %v5050
    %5078 = vmatprep.subr.mxu0 0.0
    %5079 = vmatpush1.msra.mxu0 %v5051
    %5080 = vmatprep.subr.mxu0 0.0
    %5081 = vmatpush1.msra.mxu0 %v5052
    %5082 = vmatprep.subr.mxu0 0.0
    %5083 = vmatpush1.msra.mxu0 %v5053
    %5084 = vmatprep.subr.mxu0 0.0
    %5085 = vmatpush1.msra.mxu0 %v5054
    %5086 = vmatprep.subr.mxu0 0.0
    %5087 = vmatpush1.msra.mxu0 %v5055
    %5088 = vmatprep.subr.mxu0 0.0
    %5089 = vmatpush1.msra.mxu0 %v5056
    %5090 = vmatprep.subr.mxu0 0.0
    %5091 = vmatpush1.msra.mxu0 %v5057
    %5092 = vmatprep.subr.mxu0 0.0
    %5093 = vmatpush1.msra.mxu0 %v5058
    %5094 = vmatprep.subr.mxu0 0.0
    %5095 = vmatpush1.msra.mxu0 %v5059
    %5096 = vmatprep.subr.mxu0 0.0
    %5097 = vmatpush1.msra.mxu0 %v5060
    %5098 = vmatprep.subr.mxu0 0.0
    %5099 = vmatpush1.msra.mxu0 %v5061
    %5100 = vmatprep.subr.mxu0 0.0
    %5101 = vmatpush1.msra.mxu0 %v5062
    %5102 = vmatprep.subr.mxu0 0.0
    %5103 = vmatpush1.msra.mxu0 0.0
    %5104 = vmatprep.subr.mxu0 0.0
    %5105 = vmatpush1.msra.mxu0 0.0
    %5106 = vmatprep.subr.mxu0 0.0
    %5107 = vmatpush1.msra.mxu0 0.0
    %5108 = vmatprep.subr.mxu0 0.0
    %5109 = vmatpush1.msra.mxu0 0.0
    %5110 = vmatprep.subr.mxu0 0.0
    %5111 = vmatpush1.msra.mxu0 0.0
    %5112 = vmatprep.subr.mxu0 0.0
    %5113 = vmatpush1.msra.mxu0 0.0
    %5114 = vmatprep.subr.mxu0 0.0
    %5115 = vmatpush1.msra.mxu0 0.0
    %5116 = vmatprep.subr.mxu0 0.0
    %5117 = vmatpush1.msra.mxu0 0.0
    %5118 = vmatprep.subr.mxu0 0.0
    %5119 = vmatpush1.msra.mxu0 0.0
    %5120 = vmatprep.subr.mxu0 0.0
    %5121 = vmatpush1.msra.mxu0 0.0
    %5122 = vmatprep.subr.mxu0 0.0
    %5123 = vmatpush1.msra.mxu0 0.0
    %5124 = vmatprep.subr.mxu0 0.0
    %5125 = vmatpush1.msra.mxu0 0.0
    %5126 = vmatprep.subr.mxu0 0.0
    %5127 = vmatpush1.msra.mxu0 0.0
    %5128 = vmatprep.subr.mxu0 0.0
    %5129 = vmatpush1.msra.mxu0 0.0
    %5130 = vmatprep.subr.mxu0 0.0
    %5131 = vmatpush1.msra.mxu0 0.0
    %5132 = vmatprep.subr.mxu0 0.0
    %5133 = vmatpush1.msra.mxu0 0.0
    %5134 = vmatprep.mubr.f32.mxu0 0.0
    %5135 = vmatmul.mubr.f32.gmra.mrb[0].mxu0 %v5045
    %v5136 = vpop.f32.mrb[0].mxu0
    %v5137 = vadd.f32 %v5068, %v5136
    %v5138 = vpop.f32.mrb[0].mxu0
    %5139 = vmatprep.mubr.f32.mxu0 0.0
    %5140 = vmatmul.mubr.f32.gmra.mrb[0].mxu0 %v5046
    %v5141 = vpop.f32.mrb[0].mxu0
    %v5142 = vadd.f32 %v5068, %v5141
    %v5143 = vpop.f32.mrb[0].mxu0
    %5144 = vdwg.mxu0
    %5145 = vst [vmem:[#allocation19] sm:$0xff] %v5137
    %5146 = vst [vmem:[#allocation19 + $0x8] sm:$0xff] %v5142
    // Predicated region
    $region66: #{tpu_custom_call.1} parent=1 // pred_check
      _
    $region67: #{tpu_custom_call.1} parent=1 // pred_check_branch
      %5148 = sbr.rel (0) target = $region69
    $region68: #{tpu_custom_call.1} parent=1 // pred_region
      %s5150 = ssub.s32 256, 256
      %5151 = vsyncadd [#allocation6], %s5150
      %s5152 = sshll.u32 [#allocation19], 4
      %s5153 = int_to_ptr.vmem [resolvable:$true] %s5152
      %5158 = dma.vmem_to_hbm [thread:$0]  %s5153, 256, %s8, [#allocation6], 128, 128, 8
    $region69: #{tpu_custom_call.1} parent=1 // pred_fallthru
      _
    // Predicated region
    $region70: #{tpu_custom_call.1} parent=1 // pred_check
      _
    $region71: #{tpu_custom_call.1} parent=1 // pred_check_branch
      %5160 = sbr.rel (0) target = $region73
    $region72: #{tpu_custom_call.1} parent=1 // pred_region
      %s5162 = ssub.s32 64, 64
      %5163 = vsyncadd [#allocation21], %s5162
      %s5164 = sshll.u32 [#allocation20], 4
      %s5165 = int_to_ptr.vmem [resolvable:$true] %s5164
      %5170 = dma.vmem_to_hbm [thread:$0]  %s5165, 64, %s9, [#allocation21], 32, 32, 2
    $region73: #{tpu_custom_call.1} parent=1 // pred_fallthru
      _
    // Predicated region
    $region74: #{tpu_custom_call.1} parent=1 // pred_check
      _
    $region75: #{tpu_custom_call.1} parent=1 // pred_check_branch
      %5172 = sbr.rel (0) target = $region77
    $region76: #{tpu_custom_call.1} parent=1 // pred_region
      %s5174 = ssub.s32 64, 64
      %5175 = vsyncadd [#allocation21], %s5174
      %s5176 = sshll.u32 [#allocation22], 4
      %s5177 = int_to_ptr.vmem [resolvable:$true] %s5176
      %5182 = dma.vmem_to_hbm [thread:$0]  %s5177, 64, %s10, [#allocation21], 32, 32, 2
    $region77: #{tpu_custom_call.1} parent=1 // pred_fallthru
      _
    // Predicated region
    $region78: #{tpu_custom_call.1} parent=1 // pred_check
      _
    $region79: #{tpu_custom_call.1} parent=1 // pred_check_branch
      %5184 = sbr.rel (0) target = $region81
    $region80: #{tpu_custom_call.1} parent=1 // pred_region
      %5185 = dma.done [#allocation6], 256
    $region81: #{tpu_custom_call.1} parent=1 // pred_fallthru
      _
    // Predicated region
    $region82: #{tpu_custom_call.1} parent=1 // pred_check
      _
    $region83: #{tpu_custom_call.1} parent=1 // pred_check_branch
      %5187 = sbr.rel (0) target = $region85
    $region84: #{tpu_custom_call.1} parent=1 // pred_region
      %5188 = dma.done [#allocation21], 64
    $region85: #{tpu_custom_call.1} parent=1 // pred_fallthru
      _
    // Predicated region
    $region86: #{tpu_custom_call.1} parent=1 // pred_check
      _
    $region87: #{tpu_custom_call.1} parent=1 // pred_check_branch
      %5190 = sbr.rel (0) target = $region89
    $region88: #{tpu_custom_call.1} parent=1 // pred_region
      %5191 = dma.done [#allocation21], 64
    $region89: #{tpu_custom_call.1} parent=1 // pred_fallthru
      _
    %5192 = vsyncpa [#allocation5], 1
    %5193 = vsyncpa [#allocation12], 1
    %5194 = vsyncpa [#allocation15], 1
    %5195 = vsyncpa [#allocation18], 1
    %5196 = vsyncpa [#allocation6], 1
    %5197 = vsyncpa [#allocation21], 1
    %5198 = vsyncpa [#allocation7], 1
    %5199 = vsyncpa [#allocation9], 1

</llo_original>
